<compile_context>
chip_gen: v7x
topology: tpu7x:2x2x1
jax: 0.10.0
libtpu: 0.0.40
codegen_flags: <defaults>
</compile_context>

<pallas_src>
import functools
import math

import jax
import jax.numpy as jnp
from jax import lax
from jax.experimental import pallas as pl
from jax.experimental.pallas import tpu as pltpu


# ----------------------------------------------------------------------------
# Fused Pallas kernel (whole forward, single program, batch folded into rows)
# ----------------------------------------------------------------------------
def _make_fused_kernel(n_heads, n_conv, n_stem, strides, B, T0, eps=1e-5):
    T1, T2 = T0 // 2, T0 // 4
    BT0, BT1, BT2 = B * T0, B * T1, B * T2

    def ln(v, g, b):
        mu = jnp.mean(v, axis=-1, keepdims=True)
        vc = v - mu
        var = jnp.mean(vc * vc, axis=-1, keepdims=True)
        return vc * lax.rsqrt(var + eps) * g + b

    def gelu(v):
        c = math.sqrt(2.0 / math.pi)
        return 0.5 * v * (1.0 + jnp.tanh(c * (v + 0.044715 * v * v * v)))

    def kernel(x_ref, m0_ref, m1_ref, m2_ref, kb0_ref, kb1_ref, kb2_ref,
               sel10_ref, sel21_ref, fcw_ref, fcb_ref,
               convw_ref, convg_ref, convb_ref,
               ln1g_ref, ln1b_ref, wqk_ref, bqk_ref, wvo_ref, bvo_ref, bo_ref,
               ln2g_ref, ln2b_ref, w1_ref, b1_ref, w2_ref, b2_ref,
               out_ref):
        f32 = jnp.float32
        x = x_ref[...].astype(f32)                          # (B*T0, Cin)
        masks = [m0_ref[...], m1_ref[...], m2_ref[...]]     # (B*T_l, 1) per level
        kb_refs = [kb0_ref, kb1_ref, kb2_ref]               # block-diag additive key bias
        sel_refs = [sel10_ref, sel21_ref]                   # stride-2 row selectors
        m0 = masks[0]

        # ---- embedding fc (MaskedConv1D kernel=1) ----
        x = (jnp.dot(x, fcw_ref[...], preferred_element_type=f32)
             + fcb_ref[...]) * m0

        # ---- embedding convs k=3/s=1/p=1 (no bias) + channel LN + ReLU ----
        # Shift taps via pltpu.roll over the folded (B*T) axis; zero the rows that
        # would otherwise read across a clip boundary (matches the conv's zero pad).
        row = lax.broadcasted_iota(jnp.int32, (BT0, 1), 0)
        tpos = row % T0
        prev_ok = (tpos != 0).astype(f32)
        next_ok = (tpos != T0 - 1).astype(f32)
        for li in range(n_conv):
            x_prev = pltpu.roll(x, 1, axis=0) * prev_ok
            x_next = pltpu.roll(x, BT0 - 1, axis=0) * next_ok
            taps = jnp.concatenate([x_prev, x, x_next], axis=-1)     # (B*T0, 3C)
            y = jnp.dot(taps, convw_ref[li], preferred_element_type=f32) * m0
            x = jnp.maximum(ln(y, convg_ref[li], convb_ref[li]), 0.0)

        C = x.shape[-1]
        hd = C // n_heads
        scale = 1.0 / math.sqrt(hd)
        out_off = (0, BT0, BT0 + BT1)

        # ---- stem + branch transformer blocks (pre-LN, masked MHA + GELU MLP) ----
        level = 0
        for l, stride in enumerate(strides):
            h = ln(x, ln1g_ref[l], ln1b_ref[l])
            # Fused Q/K projection (one matmul, N=2C) and fused per-head value/output
            # projection (one lane-dense matmul, N=H*C=128).
            qk = jnp.dot(h, wqk_ref[l], preferred_element_type=f32) + bqk_ref[l]
            vo = jnp.dot(h, wvo_ref[l], preferred_element_type=f32) + bvo_ref[l]
            if stride > 1:
                sel = sel_refs[level][...]
                q = jnp.dot(sel, qk[:, :C], preferred_element_type=f32)
                skip = jnp.dot(sel, x, preferred_element_type=f32)
                level += 1
            else:
                q = qk[:, :C]
                skip = x
            k = qk[:, C:]
            m_out = masks[level]
            kb = kb_refs[level][...]

            att = None
            for hh in range(n_heads):
                qh = q[:, hh * hd:(hh + 1) * hd]
                kh = k[:, hh * hd:(hh + 1) * hd]
                s = lax.dot_general(qh, kh, (((1,), (1,)), ((), ())),
                                    preferred_element_type=f32) * scale + kb
                # NOTE: rows whose keys are all masked get a uniform softmax over
                # -1e30 scores; those rows are zeroed by m_out below before any
                # downstream consumer reads them.
                s_max = jnp.max(s, axis=-1, keepdims=True)
                p = jnp.exp(s - s_max)
                p = p * pl.reciprocal(jnp.sum(p, axis=-1, keepdims=True), approx=True)
                contrib = jnp.dot(p, vo[:, hh * C:(hh + 1) * C],
                                  preferred_element_type=f32)
                att = contrib if att is None else att + contrib
            out = skip * m_out + (att + bo_ref[l]) * m_out

            h2 = ln(out, ln2g_ref[l], ln2b_ref[l])
            h2 = gelu(jnp.dot(h2, w1_ref[l], preferred_element_type=f32)
                      + b1_ref[l]) * m_out
            h2 = (jnp.dot(h2, w2_ref[l], preferred_element_type=f32)
                  + b2_ref[l]) * m_out
            x = out + h2

            if l >= n_stem:                 # branch block -> packed FPN level output
                off = out_off[l - n_stem]
                out_ref[pl.ds(off, x.shape[0]), :] = x.astype(out_ref.dtype)

    return kernel


# ----------------------------------------------------------------------------
# Wrapper: weight fusion/stacking + a single grid-free pallas_call
# ----------------------------------------------------------------------------
def video_transformer_forward(x_nct, mask_bt_bool, params, n_heads):
    B, Cin, T0 = x_nct.shape
    C = params["embd_fc_w"].shape[1]
    hd = C // n_heads
    n_conv = len(params["embd_convs"])
    n_stem = len(params["stem"])
    n_branch = len(params["branch"])
    strides = tuple([1] * n_stem + [2 if i > 0 else 1 for i in range(n_branch)])
    assert strides.count(2) == 2, "fused kernel is specialized to 3 pyramid levels"
    T1, T2 = T0 // 2, T0 // 4
    f32 = jnp.float32

    # Fold batch into the leading (M) dimension: (B*T, C) slabs.
    x_btc = jnp.transpose(x_nct, (0, 2, 1)).astype(f32).reshape(B * T0, Cin)
    m0 = mask_bt_bool.astype(f32)                                   # (B, T0)
    m1 = m0[:, ::2]
    m2 = m1[:, ::2]
    m0col = m0.reshape(B * T0, 1)
    m1col = m1.reshape(B * T1, 1)
    m2col = m2.reshape(B * T2, 1)

    # Block-diagonal additive attention bias: 0 for within-clip valid keys,
    # -1e30 for masked keys and cross-clip pairs.
    def block_bias(Tq, mk):
        Tk = mk.shape[1]
        eye = jnp.eye(B, dtype=f32)
        v = eye[:, :, None] * mk[None, :, :]                        # (B, B, Tk)
        v = jnp.broadcast_to(v[:, None, :, :], (B, Tq, B, Tk))
        return (v.reshape(B * Tq, B * Tk) - 1.0) * 1e30

    kb0 = block_bias(T0, m0)    # stem / branch0: queries T0, keys T0
    kb1 = block_bias(T1, m0)    # branch1:        queries T1, keys T0
    kb2 = block_bias(T2, m1)    # branch2:        queries T2, keys T1

    # Stride-2 row-selection matrices in the folded (B*T) layout.
    def sel_mat(Tin):
        Tout = Tin // 2
        r = jnp.arange(B * Tout)
        c = jnp.arange(B * Tin)
        rb, ri = r // Tout, r % Tout
        cb, cj = c // Tin, c % Tin
        return ((rb[:, None] == cb[None, :]) &
                (cj[None, :] == 2 * ri[:, None])).astype(f32)

    sel10 = sel_mat(T0)
    sel21 = sel_mat(T1)

    # ---- fuse / stack weights ----
    fcw = params["embd_fc_w"]
    fcb = params["embd_fc_b"].reshape(1, C)
    # fused k=3 conv taps: rows = [w(-1); w(0); w(+1)] transposed -> (3C, C)
    convw = jnp.stack([jnp.concatenate([w[:, :, 0].T, w[:, :, 1].T, w[:, :, 2].T], axis=0)
                       for w in params["embd_convs"]])
    convg = jnp.stack([g.reshape(1, C) for g, _ in params["embd_norms"]])
    convb = jnp.stack([b.reshape(1, C) for _, b in params["embd_norms"]])

    blocks = list(params["stem"]) + list(params["branch"])

    def stack_vec(key, n):
        return jnp.stack([p[key].reshape(1, n) for p in blocks])

    ln1g = stack_vec("ln1_g", C); ln1b = stack_vec("ln1_b", C)
    ln2g = stack_vec("ln2_g", C); ln2b = stack_vec("ln2_b", C)
    wqk = jnp.stack([jnp.concatenate([p["wq"], p["wk"]], axis=1) for p in blocks])
    bqk = jnp.stack([jnp.concatenate([p["bq"], p["bk"]]).reshape(1, 2 * C) for p in blocks])

    # Fold V and output projections per head: W_vo_h = wv_h @ wo_h (C, C),
    # stacked along lanes to (C, H*C); bv folds exactly to bvo_h = bv_h @ wo_h.
    def fold_vo(p):
        wv, wo, bv = p["wv"], p["wo"], p["bv"]
        wcols, bcols = [], []
        for h in range(n_heads):
            sl = slice(h * hd, (h + 1) * hd)
            wcols.append(wv[:, sl] @ wo[sl, :])
            bcols.append(bv[sl] @ wo[sl, :])
        return (jnp.concatenate(wcols, axis=1),
                jnp.concatenate(bcols).reshape(1, n_heads * C))

    folded = [fold_vo(p) for p in blocks]
    wvo = jnp.stack([f[0] for f in folded])
    bvo = jnp.stack([f[1] for f in folded])
    bo = stack_vec("bo", C)
    w1 = jnp.stack([p["w1"] for p in blocks]); b1 = stack_vec("b1", 4 * C)
    w2 = jnp.stack([p["w2"] for p in blocks]); b2 = stack_vec("b2", C)

    kernel = _make_fused_kernel(n_heads, n_conv, n_stem, strides, B, T0)

    # Single grid-free pallas_call: all operands live whole in VMEM (default
    # full-array BlockSpecs), activations never leave VMEM/vregs, and the three
    # FPN levels are emitted as one packed output slab.
    packed = pl.pallas_call(
        kernel,
        out_shape=jax.ShapeDtypeStruct((B * (T0 + T1 + T2), C), f32),
    )(x_btc, m0col, m1col, m2col, kb0, kb1, kb2, sel10, sel21,
      fcw, fcb, convw, convg, convb,
      ln1g, ln1b, wqk, bqk, wvo, bvo, bo, ln2g, ln2b, w1, b1, w2, b2)

    o0 = packed[:B * T0].reshape(B, T0, C)
    o1 = packed[B * T0:B * (T0 + T1)].reshape(B, T1, C)
    o2 = packed[B * (T0 + T1):].reshape(B, T2, C)
    fpn = (jnp.transpose(o0, (0, 2, 1)),
           jnp.transpose(o1, (0, 2, 1)),
           jnp.transpose(o2, (0, 2, 1)))
    fpn_masks = ((m0 > 0)[:, None, :], (m1 > 0)[:, None, :], (m2 > 0)[:, None, :])
    return fpn, fpn_masks


# ----------------------------------------------------------------------------
# Parameter init (deterministic, synthetic)
# ----------------------------------------------------------------------------
class KeyGen:
    def __init__(self, key):
        self.key = key

    def __call__(self):
        self.key, sub = jax.random.split(self.key)
        return sub


def init_encoder_params(kg, C):
    def w(shape):
        return 0.02 * jax.random.normal(kg(), shape, jnp.float32)

    def z(n):
        return jnp.zeros((n,), jnp.float32)

    return dict(
        ln1_g=jnp.ones((C,), jnp.float32), ln1_b=z(C),
        wq=w((C, C)), bq=z(C), wk=w((C, C)), bk=z(C), wv=w((C, C)), bv=z(C),
        wo=w((C, C)), bo=z(C),
        ln2_g=jnp.ones((C,), jnp.float32), ln2_b=z(C),
        w1=w((C, 4 * C)), b1=z(4 * C), w2=w((4 * C, C)), b2=z(C),
    )


def init_params(key, in_dim, embd_dim, arch):
    kg = KeyGen(key)

    def w(shape):
        return 0.02 * jax.random.normal(kg(), shape, jnp.float32)

    return dict(
        embd_fc_w=w((in_dim, embd_dim)),
        embd_fc_b=jnp.zeros((embd_dim,), jnp.float32),      # bias zeroed (__init_weights__)
        embd_convs=[w((embd_dim, embd_dim, 3)) for _ in range(arch[0])],
        embd_norms=[(jnp.ones((embd_dim,), jnp.float32),
                     jnp.zeros((embd_dim,), jnp.float32)) for _ in range(arch[0])],
        stem=[init_encoder_params(kg, embd_dim) for _ in range(arch[1])],
        branch=[init_encoder_params(kg, embd_dim) for _ in range(arch[2])],
    )


# ----------------------------------------------------------------------------
if __name__ == "__main__":
    B, in_dim, T = 2, 16, 32
    embd_dim, n_heads = 32, 4
    arch = (2, 1, 3)

    key = jax.random.PRNGKey(0)
    kx, _ = jax.random.split(key)
    x = jax.random.normal(kx, (B, in_dim, T), jnp.float32)
    lengths = jnp.array([T, 20])
    mask = jnp.arange(T)[None, :] < lengths[:, None]          # (B, T) bool

    params = init_params(jax.random.PRNGKey(42), in_dim, embd_dim, arch)

    fwd = jax.jit(functools.partial(video_transformer_forward, n_heads=n_heads))
    fpn, fpn_masks = fwd(x, mask, params)
    for f in fpn:
        jax.block_until_ready(f)
    for m in fpn_masks:
        jax.block_until_ready(m)

    print("KERNEL_OK")
</pallas_src>

<mosaic_0001>
module attributes {stable_mosaic.version = 11 : i64} {
  func.func @kernel(%arg0: memref<64x16xf32, #tpu.memory_space<vmem>>, %arg1: memref<64x1xf32, #tpu.memory_space<vmem>>, %arg2: memref<32x1xf32, #tpu.memory_space<vmem>>, %arg3: memref<16x1xf32, #tpu.memory_space<vmem>>, %arg4: memref<64x64xf32, #tpu.memory_space<vmem>>, %arg5: memref<32x64xf32, #tpu.memory_space<vmem>>, %arg6: memref<16x32xf32, #tpu.memory_space<vmem>>, %arg7: memref<32x64xf32, #tpu.memory_space<vmem>>, %arg8: memref<16x32xf32, #tpu.memory_space<vmem>>, %arg9: memref<16x32xf32, #tpu.memory_space<vmem>>, %arg10: memref<1x32xf32, #tpu.memory_space<vmem>>, %arg11: memref<2x96x32xf32, #tpu.memory_space<vmem>>, %arg12: memref<2x1x32xf32, #tpu.memory_space<vmem>>, %arg13: memref<2x1x32xf32, #tpu.memory_space<vmem>>, %arg14: memref<4x1x32xf32, #tpu.memory_space<vmem>>, %arg15: memref<4x1x32xf32, #tpu.memory_space<vmem>>, %arg16: memref<4x32x64xf32, #tpu.memory_space<vmem>>, %arg17: memref<4x1x64xf32, #tpu.memory_space<vmem>>, %arg18: memref<4x32x128xf32, #tpu.memory_space<vmem>>, %arg19: memref<4x1x128xf32, #tpu.memory_space<vmem>>, %arg20: memref<4x1x32xf32, #tpu.memory_space<vmem>>, %arg21: memref<4x1x32xf32, #tpu.memory_space<vmem>>, %arg22: memref<4x1x32xf32, #tpu.memory_space<vmem>>, %arg23: memref<4x32x128xf32, #tpu.memory_space<vmem>>, %arg24: memref<4x1x128xf32, #tpu.memory_space<vmem>>, %arg25: memref<4x128x32xf32, #tpu.memory_space<vmem>>, %arg26: memref<4x1x32xf32, #tpu.memory_space<vmem>>, %arg27: memref<112x32xf32, #tpu.memory_space<vmem>>) attributes {dimension_semantics = [], scalar_prefetch = 0 : i64, scratch_operands = 0 : i64, tpu.core_type = #tpu.core_type<tc>} {
    %c0 = arith.constant 0 : index
    %c0_0 = arith.constant 0 : index
    %0 = vector.load %arg0[%c0, %c0_0] : memref<64x16xf32, #tpu.memory_space<vmem>>, vector<64x16xf32>
    %c0_1 = arith.constant 0 : index
    %c0_2 = arith.constant 0 : index
    %1 = vector.load %arg1[%c0_1, %c0_2] : memref<64x1xf32, #tpu.memory_space<vmem>>, vector<64x1xf32>
    %c0_3 = arith.constant 0 : index
    %c0_4 = arith.constant 0 : index
    %2 = vector.load %arg2[%c0_3, %c0_4] : memref<32x1xf32, #tpu.memory_space<vmem>>, vector<32x1xf32>
    %c0_5 = arith.constant 0 : index
    %c0_6 = arith.constant 0 : index
    %3 = vector.load %arg3[%c0_5, %c0_6] : memref<16x1xf32, #tpu.memory_space<vmem>>, vector<16x1xf32>
    %c0_7 = arith.constant 0 : index
    %c0_8 = arith.constant 0 : index
    %4 = vector.load %arg9[%c0_7, %c0_8] : memref<16x32xf32, #tpu.memory_space<vmem>>, vector<16x32xf32>
    %cst = arith.constant dense<0.000000e+00> : vector<64x32xf32>
    %5 = tpu.matmul %0, %4, %cst {dimension_numbers = #tpu.dot_dimension_numbers<[1], [0], [0], [1], [0, 0, 1, 1], [], []>} : vector<64x16xf32>, vector<16x32xf32>, vector<64x32xf32> -> vector<64x32xf32>
    %c0_9 = arith.constant 0 : index
    %c0_10 = arith.constant 0 : index
    %6 = vector.load %arg10[%c0_9, %c0_10] : memref<1x32xf32, #tpu.memory_space<vmem>>, vector<1x32xf32>
    %7 = vector.broadcast %6 : vector<1x32xf32> to vector<64x32xf32>
    %8 = arith.addf %5, %7 : vector<64x32xf32>
    %9 = vector.broadcast %1 : vector<64x1xf32> to vector<64x32xf32>
    %10 = arith.mulf %8, %9 : vector<64x32xf32>
    %11 = tpu.iota {dimensions = array<i32: 0>} : vector<64x1xi32>
    %c32_i32 = arith.constant 32 : i32
    %c0_i32 = arith.constant 0 : i32
    %12 = arith.cmpi eq, %c32_i32, %c0_i32 : i32
    %c1_i32 = arith.constant 1 : i32
    %13 = arith.select %12, %c1_i32, %c32_i32 : i32
    %14 = vector.broadcast %13 : i32 to vector<64x1xi32>
    %15 = arith.remsi %11, %14 : vector<64x1xi32>
    %c0_i32_11 = arith.constant 0 : i32
    %16 = vector.broadcast %c0_i32_11 : i32 to vector<64x1xi32>
    %17 = arith.cmpi ne, %15, %16 : vector<64x1xi32>
    %c0_i32_12 = arith.constant 0 : i32
    %18 = vector.broadcast %c0_i32_12 : i32 to vector<64x1xi32>
    %19 = arith.cmpi slt, %15, %18 : vector<64x1xi32>
    %c0_i32_13 = arith.constant 0 : i32
    %20 = arith.cmpi slt, %13, %c0_i32_13 : i32
    %21 = vector.broadcast %20 : i1 to vector<64x1xi1>
    %22 = vector.broadcast %21 : vector<64x1xi1> to vector<64x1xi1>
    %23 = arith.xori %19, %22 : vector<64x1xi1>
    %24 = arith.andi %23, %17 : vector<64x1xi1>
    %25 = vector.broadcast %13 : i32 to vector<64x1xi32>
    %26 = arith.addi %15, %25 : vector<64x1xi32>
    %27 = arith.select %24, %26, %15 : vector<64x1xi1>, vector<64x1xi32>
    %c0_i32_14 = arith.constant 0 : i32
    %28 = vector.broadcast %c0_i32_14 : i32 to vector<64x1xi32>
    %29 = arith.cmpi ne, %27, %28 : vector<64x1xi32>
    %30 = arith.extui %29 : vector<64x1xi1> to vector<64x1xi32>
    %31 = arith.sitofp %30 : vector<64x1xi32> to vector<64x1xf32>
    %c31_i32 = arith.constant 31 : i32
    %32 = vector.broadcast %c31_i32 : i32 to vector<64x1xi32>
    %33 = arith.cmpi ne, %27, %32 : vector<64x1xi32>
    %34 = arith.extui %33 : vector<64x1xi1> to vector<64x1xi32>
    %35 = arith.sitofp %34 : vector<64x1xi32> to vector<64x1xf32>
    %c1_i32_15 = arith.constant 1 : i32
    %36 = tpu.dynamic_rotate %10 by %c1_i32_15 dim 0 : vector<64x32xf32>, i32 -> vector<64x32xf32>
    %37 = vector.broadcast %31 : vector<64x1xf32> to vector<64x32xf32>
    %38 = arith.mulf %36, %37 : vector<64x32xf32>
    %c63_i32 = arith.constant 63 : i32
    %39 = tpu.dynamic_rotate %10 by %c63_i32 dim 0 : vector<64x32xf32>, i32 -> vector<64x32xf32>
    %40 = vector.broadcast %35 : vector<64x1xf32> to vector<64x32xf32>
    %41 = arith.mulf %39, %40 : vector<64x32xf32>
    %42 = tpu.concatenate %38, %10, %41 in 1 : vector<64x32xf32>, vector<64x32xf32>, vector<64x32xf32> -> vector<64x96xf32>
    %c0_16 = arith.constant 0 : index
    %c0_17 = arith.constant 0 : index
    %c0_18 = arith.constant 0 : index
    %43 = vector.load %arg11[%c0_16, %c0_17, %c0_18] : memref<2x96x32xf32, #tpu.memory_space<vmem>>, vector<1x96x32xf32>
    %44 = vector.shape_cast %43 : vector<1x96x32xf32> to vector<96x32xf32>
    %cst_19 = arith.constant dense<0.000000e+00> : vector<64x32xf32>
    %45 = tpu.matmul %42, %44, %cst_19 {dimension_numbers = #tpu.dot_dimension_numbers<[1], [0], [0], [1], [0, 0, 1, 1], [], []>} : vector<64x96xf32>, vector<96x32xf32>, vector<64x32xf32> -> vector<64x32xf32>
    %46 = vector.broadcast %1 : vector<64x1xf32> to vector<64x32xf32>
    %47 = arith.mulf %45, %46 : vector<64x32xf32>
    %c0_20 = arith.constant 0 : index
    %c0_21 = arith.constant 0 : index
    %c0_22 = arith.constant 0 : index
    %48 = vector.load %arg12[%c0_20, %c0_21, %c0_22] : memref<2x1x32xf32, #tpu.memory_space<vmem>>, vector<1x1x32xf32>
    %49 = vector.shape_cast %48 : vector<1x1x32xf32> to vector<1x32xf32>
    %c0_23 = arith.constant 0 : index
    %c0_24 = arith.constant 0 : index
    %c0_25 = arith.constant 0 : index
    %50 = vector.load %arg13[%c0_23, %c0_24, %c0_25] : memref<2x1x32xf32, #tpu.memory_space<vmem>>, vector<1x1x32xf32>
    %51 = vector.shape_cast %50 : vector<1x1x32xf32> to vector<1x32xf32>
    %cst_26 = arith.constant dense<0.000000e+00> : vector<64xf32>
    %52 = vector.multi_reduction <add>, %47, %cst_26 [1] : vector<64x32xf32> to vector<64xf32>
    %53 = vector.shape_cast %52 : vector<64xf32> to vector<64x1xf32>
    %cst_27 = arith.constant 3.200000e+01 : f32
    %54 = vector.broadcast %cst_27 : f32 to vector<64x1xf32>
    %55 = arith.divf %53, %54 : vector<64x1xf32>
    %56 = vector.broadcast %55 : vector<64x1xf32> to vector<64x32xf32>
    %57 = arith.subf %47, %56 : vector<64x32xf32>
    %58 = arith.mulf %57, %57 : vector<64x32xf32>
    %cst_28 = arith.constant dense<0.000000e+00> : vector<64xf32>
    %59 = vector.multi_reduction <add>, %58, %cst_28 [1] : vector<64x32xf32> to vector<64xf32>
    %60 = vector.shape_cast %59 : vector<64xf32> to vector<64x1xf32>
    %cst_29 = arith.constant 3.200000e+01 : f32
    %61 = vector.broadcast %cst_29 : f32 to vector<64x1xf32>
    %62 = arith.divf %60, %61 : vector<64x1xf32>
    %cst_30 = arith.constant 9.99999974E-6 : f32
    %63 = vector.broadcast %cst_30 : f32 to vector<64x1xf32>
    %64 = arith.addf %62, %63 : vector<64x1xf32>
    %65 = math.rsqrt %64 : vector<64x1xf32>
    %66 = vector.broadcast %65 : vector<64x1xf32> to vector<64x32xf32>
    %67 = arith.mulf %57, %66 : vector<64x32xf32>
    %68 = vector.broadcast %49 : vector<1x32xf32> to vector<64x32xf32>
    %69 = arith.mulf %67, %68 : vector<64x32xf32>
    %70 = vector.broadcast %51 : vector<1x32xf32> to vector<64x32xf32>
    %71 = arith.addf %69, %70 : vector<64x32xf32>
    %cst_31 = arith.constant 0.000000e+00 : f32
    %72 = vector.broadcast %cst_31 : f32 to vector<64x32xf32>
    %73 = arith.maximumf %71, %72 : vector<64x32xf32>
    %c1_i32_32 = arith.constant 1 : i32
    %74 = tpu.dynamic_rotate %73 by %c1_i32_32 dim 0 : vector<64x32xf32>, i32 -> vector<64x32xf32>
    %75 = vector.broadcast %31 : vector<64x1xf32> to vector<64x32xf32>
    %76 = arith.mulf %74, %75 : vector<64x32xf32>
    %c63_i32_33 = arith.constant 63 : i32
    %77 = tpu.dynamic_rotate %73 by %c63_i32_33 dim 0 : vector<64x32xf32>, i32 -> vector<64x32xf32>
    %78 = vector.broadcast %35 : vector<64x1xf32> to vector<64x32xf32>
    %79 = arith.mulf %77, %78 : vector<64x32xf32>
    %80 = tpu.concatenate %76, %73, %79 in 1 : vector<64x32xf32>, vector<64x32xf32>, vector<64x32xf32> -> vector<64x96xf32>
    %c1 = arith.constant 1 : index
    %c0_34 = arith.constant 0 : index
    %c0_35 = arith.constant 0 : index
    %81 = vector.load %arg11[%c1, %c0_34, %c0_35] : memref<2x96x32xf32, #tpu.memory_space<vmem>>, vector<1x96x32xf32>
    %82 = vector.shape_cast %81 : vector<1x96x32xf32> to vector<96x32xf32>
    %cst_36 = arith.constant dense<0.000000e+00> : vector<64x32xf32>
    %83 = tpu.matmul %80, %82, %cst_36 {dimension_numbers = #tpu.dot_dimension_numbers<[1], [0], [0], [1], [0, 0, 1, 1], [], []>} : vector<64x96xf32>, vector<96x32xf32>, vector<64x32xf32> -> vector<64x32xf32>
    %84 = vector.broadcast %1 : vector<64x1xf32> to vector<64x32xf32>
    %85 = arith.mulf %83, %84 : vector<64x32xf32>
    %c1_37 = arith.constant 1 : index
    %c0_38 = arith.constant 0 : index
    %c0_39 = arith.constant 0 : index
    %86 = vector.load %arg12[%c1_37, %c0_38, %c0_39] : memref<2x1x32xf32, #tpu.memory_space<vmem>>, vector<1x1x32xf32>
    %87 = vector.shape_cast %86 : vector<1x1x32xf32> to vector<1x32xf32>
    %c1_40 = arith.constant 1 : index
    %c0_41 = arith.constant 0 : index
    %c0_42 = arith.constant 0 : index
    %88 = vector.load %arg13[%c1_40, %c0_41, %c0_42] : memref<2x1x32xf32, #tpu.memory_space<vmem>>, vector<1x1x32xf32>
    %89 = vector.shape_cast %88 : vector<1x1x32xf32> to vector<1x32xf32>
    %cst_43 = arith.constant dense<0.000000e+00> : vector<64xf32>
    %90 = vector.multi_reduction <add>, %85, %cst_43 [1] : vector<64x32xf32> to vector<64xf32>
    %91 = vector.shape_cast %90 : vector<64xf32> to vector<64x1xf32>
    %cst_44 = arith.constant 3.200000e+01 : f32
    %92 = vector.broadcast %cst_44 : f32 to vector<64x1xf32>
    %93 = arith.divf %91, %92 : vector<64x1xf32>
    %94 = vector.broadcast %93 : vector<64x1xf32> to vector<64x32xf32>
    %95 = arith.subf %85, %94 : vector<64x32xf32>
    %96 = arith.mulf %95, %95 : vector<64x32xf32>
    %cst_45 = arith.constant dense<0.000000e+00> : vector<64xf32>
    %97 = vector.multi_reduction <add>, %96, %cst_45 [1] : vector<64x32xf32> to vector<64xf32>
    %98 = vector.shape_cast %97 : vector<64xf32> to vector<64x1xf32>
    %cst_46 = arith.constant 3.200000e+01 : f32
    %99 = vector.broadcast %cst_46 : f32 to vector<64x1xf32>
    %100 = arith.divf %98, %99 : vector<64x1xf32>
    %cst_47 = arith.constant 9.99999974E-6 : f32
    %101 = vector.broadcast %cst_47 : f32 to vector<64x1xf32>
    %102 = arith.addf %100, %101 : vector<64x1xf32>
    %103 = math.rsqrt %102 : vector<64x1xf32>
    %104 = vector.broadcast %103 : vector<64x1xf32> to vector<64x32xf32>
    %105 = arith.mulf %95, %104 : vector<64x32xf32>
    %106 = vector.broadcast %87 : vector<1x32xf32> to vector<64x32xf32>
    %107 = arith.mulf %105, %106 : vector<64x32xf32>
    %108 = vector.broadcast %89 : vector<1x32xf32> to vector<64x32xf32>
    %109 = arith.addf %107, %108 : vector<64x32xf32>
    %cst_48 = arith.constant 0.000000e+00 : f32
    %110 = vector.broadcast %cst_48 : f32 to vector<64x32xf32>
    %111 = arith.maximumf %109, %110 : vector<64x32xf32>
    %c0_49 = arith.constant 0 : index
    %c0_50 = arith.constant 0 : index
    %c0_51 = arith.constant 0 : index
    %112 = vector.load %arg14[%c0_49, %c0_50, %c0_51] : memref<4x1x32xf32, #tpu.memory_space<vmem>>, vector<1x1x32xf32>
    %113 = vector.shape_cast %112 : vector<1x1x32xf32> to vector<1x32xf32>
    %c0_52 = arith.constant 0 : index
    %c0_53 = arith.constant 0 : index
    %c0_54 = arith.constant 0 : index
    %114 = vector.load %arg15[%c0_52, %c0_53, %c0_54] : memref<4x1x32xf32, #tpu.memory_space<vmem>>, vector<1x1x32xf32>
    %115 = vector.shape_cast %114 : vector<1x1x32xf32> to vector<1x32xf32>
    %cst_55 = arith.constant dense<0.000000e+00> : vector<64xf32>
    %116 = vector.multi_reduction <add>, %111, %cst_55 [1] : vector<64x32xf32> to vector<64xf32>
    %117 = vector.shape_cast %116 : vector<64xf32> to vector<64x1xf32>
    %cst_56 = arith.constant 3.200000e+01 : f32
    %118 = vector.broadcast %cst_56 : f32 to vector<64x1xf32>
    %119 = arith.divf %117, %118 : vector<64x1xf32>
    %120 = vector.broadcast %119 : vector<64x1xf32> to vector<64x32xf32>
    %121 = arith.subf %111, %120 : vector<64x32xf32>
    %122 = arith.mulf %121, %121 : vector<64x32xf32>
    %cst_57 = arith.constant dense<0.000000e+00> : vector<64xf32>
    %123 = vector.multi_reduction <add>, %122, %cst_57 [1] : vector<64x32xf32> to vector<64xf32>
    %124 = vector.shape_cast %123 : vector<64xf32> to vector<64x1xf32>
    %cst_58 = arith.constant 3.200000e+01 : f32
    %125 = vector.broadcast %cst_58 : f32 to vector<64x1xf32>
    %126 = arith.divf %124, %125 : vector<64x1xf32>
    %cst_59 = arith.constant 9.99999974E-6 : f32
    %127 = vector.broadcast %cst_59 : f32 to vector<64x1xf32>
    %128 = arith.addf %126, %127 : vector<64x1xf32>
    %129 = math.rsqrt %128 : vector<64x1xf32>
    %130 = vector.broadcast %129 : vector<64x1xf32> to vector<64x32xf32>
    %131 = arith.mulf %121, %130 : vector<64x32xf32>
    %132 = vector.broadcast %113 : vector<1x32xf32> to vector<64x32xf32>
    %133 = arith.mulf %131, %132 : vector<64x32xf32>
    %134 = vector.broadcast %115 : vector<1x32xf32> to vector<64x32xf32>
    %135 = arith.addf %133, %134 : vector<64x32xf32>
    %c0_60 = arith.constant 0 : index
    %c0_61 = arith.constant 0 : index
    %c0_62 = arith.constant 0 : index
    %136 = vector.load %arg16[%c0_60, %c0_61, %c0_62] : memref<4x32x64xf32, #tpu.memory_space<vmem>>, vector<1x32x64xf32>
    %137 = vector.shape_cast %136 : vector<1x32x64xf32> to vector<32x64xf32>
    %cst_63 = arith.constant dense<0.000000e+00> : vector<64x64xf32>
    %138 = tpu.matmul %135, %137, %cst_63 {dimension_numbers = #tpu.dot_dimension_numbers<[1], [0], [0], [1], [0, 0, 1, 1], [], []>} : vector<64x32xf32>, vector<32x64xf32>, vector<64x64xf32> -> vector<64x64xf32>
    %c0_64 = arith.constant 0 : index
    %c0_65 = arith.constant 0 : index
    %c0_66 = arith.constant 0 : index
    %139 = vector.load %arg17[%c0_64, %c0_65, %c0_66] : memref<4x1x64xf32, #tpu.memory_space<vmem>>, vector<1x1x64xf32>
    %140 = vector.shape_cast %139 : vector<1x1x64xf32> to vector<1x64xf32>
    %141 = vector.broadcast %140 : vector<1x64xf32> to vector<64x64xf32>
    %142 = arith.addf %138, %141 : vector<64x64xf32>
    %c0_67 = arith.constant 0 : index
    %c0_68 = arith.constant 0 : index
    %c0_69 = arith.constant 0 : index
    %143 = vector.load %arg18[%c0_67, %c0_68, %c0_69] : memref<4x32x128xf32, #tpu.memory_space<vmem>>, vector<1x32x128xf32>
    %144 = vector.shape_cast %143 : vector<1x32x128xf32> to vector<32x128xf32>
    %cst_70 = arith.constant dense<0.000000e+00> : vector<64x128xf32>
    %145 = tpu.matmul %135, %144, %cst_70 {dimension_numbers = #tpu.dot_dimension_numbers<[1], [0], [0], [1], [0, 0, 1, 1], [], []>} : vector<64x32xf32>, vector<32x128xf32>, vector<64x128xf32> -> vector<64x128xf32>
    %c0_71 = arith.constant 0 : index
    %c0_72 = arith.constant 0 : index
    %c0_73 = arith.constant 0 : index
    %146 = vector.load %arg19[%c0_71, %c0_72, %c0_73] : memref<4x1x128xf32, #tpu.memory_space<vmem>>, vector<1x1x128xf32>
    %147 = vector.shape_cast %146 : vector<1x1x128xf32> to vector<1x128xf32>
    %148 = vector.broadcast %147 : vector<1x128xf32> to vector<64x128xf32>
    %149 = arith.addf %145, %148 : vector<64x128xf32>
    %150 = vector.extract_strided_slice %142 {offsets = [0, 0], sizes = [64, 32], strides = [1, 1]} : vector<64x64xf32> to vector<64x32xf32>
    %151 = vector.extract_strided_slice %142 {offsets = [0, 32], sizes = [64, 32], strides = [1, 1]} : vector<64x64xf32> to vector<64x32xf32>
    %c0_74 = arith.constant 0 : index
    %c0_75 = arith.constant 0 : index
    %152 = vector.load %arg4[%c0_74, %c0_75] : memref<64x64xf32, #tpu.memory_space<vmem>>, vector<64x64xf32>
    %153 = vector.extract_strided_slice %150 {offsets = [0, 0], sizes = [64, 8], strides = [1, 1]} : vector<64x32xf32> to vector<64x8xf32>
    %154 = vector.extract_strided_slice %151 {offsets = [0, 0], sizes = [64, 8], strides = [1, 1]} : vector<64x32xf32> to vector<64x8xf32>
    %cst_76 = arith.constant dense<0.000000e+00> : vector<64x64xf32>
    %155 = tpu.matmul %153, %154, %cst_76 {dimension_numbers = #tpu.dot_dimension_numbers<[1], [1], [0], [0], [0, 0, 1, 0], [], []>} : vector<64x8xf32>, vector<64x8xf32>, vector<64x64xf32> -> vector<64x64xf32>
    %cst_77 = arith.constant 0.353553385 : f32
    %156 = vector.broadcast %cst_77 : f32 to vector<64x64xf32>
    %157 = arith.mulf %155, %156 : vector<64x64xf32>
    %158 = arith.addf %157, %152 : vector<64x64xf32>
    %cst_78 = arith.constant dense<0xFF800000> : vector<64xf32>
    %159 = vector.multi_reduction <maximumf>, %158, %cst_78 [1] : vector<64x64xf32> to vector<64xf32>
    %160 = vector.shape_cast %159 : vector<64xf32> to vector<64x1xf32>
    %161 = vector.broadcast %160 : vector<64x1xf32> to vector<64x64xf32>
    %162 = arith.subf %158, %161 : vector<64x64xf32>
    %163 = math.exp %162 : vector<64x64xf32>
    %cst_79 = arith.constant dense<0.000000e+00> : vector<64xf32>
    %164 = vector.multi_reduction <add>, %163, %cst_79 [1] : vector<64x64xf32> to vector<64xf32>
    %165 = vector.shape_cast %164 : vector<64xf32> to vector<64x1xf32>
    %166 = tpu.reciprocal %165 {approx = true} : vector<64x1xf32> -> vector<64x1xf32>
    %167 = vector.broadcast %166 : vector<64x1xf32> to vector<64x64xf32>
    %168 = arith.mulf %163, %167 : vector<64x64xf32>
    %169 = vector.extract_strided_slice %149 {offsets = [0, 0], sizes = [64, 32], strides = [1, 1]} : vector<64x128xf32> to vector<64x32xf32>
    %cst_80 = arith.constant dense<0.000000e+00> : vector<64x32xf32>
    %170 = tpu.matmul %168, %169, %cst_80 {dimension_numbers = #tpu.dot_dimension_numbers<[1], [0], [0], [1], [0, 0, 1, 1], [], []>} : vector<64x64xf32>, vector<64x32xf32>, vector<64x32xf32> -> vector<64x32xf32>
    %171 = vector.extract_strided_slice %150 {offsets = [0, 8], sizes = [64, 8], strides = [1, 1]} : vector<64x32xf32> to vector<64x8xf32>
    %172 = vector.extract_strided_slice %151 {offsets = [0, 8], sizes = [64, 8], strides = [1, 1]} : vector<64x32xf32> to vector<64x8xf32>
    %cst_81 = arith.constant dense<0.000000e+00> : vector<64x64xf32>
    %173 = tpu.matmul %171, %172, %cst_81 {dimension_numbers = #tpu.dot_dimension_numbers<[1], [1], [0], [0], [0, 0, 1, 0], [], []>} : vector<64x8xf32>, vector<64x8xf32>, vector<64x64xf32> -> vector<64x64xf32>
    %cst_82 = arith.constant 0.353553385 : f32
    %174 = vector.broadcast %cst_82 : f32 to vector<64x64xf32>
    %175 = arith.mulf %173, %174 : vector<64x64xf32>
    %176 = arith.addf %175, %152 : vector<64x64xf32>
    %cst_83 = arith.constant dense<0xFF800000> : vector<64xf32>
    %177 = vector.multi_reduction <maximumf>, %176, %cst_83 [1] : vector<64x64xf32> to vector<64xf32>
    %178 = vector.shape_cast %177 : vector<64xf32> to vector<64x1xf32>
    %179 = vector.broadcast %178 : vector<64x1xf32> to vector<64x64xf32>
    %180 = arith.subf %176, %179 : vector<64x64xf32>
    %181 = math.exp %180 : vector<64x64xf32>
    %cst_84 = arith.constant dense<0.000000e+00> : vector<64xf32>
    %182 = vector.multi_reduction <add>, %181, %cst_84 [1] : vector<64x64xf32> to vector<64xf32>
    %183 = vector.shape_cast %182 : vector<64xf32> to vector<64x1xf32>
    %184 = tpu.reciprocal %183 {approx = true} : vector<64x1xf32> -> vector<64x1xf32>
    %185 = vector.broadcast %184 : vector<64x1xf32> to vector<64x64xf32>
    %186 = arith.mulf %181, %185 : vector<64x64xf32>
    %187 = vector.extract_strided_slice %149 {offsets = [0, 32], sizes = [64, 32], strides = [1, 1]} : vector<64x128xf32> to vector<64x32xf32>
    %cst_85 = arith.constant dense<0.000000e+00> : vector<64x32xf32>
    %188 = tpu.matmul %186, %187, %cst_85 {dimension_numbers = #tpu.dot_dimension_numbers<[1], [0], [0], [1], [0, 0, 1, 1], [], []>} : vector<64x64xf32>, vector<64x32xf32>, vector<64x32xf32> -> vector<64x32xf32>
    %189 = arith.addf %170, %188 : vector<64x32xf32>
    %190 = vector.extract_strided_slice %150 {offsets = [0, 16], sizes = [64, 8], strides = [1, 1]} : vector<64x32xf32> to vector<64x8xf32>
    %191 = vector.extract_strided_slice %151 {offsets = [0, 16], sizes = [64, 8], strides = [1, 1]} : vector<64x32xf32> to vector<64x8xf32>
    %cst_86 = arith.constant dense<0.000000e+00> : vector<64x64xf32>
    %192 = tpu.matmul %190, %191, %cst_86 {dimension_numbers = #tpu.dot_dimension_numbers<[1], [1], [0], [0], [0, 0, 1, 0], [], []>} : vector<64x8xf32>, vector<64x8xf32>, vector<64x64xf32> -> vector<64x64xf32>
    %cst_87 = arith.constant 0.353553385 : f32
    %193 = vector.broadcast %cst_87 : f32 to vector<64x64xf32>
    %194 = arith.mulf %192, %193 : vector<64x64xf32>
    %195 = arith.addf %194, %152 : vector<64x64xf32>
    %cst_88 = arith.constant dense<0xFF800000> : vector<64xf32>
    %196 = vector.multi_reduction <maximumf>, %195, %cst_88 [1] : vector<64x64xf32> to vector<64xf32>
    %197 = vector.shape_cast %196 : vector<64xf32> to vector<64x1xf32>
    %198 = vector.broadcast %197 : vector<64x1xf32> to vector<64x64xf32>
    %199 = arith.subf %195, %198 : vector<64x64xf32>
    %200 = math.exp %199 : vector<64x64xf32>
    %cst_89 = arith.constant dense<0.000000e+00> : vector<64xf32>
    %201 = vector.multi_reduction <add>, %200, %cst_89 [1] : vector<64x64xf32> to vector<64xf32>
    %202 = vector.shape_cast %201 : vector<64xf32> to vector<64x1xf32>
    %203 = tpu.reciprocal %202 {approx = true} : vector<64x1xf32> -> vector<64x1xf32>
    %204 = vector.broadcast %203 : vector<64x1xf32> to vector<64x64xf32>
    %205 = arith.mulf %200, %204 : vector<64x64xf32>
    %206 = vector.extract_strided_slice %149 {offsets = [0, 64], sizes = [64, 32], strides = [1, 1]} : vector<64x128xf32> to vector<64x32xf32>
    %cst_90 = arith.constant dense<0.000000e+00> : vector<64x32xf32>
    %207 = tpu.matmul %205, %206, %cst_90 {dimension_numbers = #tpu.dot_dimension_numbers<[1], [0], [0], [1], [0, 0, 1, 1], [], []>} : vector<64x64xf32>, vector<64x32xf32>, vector<64x32xf32> -> vector<64x32xf32>
    %208 = arith.addf %189, %207 : vector<64x32xf32>
    %209 = vector.extract_strided_slice %150 {offsets = [0, 24], sizes = [64, 8], strides = [1, 1]} : vector<64x32xf32> to vector<64x8xf32>
    %210 = vector.extract_strided_slice %151 {offsets = [0, 24], sizes = [64, 8], strides = [1, 1]} : vector<64x32xf32> to vector<64x8xf32>
    %cst_91 = arith.constant dense<0.000000e+00> : vector<64x64xf32>
    %211 = tpu.matmul %209, %210, %cst_91 {dimension_numbers = #tpu.dot_dimension_numbers<[1], [1], [0], [0], [0, 0, 1, 0], [], []>} : vector<64x8xf32>, vector<64x8xf32>, vector<64x64xf32> -> vector<64x64xf32>
    %cst_92 = arith.constant 0.353553385 : f32
    %212 = vector.broadcast %cst_92 : f32 to vector<64x64xf32>
    %213 = arith.mulf %211, %212 : vector<64x64xf32>
    %214 = arith.addf %213, %152 : vector<64x64xf32>
    %cst_93 = arith.constant dense<0xFF800000> : vector<64xf32>
    %215 = vector.multi_reduction <maximumf>, %214, %cst_93 [1] : vector<64x64xf32> to vector<64xf32>
    %216 = vector.shape_cast %215 : vector<64xf32> to vector<64x1xf32>
    %217 = vector.broadcast %216 : vector<64x1xf32> to vector<64x64xf32>
    %218 = arith.subf %214, %217 : vector<64x64xf32>
    %219 = math.exp %218 : vector<64x64xf32>
    %cst_94 = arith.constant dense<0.000000e+00> : vector<64xf32>
    %220 = vector.multi_reduction <add>, %219, %cst_94 [1] : vector<64x64xf32> to vector<64xf32>
    %221 = vector.shape_cast %220 : vector<64xf32> to vector<64x1xf32>
    %222 = tpu.reciprocal %221 {approx = true} : vector<64x1xf32> -> vector<64x1xf32>
    %223 = vector.broadcast %222 : vector<64x1xf32> to vector<64x64xf32>
    %224 = arith.mulf %219, %223 : vector<64x64xf32>
    %225 = vector.extract_strided_slice %149 {offsets = [0, 96], sizes = [64, 32], strides = [1, 1]} : vector<64x128xf32> to vector<64x32xf32>
    %cst_95 = arith.constant dense<0.000000e+00> : vector<64x32xf32>
    %226 = tpu.matmul %224, %225, %cst_95 {dimension_numbers = #tpu.dot_dimension_numbers<[1], [0], [0], [1], [0, 0, 1, 1], [], []>} : vector<64x64xf32>, vector<64x32xf32>, vector<64x32xf32> -> vector<64x32xf32>
    %227 = arith.addf %208, %226 : vector<64x32xf32>
    %228 = vector.broadcast %1 : vector<64x1xf32> to vector<64x32xf32>
    %229 = arith.mulf %111, %228 : vector<64x32xf32>
    %c0_96 = arith.constant 0 : index
    %c0_97 = arith.constant 0 : index
    %c0_98 = arith.constant 0 : index
    %230 = vector.load %arg20[%c0_96, %c0_97, %c0_98] : memref<4x1x32xf32, #tpu.memory_space<vmem>>, vector<1x1x32xf32>
    %231 = vector.shape_cast %230 : vector<1x1x32xf32> to vector<1x32xf32>
    %232 = vector.broadcast %231 : vector<1x32xf32> to vector<64x32xf32>
    %233 = arith.addf %227, %232 : vector<64x32xf32>
    %234 = vector.broadcast %1 : vector<64x1xf32> to vector<64x32xf32>
    %235 = arith.mulf %233, %234 : vector<64x32xf32>
    %236 = arith.addf %229, %235 : vector<64x32xf32>
    %c0_99 = arith.constant 0 : index
    %c0_100 = arith.constant 0 : index
    %c0_101 = arith.constant 0 : index
    %237 = vector.load %arg21[%c0_99, %c0_100, %c0_101] : memref<4x1x32xf32, #tpu.memory_space<vmem>>, vector<1x1x32xf32>
    %238 = vector.shape_cast %237 : vector<1x1x32xf32> to vector<1x32xf32>
    %c0_102 = arith.constant 0 : index
    %c0_103 = arith.constant 0 : index
    %c0_104 = arith.constant 0 : index
    %239 = vector.load %arg22[%c0_102, %c0_103, %c0_104] : memref<4x1x32xf32, #tpu.memory_space<vmem>>, vector<1x1x32xf32>
    %240 = vector.shape_cast %239 : vector<1x1x32xf32> to vector<1x32xf32>
    %cst_105 = arith.constant dense<0.000000e+00> : vector<64xf32>
    %241 = vector.multi_reduction <add>, %236, %cst_105 [1] : vector<64x32xf32> to vector<64xf32>
    %242 = vector.shape_cast %241 : vector<64xf32> to vector<64x1xf32>
    %cst_106 = arith.constant 3.200000e+01 : f32
    %243 = vector.broadcast %cst_106 : f32 to vector<64x1xf32>
    %244 = arith.divf %242, %243 : vector<64x1xf32>
    %245 = vector.broadcast %244 : vector<64x1xf32> to vector<64x32xf32>
    %246 = arith.subf %236, %245 : vector<64x32xf32>
    %247 = arith.mulf %246, %246 : vector<64x32xf32>
    %cst_107 = arith.constant dense<0.000000e+00> : vector<64xf32>
    %248 = vector.multi_reduction <add>, %247, %cst_107 [1] : vector<64x32xf32> to vector<64xf32>
    %249 = vector.shape_cast %248 : vector<64xf32> to vector<64x1xf32>
    %cst_108 = arith.constant 3.200000e+01 : f32
    %250 = vector.broadcast %cst_108 : f32 to vector<64x1xf32>
    %251 = arith.divf %249, %250 : vector<64x1xf32>
    %cst_109 = arith.constant 9.99999974E-6 : f32
    %252 = vector.broadcast %cst_109 : f32 to vector<64x1xf32>
    %253 = arith.addf %251, %252 : vector<64x1xf32>
    %254 = math.rsqrt %253 : vector<64x1xf32>
    %255 = vector.broadcast %254 : vector<64x1xf32> to vector<64x32xf32>
    %256 = arith.mulf %246, %255 : vector<64x32xf32>
    %257 = vector.broadcast %238 : vector<1x32xf32> to vector<64x32xf32>
    %258 = arith.mulf %256, %257 : vector<64x32xf32>
    %259 = vector.broadcast %240 : vector<1x32xf32> to vector<64x32xf32>
    %260 = arith.addf %258, %259 : vector<64x32xf32>
    %c0_110 = arith.constant 0 : index
    %c0_111 = arith.constant 0 : index
    %c0_112 = arith.constant 0 : index
    %261 = vector.load %arg23[%c0_110, %c0_111, %c0_112] : memref<4x32x128xf32, #tpu.memory_space<vmem>>, vector<1x32x128xf32>
    %262 = vector.shape_cast %261 : vector<1x32x128xf32> to vector<32x128xf32>
    %cst_113 = arith.constant dense<0.000000e+00> : vector<64x128xf32>
    %263 = tpu.matmul %260, %262, %cst_113 {dimension_numbers = #tpu.dot_dimension_numbers<[1], [0], [0], [1], [0, 0, 1, 1], [], []>} : vector<64x32xf32>, vector<32x128xf32>, vector<64x128xf32> -> vector<64x128xf32>
    %c0_114 = arith.constant 0 : index
    %c0_115 = arith.constant 0 : index
    %c0_116 = arith.constant 0 : index
    %264 = vector.load %arg24[%c0_114, %c0_115, %c0_116] : memref<4x1x128xf32, #tpu.memory_space<vmem>>, vector<1x1x128xf32>
    %265 = vector.shape_cast %264 : vector<1x1x128xf32> to vector<1x128xf32>
    %266 = vector.broadcast %265 : vector<1x128xf32> to vector<64x128xf32>
    %267 = arith.addf %263, %266 : vector<64x128xf32>
    %cst_117 = arith.constant 5.000000e-01 : f32
    %268 = vector.broadcast %cst_117 : f32 to vector<64x128xf32>
    %269 = arith.mulf %268, %267 : vector<64x128xf32>
    %cst_118 = arith.constant 4.471500e-02 : f32
    %270 = vector.broadcast %cst_118 : f32 to vector<64x128xf32>
    %271 = arith.mulf %270, %267 : vector<64x128xf32>
    %272 = arith.mulf %271, %267 : vector<64x128xf32>
    %273 = arith.mulf %272, %267 : vector<64x128xf32>
    %274 = arith.addf %267, %273 : vector<64x128xf32>
    %cst_119 = arith.constant 0.797884583 : f32
    %275 = vector.broadcast %cst_119 : f32 to vector<64x128xf32>
    %276 = arith.mulf %275, %274 : vector<64x128xf32>
    %277 = math.tanh %276 : vector<64x128xf32>
    %cst_120 = arith.constant 1.000000e+00 : f32
    %278 = vector.broadcast %cst_120 : f32 to vector<64x128xf32>
    %279 = arith.addf %278, %277 : vector<64x128xf32>
    %280 = arith.mulf %269, %279 : vector<64x128xf32>
    %281 = vector.broadcast %1 : vector<64x1xf32> to vector<64x128xf32>
    %282 = arith.mulf %280, %281 : vector<64x128xf32>
    %c0_121 = arith.constant 0 : index
    %c0_122 = arith.constant 0 : index
    %c0_123 = arith.constant 0 : index
    %283 = vector.load %arg25[%c0_121, %c0_122, %c0_123] : memref<4x128x32xf32, #tpu.memory_space<vmem>>, vector<1x128x32xf32>
    %284 = vector.shape_cast %283 : vector<1x128x32xf32> to vector<128x32xf32>
    %cst_124 = arith.constant dense<0.000000e+00> : vector<64x32xf32>
    %285 = tpu.matmul %282, %284, %cst_124 {dimension_numbers = #tpu.dot_dimension_numbers<[1], [0], [0], [1], [0, 0, 1, 1], [], []>} : vector<64x128xf32>, vector<128x32xf32>, vector<64x32xf32> -> vector<64x32xf32>
    %c0_125 = arith.constant 0 : index
    %c0_126 = arith.constant 0 : index
    %c0_127 = arith.constant 0 : index
    %286 = vector.load %arg26[%c0_125, %c0_126, %c0_127] : memref<4x1x32xf32, #tpu.memory_space<vmem>>, vector<1x1x32xf32>
    %287 = vector.shape_cast %286 : vector<1x1x32xf32> to vector<1x32xf32>
    %288 = vector.broadcast %287 : vector<1x32xf32> to vector<64x32xf32>
    %289 = arith.addf %285, %288 : vector<64x32xf32>
    %290 = vector.broadcast %1 : vector<64x1xf32> to vector<64x32xf32>
    %291 = arith.mulf %289, %290 : vector<64x32xf32>
    %292 = arith.addf %236, %291 : vector<64x32xf32>
    %c1_128 = arith.constant 1 : index
    %c0_129 = arith.constant 0 : index
    %c0_130 = arith.constant 0 : index
    %293 = vector.load %arg14[%c1_128, %c0_129, %c0_130] : memref<4x1x32xf32, #tpu.memory_space<vmem>>, vector<1x1x32xf32>
    %294 = vector.shape_cast %293 : vector<1x1x32xf32> to vector<1x32xf32>
    %c1_131 = arith.constant 1 : index
    %c0_132 = arith.constant 0 : index
    %c0_133 = arith.constant 0 : index
    %295 = vector.load %arg15[%c1_131, %c0_132, %c0_133] : memref<4x1x32xf32, #tpu.memory_space<vmem>>, vector<1x1x32xf32>
    %296 = vector.shape_cast %295 : vector<1x1x32xf32> to vector<1x32xf32>
    %cst_134 = arith.constant dense<0.000000e+00> : vector<64xf32>
    %297 = vector.multi_reduction <add>, %292, %cst_134 [1] : vector<64x32xf32> to vector<64xf32>
    %298 = vector.shape_cast %297 : vector<64xf32> to vector<64x1xf32>
    %cst_135 = arith.constant 3.200000e+01 : f32
    %299 = vector.broadcast %cst_135 : f32 to vector<64x1xf32>
    %300 = arith.divf %298, %299 : vector<64x1xf32>
    %301 = vector.broadcast %300 : vector<64x1xf32> to vector<64x32xf32>
    %302 = arith.subf %292, %301 : vector<64x32xf32>
    %303 = arith.mulf %302, %302 : vector<64x32xf32>
    %cst_136 = arith.constant dense<0.000000e+00> : vector<64xf32>
    %304 = vector.multi_reduction <add>, %303, %cst_136 [1] : vector<64x32xf32> to vector<64xf32>
    %305 = vector.shape_cast %304 : vector<64xf32> to vector<64x1xf32>
    %cst_137 = arith.constant 3.200000e+01 : f32
    %306 = vector.broadcast %cst_137 : f32 to vector<64x1xf32>
    %307 = arith.divf %305, %306 : vector<64x1xf32>
    %cst_138 = arith.constant 9.99999974E-6 : f32
    %308 = vector.broadcast %cst_138 : f32 to vector<64x1xf32>
    %309 = arith.addf %307, %308 : vector<64x1xf32>
    %310 = math.rsqrt %309 : vector<64x1xf32>
    %311 = vector.broadcast %310 : vector<64x1xf32> to vector<64x32xf32>
    %312 = arith.mulf %302, %311 : vector<64x32xf32>
    %313 = vector.broadcast %294 : vector<1x32xf32> to vector<64x32xf32>
    %314 = arith.mulf %312, %313 : vector<64x32xf32>
    %315 = vector.broadcast %296 : vector<1x32xf32> to vector<64x32xf32>
    %316 = arith.addf %314, %315 : vector<64x32xf32>
    %c1_139 = arith.constant 1 : index
    %c0_140 = arith.constant 0 : index
    %c0_141 = arith.constant 0 : index
    %317 = vector.load %arg16[%c1_139, %c0_140, %c0_141] : memref<4x32x64xf32, #tpu.memory_space<vmem>>, vector<1x32x64xf32>
    %318 = vector.shape_cast %317 : vector<1x32x64xf32> to vector<32x64xf32>
    %cst_142 = arith.constant dense<0.000000e+00> : vector<64x64xf32>
    %319 = tpu.matmul %316, %318, %cst_142 {dimension_numbers = #tpu.dot_dimension_numbers<[1], [0], [0], [1], [0, 0, 1, 1], [], []>} : vector<64x32xf32>, vector<32x64xf32>, vector<64x64xf32> -> vector<64x64xf32>
    %c1_143 = arith.constant 1 : index
    %c0_144 = arith.constant 0 : index
    %c0_145 = arith.constant 0 : index
    %320 = vector.load %arg17[%c1_143, %c0_144, %c0_145] : memref<4x1x64xf32, #tpu.memory_space<vmem>>, vector<1x1x64xf32>
    %321 = vector.shape_cast %320 : vector<1x1x64xf32> to vector<1x64xf32>
    %322 = vector.broadcast %321 : vector<1x64xf32> to vector<64x64xf32>
    %323 = arith.addf %319, %322 : vector<64x64xf32>
    %c1_146 = arith.constant 1 : index
    %c0_147 = arith.constant 0 : index
    %c0_148 = arith.constant 0 : index
    %324 = vector.load %arg18[%c1_146, %c0_147, %c0_148] : memref<4x32x128xf32, #tpu.memory_space<vmem>>, vector<1x32x128xf32>
    %325 = vector.shape_cast %324 : vector<1x32x128xf32> to vector<32x128xf32>
    %cst_149 = arith.constant dense<0.000000e+00> : vector<64x128xf32>
    %326 = tpu.matmul %316, %325, %cst_149 {dimension_numbers = #tpu.dot_dimension_numbers<[1], [0], [0], [1], [0, 0, 1, 1], [], []>} : vector<64x32xf32>, vector<32x128xf32>, vector<64x128xf32> -> vector<64x128xf32>
    %c1_150 = arith.constant 1 : index
    %c0_151 = arith.constant 0 : index
    %c0_152 = arith.constant 0 : index
    %327 = vector.load %arg19[%c1_150, %c0_151, %c0_152] : memref<4x1x128xf32, #tpu.memory_space<vmem>>, vector<1x1x128xf32>
    %328 = vector.shape_cast %327 : vector<1x1x128xf32> to vector<1x128xf32>
    %329 = vector.broadcast %328 : vector<1x128xf32> to vector<64x128xf32>
    %330 = arith.addf %326, %329 : vector<64x128xf32>
    %331 = vector.extract_strided_slice %323 {offsets = [0, 0], sizes = [64, 32], strides = [1, 1]} : vector<64x64xf32> to vector<64x32xf32>
    %332 = vector.extract_strided_slice %323 {offsets = [0, 32], sizes = [64, 32], strides = [1, 1]} : vector<64x64xf32> to vector<64x32xf32>
    %c0_153 = arith.constant 0 : index
    %c0_154 = arith.constant 0 : index
    %333 = vector.load %arg4[%c0_153, %c0_154] : memref<64x64xf32, #tpu.memory_space<vmem>>, vector<64x64xf32>
    %334 = vector.extract_strided_slice %331 {offsets = [0, 0], sizes = [64, 8], strides = [1, 1]} : vector<64x32xf32> to vector<64x8xf32>
    %335 = vector.extract_strided_slice %332 {offsets = [0, 0], sizes = [64, 8], strides = [1, 1]} : vector<64x32xf32> to vector<64x8xf32>
    %cst_155 = arith.constant dense<0.000000e+00> : vector<64x64xf32>
    %336 = tpu.matmul %334, %335, %cst_155 {dimension_numbers = #tpu.dot_dimension_numbers<[1], [1], [0], [0], [0, 0, 1, 0], [], []>} : vector<64x8xf32>, vector<64x8xf32>, vector<64x64xf32> -> vector<64x64xf32>
    %cst_156 = arith.constant 0.353553385 : f32
    %337 = vector.broadcast %cst_156 : f32 to vector<64x64xf32>
    %338 = arith.mulf %336, %337 : vector<64x64xf32>
    %339 = arith.addf %338, %333 : vector<64x64xf32>
    %cst_157 = arith.constant dense<0xFF800000> : vector<64xf32>
    %340 = vector.multi_reduction <maximumf>, %339, %cst_157 [1] : vector<64x64xf32> to vector<64xf32>
    %341 = vector.shape_cast %340 : vector<64xf32> to vector<64x1xf32>
    %342 = vector.broadcast %341 : vector<64x1xf32> to vector<64x64xf32>
    %343 = arith.subf %339, %342 : vector<64x64xf32>
    %344 = math.exp %343 : vector<64x64xf32>
    %cst_158 = arith.constant dense<0.000000e+00> : vector<64xf32>
    %345 = vector.multi_reduction <add>, %344, %cst_158 [1] : vector<64x64xf32> to vector<64xf32>
    %346 = vector.shape_cast %345 : vector<64xf32> to vector<64x1xf32>
    %347 = tpu.reciprocal %346 {approx = true} : vector<64x1xf32> -> vector<64x1xf32>
    %348 = vector.broadcast %347 : vector<64x1xf32> to vector<64x64xf32>
    %349 = arith.mulf %344, %348 : vector<64x64xf32>
    %350 = vector.extract_strided_slice %330 {offsets = [0, 0], sizes = [64, 32], strides = [1, 1]} : vector<64x128xf32> to vector<64x32xf32>
    %cst_159 = arith.constant dense<0.000000e+00> : vector<64x32xf32>
    %351 = tpu.matmul %349, %350, %cst_159 {dimension_numbers = #tpu.dot_dimension_numbers<[1], [0], [0], [1], [0, 0, 1, 1], [], []>} : vector<64x64xf32>, vector<64x32xf32>, vector<64x32xf32> -> vector<64x32xf32>
    %352 = vector.extract_strided_slice %331 {offsets = [0, 8], sizes = [64, 8], strides = [1, 1]} : vector<64x32xf32> to vector<64x8xf32>
    %353 = vector.extract_strided_slice %332 {offsets = [0, 8], sizes = [64, 8], strides = [1, 1]} : vector<64x32xf32> to vector<64x8xf32>
    %cst_160 = arith.constant dense<0.000000e+00> : vector<64x64xf32>
    %354 = tpu.matmul %352, %353, %cst_160 {dimension_numbers = #tpu.dot_dimension_numbers<[1], [1], [0], [0], [0, 0, 1, 0], [], []>} : vector<64x8xf32>, vector<64x8xf32>, vector<64x64xf32> -> vector<64x64xf32>
    %cst_161 = arith.constant 0.353553385 : f32
    %355 = vector.broadcast %cst_161 : f32 to vector<64x64xf32>
    %356 = arith.mulf %354, %355 : vector<64x64xf32>
    %357 = arith.addf %356, %333 : vector<64x64xf32>
    %cst_162 = arith.constant dense<0xFF800000> : vector<64xf32>
    %358 = vector.multi_reduction <maximumf>, %357, %cst_162 [1] : vector<64x64xf32> to vector<64xf32>
    %359 = vector.shape_cast %358 : vector<64xf32> to vector<64x1xf32>
    %360 = vector.broadcast %359 : vector<64x1xf32> to vector<64x64xf32>
    %361 = arith.subf %357, %360 : vector<64x64xf32>
    %362 = math.exp %361 : vector<64x64xf32>
    %cst_163 = arith.constant dense<0.000000e+00> : vector<64xf32>
    %363 = vector.multi_reduction <add>, %362, %cst_163 [1] : vector<64x64xf32> to vector<64xf32>
    %364 = vector.shape_cast %363 : vector<64xf32> to vector<64x1xf32>
    %365 = tpu.reciprocal %364 {approx = true} : vector<64x1xf32> -> vector<64x1xf32>
    %366 = vector.broadcast %365 : vector<64x1xf32> to vector<64x64xf32>
    %367 = arith.mulf %362, %366 : vector<64x64xf32>
    %368 = vector.extract_strided_slice %330 {offsets = [0, 32], sizes = [64, 32], strides = [1, 1]} : vector<64x128xf32> to vector<64x32xf32>
    %cst_164 = arith.constant dense<0.000000e+00> : vector<64x32xf32>
    %369 = tpu.matmul %367, %368, %cst_164 {dimension_numbers = #tpu.dot_dimension_numbers<[1], [0], [0], [1], [0, 0, 1, 1], [], []>} : vector<64x64xf32>, vector<64x32xf32>, vector<64x32xf32> -> vector<64x32xf32>
    %370 = arith.addf %351, %369 : vector<64x32xf32>
    %371 = vector.extract_strided_slice %331 {offsets = [0, 16], sizes = [64, 8], strides = [1, 1]} : vector<64x32xf32> to vector<64x8xf32>
    %372 = vector.extract_strided_slice %332 {offsets = [0, 16], sizes = [64, 8], strides = [1, 1]} : vector<64x32xf32> to vector<64x8xf32>
    %cst_165 = arith.constant dense<0.000000e+00> : vector<64x64xf32>
    %373 = tpu.matmul %371, %372, %cst_165 {dimension_numbers = #tpu.dot_dimension_numbers<[1], [1], [0], [0], [0, 0, 1, 0], [], []>} : vector<64x8xf32>, vector<64x8xf32>, vector<64x64xf32> -> vector<64x64xf32>
    %cst_166 = arith.constant 0.353553385 : f32
    %374 = vector.broadcast %cst_166 : f32 to vector<64x64xf32>
    %375 = arith.mulf %373, %374 : vector<64x64xf32>
    %376 = arith.addf %375, %333 : vector<64x64xf32>
    %cst_167 = arith.constant dense<0xFF800000> : vector<64xf32>
    %377 = vector.multi_reduction <maximumf>, %376, %cst_167 [1] : vector<64x64xf32> to vector<64xf32>
    %378 = vector.shape_cast %377 : vector<64xf32> to vector<64x1xf32>
    %379 = vector.broadcast %378 : vector<64x1xf32> to vector<64x64xf32>
    %380 = arith.subf %376, %379 : vector<64x64xf32>
    %381 = math.exp %380 : vector<64x64xf32>
    %cst_168 = arith.constant dense<0.000000e+00> : vector<64xf32>
    %382 = vector.multi_reduction <add>, %381, %cst_168 [1] : vector<64x64xf32> to vector<64xf32>
    %383 = vector.shape_cast %382 : vector<64xf32> to vector<64x1xf32>
    %384 = tpu.reciprocal %383 {approx = true} : vector<64x1xf32> -> vector<64x1xf32>
    %385 = vector.broadcast %384 : vector<64x1xf32> to vector<64x64xf32>
    %386 = arith.mulf %381, %385 : vector<64x64xf32>
    %387 = vector.extract_strided_slice %330 {offsets = [0, 64], sizes = [64, 32], strides = [1, 1]} : vector<64x128xf32> to vector<64x32xf32>
    %cst_169 = arith.constant dense<0.000000e+00> : vector<64x32xf32>
    %388 = tpu.matmul %386, %387, %cst_169 {dimension_numbers = #tpu.dot_dimension_numbers<[1], [0], [0], [1], [0, 0, 1, 1], [], []>} : vector<64x64xf32>, vector<64x32xf32>, vector<64x32xf32> -> vector<64x32xf32>
    %389 = arith.addf %370, %388 : vector<64x32xf32>
    %390 = vector.extract_strided_slice %331 {offsets = [0, 24], sizes = [64, 8], strides = [1, 1]} : vector<64x32xf32> to vector<64x8xf32>
    %391 = vector.extract_strided_slice %332 {offsets = [0, 24], sizes = [64, 8], strides = [1, 1]} : vector<64x32xf32> to vector<64x8xf32>
    %cst_170 = arith.constant dense<0.000000e+00> : vector<64x64xf32>
    %392 = tpu.matmul %390, %391, %cst_170 {dimension_numbers = #tpu.dot_dimension_numbers<[1], [1], [0], [0], [0, 0, 1, 0], [], []>} : vector<64x8xf32>, vector<64x8xf32>, vector<64x64xf32> -> vector<64x64xf32>
    %cst_171 = arith.constant 0.353553385 : f32
    %393 = vector.broadcast %cst_171 : f32 to vector<64x64xf32>
    %394 = arith.mulf %392, %393 : vector<64x64xf32>
    %395 = arith.addf %394, %333 : vector<64x64xf32>
    %cst_172 = arith.constant dense<0xFF800000> : vector<64xf32>
    %396 = vector.multi_reduction <maximumf>, %395, %cst_172 [1] : vector<64x64xf32> to vector<64xf32>
    %397 = vector.shape_cast %396 : vector<64xf32> to vector<64x1xf32>
    %398 = vector.broadcast %397 : vector<64x1xf32> to vector<64x64xf32>
    %399 = arith.subf %395, %398 : vector<64x64xf32>
    %400 = math.exp %399 : vector<64x64xf32>
    %cst_173 = arith.constant dense<0.000000e+00> : vector<64xf32>
    %401 = vector.multi_reduction <add>, %400, %cst_173 [1] : vector<64x64xf32> to vector<64xf32>
    %402 = vector.shape_cast %401 : vector<64xf32> to vector<64x1xf32>
    %403 = tpu.reciprocal %402 {approx = true} : vector<64x1xf32> -> vector<64x1xf32>
    %404 = vector.broadcast %403 : vector<64x1xf32> to vector<64x64xf32>
    %405 = arith.mulf %400, %404 : vector<64x64xf32>
    %406 = vector.extract_strided_slice %330 {offsets = [0, 96], sizes = [64, 32], strides = [1, 1]} : vector<64x128xf32> to vector<64x32xf32>
    %cst_174 = arith.constant dense<0.000000e+00> : vector<64x32xf32>
    %407 = tpu.matmul %405, %406, %cst_174 {dimension_numbers = #tpu.dot_dimension_numbers<[1], [0], [0], [1], [0, 0, 1, 1], [], []>} : vector<64x64xf32>, vector<64x32xf32>, vector<64x32xf32> -> vector<64x32xf32>
    %408 = arith.addf %389, %407 : vector<64x32xf32>
    %409 = vector.broadcast %1 : vector<64x1xf32> to vector<64x32xf32>
    %410 = arith.mulf %292, %409 : vector<64x32xf32>
    %c1_175 = arith.constant 1 : index
    %c0_176 = arith.constant 0 : index
    %c0_177 = arith.constant 0 : index
    %411 = vector.load %arg20[%c1_175, %c0_176, %c0_177] : memref<4x1x32xf32, #tpu.memory_space<vmem>>, vector<1x1x32xf32>
    %412 = vector.shape_cast %411 : vector<1x1x32xf32> to vector<1x32xf32>
    %413 = vector.broadcast %412 : vector<1x32xf32> to vector<64x32xf32>
    %414 = arith.addf %408, %413 : vector<64x32xf32>
    %415 = vector.broadcast %1 : vector<64x1xf32> to vector<64x32xf32>
    %416 = arith.mulf %414, %415 : vector<64x32xf32>
    %417 = arith.addf %410, %416 : vector<64x32xf32>
    %c1_178 = arith.constant 1 : index
    %c0_179 = arith.constant 0 : index
    %c0_180 = arith.constant 0 : index
    %418 = vector.load %arg21[%c1_178, %c0_179, %c0_180] : memref<4x1x32xf32, #tpu.memory_space<vmem>>, vector<1x1x32xf32>
    %419 = vector.shape_cast %418 : vector<1x1x32xf32> to vector<1x32xf32>
    %c1_181 = arith.constant 1 : index
    %c0_182 = arith.constant 0 : index
    %c0_183 = arith.constant 0 : index
    %420 = vector.load %arg22[%c1_181, %c0_182, %c0_183] : memref<4x1x32xf32, #tpu.memory_space<vmem>>, vector<1x1x32xf32>
    %421 = vector.shape_cast %420 : vector<1x1x32xf32> to vector<1x32xf32>
    %cst_184 = arith.constant dense<0.000000e+00> : vector<64xf32>
    %422 = vector.multi_reduction <add>, %417, %cst_184 [1] : vector<64x32xf32> to vector<64xf32>
    %423 = vector.shape_cast %422 : vector<64xf32> to vector<64x1xf32>
    %cst_185 = arith.constant 3.200000e+01 : f32
    %424 = vector.broadcast %cst_185 : f32 to vector<64x1xf32>
    %425 = arith.divf %423, %424 : vector<64x1xf32>
    %426 = vector.broadcast %425 : vector<64x1xf32> to vector<64x32xf32>
    %427 = arith.subf %417, %426 : vector<64x32xf32>
    %428 = arith.mulf %427, %427 : vector<64x32xf32>
    %cst_186 = arith.constant dense<0.000000e+00> : vector<64xf32>
    %429 = vector.multi_reduction <add>, %428, %cst_186 [1] : vector<64x32xf32> to vector<64xf32>
    %430 = vector.shape_cast %429 : vector<64xf32> to vector<64x1xf32>
    %cst_187 = arith.constant 3.200000e+01 : f32
    %431 = vector.broadcast %cst_187 : f32 to vector<64x1xf32>
    %432 = arith.divf %430, %431 : vector<64x1xf32>
    %cst_188 = arith.constant 9.99999974E-6 : f32
    %433 = vector.broadcast %cst_188 : f32 to vector<64x1xf32>
    %434 = arith.addf %432, %433 : vector<64x1xf32>
    %435 = math.rsqrt %434 : vector<64x1xf32>
    %436 = vector.broadcast %435 : vector<64x1xf32> to vector<64x32xf32>
    %437 = arith.mulf %427, %436 : vector<64x32xf32>
    %438 = vector.broadcast %419 : vector<1x32xf32> to vector<64x32xf32>
    %439 = arith.mulf %437, %438 : vector<64x32xf32>
    %440 = vector.broadcast %421 : vector<1x32xf32> to vector<64x32xf32>
    %441 = arith.addf %439, %440 : vector<64x32xf32>
    %c1_189 = arith.constant 1 : index
    %c0_190 = arith.constant 0 : index
    %c0_191 = arith.constant 0 : index
    %442 = vector.load %arg23[%c1_189, %c0_190, %c0_191] : memref<4x32x128xf32, #tpu.memory_space<vmem>>, vector<1x32x128xf32>
    %443 = vector.shape_cast %442 : vector<1x32x128xf32> to vector<32x128xf32>
    %cst_192 = arith.constant dense<0.000000e+00> : vector<64x128xf32>
    %444 = tpu.matmul %441, %443, %cst_192 {dimension_numbers = #tpu.dot_dimension_numbers<[1], [0], [0], [1], [0, 0, 1, 1], [], []>} : vector<64x32xf32>, vector<32x128xf32>, vector<64x128xf32> -> vector<64x128xf32>
    %c1_193 = arith.constant 1 : index
    %c0_194 = arith.constant 0 : index
    %c0_195 = arith.constant 0 : index
    %445 = vector.load %arg24[%c1_193, %c0_194, %c0_195] : memref<4x1x128xf32, #tpu.memory_space<vmem>>, vector<1x1x128xf32>
    %446 = vector.shape_cast %445 : vector<1x1x128xf32> to vector<1x128xf32>
    %447 = vector.broadcast %446 : vector<1x128xf32> to vector<64x128xf32>
    %448 = arith.addf %444, %447 : vector<64x128xf32>
    %cst_196 = arith.constant 5.000000e-01 : f32
    %449 = vector.broadcast %cst_196 : f32 to vector<64x128xf32>
    %450 = arith.mulf %449, %448 : vector<64x128xf32>
    %cst_197 = arith.constant 4.471500e-02 : f32
    %451 = vector.broadcast %cst_197 : f32 to vector<64x128xf32>
    %452 = arith.mulf %451, %448 : vector<64x128xf32>
    %453 = arith.mulf %452, %448 : vector<64x128xf32>
    %454 = arith.mulf %453, %448 : vector<64x128xf32>
    %455 = arith.addf %448, %454 : vector<64x128xf32>
    %cst_198 = arith.constant 0.797884583 : f32
    %456 = vector.broadcast %cst_198 : f32 to vector<64x128xf32>
    %457 = arith.mulf %456, %455 : vector<64x128xf32>
    %458 = math.tanh %457 : vector<64x128xf32>
    %cst_199 = arith.constant 1.000000e+00 : f32
    %459 = vector.broadcast %cst_199 : f32 to vector<64x128xf32>
    %460 = arith.addf %459, %458 : vector<64x128xf32>
    %461 = arith.mulf %450, %460 : vector<64x128xf32>
    %462 = vector.broadcast %1 : vector<64x1xf32> to vector<64x128xf32>
    %463 = arith.mulf %461, %462 : vector<64x128xf32>
    %c1_200 = arith.constant 1 : index
    %c0_201 = arith.constant 0 : index
    %c0_202 = arith.constant 0 : index
    %464 = vector.load %arg25[%c1_200, %c0_201, %c0_202] : memref<4x128x32xf32, #tpu.memory_space<vmem>>, vector<1x128x32xf32>
    %465 = vector.shape_cast %464 : vector<1x128x32xf32> to vector<128x32xf32>
    %cst_203 = arith.constant dense<0.000000e+00> : vector<64x32xf32>
    %466 = tpu.matmul %463, %465, %cst_203 {dimension_numbers = #tpu.dot_dimension_numbers<[1], [0], [0], [1], [0, 0, 1, 1], [], []>} : vector<64x128xf32>, vector<128x32xf32>, vector<64x32xf32> -> vector<64x32xf32>
    %c1_204 = arith.constant 1 : index
    %c0_205 = arith.constant 0 : index
    %c0_206 = arith.constant 0 : index
    %467 = vector.load %arg26[%c1_204, %c0_205, %c0_206] : memref<4x1x32xf32, #tpu.memory_space<vmem>>, vector<1x1x32xf32>
    %468 = vector.shape_cast %467 : vector<1x1x32xf32> to vector<1x32xf32>
    %469 = vector.broadcast %468 : vector<1x32xf32> to vector<64x32xf32>
    %470 = arith.addf %466, %469 : vector<64x32xf32>
    %471 = vector.broadcast %1 : vector<64x1xf32> to vector<64x32xf32>
    %472 = arith.mulf %470, %471 : vector<64x32xf32>
    %473 = arith.addf %417, %472 : vector<64x32xf32>
    %c0_207 = arith.constant 0 : index
    %c0_208 = arith.constant 0 : index
    %474 = vector.load %arg27[%c0_207, %c0_208] : memref<112x32xf32, #tpu.memory_space<vmem>>, vector<64x32xf32>
    tpu.vector_store %arg27[%c0_207, %c0_208], %473 {strides = array<i32>} : memref<112x32xf32, #tpu.memory_space<vmem>>, vector<64x32xf32>,
    %c2 = arith.constant 2 : index
    %c0_209 = arith.constant 0 : index
    %c0_210 = arith.constant 0 : index
    %475 = vector.load %arg14[%c2, %c0_209, %c0_210] : memref<4x1x32xf32, #tpu.memory_space<vmem>>, vector<1x1x32xf32>
    %476 = vector.shape_cast %475 : vector<1x1x32xf32> to vector<1x32xf32>
    %c2_211 = arith.constant 2 : index
    %c0_212 = arith.constant 0 : index
    %c0_213 = arith.constant 0 : index
    %477 = vector.load %arg15[%c2_211, %c0_212, %c0_213] : memref<4x1x32xf32, #tpu.memory_space<vmem>>, vector<1x1x32xf32>
    %478 = vector.shape_cast %477 : vector<1x1x32xf32> to vector<1x32xf32>
    %cst_214 = arith.constant dense<0.000000e+00> : vector<64xf32>
    %479 = vector.multi_reduction <add>, %473, %cst_214 [1] : vector<64x32xf32> to vector<64xf32>
    %480 = vector.shape_cast %479 : vector<64xf32> to vector<64x1xf32>
    %cst_215 = arith.constant 3.200000e+01 : f32
    %481 = vector.broadcast %cst_215 : f32 to vector<64x1xf32>
    %482 = arith.divf %480, %481 : vector<64x1xf32>
    %483 = vector.broadcast %482 : vector<64x1xf32> to vector<64x32xf32>
    %484 = arith.subf %473, %483 : vector<64x32xf32>
    %485 = arith.mulf %484, %484 : vector<64x32xf32>
    %cst_216 = arith.constant dense<0.000000e+00> : vector<64xf32>
    %486 = vector.multi_reduction <add>, %485, %cst_216 [1] : vector<64x32xf32> to vector<64xf32>
    %487 = vector.shape_cast %486 : vector<64xf32> to vector<64x1xf32>
    %cst_217 = arith.constant 3.200000e+01 : f32
    %488 = vector.broadcast %cst_217 : f32 to vector<64x1xf32>
    %489 = arith.divf %487, %488 : vector<64x1xf32>
    %cst_218 = arith.constant 9.99999974E-6 : f32
    %490 = vector.broadcast %cst_218 : f32 to vector<64x1xf32>
    %491 = arith.addf %489, %490 : vector<64x1xf32>
    %492 = math.rsqrt %491 : vector<64x1xf32>
    %493 = vector.broadcast %492 : vector<64x1xf32> to vector<64x32xf32>
    %494 = arith.mulf %484, %493 : vector<64x32xf32>
    %495 = vector.broadcast %476 : vector<1x32xf32> to vector<64x32xf32>
    %496 = arith.mulf %494, %495 : vector<64x32xf32>
    %497 = vector.broadcast %478 : vector<1x32xf32> to vector<64x32xf32>
    %498 = arith.addf %496, %497 : vector<64x32xf32>
    %c2_219 = arith.constant 2 : index
    %c0_220 = arith.constant 0 : index
    %c0_221 = arith.constant 0 : index
    %499 = vector.load %arg16[%c2_219, %c0_220, %c0_221] : memref<4x32x64xf32, #tpu.memory_space<vmem>>, vector<1x32x64xf32>
    %500 = vector.shape_cast %499 : vector<1x32x64xf32> to vector<32x64xf32>
    %cst_222 = arith.constant dense<0.000000e+00> : vector<64x64xf32>
    %501 = tpu.matmul %498, %500, %cst_222 {dimension_numbers = #tpu.dot_dimension_numbers<[1], [0], [0], [1], [0, 0, 1, 1], [], []>} : vector<64x32xf32>, vector<32x64xf32>, vector<64x64xf32> -> vector<64x64xf32>
    %c2_223 = arith.constant 2 : index
    %c0_224 = arith.constant 0 : index
    %c0_225 = arith.constant 0 : index
    %502 = vector.load %arg17[%c2_223, %c0_224, %c0_225] : memref<4x1x64xf32, #tpu.memory_space<vmem>>, vector<1x1x64xf32>
    %503 = vector.shape_cast %502 : vector<1x1x64xf32> to vector<1x64xf32>
    %504 = vector.broadcast %503 : vector<1x64xf32> to vector<64x64xf32>
    %505 = arith.addf %501, %504 : vector<64x64xf32>
    %c2_226 = arith.constant 2 : index
    %c0_227 = arith.constant 0 : index
    %c0_228 = arith.constant 0 : index
    %506 = vector.load %arg18[%c2_226, %c0_227, %c0_228] : memref<4x32x128xf32, #tpu.memory_space<vmem>>, vector<1x32x128xf32>
    %507 = vector.shape_cast %506 : vector<1x32x128xf32> to vector<32x128xf32>
    %cst_229 = arith.constant dense<0.000000e+00> : vector<64x128xf32>
    %508 = tpu.matmul %498, %507, %cst_229 {dimension_numbers = #tpu.dot_dimension_numbers<[1], [0], [0], [1], [0, 0, 1, 1], [], []>} : vector<64x32xf32>, vector<32x128xf32>, vector<64x128xf32> -> vector<64x128xf32>
    %c2_230 = arith.constant 2 : index
    %c0_231 = arith.constant 0 : index
    %c0_232 = arith.constant 0 : index
    %509 = vector.load %arg19[%c2_230, %c0_231, %c0_232] : memref<4x1x128xf32, #tpu.memory_space<vmem>>, vector<1x1x128xf32>
    %510 = vector.shape_cast %509 : vector<1x1x128xf32> to vector<1x128xf32>
    %511 = vector.broadcast %510 : vector<1x128xf32> to vector<64x128xf32>
    %512 = arith.addf %508, %511 : vector<64x128xf32>
    %c0_233 = arith.constant 0 : index
    %c0_234 = arith.constant 0 : index
    %513 = vector.load %arg7[%c0_233, %c0_234] : memref<32x64xf32, #tpu.memory_space<vmem>>, vector<32x64xf32>
    %514 = vector.extract_strided_slice %505 {offsets = [0, 0], sizes = [64, 32], strides = [1, 1]} : vector<64x64xf32> to vector<64x32xf32>
    %cst_235 = arith.constant dense<0.000000e+00> : vector<32x32xf32>
    %515 = tpu.matmul %513, %514, %cst_235 {dimension_numbers = #tpu.dot_dimension_numbers<[1], [0], [0], [1], [0, 0, 1, 1], [], []>} : vector<32x64xf32>, vector<64x32xf32>, vector<32x32xf32> -> vector<32x32xf32>
    %cst_236 = arith.constant dense<0.000000e+00> : vector<32x32xf32>
    %516 = tpu.matmul %513, %473, %cst_236 {dimension_numbers = #tpu.dot_dimension_numbers<[1], [0], [0], [1], [0, 0, 1, 1], [], []>} : vector<32x64xf32>, vector<64x32xf32>, vector<32x32xf32> -> vector<32x32xf32>
    %517 = vector.extract_strided_slice %505 {offsets = [0, 32], sizes = [64, 32], strides = [1, 1]} : vector<64x64xf32> to vector<64x32xf32>
    %c0_237 = arith.constant 0 : index
    %c0_238 = arith.constant 0 : index
    %518 = vector.load %arg5[%c0_237, %c0_238] : memref<32x64xf32, #tpu.memory_space<vmem>>, vector<32x64xf32>
    %519 = vector.extract_strided_slice %515 {offsets = [0, 0], sizes = [32, 8], strides = [1, 1]} : vector<32x32xf32> to vector<32x8xf32>
    %520 = vector.extract_strided_slice %517 {offsets = [0, 0], sizes = [64, 8], strides = [1, 1]} : vector<64x32xf32> to vector<64x8xf32>
    %cst_239 = arith.constant dense<0.000000e+00> : vector<32x64xf32>
    %521 = tpu.matmul %519, %520, %cst_239 {dimension_numbers = #tpu.dot_dimension_numbers<[1], [1], [0], [0], [0, 0, 1, 0], [], []>} : vector<32x8xf32>, vector<64x8xf32>, vector<32x64xf32> -> vector<32x64xf32>
    %cst_240 = arith.constant 0.353553385 : f32
    %522 = vector.broadcast %cst_240 : f32 to vector<32x64xf32>
    %523 = arith.mulf %521, %522 : vector<32x64xf32>
    %524 = arith.addf %523, %518 : vector<32x64xf32>
    %cst_241 = arith.constant dense<0xFF800000> : vector<32xf32>
    %525 = vector.multi_reduction <maximumf>, %524, %cst_241 [1] : vector<32x64xf32> to vector<32xf32>
    %526 = vector.shape_cast %525 : vector<32xf32> to vector<32x1xf32>
    %527 = vector.broadcast %526 : vector<32x1xf32> to vector<32x64xf32>
    %528 = arith.subf %524, %527 : vector<32x64xf32>
    %529 = math.exp %528 : vector<32x64xf32>
    %cst_242 = arith.constant dense<0.000000e+00> : vector<32xf32>
    %530 = vector.multi_reduction <add>, %529, %cst_242 [1] : vector<32x64xf32> to vector<32xf32>
    %531 = vector.shape_cast %530 : vector<32xf32> to vector<32x1xf32>
    %532 = tpu.reciprocal %531 {approx = true} : vector<32x1xf32> -> vector<32x1xf32>
    %533 = vector.broadcast %532 : vector<32x1xf32> to vector<32x64xf32>
    %534 = arith.mulf %529, %533 : vector<32x64xf32>
    %535 = vector.extract_strided_slice %512 {offsets = [0, 0], sizes = [64, 32], strides = [1, 1]} : vector<64x128xf32> to vector<64x32xf32>
    %cst_243 = arith.constant dense<0.000000e+00> : vector<32x32xf32>
    %536 = tpu.matmul %534, %535, %cst_243 {dimension_numbers = #tpu.dot_dimension_numbers<[1], [0], [0], [1], [0, 0, 1, 1], [], []>} : vector<32x64xf32>, vector<64x32xf32>, vector<32x32xf32> -> vector<32x32xf32>
    %537 = vector.extract_strided_slice %515 {offsets = [0, 8], sizes = [32, 8], strides = [1, 1]} : vector<32x32xf32> to vector<32x8xf32>
    %538 = vector.extract_strided_slice %517 {offsets = [0, 8], sizes = [64, 8], strides = [1, 1]} : vector<64x32xf32> to vector<64x8xf32>
    %cst_244 = arith.constant dense<0.000000e+00> : vector<32x64xf32>
    %539 = tpu.matmul %537, %538, %cst_244 {dimension_numbers = #tpu.dot_dimension_numbers<[1], [1], [0], [0], [0, 0, 1, 0], [], []>} : vector<32x8xf32>, vector<64x8xf32>, vector<32x64xf32> -> vector<32x64xf32>
    %cst_245 = arith.constant 0.353553385 : f32
    %540 = vector.broadcast %cst_245 : f32 to vector<32x64xf32>
    %541 = arith.mulf %539, %540 : vector<32x64xf32>
    %542 = arith.addf %541, %518 : vector<32x64xf32>
    %cst_246 = arith.constant dense<0xFF800000> : vector<32xf32>
    %543 = vector.multi_reduction <maximumf>, %542, %cst_246 [1] : vector<32x64xf32> to vector<32xf32>
    %544 = vector.shape_cast %543 : vector<32xf32> to vector<32x1xf32>
    %545 = vector.broadcast %544 : vector<32x1xf32> to vector<32x64xf32>
    %546 = arith.subf %542, %545 : vector<32x64xf32>
    %547 = math.exp %546 : vector<32x64xf32>
    %cst_247 = arith.constant dense<0.000000e+00> : vector<32xf32>
    %548 = vector.multi_reduction <add>, %547, %cst_247 [1] : vector<32x64xf32> to vector<32xf32>
    %549 = vector.shape_cast %548 : vector<32xf32> to vector<32x1xf32>
    %550 = tpu.reciprocal %549 {approx = true} : vector<32x1xf32> -> vector<32x1xf32>
    %551 = vector.broadcast %550 : vector<32x1xf32> to vector<32x64xf32>
    %552 = arith.mulf %547, %551 : vector<32x64xf32>
    %553 = vector.extract_strided_slice %512 {offsets = [0, 32], sizes = [64, 32], strides = [1, 1]} : vector<64x128xf32> to vector<64x32xf32>
    %cst_248 = arith.constant dense<0.000000e+00> : vector<32x32xf32>
    %554 = tpu.matmul %552, %553, %cst_248 {dimension_numbers = #tpu.dot_dimension_numbers<[1], [0], [0], [1], [0, 0, 1, 1], [], []>} : vector<32x64xf32>, vector<64x32xf32>, vector<32x32xf32> -> vector<32x32xf32>
    %555 = arith.addf %536, %554 : vector<32x32xf32>
    %556 = vector.extract_strided_slice %515 {offsets = [0, 16], sizes = [32, 8], strides = [1, 1]} : vector<32x32xf32> to vector<32x8xf32>
    %557 = vector.extract_strided_slice %517 {offsets = [0, 16], sizes = [64, 8], strides = [1, 1]} : vector<64x32xf32> to vector<64x8xf32>
    %cst_249 = arith.constant dense<0.000000e+00> : vector<32x64xf32>
    %558 = tpu.matmul %556, %557, %cst_249 {dimension_numbers = #tpu.dot_dimension_numbers<[1], [1], [0], [0], [0, 0, 1, 0], [], []>} : vector<32x8xf32>, vector<64x8xf32>, vector<32x64xf32> -> vector<32x64xf32>
    %cst_250 = arith.constant 0.353553385 : f32
    %559 = vector.broadcast %cst_250 : f32 to vector<32x64xf32>
    %560 = arith.mulf %558, %559 : vector<32x64xf32>
    %561 = arith.addf %560, %518 : vector<32x64xf32>
    %cst_251 = arith.constant dense<0xFF800000> : vector<32xf32>
    %562 = vector.multi_reduction <maximumf>, %561, %cst_251 [1] : vector<32x64xf32> to vector<32xf32>
    %563 = vector.shape_cast %562 : vector<32xf32> to vector<32x1xf32>
    %564 = vector.broadcast %563 : vector<32x1xf32> to vector<32x64xf32>
    %565 = arith.subf %561, %564 : vector<32x64xf32>
    %566 = math.exp %565 : vector<32x64xf32>
    %cst_252 = arith.constant dense<0.000000e+00> : vector<32xf32>
    %567 = vector.multi_reduction <add>, %566, %cst_252 [1] : vector<32x64xf32> to vector<32xf32>
    %568 = vector.shape_cast %567 : vector<32xf32> to vector<32x1xf32>
    %569 = tpu.reciprocal %568 {approx = true} : vector<32x1xf32> -> vector<32x1xf32>
    %570 = vector.broadcast %569 : vector<32x1xf32> to vector<32x64xf32>
    %571 = arith.mulf %566, %570 : vector<32x64xf32>
    %572 = vector.extract_strided_slice %512 {offsets = [0, 64], sizes = [64, 32], strides = [1, 1]} : vector<64x128xf32> to vector<64x32xf32>
    %cst_253 = arith.constant dense<0.000000e+00> : vector<32x32xf32>
    %573 = tpu.matmul %571, %572, %cst_253 {dimension_numbers = #tpu.dot_dimension_numbers<[1], [0], [0], [1], [0, 0, 1, 1], [], []>} : vector<32x64xf32>, vector<64x32xf32>, vector<32x32xf32> -> vector<32x32xf32>
    %574 = arith.addf %555, %573 : vector<32x32xf32>
    %575 = vector.extract_strided_slice %515 {offsets = [0, 24], sizes = [32, 8], strides = [1, 1]} : vector<32x32xf32> to vector<32x8xf32>
    %576 = vector.extract_strided_slice %517 {offsets = [0, 24], sizes = [64, 8], strides = [1, 1]} : vector<64x32xf32> to vector<64x8xf32>
    %cst_254 = arith.constant dense<0.000000e+00> : vector<32x64xf32>
    %577 = tpu.matmul %575, %576, %cst_254 {dimension_numbers = #tpu.dot_dimension_numbers<[1], [1], [0], [0], [0, 0, 1, 0], [], []>} : vector<32x8xf32>, vector<64x8xf32>, vector<32x64xf32> -> vector<32x64xf32>
    %cst_255 = arith.constant 0.353553385 : f32
    %578 = vector.broadcast %cst_255 : f32 to vector<32x64xf32>
    %579 = arith.mulf %577, %578 : vector<32x64xf32>
    %580 = arith.addf %579, %518 : vector<32x64xf32>
    %cst_256 = arith.constant dense<0xFF800000> : vector<32xf32>
    %581 = vector.multi_reduction <maximumf>, %580, %cst_256 [1] : vector<32x64xf32> to vector<32xf32>
    %582 = vector.shape_cast %581 : vector<32xf32> to vector<32x1xf32>
    %583 = vector.broadcast %582 : vector<32x1xf32> to vector<32x64xf32>
    %584 = arith.subf %580, %583 : vector<32x64xf32>
    %585 = math.exp %584 : vector<32x64xf32>
    %cst_257 = arith.constant dense<0.000000e+00> : vector<32xf32>
    %586 = vector.multi_reduction <add>, %585, %cst_257 [1] : vector<32x64xf32> to vector<32xf32>
    %587 = vector.shape_cast %586 : vector<32xf32> to vector<32x1xf32>
    %588 = tpu.reciprocal %587 {approx = true} : vector<32x1xf32> -> vector<32x1xf32>
    %589 = vector.broadcast %588 : vector<32x1xf32> to vector<32x64xf32>
    %590 = arith.mulf %585, %589 : vector<32x64xf32>
    %591 = vector.extract_strided_slice %512 {offsets = [0, 96], sizes = [64, 32], strides = [1, 1]} : vector<64x128xf32> to vector<64x32xf32>
    %cst_258 = arith.constant dense<0.000000e+00> : vector<32x32xf32>
    %592 = tpu.matmul %590, %591, %cst_258 {dimension_numbers = #tpu.dot_dimension_numbers<[1], [0], [0], [1], [0, 0, 1, 1], [], []>} : vector<32x64xf32>, vector<64x32xf32>, vector<32x32xf32> -> vector<32x32xf32>
    %593 = arith.addf %574, %592 : vector<32x32xf32>
    %594 = vector.broadcast %2 : vector<32x1xf32> to vector<32x32xf32>
    %595 = arith.mulf %516, %594 : vector<32x32xf32>
    %c2_259 = arith.constant 2 : index
    %c0_260 = arith.constant 0 : index
    %c0_261 = arith.constant 0 : index
    %596 = vector.load %arg20[%c2_259, %c0_260, %c0_261] : memref<4x1x32xf32, #tpu.memory_space<vmem>>, vector<1x1x32xf32>
    %597 = vector.shape_cast %596 : vector<1x1x32xf32> to vector<1x32xf32>
    %598 = vector.broadcast %597 : vector<1x32xf32> to vector<32x32xf32>
    %599 = arith.addf %593, %598 : vector<32x32xf32>
    %600 = vector.broadcast %2 : vector<32x1xf32> to vector<32x32xf32>
    %601 = arith.mulf %599, %600 : vector<32x32xf32>
    %602 = arith.addf %595, %601 : vector<32x32xf32>
    %c2_262 = arith.constant 2 : index
    %c0_263 = arith.constant 0 : index
    %c0_264 = arith.constant 0 : index
    %603 = vector.load %arg21[%c2_262, %c0_263, %c0_264] : memref<4x1x32xf32, #tpu.memory_space<vmem>>, vector<1x1x32xf32>
    %604 = vector.shape_cast %603 : vector<1x1x32xf32> to vector<1x32xf32>
    %c2_265 = arith.constant 2 : index
    %c0_266 = arith.constant 0 : index
    %c0_267 = arith.constant 0 : index
    %605 = vector.load %arg22[%c2_265, %c0_266, %c0_267] : memref<4x1x32xf32, #tpu.memory_space<vmem>>, vector<1x1x32xf32>
    %606 = vector.shape_cast %605 : vector<1x1x32xf32> to vector<1x32xf32>
    %cst_268 = arith.constant dense<0.000000e+00> : vector<32xf32>
    %607 = vector.multi_reduction <add>, %602, %cst_268 [1] : vector<32x32xf32> to vector<32xf32>
    %608 = vector.shape_cast %607 : vector<32xf32> to vector<32x1xf32>
    %cst_269 = arith.constant 3.200000e+01 : f32
    %609 = vector.broadcast %cst_269 : f32 to vector<32x1xf32>
    %610 = arith.divf %608, %609 : vector<32x1xf32>
    %611 = vector.broadcast %610 : vector<32x1xf32> to vector<32x32xf32>
    %612 = arith.subf %602, %611 : vector<32x32xf32>
    %613 = arith.mulf %612, %612 : vector<32x32xf32>
    %cst_270 = arith.constant dense<0.000000e+00> : vector<32xf32>
    %614 = vector.multi_reduction <add>, %613, %cst_270 [1] : vector<32x32xf32> to vector<32xf32>
    %615 = vector.shape_cast %614 : vector<32xf32> to vector<32x1xf32>
    %cst_271 = arith.constant 3.200000e+01 : f32
    %616 = vector.broadcast %cst_271 : f32 to vector<32x1xf32>
    %617 = arith.divf %615, %616 : vector<32x1xf32>
    %cst_272 = arith.constant 9.99999974E-6 : f32
    %618 = vector.broadcast %cst_272 : f32 to vector<32x1xf32>
    %619 = arith.addf %617, %618 : vector<32x1xf32>
    %620 = math.rsqrt %619 : vector<32x1xf32>
    %621 = vector.broadcast %620 : vector<32x1xf32> to vector<32x32xf32>
    %622 = arith.mulf %612, %621 : vector<32x32xf32>
    %623 = vector.broadcast %604 : vector<1x32xf32> to vector<32x32xf32>
    %624 = arith.mulf %622, %623 : vector<32x32xf32>
    %625 = vector.broadcast %606 : vector<1x32xf32> to vector<32x32xf32>
    %626 = arith.addf %624, %625 : vector<32x32xf32>
    %c2_273 = arith.constant 2 : index
    %c0_274 = arith.constant 0 : index
    %c0_275 = arith.constant 0 : index
    %627 = vector.load %arg23[%c2_273, %c0_274, %c0_275] : memref<4x32x128xf32, #tpu.memory_space<vmem>>, vector<1x32x128xf32>
    %628 = vector.shape_cast %627 : vector<1x32x128xf32> to vector<32x128xf32>
    %cst_276 = arith.constant dense<0.000000e+00> : vector<32x128xf32>
    %629 = tpu.matmul %626, %628, %cst_276 {dimension_numbers = #tpu.dot_dimension_numbers<[1], [0], [0], [1], [0, 0, 1, 1], [], []>} : vector<32x32xf32>, vector<32x128xf32>, vector<32x128xf32> -> vector<32x128xf32>
    %c2_277 = arith.constant 2 : index
    %c0_278 = arith.constant 0 : index
    %c0_279 = arith.constant 0 : index
    %630 = vector.load %arg24[%c2_277, %c0_278, %c0_279] : memref<4x1x128xf32, #tpu.memory_space<vmem>>, vector<1x1x128xf32>
    %631 = vector.shape_cast %630 : vector<1x1x128xf32> to vector<1x128xf32>
    %632 = vector.broadcast %631 : vector<1x128xf32> to vector<32x128xf32>
    %633 = arith.addf %629, %632 : vector<32x128xf32>
    %cst_280 = arith.constant 5.000000e-01 : f32
    %634 = vector.broadcast %cst_280 : f32 to vector<32x128xf32>
    %635 = arith.mulf %634, %633 : vector<32x128xf32>
    %cst_281 = arith.constant 4.471500e-02 : f32
    %636 = vector.broadcast %cst_281 : f32 to vector<32x128xf32>
    %637 = arith.mulf %636, %633 : vector<32x128xf32>
    %638 = arith.mulf %637, %633 : vector<32x128xf32>
    %639 = arith.mulf %638, %633 : vector<32x128xf32>
    %640 = arith.addf %633, %639 : vector<32x128xf32>
    %cst_282 = arith.constant 0.797884583 : f32
    %641 = vector.broadcast %cst_282 : f32 to vector<32x128xf32>
    %642 = arith.mulf %641, %640 : vector<32x128xf32>
    %643 = math.tanh %642 : vector<32x128xf32>
    %cst_283 = arith.constant 1.000000e+00 : f32
    %644 = vector.broadcast %cst_283 : f32 to vector<32x128xf32>
    %645 = arith.addf %644, %643 : vector<32x128xf32>
    %646 = arith.mulf %635, %645 : vector<32x128xf32>
    %647 = vector.broadcast %2 : vector<32x1xf32> to vector<32x128xf32>
    %648 = arith.mulf %646, %647 : vector<32x128xf32>
    %c2_284 = arith.constant 2 : index
    %c0_285 = arith.constant 0 : index
    %c0_286 = arith.constant 0 : index
    %649 = vector.load %arg25[%c2_284, %c0_285, %c0_286] : memref<4x128x32xf32, #tpu.memory_space<vmem>>, vector<1x128x32xf32>
    %650 = vector.shape_cast %649 : vector<1x128x32xf32> to vector<128x32xf32>
    %cst_287 = arith.constant dense<0.000000e+00> : vector<32x32xf32>
    %651 = tpu.matmul %648, %650, %cst_287 {dimension_numbers = #tpu.dot_dimension_numbers<[1], [0], [0], [1], [0, 0, 1, 1], [], []>} : vector<32x128xf32>, vector<128x32xf32>, vector<32x32xf32> -> vector<32x32xf32>
    %c2_288 = arith.constant 2 : index
    %c0_289 = arith.constant 0 : index
    %c0_290 = arith.constant 0 : index
    %652 = vector.load %arg26[%c2_288, %c0_289, %c0_290] : memref<4x1x32xf32, #tpu.memory_space<vmem>>, vector<1x1x32xf32>
    %653 = vector.shape_cast %652 : vector<1x1x32xf32> to vector<1x32xf32>
    %654 = vector.broadcast %653 : vector<1x32xf32> to vector<32x32xf32>
    %655 = arith.addf %651, %654 : vector<32x32xf32>
    %656 = vector.broadcast %2 : vector<32x1xf32> to vector<32x32xf32>
    %657 = arith.mulf %655, %656 : vector<32x32xf32>
    %658 = arith.addf %602, %657 : vector<32x32xf32>
    %c64 = arith.constant 64 : index
    %c0_291 = arith.constant 0 : index
    %659 = vector.load %arg27[%c64, %c0_291] : memref<112x32xf32, #tpu.memory_space<vmem>>, vector<32x32xf32>
    tpu.vector_store %arg27[%c64, %c0_291], %658 {strides = array<i32>} : memref<112x32xf32, #tpu.memory_space<vmem>>, vector<32x32xf32>,
    %c3 = arith.constant 3 : index
    %c0_292 = arith.constant 0 : index
    %c0_293 = arith.constant 0 : index
    %660 = vector.load %arg14[%c3, %c0_292, %c0_293] : memref<4x1x32xf32, #tpu.memory_space<vmem>>, vector<1x1x32xf32>
    %661 = vector.shape_cast %660 : vector<1x1x32xf32> to vector<1x32xf32>
    %c3_294 = arith.constant 3 : index
    %c0_295 = arith.constant 0 : index
    %c0_296 = arith.constant 0 : index
    %662 = vector.load %arg15[%c3_294, %c0_295, %c0_296] : memref<4x1x32xf32, #tpu.memory_space<vmem>>, vector<1x1x32xf32>
    %663 = vector.shape_cast %662 : vector<1x1x32xf32> to vector<1x32xf32>
    %cst_297 = arith.constant dense<0.000000e+00> : vector<32xf32>
    %664 = vector.multi_reduction <add>, %658, %cst_297 [1] : vector<32x32xf32> to vector<32xf32>
    %665 = vector.shape_cast %664 : vector<32xf32> to vector<32x1xf32>
    %cst_298 = arith.constant 3.200000e+01 : f32
    %666 = vector.broadcast %cst_298 : f32 to vector<32x1xf32>
    %667 = arith.divf %665, %666 : vector<32x1xf32>
    %668 = vector.broadcast %667 : vector<32x1xf32> to vector<32x32xf32>
    %669 = arith.subf %658, %668 : vector<32x32xf32>
    %670 = arith.mulf %669, %669 : vector<32x32xf32>
    %cst_299 = arith.constant dense<0.000000e+00> : vector<32xf32>
    %671 = vector.multi_reduction <add>, %670, %cst_299 [1] : vector<32x32xf32> to vector<32xf32>
    %672 = vector.shape_cast %671 : vector<32xf32> to vector<32x1xf32>
    %cst_300 = arith.constant 3.200000e+01 : f32
    %673 = vector.broadcast %cst_300 : f32 to vector<32x1xf32>
    %674 = arith.divf %672, %673 : vector<32x1xf32>
    %cst_301 = arith.constant 9.99999974E-6 : f32
    %675 = vector.broadcast %cst_301 : f32 to vector<32x1xf32>
    %676 = arith.addf %674, %675 : vector<32x1xf32>
    %677 = math.rsqrt %676 : vector<32x1xf32>
    %678 = vector.broadcast %677 : vector<32x1xf32> to vector<32x32xf32>
    %679 = arith.mulf %669, %678 : vector<32x32xf32>
    %680 = vector.broadcast %661 : vector<1x32xf32> to vector<32x32xf32>
    %681 = arith.mulf %679, %680 : vector<32x32xf32>
    %682 = vector.broadcast %663 : vector<1x32xf32> to vector<32x32xf32>
    %683 = arith.addf %681, %682 : vector<32x32xf32>
    %c3_302 = arith.constant 3 : index
    %c0_303 = arith.constant 0 : index
    %c0_304 = arith.constant 0 : index
    %684 = vector.load %arg16[%c3_302, %c0_303, %c0_304] : memref<4x32x64xf32, #tpu.memory_space<vmem>>, vector<1x32x64xf32>
    %685 = vector.shape_cast %684 : vector<1x32x64xf32> to vector<32x64xf32>
    %cst_305 = arith.constant dense<0.000000e+00> : vector<32x64xf32>
    %686 = tpu.matmul %683, %685, %cst_305 {dimension_numbers = #tpu.dot_dimension_numbers<[1], [0], [0], [1], [0, 0, 1, 1], [], []>} : vector<32x32xf32>, vector<32x64xf32>, vector<32x64xf32> -> vector<32x64xf32>
    %c3_306 = arith.constant 3 : index
    %c0_307 = arith.constant 0 : index
    %c0_308 = arith.constant 0 : index
    %687 = vector.load %arg17[%c3_306, %c0_307, %c0_308] : memref<4x1x64xf32, #tpu.memory_space<vmem>>, vector<1x1x64xf32>
    %688 = vector.shape_cast %687 : vector<1x1x64xf32> to vector<1x64xf32>
    %689 = vector.broadcast %688 : vector<1x64xf32> to vector<32x64xf32>
    %690 = arith.addf %686, %689 : vector<32x64xf32>
    %c3_309 = arith.constant 3 : index
    %c0_310 = arith.constant 0 : index
    %c0_311 = arith.constant 0 : index
    %691 = vector.load %arg18[%c3_309, %c0_310, %c0_311] : memref<4x32x128xf32, #tpu.memory_space<vmem>>, vector<1x32x128xf32>
    %692 = vector.shape_cast %691 : vector<1x32x128xf32> to vector<32x128xf32>
    %cst_312 = arith.constant dense<0.000000e+00> : vector<32x128xf32>
    %693 = tpu.matmul %683, %692, %cst_312 {dimension_numbers = #tpu.dot_dimension_numbers<[1], [0], [0], [1], [0, 0, 1, 1], [], []>} : vector<32x32xf32>, vector<32x128xf32>, vector<32x128xf32> -> vector<32x128xf32>
    %c3_313 = arith.constant 3 : index
    %c0_314 = arith.constant 0 : index
    %c0_315 = arith.constant 0 : index
    %694 = vector.load %arg19[%c3_313, %c0_314, %c0_315] : memref<4x1x128xf32, #tpu.memory_space<vmem>>, vector<1x1x128xf32>
    %695 = vector.shape_cast %694 : vector<1x1x128xf32> to vector<1x128xf32>
    %696 = vector.broadcast %695 : vector<1x128xf32> to vector<32x128xf32>
    %697 = arith.addf %693, %696 : vector<32x128xf32>
    %c0_316 = arith.constant 0 : index
    %c0_317 = arith.constant 0 : index
    %698 = vector.load %arg8[%c0_316, %c0_317] : memref<16x32xf32, #tpu.memory_space<vmem>>, vector<16x32xf32>
    %699 = vector.extract_strided_slice %690 {offsets = [0, 0], sizes = [32, 32], strides = [1, 1]} : vector<32x64xf32> to vector<32x32xf32>
    %cst_318 = arith.constant dense<0.000000e+00> : vector<16x32xf32>
    %700 = tpu.matmul %698, %699, %cst_318 {dimension_numbers = #tpu.dot_dimension_numbers<[1], [0], [0], [1], [0, 0, 1, 1], [], []>} : vector<16x32xf32>, vector<32x32xf32>, vector<16x32xf32> -> vector<16x32xf32>
    %cst_319 = arith.constant dense<0.000000e+00> : vector<16x32xf32>
    %701 = tpu.matmul %698, %658, %cst_319 {dimension_numbers = #tpu.dot_dimension_numbers<[1], [0], [0], [1], [0, 0, 1, 1], [], []>} : vector<16x32xf32>, vector<32x32xf32>, vector<16x32xf32> -> vector<16x32xf32>
    %702 = vector.extract_strided_slice %690 {offsets = [0, 32], sizes = [32, 32], strides = [1, 1]} : vector<32x64xf32> to vector<32x32xf32>
    %c0_320 = arith.constant 0 : index
    %c0_321 = arith.constant 0 : index
    %703 = vector.load %arg6[%c0_320, %c0_321] : memref<16x32xf32, #tpu.memory_space<vmem>>, vector<16x32xf32>
    %704 = vector.extract_strided_slice %700 {offsets = [0, 0], sizes = [16, 8], strides = [1, 1]} : vector<16x32xf32> to vector<16x8xf32>
    %705 = vector.extract_strided_slice %702 {offsets = [0, 0], sizes = [32, 8], strides = [1, 1]} : vector<32x32xf32> to vector<32x8xf32>
    %cst_322 = arith.constant dense<0.000000e+00> : vector<16x32xf32>
    %706 = tpu.matmul %704, %705, %cst_322 {dimension_numbers = #tpu.dot_dimension_numbers<[1], [1], [0], [0], [0, 0, 1, 0], [], []>} : vector<16x8xf32>, vector<32x8xf32>, vector<16x32xf32> -> vector<16x32xf32>
    %cst_323 = arith.constant 0.353553385 : f32
    %707 = vector.broadcast %cst_323 : f32 to vector<16x32xf32>
    %708 = arith.mulf %706, %707 : vector<16x32xf32>
    %709 = arith.addf %708, %703 : vector<16x32xf32>
    %cst_324 = arith.constant dense<0xFF800000> : vector<16xf32>
    %710 = vector.multi_reduction <maximumf>, %709, %cst_324 [1] : vector<16x32xf32> to vector<16xf32>
    %711 = vector.shape_cast %710 : vector<16xf32> to vector<16x1xf32>
    %712 = vector.broadcast %711 : vector<16x1xf32> to vector<16x32xf32>
    %713 = arith.subf %709, %712 : vector<16x32xf32>
    %714 = math.exp %713 : vector<16x32xf32>
    %cst_325 = arith.constant dense<0.000000e+00> : vector<16xf32>
    %715 = vector.multi_reduction <add>, %714, %cst_325 [1] : vector<16x32xf32> to vector<16xf32>
    %716 = vector.shape_cast %715 : vector<16xf32> to vector<16x1xf32>
    %717 = tpu.reciprocal %716 {approx = true} : vector<16x1xf32> -> vector<16x1xf32>
    %718 = vector.broadcast %717 : vector<16x1xf32> to vector<16x32xf32>
    %719 = arith.mulf %714, %718 : vector<16x32xf32>
    %720 = vector.extract_strided_slice %697 {offsets = [0, 0], sizes = [32, 32], strides = [1, 1]} : vector<32x128xf32> to vector<32x32xf32>
    %cst_326 = arith.constant dense<0.000000e+00> : vector<16x32xf32>
    %721 = tpu.matmul %719, %720, %cst_326 {dimension_numbers = #tpu.dot_dimension_numbers<[1], [0], [0], [1], [0, 0, 1, 1], [], []>} : vector<16x32xf32>, vector<32x32xf32>, vector<16x32xf32> -> vector<16x32xf32>
    %722 = vector.extract_strided_slice %700 {offsets = [0, 8], sizes = [16, 8], strides = [1, 1]} : vector<16x32xf32> to vector<16x8xf32>
    %723 = vector.extract_strided_slice %702 {offsets = [0, 8], sizes = [32, 8], strides = [1, 1]} : vector<32x32xf32> to vector<32x8xf32>
    %cst_327 = arith.constant dense<0.000000e+00> : vector<16x32xf32>
    %724 = tpu.matmul %722, %723, %cst_327 {dimension_numbers = #tpu.dot_dimension_numbers<[1], [1], [0], [0], [0, 0, 1, 0], [], []>} : vector<16x8xf32>, vector<32x8xf32>, vector<16x32xf32> -> vector<16x32xf32>
    %cst_328 = arith.constant 0.353553385 : f32
    %725 = vector.broadcast %cst_328 : f32 to vector<16x32xf32>
    %726 = arith.mulf %724, %725 : vector<16x32xf32>
    %727 = arith.addf %726, %703 : vector<16x32xf32>
    %cst_329 = arith.constant dense<0xFF800000> : vector<16xf32>
    %728 = vector.multi_reduction <maximumf>, %727, %cst_329 [1] : vector<16x32xf32> to vector<16xf32>
    %729 = vector.shape_cast %728 : vector<16xf32> to vector<16x1xf32>
    %730 = vector.broadcast %729 : vector<16x1xf32> to vector<16x32xf32>
    %731 = arith.subf %727, %730 : vector<16x32xf32>
    %732 = math.exp %731 : vector<16x32xf32>
    %cst_330 = arith.constant dense<0.000000e+00> : vector<16xf32>
    %733 = vector.multi_reduction <add>, %732, %cst_330 [1] : vector<16x32xf32> to vector<16xf32>
    %734 = vector.shape_cast %733 : vector<16xf32> to vector<16x1xf32>
    %735 = tpu.reciprocal %734 {approx = true} : vector<16x1xf32> -> vector<16x1xf32>
    %736 = vector.broadcast %735 : vector<16x1xf32> to vector<16x32xf32>
    %737 = arith.mulf %732, %736 : vector<16x32xf32>
    %738 = vector.extract_strided_slice %697 {offsets = [0, 32], sizes = [32, 32], strides = [1, 1]} : vector<32x128xf32> to vector<32x32xf32>
    %cst_331 = arith.constant dense<0.000000e+00> : vector<16x32xf32>
    %739 = tpu.matmul %737, %738, %cst_331 {dimension_numbers = #tpu.dot_dimension_numbers<[1], [0], [0], [1], [0, 0, 1, 1], [], []>} : vector<16x32xf32>, vector<32x32xf32>, vector<16x32xf32> -> vector<16x32xf32>
    %740 = arith.addf %721, %739 : vector<16x32xf32>
    %741 = vector.extract_strided_slice %700 {offsets = [0, 16], sizes = [16, 8], strides = [1, 1]} : vector<16x32xf32> to vector<16x8xf32>
    %742 = vector.extract_strided_slice %702 {offsets = [0, 16], sizes = [32, 8], strides = [1, 1]} : vector<32x32xf32> to vector<32x8xf32>
    %cst_332 = arith.constant dense<0.000000e+00> : vector<16x32xf32>
    %743 = tpu.matmul %741, %742, %cst_332 {dimension_numbers = #tpu.dot_dimension_numbers<[1], [1], [0], [0], [0, 0, 1, 0], [], []>} : vector<16x8xf32>, vector<32x8xf32>, vector<16x32xf32> -> vector<16x32xf32>
    %cst_333 = arith.constant 0.353553385 : f32
    %744 = vector.broadcast %cst_333 : f32 to vector<16x32xf32>
    %745 = arith.mulf %743, %744 : vector<16x32xf32>
    %746 = arith.addf %745, %703 : vector<16x32xf32>
    %cst_334 = arith.constant dense<0xFF800000> : vector<16xf32>
    %747 = vector.multi_reduction <maximumf>, %746, %cst_334 [1] : vector<16x32xf32> to vector<16xf32>
    %748 = vector.shape_cast %747 : vector<16xf32> to vector<16x1xf32>
    %749 = vector.broadcast %748 : vector<16x1xf32> to vector<16x32xf32>
    %750 = arith.subf %746, %749 : vector<16x32xf32>
    %751 = math.exp %750 : vector<16x32xf32>
    %cst_335 = arith.constant dense<0.000000e+00> : vector<16xf32>
    %752 = vector.multi_reduction <add>, %751, %cst_335 [1] : vector<16x32xf32> to vector<16xf32>
    %753 = vector.shape_cast %752 : vector<16xf32> to vector<16x1xf32>
    %754 = tpu.reciprocal %753 {approx = true} : vector<16x1xf32> -> vector<16x1xf32>
    %755 = vector.broadcast %754 : vector<16x1xf32> to vector<16x32xf32>
    %756 = arith.mulf %751, %755 : vector<16x32xf32>
    %757 = vector.extract_strided_slice %697 {offsets = [0, 64], sizes = [32, 32], strides = [1, 1]} : vector<32x128xf32> to vector<32x32xf32>
    %cst_336 = arith.constant dense<0.000000e+00> : vector<16x32xf32>
    %758 = tpu.matmul %756, %757, %cst_336 {dimension_numbers = #tpu.dot_dimension_numbers<[1], [0], [0], [1], [0, 0, 1, 1], [], []>} : vector<16x32xf32>, vector<32x32xf32>, vector<16x32xf32> -> vector<16x32xf32>
    %759 = arith.addf %740, %758 : vector<16x32xf32>
    %760 = vector.extract_strided_slice %700 {offsets = [0, 24], sizes = [16, 8], strides = [1, 1]} : vector<16x32xf32> to vector<16x8xf32>
    %761 = vector.extract_strided_slice %702 {offsets = [0, 24], sizes = [32, 8], strides = [1, 1]} : vector<32x32xf32> to vector<32x8xf32>
    %cst_337 = arith.constant dense<0.000000e+00> : vector<16x32xf32>
    %762 = tpu.matmul %760, %761, %cst_337 {dimension_numbers = #tpu.dot_dimension_numbers<[1], [1], [0], [0], [0, 0, 1, 0], [], []>} : vector<16x8xf32>, vector<32x8xf32>, vector<16x32xf32> -> vector<16x32xf32>
    %cst_338 = arith.constant 0.353553385 : f32
    %763 = vector.broadcast %cst_338 : f32 to vector<16x32xf32>
    %764 = arith.mulf %762, %763 : vector<16x32xf32>
    %765 = arith.addf %764, %703 : vector<16x32xf32>
    %cst_339 = arith.constant dense<0xFF800000> : vector<16xf32>
    %766 = vector.multi_reduction <maximumf>, %765, %cst_339 [1] : vector<16x32xf32> to vector<16xf32>
    %767 = vector.shape_cast %766 : vector<16xf32> to vector<16x1xf32>
    %768 = vector.broadcast %767 : vector<16x1xf32> to vector<16x32xf32>
    %769 = arith.subf %765, %768 : vector<16x32xf32>
    %770 = math.exp %769 : vector<16x32xf32>
    %cst_340 = arith.constant dense<0.000000e+00> : vector<16xf32>
    %771 = vector.multi_reduction <add>, %770, %cst_340 [1] : vector<16x32xf32> to vector<16xf32>
    %772 = vector.shape_cast %771 : vector<16xf32> to vector<16x1xf32>
    %773 = tpu.reciprocal %772 {approx = true} : vector<16x1xf32> -> vector<16x1xf32>
    %774 = vector.broadcast %773 : vector<16x1xf32> to vector<16x32xf32>
    %775 = arith.mulf %770, %774 : vector<16x32xf32>
    %776 = vector.extract_strided_slice %697 {offsets = [0, 96], sizes = [32, 32], strides = [1, 1]} : vector<32x128xf32> to vector<32x32xf32>
    %cst_341 = arith.constant dense<0.000000e+00> : vector<16x32xf32>
    %777 = tpu.matmul %775, %776, %cst_341 {dimension_numbers = #tpu.dot_dimension_numbers<[1], [0], [0], [1], [0, 0, 1, 1], [], []>} : vector<16x32xf32>, vector<32x32xf32>, vector<16x32xf32> -> vector<16x32xf32>
    %778 = arith.addf %759, %777 : vector<16x32xf32>
    %779 = vector.broadcast %3 : vector<16x1xf32> to vector<16x32xf32>
    %780 = arith.mulf %701, %779 : vector<16x32xf32>
    %c3_342 = arith.constant 3 : index
    %c0_343 = arith.constant 0 : index
    %c0_344 = arith.constant 0 : index
    %781 = vector.load %arg20[%c3_342, %c0_343, %c0_344] : memref<4x1x32xf32, #tpu.memory_space<vmem>>, vector<1x1x32xf32>
    %782 = vector.shape_cast %781 : vector<1x1x32xf32> to vector<1x32xf32>
    %783 = vector.broadcast %782 : vector<1x32xf32> to vector<16x32xf32>
    %784 = arith.addf %778, %783 : vector<16x32xf32>
    %785 = vector.broadcast %3 : vector<16x1xf32> to vector<16x32xf32>
    %786 = arith.mulf %784, %785 : vector<16x32xf32>
    %787 = arith.addf %780, %786 : vector<16x32xf32>
    %c3_345 = arith.constant 3 : index
    %c0_346 = arith.constant 0 : index
    %c0_347 = arith.constant 0 : index
    %788 = vector.load %arg21[%c3_345, %c0_346, %c0_347] : memref<4x1x32xf32, #tpu.memory_space<vmem>>, vector<1x1x32xf32>
    %789 = vector.shape_cast %788 : vector<1x1x32xf32> to vector<1x32xf32>
    %c3_348 = arith.constant 3 : index
    %c0_349 = arith.constant 0 : index
    %c0_350 = arith.constant 0 : index
    %790 = vector.load %arg22[%c3_348, %c0_349, %c0_350] : memref<4x1x32xf32, #tpu.memory_space<vmem>>, vector<1x1x32xf32>
    %791 = vector.shape_cast %790 : vector<1x1x32xf32> to vector<1x32xf32>
    %cst_351 = arith.constant dense<0.000000e+00> : vector<16xf32>
    %792 = vector.multi_reduction <add>, %787, %cst_351 [1] : vector<16x32xf32> to vector<16xf32>
    %793 = vector.shape_cast %792 : vector<16xf32> to vector<16x1xf32>
    %cst_352 = arith.constant 3.200000e+01 : f32
    %794 = vector.broadcast %cst_352 : f32 to vector<16x1xf32>
    %795 = arith.divf %793, %794 : vector<16x1xf32>
    %796 = vector.broadcast %795 : vector<16x1xf32> to vector<16x32xf32>
    %797 = arith.subf %787, %796 : vector<16x32xf32>
    %798 = arith.mulf %797, %797 : vector<16x32xf32>
    %cst_353 = arith.constant dense<0.000000e+00> : vector<16xf32>
    %799 = vector.multi_reduction <add>, %798, %cst_353 [1] : vector<16x32xf32> to vector<16xf32>
    %800 = vector.shape_cast %799 : vector<16xf32> to vector<16x1xf32>
    %cst_354 = arith.constant 3.200000e+01 : f32
    %801 = vector.broadcast %cst_354 : f32 to vector<16x1xf32>
    %802 = arith.divf %800, %801 : vector<16x1xf32>
    %cst_355 = arith.constant 9.99999974E-6 : f32
    %803 = vector.broadcast %cst_355 : f32 to vector<16x1xf32>
    %804 = arith.addf %802, %803 : vector<16x1xf32>
    %805 = math.rsqrt %804 : vector<16x1xf32>
    %806 = vector.broadcast %805 : vector<16x1xf32> to vector<16x32xf32>
    %807 = arith.mulf %797, %806 : vector<16x32xf32>
    %808 = vector.broadcast %789 : vector<1x32xf32> to vector<16x32xf32>
    %809 = arith.mulf %807, %808 : vector<16x32xf32>
    %810 = vector.broadcast %791 : vector<1x32xf32> to vector<16x32xf32>
    %811 = arith.addf %809, %810 : vector<16x32xf32>
    %c3_356 = arith.constant 3 : index
    %c0_357 = arith.constant 0 : index
    %c0_358 = arith.constant 0 : index
    %812 = vector.load %arg23[%c3_356, %c0_357, %c0_358] : memref<4x32x128xf32, #tpu.memory_space<vmem>>, vector<1x32x128xf32>
    %813 = vector.shape_cast %812 : vector<1x32x128xf32> to vector<32x128xf32>
    %cst_359 = arith.constant dense<0.000000e+00> : vector<16x128xf32>
    %814 = tpu.matmul %811, %813, %cst_359 {dimension_numbers = #tpu.dot_dimension_numbers<[1], [0], [0], [1], [0, 0, 1, 1], [], []>} : vector<16x32xf32>, vector<32x128xf32>, vector<16x128xf32> -> vector<16x128xf32>
    %c3_360 = arith.constant 3 : index
    %c0_361 = arith.constant 0 : index
    %c0_362 = arith.constant 0 : index
    %815 = vector.load %arg24[%c3_360, %c0_361, %c0_362] : memref<4x1x128xf32, #tpu.memory_space<vmem>>, vector<1x1x128xf32>
    %816 = vector.shape_cast %815 : vector<1x1x128xf32> to vector<1x128xf32>
    %817 = vector.broadcast %816 : vector<1x128xf32> to vector<16x128xf32>
    %818 = arith.addf %814, %817 : vector<16x128xf32>
    %cst_363 = arith.constant 5.000000e-01 : f32
    %819 = vector.broadcast %cst_363 : f32 to vector<16x128xf32>
    %820 = arith.mulf %819, %818 : vector<16x128xf32>
    %cst_364 = arith.constant 4.471500e-02 : f32
    %821 = vector.broadcast %cst_364 : f32 to vector<16x128xf32>
    %822 = arith.mulf %821, %818 : vector<16x128xf32>
    %823 = arith.mulf %822, %818 : vector<16x128xf32>
    %824 = arith.mulf %823, %818 : vector<16x128xf32>
    %825 = arith.addf %818, %824 : vector<16x128xf32>
    %cst_365 = arith.constant 0.797884583 : f32
    %826 = vector.broadcast %cst_365 : f32 to vector<16x128xf32>
    %827 = arith.mulf %826, %825 : vector<16x128xf32>
    %828 = math.tanh %827 : vector<16x128xf32>
    %cst_366 = arith.constant 1.000000e+00 : f32
    %829 = vector.broadcast %cst_366 : f32 to vector<16x128xf32>
    %830 = arith.addf %829, %828 : vector<16x128xf32>
    %831 = arith.mulf %820, %830 : vector<16x128xf32>
    %832 = vector.broadcast %3 : vector<16x1xf32> to vector<16x128xf32>
    %833 = arith.mulf %831, %832 : vector<16x128xf32>
    %c3_367 = arith.constant 3 : index
    %c0_368 = arith.constant 0 : index
    %c0_369 = arith.constant 0 : index
    %834 = vector.load %arg25[%c3_367, %c0_368, %c0_369] : memref<4x128x32xf32, #tpu.memory_space<vmem>>, vector<1x128x32xf32>
    %835 = vector.shape_cast %834 : vector<1x128x32xf32> to vector<128x32xf32>
    %cst_370 = arith.constant dense<0.000000e+00> : vector<16x32xf32>
    %836 = tpu.matmul %833, %835, %cst_370 {dimension_numbers = #tpu.dot_dimension_numbers<[1], [0], [0], [1], [0, 0, 1, 1], [], []>} : vector<16x128xf32>, vector<128x32xf32>, vector<16x32xf32> -> vector<16x32xf32>
    %c3_371 = arith.constant 3 : index
    %c0_372 = arith.constant 0 : index
    %c0_373 = arith.constant 0 : index
    %837 = vector.load %arg26[%c3_371, %c0_372, %c0_373] : memref<4x1x32xf32, #tpu.memory_space<vmem>>, vector<1x1x32xf32>
    %838 = vector.shape_cast %837 : vector<1x1x32xf32> to vector<1x32xf32>
    %839 = vector.broadcast %838 : vector<1x32xf32> to vector<16x32xf32>
    %840 = arith.addf %836, %839 : vector<16x32xf32>
    %841 = vector.broadcast %3 : vector<16x1xf32> to vector<16x32xf32>
    %842 = arith.mulf %840, %841 : vector<16x32xf32>
    %843 = arith.addf %787, %842 : vector<16x32xf32>
    %c96 = arith.constant 96 : index
    %c0_374 = arith.constant 0 : index
    %844 = vector.load %arg27[%c96, %c0_374] : memref<112x32xf32, #tpu.memory_space<vmem>>, vector<16x32xf32>
    tpu.vector_store %arg27[%c96, %c0_374], %843 {strides = array<i32>} : memref<112x32xf32, #tpu.memory_space<vmem>>, vector<16x32xf32>,
    return
  }
}

</mosaic_0001>

<llo_original>
// kernel: video_transformer_forward.1
$region0: #{video_transformer_forward.1}
  #allocation0 [shape = 'u32[]', space=smem, size = 0x4, offset = 0x4, fixed_abs, tag = 'smem constant byte address 0x4 - core index']
  #allocation1 [shape = 'u32[144,128]{1,0:T(1,128)}', space=vmem, size = 0x12000, scoped, tag = 'internal scratch']
  %s0 = inlined_call_operand.vmem [shape: f32[64,16], index: 0, kind: input, shape index: {}]
  %s1 = inlined_call_operand.vmem [shape: f32[64,1], index: 1, kind: input, shape index: {}]
  %s2 = inlined_call_operand.vmem [shape: f32[32,1], index: 2, kind: input, shape index: {}]
  %s3 = inlined_call_operand.vmem [shape: f32[16,1], index: 3, kind: input, shape index: {}]
  %s4 = inlined_call_operand.vmem [shape: f32[64,64], index: 4, kind: input, shape index: {}]
  %s5 = inlined_call_operand.vmem [shape: f32[32,64], index: 5, kind: input, shape index: {}]
  %s6 = inlined_call_operand.vmem [shape: f32[16,32], index: 6, kind: input, shape index: {}]
  %s7 = inlined_call_operand.vmem [shape: f32[32,64], index: 7, kind: input, shape index: {}]
  %s8 = inlined_call_operand.vmem [shape: f32[16,32], index: 8, kind: input, shape index: {}]
  %s9 = inlined_call_operand.vmem [shape: f32[16,32], index: 9, kind: input, shape index: {}]
  %s10 = inlined_call_operand.vmem [shape: f32[1,32], index: 10, kind: input, shape index: {}]
  %s11 = inlined_call_operand.vmem [shape: f32[2,96,32], index: 11, kind: input, shape index: {}]
  %s12 = inlined_call_operand.vmem [shape: f32[2,1,32], index: 12, kind: input, shape index: {}]
  %s13 = inlined_call_operand.vmem [shape: f32[2,1,32], index: 13, kind: input, shape index: {}]
  %s14 = inlined_call_operand.vmem [shape: f32[4,1,32], index: 14, kind: input, shape index: {}]
  %s15 = inlined_call_operand.vmem [shape: f32[4,1,32], index: 15, kind: input, shape index: {}]
  %s16 = inlined_call_operand.vmem [shape: f32[4,32,64], index: 16, kind: input, shape index: {}]
  %s17 = inlined_call_operand.vmem [shape: f32[4,1,64], index: 17, kind: input, shape index: {}]
  %s18 = inlined_call_operand.vmem [shape: f32[4,32,128], index: 18, kind: input, shape index: {}]
  %s19 = inlined_call_operand.vmem [shape: f32[4,1,128], index: 19, kind: input, shape index: {}]
  %s20 = inlined_call_operand.vmem [shape: f32[4,1,32], index: 20, kind: input, shape index: {}]
  %s21 = inlined_call_operand.vmem [shape: f32[4,1,32], index: 21, kind: input, shape index: {}]
  %s22 = inlined_call_operand.vmem [shape: f32[4,1,32], index: 22, kind: input, shape index: {}]
  %s23 = inlined_call_operand.vmem [shape: f32[4,32,128], index: 23, kind: input, shape index: {}]
  %s24 = inlined_call_operand.vmem [shape: f32[4,1,128], index: 24, kind: input, shape index: {}]
  %s25 = inlined_call_operand.vmem [shape: f32[4,128,32], index: 25, kind: input, shape index: {}]
  %s26 = inlined_call_operand.vmem [shape: f32[4,1,32], index: 26, kind: input, shape index: {}]
  %s27 = inlined_call_operand.vmem [shape: f32[112,32], index: 27, kind: output, shape index: {}]
  %s28 = sld [smem:[#allocation0]]
  $region118: #{video_transformer_forward.1} parent=0
    _
  %s30 = ssub.s32 1, %s28
  %s31 = scalar_select 0, %s30, %s28
  // Predicated region
  $region2: #{video_transformer_forward.1} parent=0 // pred_check
    _
  $region3: #{video_transformer_forward.1} parent=0 // pred_check_branch
    %33 = sbr.rel (0) target = $region5
  $region4: #{video_transformer_forward.1} parent=0 // pred_region
    _
  $region5: #{video_transformer_forward.1} parent=0 // pred_fallthru
    _
  // Predicated region
  $region6: #{video_transformer_forward.1} parent=0 // pred_check
    _
  $region7: #{video_transformer_forward.1} parent=0 // pred_check_branch
    %35 = sbr.rel (0) target = $region9
  $region8: #{video_transformer_forward.1} parent=0 // pred_region
    _
  $region9: #{video_transformer_forward.1} parent=0 // pred_fallthru
    _
  // Predicated region
  $region10: #{video_transformer_forward.1} parent=0 // pred_check
    _
  $region11: #{video_transformer_forward.1} parent=0 // pred_check_branch
    %37 = sbr.rel (0) target = $region13
  $region12: #{video_transformer_forward.1} parent=0 // pred_region
    _
  $region13: #{video_transformer_forward.1} parent=0 // pred_fallthru
    _
  // Predicated region
  $region14: #{video_transformer_forward.1} parent=0 // pred_check
    _
  $region15: #{video_transformer_forward.1} parent=0 // pred_check_branch
    %39 = sbr.rel (0) target = $region17
  $region16: #{video_transformer_forward.1} parent=0 // pred_region
    _
  $region17: #{video_transformer_forward.1} parent=0 // pred_fallthru
    _
  // Predicated region
  $region18: #{video_transformer_forward.1} parent=0 // pred_check
    _
  $region19: #{video_transformer_forward.1} parent=0 // pred_check_branch
    %41 = sbr.rel (0) target = $region21
  $region20: #{video_transformer_forward.1} parent=0 // pred_region
    _
  $region21: #{video_transformer_forward.1} parent=0 // pred_fallthru
    _
  // Predicated region
  $region22: #{video_transformer_forward.1} parent=0 // pred_check
    _
  $region23: #{video_transformer_forward.1} parent=0 // pred_check_branch
    %43 = sbr.rel (0) target = $region25
  $region24: #{video_transformer_forward.1} parent=0 // pred_region
    _
  $region25: #{video_transformer_forward.1} parent=0 // pred_fallthru
    _
  // Predicated region
  $region26: #{video_transformer_forward.1} parent=0 // pred_check
    _
  $region27: #{video_transformer_forward.1} parent=0 // pred_check_branch
    %45 = sbr.rel (0) target = $region29
  $region28: #{video_transformer_forward.1} parent=0 // pred_region
    _
  $region29: #{video_transformer_forward.1} parent=0 // pred_fallthru
    _
  // Predicated region
  $region30: #{video_transformer_forward.1} parent=0 // pred_check
    _
  $region31: #{video_transformer_forward.1} parent=0 // pred_check_branch
    %47 = sbr.rel (0) target = $region33
  $region32: #{video_transformer_forward.1} parent=0 // pred_region
    _
  $region33: #{video_transformer_forward.1} parent=0 // pred_fallthru
    _
  // Predicated region
  $region34: #{video_transformer_forward.1} parent=0 // pred_check
    _
  $region35: #{video_transformer_forward.1} parent=0 // pred_check_branch
    %49 = sbr.rel (0) target = $region37
  $region36: #{video_transformer_forward.1} parent=0 // pred_region
    _
  $region37: #{video_transformer_forward.1} parent=0 // pred_fallthru
    _
  // Predicated region
  $region38: #{video_transformer_forward.1} parent=0 // pred_check
    _
  $region39: #{video_transformer_forward.1} parent=0 // pred_check_branch
    %51 = sbr.rel (0) target = $region41
  $region40: #{video_transformer_forward.1} parent=0 // pred_region
    _
  $region41: #{video_transformer_forward.1} parent=0 // pred_fallthru
    _
  // Predicated region
  $region42: #{video_transformer_forward.1} parent=0 // pred_check
    _
  $region43: #{video_transformer_forward.1} parent=0 // pred_check_branch
    %53 = sbr.rel (0) target = $region45
  $region44: #{video_transformer_forward.1} parent=0 // pred_region
    _
  $region45: #{video_transformer_forward.1} parent=0 // pred_fallthru
    _
  // Predicated region
  $region46: #{video_transformer_forward.1} parent=0 // pred_check
    _
  $region47: #{video_transformer_forward.1} parent=0 // pred_check_branch
    %55 = sbr.rel (0) target = $region49
  $region48: #{video_transformer_forward.1} parent=0 // pred_region
    _
  $region49: #{video_transformer_forward.1} parent=0 // pred_fallthru
    _
  // Predicated region
  $region50: #{video_transformer_forward.1} parent=0 // pred_check
    _
  $region51: #{video_transformer_forward.1} parent=0 // pred_check_branch
    %57 = sbr.rel (0) target = $region53
  $region52: #{video_transformer_forward.1} parent=0 // pred_region
    _
  $region53: #{video_transformer_forward.1} parent=0 // pred_fallthru
    _
  // Predicated region
  $region54: #{video_transformer_forward.1} parent=0 // pred_check
    _
  $region55: #{video_transformer_forward.1} parent=0 // pred_check_branch
    %59 = sbr.rel (0) target = $region57
  $region56: #{video_transformer_forward.1} parent=0 // pred_region
    _
  $region57: #{video_transformer_forward.1} parent=0 // pred_fallthru
    _
  // Predicated region
  $region58: #{video_transformer_forward.1} parent=0 // pred_check
    _
  $region59: #{video_transformer_forward.1} parent=0 // pred_check_branch
    %61 = sbr.rel (0) target = $region61
  $region60: #{video_transformer_forward.1} parent=0 // pred_region
    _
  $region61: #{video_transformer_forward.1} parent=0 // pred_fallthru
    _
  // Predicated region
  $region62: #{video_transformer_forward.1} parent=0 // pred_check
    _
  $region63: #{video_transformer_forward.1} parent=0 // pred_check_branch
    %63 = sbr.rel (0) target = $region65
  $region64: #{video_transformer_forward.1} parent=0 // pred_region
    _
  $region65: #{video_transformer_forward.1} parent=0 // pred_fallthru
    _
  // Predicated region
  $region66: #{video_transformer_forward.1} parent=0 // pred_check
    _
  $region67: #{video_transformer_forward.1} parent=0 // pred_check_branch
    %65 = sbr.rel (0) target = $region69
  $region68: #{video_transformer_forward.1} parent=0 // pred_region
    _
  $region69: #{video_transformer_forward.1} parent=0 // pred_fallthru
    _
  // Predicated region
  $region70: #{video_transformer_forward.1} parent=0 // pred_check
    _
  $region71: #{video_transformer_forward.1} parent=0 // pred_check_branch
    %67 = sbr.rel (0) target = $region73
  $region72: #{video_transformer_forward.1} parent=0 // pred_region
    _
  $region73: #{video_transformer_forward.1} parent=0 // pred_fallthru
    _
  // Predicated region
  $region74: #{video_transformer_forward.1} parent=0 // pred_check
    _
  $region75: #{video_transformer_forward.1} parent=0 // pred_check_branch
    %69 = sbr.rel (0) target = $region77
  $region76: #{video_transformer_forward.1} parent=0 // pred_region
    _
  $region77: #{video_transformer_forward.1} parent=0 // pred_fallthru
    _
  // Predicated region
  $region78: #{video_transformer_forward.1} parent=0 // pred_check
    _
  $region79: #{video_transformer_forward.1} parent=0 // pred_check_branch
    %71 = sbr.rel (0) target = $region81
  $region80: #{video_transformer_forward.1} parent=0 // pred_region
    _
  $region81: #{video_transformer_forward.1} parent=0 // pred_fallthru
    _
  // Predicated region
  $region82: #{video_transformer_forward.1} parent=0 // pred_check
    _
  $region83: #{video_transformer_forward.1} parent=0 // pred_check_branch
    %73 = sbr.rel (0) target = $region85
  $region84: #{video_transformer_forward.1} parent=0 // pred_region
    _
  $region85: #{video_transformer_forward.1} parent=0 // pred_fallthru
    _
  // Predicated region
  $region86: #{video_transformer_forward.1} parent=0 // pred_check
    _
  $region87: #{video_transformer_forward.1} parent=0 // pred_check_branch
    %75 = sbr.rel (0) target = $region89
  $region88: #{video_transformer_forward.1} parent=0 // pred_region
    _
  $region89: #{video_transformer_forward.1} parent=0 // pred_fallthru
    _
  // Predicated region
  $region90: #{video_transformer_forward.1} parent=0 // pred_check
    _
  $region91: #{video_transformer_forward.1} parent=0 // pred_check_branch
    %77 = sbr.rel (0) target = $region93
  $region92: #{video_transformer_forward.1} parent=0 // pred_region
    _
  $region93: #{video_transformer_forward.1} parent=0 // pred_fallthru
    _
  // Predicated region
  $region94: #{video_transformer_forward.1} parent=0 // pred_check
    _
  $region95: #{video_transformer_forward.1} parent=0 // pred_check_branch
    %79 = sbr.rel (0) target = $region97
  $region96: #{video_transformer_forward.1} parent=0 // pred_region
    _
  $region97: #{video_transformer_forward.1} parent=0 // pred_fallthru
    _
  // Predicated region
  $region98: #{video_transformer_forward.1} parent=0 // pred_check
    _
  $region99: #{video_transformer_forward.1} parent=0 // pred_check_branch
    %81 = sbr.rel (0) target = $region101
  $region100: #{video_transformer_forward.1} parent=0 // pred_region
    _
  $region101: #{video_transformer_forward.1} parent=0 // pred_fallthru
    _
  // Predicated region
  $region102: #{video_transformer_forward.1} parent=0 // pred_check
    _
  $region103: #{video_transformer_forward.1} parent=0 // pred_check_branch
    %83 = sbr.rel (0) target = $region105
  $region104: #{video_transformer_forward.1} parent=0 // pred_region
    _
  $region105: #{video_transformer_forward.1} parent=0 // pred_fallthru
    _
  // Predicated region
  $region106: #{video_transformer_forward.1} parent=0 // pred_check
    _
  $region107: #{video_transformer_forward.1} parent=0 // pred_check_branch
    %85 = sbr.rel (0) target = $region109
  $region108: #{video_transformer_forward.1} parent=0 // pred_region
    _
  $region109: #{video_transformer_forward.1} parent=0 // pred_fallthru
    _
  %v86 = vld [vmem:[%s0] sm:$0xff]
  %v87 = vld [vmem:[%s0 + $0x8] sm:$0xff]
  %v88 = vld [vmem:[%s0 + $0x10] sm:$0xff]
  %v89 = vld [vmem:[%s0 + $0x18] sm:$0xff]
  %v90 = vld [vmem:[%s0 + $0x20] sm:$0xff]
  %v91 = vld [vmem:[%s0 + $0x28] sm:$0xff]
  %v92 = vld [vmem:[%s0 + $0x30] sm:$0xff]
  %v93 = vld [vmem:[%s0 + $0x38] sm:$0xff]
  %v94 = vld [vmem:[%s1] sm:$0xff]
  %v95 = vld [vmem:[%s1 + $0x8] sm:$0xff]
  %v96 = vld [vmem:[%s1 + $0x10] sm:$0xff]
  %v97 = vld [vmem:[%s1 + $0x18] sm:$0xff]
  %v98 = vld [vmem:[%s1 + $0x20] sm:$0xff]
  %v99 = vld [vmem:[%s1 + $0x28] sm:$0xff]
  %v100 = vld [vmem:[%s1 + $0x30] sm:$0xff]
  %v101 = vld [vmem:[%s1 + $0x38] sm:$0xff]
  %v102 = vld [vmem:[%s2] sm:$0xff]
  %v103 = vld [vmem:[%s2 + $0x8] sm:$0xff]
  %v104 = vld [vmem:[%s2 + $0x10] sm:$0xff]
  %v105 = vld [vmem:[%s2 + $0x18] sm:$0xff]
  %v106 = vld [vmem:[%s3] sm:$0xff]
  %v107 = vld [vmem:[%s3 + $0x8] sm:$0xff]
  %v108 = vld [vmem:[%s9] sm:$0xff]
  %v109 = vld [vmem:[%s9 + $0x8] sm:$0xff]
  %v110 = vld [vmem:[%s10] sm:$0x1]
  %v112 = vlaneseq
  %v113 = vshrl.u32 %v112, 7
  %v114 = vsub.s32 0, %v113
  %v115 = vrot.slane %v110, %v114
  %vm117 = vcmask 130048
  %v119 = vsel %vm117, %v86, 0
  %v122 = vsel %vm117, %v87, 0
  %v125 = vsel %vm117, %v88, 0
  %v128 = vsel %vm117, %v89, 0
  %v131 = vsel %vm117, %v90, 0
  %v134 = vsel %vm117, %v91, 0
  %v137 = vsel %vm117, %v92, 0
  %v140 = vsel %vm117, %v93, 0
  %142 = vmatprep.subr.mxu0 0.0
  %143 = vmatpush1.msra.mxu0 %v108
  %144 = vmatprep.subr.mxu0 0.0
  %145 = vmatpush1.msra.mxu0 %v109
  %146 = vmatprep.subr.mxu0 0.0
  %147 = vmatpush1.msra.mxu0 0.0
  %148 = vmatprep.subr.mxu0 0.0
  %149 = vmatpush1.msra.mxu0 0.0
  %150 = vmatprep.subr.mxu0 0.0
  %151 = vmatpush1.msra.mxu0 0.0
  %152 = vmatprep.subr.mxu0 0.0
  %153 = vmatpush1.msra.mxu0 0.0
  %154 = vmatprep.subr.mxu0 0.0
  %155 = vmatpush1.msra.mxu0 0.0
  %156 = vmatprep.subr.mxu0 0.0
  %157 = vmatpush1.msra.mxu0 0.0
  %158 = vmatprep.subr.mxu0 0.0
  %159 = vmatpush1.msra.mxu0 0.0
  %160 = vmatprep.subr.mxu0 0.0
  %161 = vmatpush1.msra.mxu0 0.0
  %162 = vmatprep.subr.mxu0 0.0
  %163 = vmatpush1.msra.mxu0 0.0
  %164 = vmatprep.subr.mxu0 0.0
  %165 = vmatpush1.msra.mxu0 0.0
  %166 = vmatprep.subr.mxu0 0.0
  %167 = vmatpush1.msra.mxu0 0.0
  %168 = vmatprep.subr.mxu0 0.0
  %169 = vmatpush1.msra.mxu0 0.0
  %170 = vmatprep.subr.mxu0 0.0
  %171 = vmatpush1.msra.mxu0 0.0
  %172 = vmatprep.subr.mxu0 0.0
  %173 = vmatpush1.msra.mxu0 0.0
  %174 = vmatprep.subr.mxu0 0.0
  %175 = vmatpush1.msra.mxu0 0.0
  %176 = vmatprep.subr.mxu0 0.0
  %177 = vmatpush1.msra.mxu0 0.0
  %178 = vmatprep.subr.mxu0 0.0
  %179 = vmatpush1.msra.mxu0 0.0
  %180 = vmatprep.subr.mxu0 0.0
  %181 = vmatpush1.msra.mxu0 0.0
  %182 = vmatprep.subr.mxu0 0.0
  %183 = vmatpush1.msra.mxu0 0.0
  %184 = vmatprep.subr.mxu0 0.0
  %185 = vmatpush1.msra.mxu0 0.0
  %186 = vmatprep.subr.mxu0 0.0
  %187 = vmatpush1.msra.mxu0 0.0
  %188 = vmatprep.subr.mxu0 0.0
  %189 = vmatpush1.msra.mxu0 0.0
  %190 = vmatprep.subr.mxu0 0.0
  %191 = vmatpush1.msra.mxu0 0.0
  %192 = vmatprep.subr.mxu0 0.0
  %193 = vmatpush1.msra.mxu0 0.0
  %194 = vmatprep.subr.mxu0 0.0
  %195 = vmatpush1.msra.mxu0 0.0
  %196 = vmatprep.subr.mxu0 0.0
  %197 = vmatpush1.msra.mxu0 0.0
  %198 = vmatprep.subr.mxu0 0.0
  %199 = vmatpush1.msra.mxu0 0.0
  %200 = vmatprep.subr.mxu0 0.0
  %201 = vmatpush1.msra.mxu0 0.0
  %202 = vmatprep.subr.mxu0 0.0
  %203 = vmatpush1.msra.mxu0 0.0
  %204 = vmatprep.subr.mxu0 0.0
  %205 = vmatpush1.msra.mxu0 0.0
  %206 = vmatprep.mubr.f32.mxu0 0.0
  %207 = vmatmul.mubr.f32.gmra.mrb[0].mxu0 %v119
  %v208 = vpop.f32.mrb[0].mxu0
  %v209 = vadd.f32 %v115, %v208
  %v210 = vpop.f32.mrb[0].mxu0
  %211 = vmatprep.mubr.f32.mxu0 0.0
  %212 = vmatmul.mubr.f32.gmra.mrb[0].mxu0 %v122
  %v213 = vpop.f32.mrb[0].mxu0
  %v214 = vadd.f32 %v115, %v213
  %v215 = vpop.f32.mrb[0].mxu0
  %216 = vmatprep.mubr.f32.mxu0 0.0
  %217 = vmatmul.mubr.f32.gmra.mrb[0].mxu0 %v125
  %v218 = vpop.f32.mrb[0].mxu0
  %v219 = vadd.f32 %v115, %v218
  %v220 = vpop.f32.mrb[0].mxu0
  %221 = vmatprep.mubr.f32.mxu0 0.0
  %222 = vmatmul.mubr.f32.gmra.mrb[0].mxu0 %v128
  %v223 = vpop.f32.mrb[0].mxu0
  %v224 = vadd.f32 %v115, %v223
  %v225 = vpop.f32.mrb[0].mxu0
  %226 = vmatprep.mubr.f32.mxu0 0.0
  %227 = vmatmul.mubr.f32.gmra.mrb[0].mxu0 %v131
  %v228 = vpop.f32.mrb[0].mxu0
  %v229 = vadd.f32 %v115, %v228
  %v230 = vpop.f32.mrb[0].mxu0
  %231 = vmatprep.mubr.f32.mxu0 0.0
  %232 = vmatmul.mubr.f32.gmra.mrb[0].mxu0 %v134
  %v233 = vpop.f32.mrb[0].mxu0
  %v234 = vadd.f32 %v115, %v233
  %v235 = vpop.f32.mrb[0].mxu0
  %236 = vmatprep.mubr.f32.mxu0 0.0
  %237 = vmatmul.mubr.f32.gmra.mrb[0].mxu0 %v137
  %v238 = vpop.f32.mrb[0].mxu0
  %v239 = vadd.f32 %v115, %v238
  %v240 = vpop.f32.mrb[0].mxu0
  %241 = vmatprep.mubr.f32.mxu0 0.0
  %242 = vmatmul.mubr.f32.gmra.mrb[0].mxu0 %v140
  %v243 = vpop.f32.mrb[0].mxu0
  %v244 = vadd.f32 %v115, %v243
  %v245 = vpop.f32.mrb[0].mxu0
  %246 = vdwg.mxu0
  %248 = vset.pattern.permute.xlu0 0
  %249 = vperm.xlu0 %248, %v94
  %v250 = vpop.permute.xlu0 %249
  %253 = vset.pattern.permute.xlu0 0
  %254 = vperm.xlu0 %253, %v95
  %v255 = vpop.permute.xlu0 %254
  %258 = vset.pattern.permute.xlu0 0
  %259 = vperm.xlu0 %258, %v96
  %v260 = vpop.permute.xlu0 %259
  %263 = vset.pattern.permute.xlu0 0
  %264 = vperm.xlu0 %263, %v97
  %v265 = vpop.permute.xlu0 %264
  %268 = vset.pattern.permute.xlu0 0
  %269 = vperm.xlu0 %268, %v98
  %v270 = vpop.permute.xlu0 %269
  %273 = vset.pattern.permute.xlu0 0
  %274 = vperm.xlu0 %273, %v99
  %v275 = vpop.permute.xlu0 %274
  %278 = vset.pattern.permute.xlu0 0
  %279 = vperm.xlu0 %278, %v100
  %v280 = vpop.permute.xlu0 %279
  %283 = vset.pattern.permute.xlu0 0
  %284 = vperm.xlu0 %283, %v101
  %v285 = vpop.permute.xlu0 %284
  %v287 = vmul.f32 %v209, %v250
  %v288 = vmul.f32 %v214, %v255
  %v289 = vmul.f32 %v219, %v260
  %v290 = vmul.f32 %v224, %v265
  %v291 = vmul.f32 %v229, %v270
  %v292 = vmul.f32 %v234, %v275
  %v293 = vmul.f32 %v239, %v280
  %v294 = vmul.f32 %v244, %v285
  %v295 = vlaneseq
  %v296 = vshrl.u32 %v295, 7
  %v297 = vadd.s32 %v296, 8
  %v298 = vadd.s32 %v296, 16
  %v299 = vadd.s32 %v296, 24
  %v300 = vadd.s32 %v296, 32
  %v301 = vadd.s32 %v296, 40
  %v302 = vadd.s32 %v296, 48
  %v303 = vadd.s32 %v296, 56
  %vm304 = vcmp.lt.s32.totalorder %v296, 0
  %v305 = vsub.s32 0, %v296
  %v306 = vsel %vm304, %v305, %v296
  %v307 = vshrl.u32 %v306, 5
  %v308 = vand.u32 %v306, 31
  %v309 = vsub.s32 0, %v308
  %v310 = vsel %vm304, %v309, %v308
  %vm311 = vcmp.lt.s32.totalorder %v297, 0
  %v312 = vsub.s32 0, %v297
  %v313 = vsel %vm311, %v312, %v297
  %v314 = vshrl.u32 %v313, 5
  %v315 = vand.u32 %v313, 31
  %v316 = vsub.s32 0, %v315
  %v317 = vsel %vm311, %v316, %v315
  %vm318 = vcmp.lt.s32.totalorder %v298, 0
  %v319 = vsub.s32 0, %v298
  %v320 = vsel %vm318, %v319, %v298
  %v321 = vshrl.u32 %v320, 5
  %v322 = vand.u32 %v320, 31
  %v323 = vsub.s32 0, %v322
  %v324 = vsel %vm318, %v323, %v322
  %vm325 = vcmp.lt.s32.totalorder %v299, 0
  %v326 = vsub.s32 0, %v299
  %v327 = vsel %vm325, %v326, %v299
  %v328 = vshrl.u32 %v327, 5
  %v329 = vand.u32 %v327, 31
  %v330 = vsub.s32 0, %v329
  %v331 = vsel %vm325, %v330, %v329
  %vm332 = vcmp.lt.s32.totalorder %v300, 0
  %v333 = vsub.s32 0, %v300
  %v334 = vsel %vm332, %v333, %v300
  %v335 = vshrl.u32 %v334, 5
  %v336 = vand.u32 %v334, 31
  %v337 = vsub.s32 0, %v336
  %v338 = vsel %vm332, %v337, %v336
  %vm339 = vcmp.lt.s32.totalorder %v301, 0
  %v340 = vsub.s32 0, %v301
  %v341 = vsel %vm339, %v340, %v301
  %v342 = vshrl.u32 %v341, 5
  %v343 = vand.u32 %v341, 31
  %v344 = vsub.s32 0, %v343
  %v345 = vsel %vm339, %v344, %v343
  %vm346 = vcmp.lt.s32.totalorder %v302, 0
  %v347 = vsub.s32 0, %v302
  %v348 = vsel %vm346, %v347, %v302
  %v349 = vshrl.u32 %v348, 5
  %v350 = vand.u32 %v348, 31
  %v351 = vsub.s32 0, %v350
  %v352 = vsel %vm346, %v351, %v350
  %vm353 = vcmp.lt.s32.totalorder %v303, 0
  %v354 = vsub.s32 0, %v303
  %v355 = vsel %vm353, %v354, %v303
  %v356 = vshrl.u32 %v355, 5
  %v357 = vand.u32 %v355, 31
  %v358 = vsub.s32 0, %v357
  %v359 = vsel %vm353, %v358, %v357
  %vm360 = vcmp.ne.s32.totalorder %v310, 0
  %vm361 = vcmp.ne.s32.totalorder %v317, 0
  %vm362 = vcmp.ne.s32.totalorder %v324, 0
  %vm363 = vcmp.ne.s32.totalorder %v331, 0
  %vm364 = vcmp.ne.s32.totalorder %v338, 0
  %vm365 = vcmp.ne.s32.totalorder %v345, 0
  %vm366 = vcmp.ne.s32.totalorder %v352, 0
  %vm367 = vcmp.ne.s32.totalorder %v359, 0
  %vm368 = vcmp.lt.s32.totalorder %v310, 0
  %vm369 = vcmp.lt.s32.totalorder %v317, 0
  %vm370 = vcmp.lt.s32.totalorder %v324, 0
  %vm371 = vcmp.lt.s32.totalorder %v331, 0
  %vm372 = vcmp.lt.s32.totalorder %v338, 0
  %vm373 = vcmp.lt.s32.totalorder %v345, 0
  %vm374 = vcmp.lt.s32.totalorder %v352, 0
  %vm375 = vcmp.lt.s32.totalorder %v359, 0
  %vm376 = vmand %vm368, %vm360
  %vm377 = vmand %vm369, %vm361
  %vm378 = vmand %vm370, %vm362
  %vm379 = vmand %vm371, %vm363
  %vm380 = vmand %vm372, %vm364
  %vm381 = vmand %vm373, %vm365
  %vm382 = vmand %vm374, %vm366
  %vm383 = vmand %vm375, %vm367
  %v384 = vadd.s32 %v310, 32
  %v385 = vadd.s32 %v317, 32
  %v386 = vadd.s32 %v324, 32
  %v387 = vadd.s32 %v331, 32
  %v388 = vadd.s32 %v338, 32
  %v389 = vadd.s32 %v345, 32
  %v390 = vadd.s32 %v352, 32
  %v391 = vadd.s32 %v359, 32
  %v392 = vsel %vm376, %v384, %v310
  %v393 = vsel %vm377, %v385, %v317
  %v394 = vsel %vm378, %v386, %v324
  %v395 = vsel %vm379, %v387, %v331
  %v396 = vsel %vm380, %v388, %v338
  %v397 = vsel %vm381, %v389, %v345
  %v398 = vsel %vm382, %v390, %v352
  %v399 = vsel %vm383, %v391, %v359
  %vm400 = vcmp.ne.s32.totalorder %v392, 0
  %vm401 = vcmp.ne.s32.totalorder %v393, 0
  %vm402 = vcmp.ne.s32.totalorder %v394, 0
  %vm403 = vcmp.ne.s32.totalorder %v395, 0
  %vm404 = vcmp.ne.s32.totalorder %v396, 0
  %vm405 = vcmp.ne.s32.totalorder %v397, 0
  %vm406 = vcmp.ne.s32.totalorder %v398, 0
  %vm407 = vcmp.ne.s32.totalorder %v399, 0
  %v408 = vsel %vm400, 1, 0
  %v409 = vsel %vm401, 1, 0
  %v410 = vsel %vm402, 1, 0
  %v411 = vsel %vm403, 1, 0
  %v412 = vsel %vm404, 1, 0
  %v413 = vsel %vm405, 1, 0
  %v414 = vsel %vm406, 1, 0
  %v415 = vsel %vm407, 1, 0
  %v416 = vcvt.s32.f32 %v408
  %v417 = vcvt.s32.f32 %v409
  %v418 = vcvt.s32.f32 %v410
  %v419 = vcvt.s32.f32 %v411
  %v420 = vcvt.s32.f32 %v412
  %v421 = vcvt.s32.f32 %v413
  %v422 = vcvt.s32.f32 %v414
  %v423 = vcvt.s32.f32 %v415
  %vm424 = vcmp.ne.s32.totalorder %v392, 31
  %vm425 = vcmp.ne.s32.totalorder %v393, 31
  %vm426 = vcmp.ne.s32.totalorder %v394, 31
  %vm427 = vcmp.ne.s32.totalorder %v395, 31
  %vm428 = vcmp.ne.s32.totalorder %v396, 31
  %vm429 = vcmp.ne.s32.totalorder %v397, 31
  %vm430 = vcmp.ne.s32.totalorder %v398, 31
  %vm431 = vcmp.ne.s32.totalorder %v399, 31
  %v432 = vsel %vm424, 1, 0
  %v433 = vsel %vm425, 1, 0
  %v434 = vsel %vm426, 1, 0
  %v435 = vsel %vm427, 1, 0
  %v436 = vsel %vm428, 1, 0
  %v437 = vsel %vm429, 1, 0
  %v438 = vsel %vm430, 1, 0
  %v439 = vsel %vm431, 1, 0
  %v440 = vcvt.s32.f32 %v432
  %v441 = vcvt.s32.f32 %v433
  %v442 = vcvt.s32.f32 %v434
  %v443 = vcvt.s32.f32 %v435
  %v444 = vcvt.s32.f32 %v436
  %v445 = vcvt.s32.f32 %v437
  %v446 = vcvt.s32.f32 %v438
  %v447 = vcvt.s32.f32 %v439
  %v448 = vrot.slane %v287, 7
  %v449 = vrot.slane %v288, 7
  %v450 = vrot.slane %v289, 7
  %v451 = vrot.slane %v290, 7
  %v452 = vrot.slane %v291, 7
  %v453 = vrot.slane %v292, 7
  %v454 = vrot.slane %v293, 7
  %v455 = vrot.slane %v294, 7
  %vm456 = vcmp.lt.s32.totalorder %v296, 1
  %v457 = vsel %vm456, %v454, %v455
  %v458 = vsel %vm456, %v453, %v454
  %v459 = vsel %vm456, %v452, %v453
  %v460 = vsel %vm456, %v451, %v452
  %v461 = vsel %vm456, %v450, %v451
  %v462 = vsel %vm456, %v449, %v450
  %v463 = vsel %vm456, %v448, %v449
  %v464 = vsel %vm456, %v455, %v448
  %v465 = vmul.f32 %v464, %v416
  %v466 = vmul.f32 %v463, %v417
  %v467 = vmul.f32 %v462, %v418
  %v468 = vmul.f32 %v461, %v419
  %v469 = vmul.f32 %v460, %v420
  %v470 = vmul.f32 %v459, %v421
  %v471 = vmul.f32 %v458, %v422
  %v472 = vmul.f32 %v457, %v423
  %v473 = vrot.slane %v287, 1
  %v474 = vrot.slane %v288, 1
  %v475 = vrot.slane %v289, 1
  %v476 = vrot.slane %v290, 1
  %v477 = vrot.slane %v291, 1
  %v478 = vrot.slane %v292, 1
  %v479 = vrot.slane %v293, 1
  %v480 = vrot.slane %v294, 1
  %vm481 = vcmp.lt.s32.totalorder %v296, 7
  %v482 = vsel %vm481, %v479, %v480
  %v483 = vsel %vm481, %v478, %v479
  %v484 = vsel %vm481, %v477, %v478
  %v485 = vsel %vm481, %v476, %v477
  %v486 = vsel %vm481, %v475, %v476
  %v487 = vsel %vm481, %v474, %v475
  %v488 = vsel %vm481, %v473, %v474
  %v489 = vsel %vm481, %v480, %v473
  %v490 = vmul.f32 %v488, %v440
  %v491 = vmul.f32 %v487, %v441
  %v492 = vmul.f32 %v486, %v442
  %v493 = vmul.f32 %v485, %v443
  %v494 = vmul.f32 %v484, %v444
  %v495 = vmul.f32 %v483, %v445
  %v496 = vmul.f32 %v482, %v446
  %v497 = vmul.f32 %v489, %v447
  %506 = vrot.lane.b32.xlu0 %v287, 32
  %v507 = vpop.permute.xlu0 %506
  %508 = vrot.lane.b32.xlu0 %v288, 32
  %v509 = vpop.permute.xlu0 %508
  %510 = vrot.lane.b32.xlu0 %v289, 32
  %v511 = vpop.permute.xlu0 %510
  %512 = vrot.lane.b32.xlu0 %v290, 32
  %v513 = vpop.permute.xlu0 %512
  %514 = vrot.lane.b32.xlu0 %v291, 32
  %v515 = vpop.permute.xlu0 %514
  %516 = vrot.lane.b32.xlu0 %v292, 32
  %v517 = vpop.permute.xlu0 %516
  %518 = vrot.lane.b32.xlu0 %v293, 32
  %v519 = vpop.permute.xlu0 %518
  %520 = vrot.lane.b32.xlu0 %v294, 32
  %v521 = vpop.permute.xlu0 %520
  %538 = vrot.lane.b32.xlu0 %v490, 64
  %v539 = vpop.permute.xlu0 %538
  %540 = vrot.lane.b32.xlu0 %v491, 64
  %v541 = vpop.permute.xlu0 %540
  %542 = vrot.lane.b32.xlu0 %v492, 64
  %v543 = vpop.permute.xlu0 %542
  %544 = vrot.lane.b32.xlu0 %v493, 64
  %v545 = vpop.permute.xlu0 %544
  %546 = vrot.lane.b32.xlu0 %v494, 64
  %v547 = vpop.permute.xlu0 %546
  %548 = vrot.lane.b32.xlu0 %v495, 64
  %v549 = vpop.permute.xlu0 %548
  %550 = vrot.lane.b32.xlu0 %v496, 64
  %v551 = vpop.permute.xlu0 %550
  %552 = vrot.lane.b32.xlu0 %v497, 64
  %v553 = vpop.permute.xlu0 %552
  %vm562 = vcmask 261120
  %v563 = vsel %vm562, %v465, %v507
  %v564 = vsel %vm562, %v466, %v509
  %v565 = vsel %vm562, %v467, %v511
  %v566 = vsel %vm562, %v468, %v513
  %v567 = vsel %vm562, %v469, %v515
  %v568 = vsel %vm562, %v470, %v517
  %v569 = vsel %vm562, %v471, %v519
  %v570 = vsel %vm562, %v472, %v521
  %vm571 = vcmask 523264
  %v572 = vsel %vm571, %v563, %v539
  %v573 = vsel %vm571, %v564, %v541
  %v574 = vsel %vm571, %v565, %v543
  %v575 = vsel %vm571, %v566, %v545
  %v576 = vsel %vm571, %v567, %v547
  %v577 = vsel %vm571, %v568, %v549
  %v578 = vsel %vm571, %v569, %v551
  %v579 = vsel %vm571, %v570, %v553
  %v580 = vld [vmem:[%s11] sm:$0xff]
  %v581 = vld [vmem:[%s11 + $0x8] sm:$0xff]
  %v582 = vld [vmem:[%s11 + $0x10] sm:$0xff]
  %v583 = vld [vmem:[%s11 + $0x18] sm:$0xff]
  %v584 = vld [vmem:[%s11 + $0x20] sm:$0xff]
  %v585 = vld [vmem:[%s11 + $0x28] sm:$0xff]
  %v586 = vld [vmem:[%s11 + $0x30] sm:$0xff]
  %v587 = vld [vmem:[%s11 + $0x38] sm:$0xff]
  %v588 = vld [vmem:[%s11 + $0x40] sm:$0xff]
  %v589 = vld [vmem:[%s11 + $0x48] sm:$0xff]
  %v590 = vld [vmem:[%s11 + $0x50] sm:$0xff]
  %v591 = vld [vmem:[%s11 + $0x58] sm:$0xff]
  %vm592 = vcmask 785408
  %v594 = vsel %vm592, %v572, 0
  %v597 = vsel %vm592, %v573, 0
  %v600 = vsel %vm592, %v574, 0
  %v603 = vsel %vm592, %v575, 0
  %v606 = vsel %vm592, %v576, 0
  %v609 = vsel %vm592, %v577, 0
  %v612 = vsel %vm592, %v578, 0
  %v615 = vsel %vm592, %v579, 0
  %617 = vmatprep.subr.mxu0 0.0
  %618 = vmatpush1.msra.mxu0 %v580
  %619 = vmatprep.subr.mxu0 0.0
  %620 = vmatpush1.msra.mxu0 %v581
  %621 = vmatprep.subr.mxu0 0.0
  %622 = vmatpush1.msra.mxu0 %v582
  %623 = vmatprep.subr.mxu0 0.0
  %624 = vmatpush1.msra.mxu0 %v583
  %625 = vmatprep.subr.mxu0 0.0
  %626 = vmatpush1.msra.mxu0 %v584
  %627 = vmatprep.subr.mxu0 0.0
  %628 = vmatpush1.msra.mxu0 %v585
  %629 = vmatprep.subr.mxu0 0.0
  %630 = vmatpush1.msra.mxu0 %v586
  %631 = vmatprep.subr.mxu0 0.0
  %632 = vmatpush1.msra.mxu0 %v587
  %633 = vmatprep.subr.mxu0 0.0
  %634 = vmatpush1.msra.mxu0 %v588
  %635 = vmatprep.subr.mxu0 0.0
  %636 = vmatpush1.msra.mxu0 %v589
  %637 = vmatprep.subr.mxu0 0.0
  %638 = vmatpush1.msra.mxu0 %v590
  %639 = vmatprep.subr.mxu0 0.0
  %640 = vmatpush1.msra.mxu0 %v591
  %641 = vmatprep.subr.mxu0 0.0
  %642 = vmatpush1.msra.mxu0 0.0
  %643 = vmatprep.subr.mxu0 0.0
  %644 = vmatpush1.msra.mxu0 0.0
  %645 = vmatprep.subr.mxu0 0.0
  %646 = vmatpush1.msra.mxu0 0.0
  %647 = vmatprep.subr.mxu0 0.0
  %648 = vmatpush1.msra.mxu0 0.0
  %649 = vmatprep.subr.mxu0 0.0
  %650 = vmatpush1.msra.mxu0 0.0
  %651 = vmatprep.subr.mxu0 0.0
  %652 = vmatpush1.msra.mxu0 0.0
  %653 = vmatprep.subr.mxu0 0.0
  %654 = vmatpush1.msra.mxu0 0.0
  %655 = vmatprep.subr.mxu0 0.0
  %656 = vmatpush1.msra.mxu0 0.0
  %657 = vmatprep.subr.mxu0 0.0
  %658 = vmatpush1.msra.mxu0 0.0
  %659 = vmatprep.subr.mxu0 0.0
  %660 = vmatpush1.msra.mxu0 0.0
  %661 = vmatprep.subr.mxu0 0.0
  %662 = vmatpush1.msra.mxu0 0.0
  %663 = vmatprep.subr.mxu0 0.0
  %664 = vmatpush1.msra.mxu0 0.0
  %665 = vmatprep.subr.mxu0 0.0
  %666 = vmatpush1.msra.mxu0 0.0
  %667 = vmatprep.subr.mxu0 0.0
  %668 = vmatpush1.msra.mxu0 0.0
  %669 = vmatprep.subr.mxu0 0.0
  %670 = vmatpush1.msra.mxu0 0.0
  %671 = vmatprep.subr.mxu0 0.0
  %672 = vmatpush1.msra.mxu0 0.0
  %673 = vmatprep.subr.mxu0 0.0
  %674 = vmatpush1.msra.mxu0 0.0
  %675 = vmatprep.subr.mxu0 0.0
  %676 = vmatpush1.msra.mxu0 0.0
  %677 = vmatprep.subr.mxu0 0.0
  %678 = vmatpush1.msra.mxu0 0.0
  %679 = vmatprep.subr.mxu0 0.0
  %680 = vmatpush1.msra.mxu0 0.0
  %681 = vmatprep.mubr.f32.mxu0 0.0
  %682 = vmatmul.mubr.f32.gmra.mrb[0].mxu0 %v594
  %v683 = vpop.f32.mrb[0].mxu0
  %v684 = vadd.f32 0.0, %v683
  %v685 = vpop.f32.mrb[0].mxu0
  %686 = vmatprep.mubr.f32.mxu0 0.0
  %687 = vmatmul.mubr.f32.gmra.mrb[0].mxu0 %v597
  %v688 = vpop.f32.mrb[0].mxu0
  %v689 = vadd.f32 0.0, %v688
  %v690 = vpop.f32.mrb[0].mxu0
  %691 = vmatprep.mubr.f32.mxu0 0.0
  %692 = vmatmul.mubr.f32.gmra.mrb[0].mxu0 %v600
  %v693 = vpop.f32.mrb[0].mxu0
  %v694 = vadd.f32 0.0, %v693
  %v695 = vpop.f32.mrb[0].mxu0
  %696 = vmatprep.mubr.f32.mxu0 0.0
  %697 = vmatmul.mubr.f32.gmra.mrb[0].mxu0 %v603
  %v698 = vpop.f32.mrb[0].mxu0
  %v699 = vadd.f32 0.0, %v698
  %v700 = vpop.f32.mrb[0].mxu0
  %701 = vmatprep.mubr.f32.mxu0 0.0
  %702 = vmatmul.mubr.f32.gmra.mrb[0].mxu0 %v606
  %v703 = vpop.f32.mrb[0].mxu0
  %v704 = vadd.f32 0.0, %v703
  %v705 = vpop.f32.mrb[0].mxu0
  %706 = vmatprep.mubr.f32.mxu0 0.0
  %707 = vmatmul.mubr.f32.gmra.mrb[0].mxu0 %v609
  %v708 = vpop.f32.mrb[0].mxu0
  %v709 = vadd.f32 0.0, %v708
  %v710 = vpop.f32.mrb[0].mxu0
  %711 = vmatprep.mubr.f32.mxu0 0.0
  %712 = vmatmul.mubr.f32.gmra.mrb[0].mxu0 %v612
  %v713 = vpop.f32.mrb[0].mxu0
  %v714 = vadd.f32 0.0, %v713
  %v715 = vpop.f32.mrb[0].mxu0
  %716 = vmatprep.mubr.f32.mxu0 0.0
  %717 = vmatmul.mubr.f32.gmra.mrb[0].mxu0 %v615
  %v718 = vpop.f32.mrb[0].mxu0
  %v719 = vadd.f32 0.0, %v718
  %v720 = vpop.f32.mrb[0].mxu0
  %721 = vdwg.mxu0
  %v722 = vmul.f32 %v684, %v250
  %v723 = vmul.f32 %v689, %v255
  %v724 = vmul.f32 %v694, %v260
  %v725 = vmul.f32 %v699, %v265
  %v726 = vmul.f32 %v704, %v270
  %v727 = vmul.f32 %v709, %v275
  %v728 = vmul.f32 %v714, %v280
  %v729 = vmul.f32 %v719, %v285
  %v730 = vld [vmem:[%s12] sm:$0x1]
  %v731 = vld [vmem:[%s13] sm:$0x1]
  %v732 = vsel %vm562, %v722, 0.0
  %733 = vadd.xlane.f32.xlu0 %v732
  %v734 = vpop.xlane.xlu0 %733
  %v735 = vsel %vm562, %v723, 0.0
  %736 = vadd.xlane.f32.xlu0 %v735
  %v737 = vpop.xlane.xlu0 %736
  %v738 = vsel %vm562, %v724, 0.0
  %739 = vadd.xlane.f32.xlu0 %v738
  %v740 = vpop.xlane.xlu0 %739
  %v741 = vsel %vm562, %v725, 0.0
  %742 = vadd.xlane.f32.xlu0 %v741
  %v743 = vpop.xlane.xlu0 %742
  %v744 = vsel %vm562, %v726, 0.0
  %745 = vadd.xlane.f32.xlu0 %v744
  %v746 = vpop.xlane.xlu0 %745
  %v747 = vsel %vm562, %v727, 0.0
  %748 = vadd.xlane.f32.xlu0 %v747
  %v749 = vpop.xlane.xlu0 %748
  %v750 = vsel %vm562, %v728, 0.0
  %751 = vadd.xlane.f32.xlu0 %v750
  %v752 = vpop.xlane.xlu0 %751
  %v753 = vsel %vm562, %v729, 0.0
  %754 = vadd.xlane.f32.xlu0 %v753
  %v755 = vpop.xlane.xlu0 %754
  %v756 = vrcp.pop 32.0
  %v757 = vmul.f32 %v734, %v756
  %v758 = vmul.f32 %v737, %v756
  %v759 = vmul.f32 %v740, %v756
  %v760 = vmul.f32 %v743, %v756
  %v761 = vmul.f32 %v746, %v756
  %v762 = vmul.f32 %v749, %v756
  %v763 = vmul.f32 %v752, %v756
  %v764 = vmul.f32 %v755, %v756
  %v765 = vsub.f32 %v722, %v757
  %v766 = vsub.f32 %v723, %v758
  %v767 = vsub.f32 %v724, %v759
  %v768 = vsub.f32 %v725, %v760
  %v769 = vsub.f32 %v726, %v761
  %v770 = vsub.f32 %v727, %v762
  %v771 = vsub.f32 %v728, %v763
  %v772 = vsub.f32 %v729, %v764
  %v773 = vmul.f32 %v765, %v765
  %v774 = vmul.f32 %v766, %v766
  %v775 = vmul.f32 %v767, %v767
  %v776 = vmul.f32 %v768, %v768
  %v777 = vmul.f32 %v769, %v769
  %v778 = vmul.f32 %v770, %v770
  %v779 = vmul.f32 %v771, %v771
  %v780 = vmul.f32 %v772, %v772
  %v781 = vsel %vm562, %v773, 0.0
  %782 = vadd.xlane.f32.xlu0 %v781
  %v783 = vpop.xlane.xlu0 %782
  %v784 = vsel %vm562, %v774, 0.0
  %785 = vadd.xlane.f32.xlu0 %v784
  %v786 = vpop.xlane.xlu0 %785
  %v787 = vsel %vm562, %v775, 0.0
  %788 = vadd.xlane.f32.xlu0 %v787
  %v789 = vpop.xlane.xlu0 %788
  %v790 = vsel %vm562, %v776, 0.0
  %791 = vadd.xlane.f32.xlu0 %v790
  %v792 = vpop.xlane.xlu0 %791
  %v793 = vsel %vm562, %v777, 0.0
  %794 = vadd.xlane.f32.xlu0 %v793
  %v795 = vpop.xlane.xlu0 %794
  %v796 = vsel %vm562, %v778, 0.0
  %797 = vadd.xlane.f32.xlu0 %v796
  %v798 = vpop.xlane.xlu0 %797
  %v799 = vsel %vm562, %v779, 0.0
  %800 = vadd.xlane.f32.xlu0 %v799
  %v801 = vpop.xlane.xlu0 %800
  %v802 = vsel %vm562, %v780, 0.0
  %803 = vadd.xlane.f32.xlu0 %v802
  %v804 = vpop.xlane.xlu0 %803
  %v805 = vmul.f32 %v783, %v756
  %v806 = vmul.f32 %v786, %v756
  %v807 = vmul.f32 %v789, %v756
  %v808 = vmul.f32 %v792, %v756
  %v809 = vmul.f32 %v795, %v756
  %v810 = vmul.f32 %v798, %v756
  %v811 = vmul.f32 %v801, %v756
  %v812 = vmul.f32 %v804, %v756
  %v813 = vadd.f32 %v805, 1e-05
  %v814 = vadd.f32 %v806, 1e-05
  %v815 = vadd.f32 %v807, 1e-05
  %v816 = vadd.f32 %v808, 1e-05
  %v817 = vadd.f32 %v809, 1e-05
  %v818 = vadd.f32 %v810, 1e-05
  %v819 = vadd.f32 %v811, 1e-05
  %v820 = vadd.f32 %v812, 1e-05
  %v821 = vrsqrt.pop %v813
  %v822 = vrsqrt.pop %v814
  %v823 = vrsqrt.pop %v815
  %v824 = vrsqrt.pop %v816
  %v825 = vrsqrt.pop %v817
  %v826 = vrsqrt.pop %v818
  %v827 = vrsqrt.pop %v819
  %v828 = vrsqrt.pop %v820
  %v829 = vmul.f32 %v765, %v821
  %v830 = vmul.f32 %v766, %v822
  %v831 = vmul.f32 %v767, %v823
  %v832 = vmul.f32 %v768, %v824
  %v833 = vmul.f32 %v769, %v825
  %v834 = vmul.f32 %v770, %v826
  %v835 = vmul.f32 %v771, %v827
  %v836 = vmul.f32 %v772, %v828
  %v838 = vlaneseq
  %v839 = vshrl.u32 %v838, 7
  %v840 = vsub.s32 0, %v839
  %v841 = vrot.slane %v730, %v840
  %v843 = vmul.f32 %v829, %v841
  %v844 = vmul.f32 %v830, %v841
  %v845 = vmul.f32 %v831, %v841
  %v846 = vmul.f32 %v832, %v841
  %v847 = vmul.f32 %v833, %v841
  %v848 = vmul.f32 %v834, %v841
  %v849 = vmul.f32 %v835, %v841
  %v850 = vmul.f32 %v836, %v841
  %v852 = vlaneseq
  %v853 = vshrl.u32 %v852, 7
  %v854 = vsub.s32 0, %v853
  %v855 = vrot.slane %v731, %v854
  %v857 = vadd.f32 %v843, %v855
  %v858 = vadd.f32 %v844, %v855
  %v859 = vadd.f32 %v845, %v855
  %v860 = vadd.f32 %v846, %v855
  %v861 = vadd.f32 %v847, %v855
  %v862 = vadd.f32 %v848, %v855
  %v863 = vadd.f32 %v849, %v855
  %v864 = vadd.f32 %v850, %v855
  %v865 = vmax.f32 %v857, 0.0
  %v866 = vmax.f32 %v858, 0.0
  %v867 = vmax.f32 %v859, 0.0
  %v868 = vmax.f32 %v860, 0.0
  %v869 = vmax.f32 %v861, 0.0
  %v870 = vmax.f32 %v862, 0.0
  %v871 = vmax.f32 %v863, 0.0
  %v872 = vmax.f32 %v864, 0.0
  %v873 = vrot.slane %v865, 7
  %v874 = vrot.slane %v866, 7
  %v875 = vrot.slane %v867, 7
  %v876 = vrot.slane %v868, 7
  %v877 = vrot.slane %v869, 7
  %v878 = vrot.slane %v870, 7
  %v879 = vrot.slane %v871, 7
  %v880 = vrot.slane %v872, 7
  %v881 = vsel %vm456, %v879, %v880
  %v882 = vsel %vm456, %v878, %v879
  %v883 = vsel %vm456, %v877, %v878
  %v884 = vsel %vm456, %v876, %v877
  %v885 = vsel %vm456, %v875, %v876
  %v886 = vsel %vm456, %v874, %v875
  %v887 = vsel %vm456, %v873, %v874
  %v888 = vsel %vm456, %v880, %v873
  %v889 = vmul.f32 %v888, %v416
  %v890 = vmul.f32 %v887, %v417
  %v891 = vmul.f32 %v886, %v418
  %v892 = vmul.f32 %v885, %v419
  %v893 = vmul.f32 %v884, %v420
  %v894 = vmul.f32 %v883, %v421
  %v895 = vmul.f32 %v882, %v422
  %v896 = vmul.f32 %v881, %v423
  %v897 = vrot.slane %v865, 1
  %v898 = vrot.slane %v866, 1
  %v899 = vrot.slane %v867, 1
  %v900 = vrot.slane %v868, 1
  %v901 = vrot.slane %v869, 1
  %v902 = vrot.slane %v870, 1
  %v903 = vrot.slane %v871, 1
  %v904 = vrot.slane %v872, 1
  %v905 = vsel %vm481, %v903, %v904
  %v906 = vsel %vm481, %v902, %v903
  %v907 = vsel %vm481, %v901, %v902
  %v908 = vsel %vm481, %v900, %v901
  %v909 = vsel %vm481, %v899, %v900
  %v910 = vsel %vm481, %v898, %v899
  %v911 = vsel %vm481, %v897, %v898
  %v912 = vsel %vm481, %v904, %v897
  %v913 = vmul.f32 %v911, %v440
  %v914 = vmul.f32 %v910, %v441
  %v915 = vmul.f32 %v909, %v442
  %v916 = vmul.f32 %v908, %v443
  %v917 = vmul.f32 %v907, %v444
  %v918 = vmul.f32 %v906, %v445
  %v919 = vmul.f32 %v905, %v446
  %v920 = vmul.f32 %v912, %v447
  %929 = vrot.lane.b32.xlu0 %v865, 32
  %v930 = vpop.permute.xlu0 %929
  %931 = vrot.lane.b32.xlu0 %v866, 32
  %v932 = vpop.permute.xlu0 %931
  %933 = vrot.lane.b32.xlu0 %v867, 32
  %v934 = vpop.permute.xlu0 %933
  %935 = vrot.lane.b32.xlu0 %v868, 32
  %v936 = vpop.permute.xlu0 %935
  %937 = vrot.lane.b32.xlu0 %v869, 32
  %v938 = vpop.permute.xlu0 %937
  %939 = vrot.lane.b32.xlu0 %v870, 32
  %v940 = vpop.permute.xlu0 %939
  %941 = vrot.lane.b32.xlu0 %v871, 32
  %v942 = vpop.permute.xlu0 %941
  %943 = vrot.lane.b32.xlu0 %v872, 32
  %v944 = vpop.permute.xlu0 %943
  %961 = vrot.lane.b32.xlu0 %v913, 64
  %v962 = vpop.permute.xlu0 %961
  %963 = vrot.lane.b32.xlu0 %v914, 64
  %v964 = vpop.permute.xlu0 %963
  %965 = vrot.lane.b32.xlu0 %v915, 64
  %v966 = vpop.permute.xlu0 %965
  %967 = vrot.lane.b32.xlu0 %v916, 64
  %v968 = vpop.permute.xlu0 %967
  %969 = vrot.lane.b32.xlu0 %v917, 64
  %v970 = vpop.permute.xlu0 %969
  %971 = vrot.lane.b32.xlu0 %v918, 64
  %v972 = vpop.permute.xlu0 %971
  %973 = vrot.lane.b32.xlu0 %v919, 64
  %v974 = vpop.permute.xlu0 %973
  %975 = vrot.lane.b32.xlu0 %v920, 64
  %v976 = vpop.permute.xlu0 %975
  %v985 = vsel %vm562, %v889, %v930
  %v986 = vsel %vm562, %v890, %v932
  %v987 = vsel %vm562, %v891, %v934
  %v988 = vsel %vm562, %v892, %v936
  %v989 = vsel %vm562, %v893, %v938
  %v990 = vsel %vm562, %v894, %v940
  %v991 = vsel %vm562, %v895, %v942
  %v992 = vsel %vm562, %v896, %v944
  %v993 = vsel %vm571, %v985, %v962
  %v994 = vsel %vm571, %v986, %v964
  %v995 = vsel %vm571, %v987, %v966
  %v996 = vsel %vm571, %v988, %v968
  %v997 = vsel %vm571, %v989, %v970
  %v998 = vsel %vm571, %v990, %v972
  %v999 = vsel %vm571, %v991, %v974
  %v1000 = vsel %vm571, %v992, %v976
  %s1001 = scalar_lea.vmem %s11, 96
  %v1002 = vld [vmem:[%s1001] sm:$0xff]
  %v1003 = vld [vmem:[%s1001 + $0x8] sm:$0xff]
  %v1004 = vld [vmem:[%s1001 + $0x10] sm:$0xff]
  %v1005 = vld [vmem:[%s1001 + $0x18] sm:$0xff]
  %v1006 = vld [vmem:[%s1001 + $0x20] sm:$0xff]
  %v1007 = vld [vmem:[%s1001 + $0x28] sm:$0xff]
  %v1008 = vld [vmem:[%s1001 + $0x30] sm:$0xff]
  %v1009 = vld [vmem:[%s1001 + $0x38] sm:$0xff]
  %v1010 = vld [vmem:[%s1001 + $0x40] sm:$0xff]
  %v1011 = vld [vmem:[%s1001 + $0x48] sm:$0xff]
  %v1012 = vld [vmem:[%s1001 + $0x50] sm:$0xff]
  %v1013 = vld [vmem:[%s1001 + $0x58] sm:$0xff]
  %v1015 = vsel %vm592, %v993, 0
  %v1018 = vsel %vm592, %v994, 0
  %v1021 = vsel %vm592, %v995, 0
  %v1024 = vsel %vm592, %v996, 0
  %v1027 = vsel %vm592, %v997, 0
  %v1030 = vsel %vm592, %v998, 0
  %v1033 = vsel %vm592, %v999, 0
  %v1036 = vsel %vm592, %v1000, 0
  %1038 = vmatprep.subr.mxu0 0.0
  %1039 = vmatpush1.msra.mxu0 %v1002
  %1040 = vmatprep.subr.mxu0 0.0
  %1041 = vmatpush1.msra.mxu0 %v1003
  %1042 = vmatprep.subr.mxu0 0.0
  %1043 = vmatpush1.msra.mxu0 %v1004
  %1044 = vmatprep.subr.mxu0 0.0
  %1045 = vmatpush1.msra.mxu0 %v1005
  %1046 = vmatprep.subr.mxu0 0.0
  %1047 = vmatpush1.msra.mxu0 %v1006
  %1048 = vmatprep.subr.mxu0 0.0
  %1049 = vmatpush1.msra.mxu0 %v1007
  %1050 = vmatprep.subr.mxu0 0.0
  %1051 = vmatpush1.msra.mxu0 %v1008
  %1052 = vmatprep.subr.mxu0 0.0
  %1053 = vmatpush1.msra.mxu0 %v1009
  %1054 = vmatprep.subr.mxu0 0.0
  %1055 = vmatpush1.msra.mxu0 %v1010
  %1056 = vmatprep.subr.mxu0 0.0
  %1057 = vmatpush1.msra.mxu0 %v1011
  %1058 = vmatprep.subr.mxu0 0.0
  %1059 = vmatpush1.msra.mxu0 %v1012
  %1060 = vmatprep.subr.mxu0 0.0
  %1061 = vmatpush1.msra.mxu0 %v1013
  %1062 = vmatprep.subr.mxu0 0.0
  %1063 = vmatpush1.msra.mxu0 0.0
  %1064 = vmatprep.subr.mxu0 0.0
  %1065 = vmatpush1.msra.mxu0 0.0
  %1066 = vmatprep.subr.mxu0 0.0
  %1067 = vmatpush1.msra.mxu0 0.0
  %1068 = vmatprep.subr.mxu0 0.0
  %1069 = vmatpush1.msra.mxu0 0.0
  %1070 = vmatprep.subr.mxu0 0.0
  %1071 = vmatpush1.msra.mxu0 0.0
  %1072 = vmatprep.subr.mxu0 0.0
  %1073 = vmatpush1.msra.mxu0 0.0
  %1074 = vmatprep.subr.mxu0 0.0
  %1075 = vmatpush1.msra.mxu0 0.0
  %1076 = vmatprep.subr.mxu0 0.0
  %1077 = vmatpush1.msra.mxu0 0.0
  %1078 = vmatprep.subr.mxu0 0.0
  %1079 = vmatpush1.msra.mxu0 0.0
  %1080 = vmatprep.subr.mxu0 0.0
  %1081 = vmatpush1.msra.mxu0 0.0
  %1082 = vmatprep.subr.mxu0 0.0
  %1083 = vmatpush1.msra.mxu0 0.0
  %1084 = vmatprep.subr.mxu0 0.0
  %1085 = vmatpush1.msra.mxu0 0.0
  %1086 = vmatprep.subr.mxu0 0.0
  %1087 = vmatpush1.msra.mxu0 0.0
  %1088 = vmatprep.subr.mxu0 0.0
  %1089 = vmatpush1.msra.mxu0 0.0
  %1090 = vmatprep.subr.mxu0 0.0
  %1091 = vmatpush1.msra.mxu0 0.0
  %1092 = vmatprep.subr.mxu0 0.0
  %1093 = vmatpush1.msra.mxu0 0.0
  %1094 = vmatprep.subr.mxu0 0.0
  %1095 = vmatpush1.msra.mxu0 0.0
  %1096 = vmatprep.subr.mxu0 0.0
  %1097 = vmatpush1.msra.mxu0 0.0
  %1098 = vmatprep.subr.mxu0 0.0
  %1099 = vmatpush1.msra.mxu0 0.0
  %1100 = vmatprep.subr.mxu0 0.0
  %1101 = vmatpush1.msra.mxu0 0.0
  %1102 = vmatprep.mubr.f32.mxu0 0.0
  %1103 = vmatmul.mubr.f32.gmra.mrb[0].mxu0 %v1015
  %v1104 = vpop.f32.mrb[0].mxu0
  %v1105 = vadd.f32 0.0, %v1104
  %v1106 = vpop.f32.mrb[0].mxu0
  %1107 = vmatprep.mubr.f32.mxu0 0.0
  %1108 = vmatmul.mubr.f32.gmra.mrb[0].mxu0 %v1018
  %v1109 = vpop.f32.mrb[0].mxu0
  %v1110 = vadd.f32 0.0, %v1109
  %v1111 = vpop.f32.mrb[0].mxu0
  %1112 = vmatprep.mubr.f32.mxu0 0.0
  %1113 = vmatmul.mubr.f32.gmra.mrb[0].mxu0 %v1021
  %v1114 = vpop.f32.mrb[0].mxu0
  %v1115 = vadd.f32 0.0, %v1114
  %v1116 = vpop.f32.mrb[0].mxu0
  %1117 = vmatprep.mubr.f32.mxu0 0.0
  %1118 = vmatmul.mubr.f32.gmra.mrb[0].mxu0 %v1024
  %v1119 = vpop.f32.mrb[0].mxu0
  %v1120 = vadd.f32 0.0, %v1119
  %v1121 = vpop.f32.mrb[0].mxu0
  %1122 = vmatprep.mubr.f32.mxu0 0.0
  %1123 = vmatmul.mubr.f32.gmra.mrb[0].mxu0 %v1027
  %v1124 = vpop.f32.mrb[0].mxu0
  %v1125 = vadd.f32 0.0, %v1124
  %v1126 = vpop.f32.mrb[0].mxu0
  %1127 = vmatprep.mubr.f32.mxu0 0.0
  %1128 = vmatmul.mubr.f32.gmra.mrb[0].mxu0 %v1030
  %v1129 = vpop.f32.mrb[0].mxu0
  %v1130 = vadd.f32 0.0, %v1129
  %v1131 = vpop.f32.mrb[0].mxu0
  %1132 = vmatprep.mubr.f32.mxu0 0.0
  %1133 = vmatmul.mubr.f32.gmra.mrb[0].mxu0 %v1033
  %v1134 = vpop.f32.mrb[0].mxu0
  %v1135 = vadd.f32 0.0, %v1134
  %v1136 = vpop.f32.mrb[0].mxu0
  %1137 = vmatprep.mubr.f32.mxu0 0.0
  %1138 = vmatmul.mubr.f32.gmra.mrb[0].mxu0 %v1036
  %v1139 = vpop.f32.mrb[0].mxu0
  %v1140 = vadd.f32 0.0, %v1139
  %v1141 = vpop.f32.mrb[0].mxu0
  %1142 = vdwg.mxu0
  %v1143 = vmul.f32 %v1105, %v250
  %v1144 = vmul.f32 %v1110, %v255
  %v1145 = vmul.f32 %v1115, %v260
  %v1146 = vmul.f32 %v1120, %v265
  %v1147 = vmul.f32 %v1125, %v270
  %v1148 = vmul.f32 %v1130, %v275
  %v1149 = vmul.f32 %v1135, %v280
  %v1150 = vmul.f32 %v1140, %v285
  %s1151 = scalar_lea.vmem %s12, 1
  %v1152 = vld [vmem:[%s1151] sm:$0x1]
  %s1153 = scalar_lea.vmem %s13, 1
  %v1154 = vld [vmem:[%s1153] sm:$0x1]
  %v1155 = vsel %vm562, %v1143, 0.0
  %1156 = vadd.xlane.f32.xlu0 %v1155
  %v1157 = vpop.xlane.xlu0 %1156
  %v1158 = vsel %vm562, %v1144, 0.0
  %1159 = vadd.xlane.f32.xlu0 %v1158
  %v1160 = vpop.xlane.xlu0 %1159
  %v1161 = vsel %vm562, %v1145, 0.0
  %1162 = vadd.xlane.f32.xlu0 %v1161
  %v1163 = vpop.xlane.xlu0 %1162
  %v1164 = vsel %vm562, %v1146, 0.0
  %1165 = vadd.xlane.f32.xlu0 %v1164
  %v1166 = vpop.xlane.xlu0 %1165
  %v1167 = vsel %vm562, %v1147, 0.0
  %1168 = vadd.xlane.f32.xlu0 %v1167
  %v1169 = vpop.xlane.xlu0 %1168
  %v1170 = vsel %vm562, %v1148, 0.0
  %1171 = vadd.xlane.f32.xlu0 %v1170
  %v1172 = vpop.xlane.xlu0 %1171
  %v1173 = vsel %vm562, %v1149, 0.0
  %1174 = vadd.xlane.f32.xlu0 %v1173
  %v1175 = vpop.xlane.xlu0 %1174
  %v1176 = vsel %vm562, %v1150, 0.0
  %1177 = vadd.xlane.f32.xlu0 %v1176
  %v1178 = vpop.xlane.xlu0 %1177
  %v1179 = vmul.f32 %v1157, %v756
  %v1180 = vmul.f32 %v1160, %v756
  %v1181 = vmul.f32 %v1163, %v756
  %v1182 = vmul.f32 %v1166, %v756
  %v1183 = vmul.f32 %v1169, %v756
  %v1184 = vmul.f32 %v1172, %v756
  %v1185 = vmul.f32 %v1175, %v756
  %v1186 = vmul.f32 %v1178, %v756
  %v1187 = vsub.f32 %v1143, %v1179
  %v1188 = vsub.f32 %v1144, %v1180
  %v1189 = vsub.f32 %v1145, %v1181
  %v1190 = vsub.f32 %v1146, %v1182
  %v1191 = vsub.f32 %v1147, %v1183
  %v1192 = vsub.f32 %v1148, %v1184
  %v1193 = vsub.f32 %v1149, %v1185
  %v1194 = vsub.f32 %v1150, %v1186
  %v1195 = vmul.f32 %v1187, %v1187
  %v1196 = vmul.f32 %v1188, %v1188
  %v1197 = vmul.f32 %v1189, %v1189
  %v1198 = vmul.f32 %v1190, %v1190
  %v1199 = vmul.f32 %v1191, %v1191
  %v1200 = vmul.f32 %v1192, %v1192
  %v1201 = vmul.f32 %v1193, %v1193
  %v1202 = vmul.f32 %v1194, %v1194
  %v1203 = vsel %vm562, %v1195, 0.0
  %1204 = vadd.xlane.f32.xlu0 %v1203
  %v1205 = vpop.xlane.xlu0 %1204
  %v1206 = vsel %vm562, %v1196, 0.0
  %1207 = vadd.xlane.f32.xlu0 %v1206
  %v1208 = vpop.xlane.xlu0 %1207
  %v1209 = vsel %vm562, %v1197, 0.0
  %1210 = vadd.xlane.f32.xlu0 %v1209
  %v1211 = vpop.xlane.xlu0 %1210
  %v1212 = vsel %vm562, %v1198, 0.0
  %1213 = vadd.xlane.f32.xlu0 %v1212
  %v1214 = vpop.xlane.xlu0 %1213
  %v1215 = vsel %vm562, %v1199, 0.0
  %1216 = vadd.xlane.f32.xlu0 %v1215
  %v1217 = vpop.xlane.xlu0 %1216
  %v1218 = vsel %vm562, %v1200, 0.0
  %1219 = vadd.xlane.f32.xlu0 %v1218
  %v1220 = vpop.xlane.xlu0 %1219
  %v1221 = vsel %vm562, %v1201, 0.0
  %1222 = vadd.xlane.f32.xlu0 %v1221
  %v1223 = vpop.xlane.xlu0 %1222
  %v1224 = vsel %vm562, %v1202, 0.0
  %1225 = vadd.xlane.f32.xlu0 %v1224
  %v1226 = vpop.xlane.xlu0 %1225
  %v1227 = vmul.f32 %v1205, %v756
  %v1228 = vmul.f32 %v1208, %v756
  %v1229 = vmul.f32 %v1211, %v756
  %v1230 = vmul.f32 %v1214, %v756
  %v1231 = vmul.f32 %v1217, %v756
  %v1232 = vmul.f32 %v1220, %v756
  %v1233 = vmul.f32 %v1223, %v756
  %v1234 = vmul.f32 %v1226, %v756
  %v1235 = vadd.f32 %v1227, 1e-05
  %v1236 = vadd.f32 %v1228, 1e-05
  %v1237 = vadd.f32 %v1229, 1e-05
  %v1238 = vadd.f32 %v1230, 1e-05
  %v1239 = vadd.f32 %v1231, 1e-05
  %v1240 = vadd.f32 %v1232, 1e-05
  %v1241 = vadd.f32 %v1233, 1e-05
  %v1242 = vadd.f32 %v1234, 1e-05
  %v1243 = vrsqrt.pop %v1235
  %v1244 = vrsqrt.pop %v1236
  %v1245 = vrsqrt.pop %v1237
  %v1246 = vrsqrt.pop %v1238
  %v1247 = vrsqrt.pop %v1239
  %v1248 = vrsqrt.pop %v1240
  %v1249 = vrsqrt.pop %v1241
  %v1250 = vrsqrt.pop %v1242
  %v1251 = vmul.f32 %v1187, %v1243
  %v1252 = vmul.f32 %v1188, %v1244
  %v1253 = vmul.f32 %v1189, %v1245
  %v1254 = vmul.f32 %v1190, %v1246
  %v1255 = vmul.f32 %v1191, %v1247
  %v1256 = vmul.f32 %v1192, %v1248
  %v1257 = vmul.f32 %v1193, %v1249
  %v1258 = vmul.f32 %v1194, %v1250
  %v1260 = vlaneseq
  %v1261 = vshrl.u32 %v1260, 7
  %v1262 = vsub.s32 0, %v1261
  %v1263 = vrot.slane %v1152, %v1262
  %v1265 = vmul.f32 %v1251, %v1263
  %v1266 = vmul.f32 %v1252, %v1263
  %v1267 = vmul.f32 %v1253, %v1263
  %v1268 = vmul.f32 %v1254, %v1263
  %v1269 = vmul.f32 %v1255, %v1263
  %v1270 = vmul.f32 %v1256, %v1263
  %v1271 = vmul.f32 %v1257, %v1263
  %v1272 = vmul.f32 %v1258, %v1263
  %v1274 = vlaneseq
  %v1275 = vshrl.u32 %v1274, 7
  %v1276 = vsub.s32 0, %v1275
  %v1277 = vrot.slane %v1154, %v1276
  %v1279 = vadd.f32 %v1265, %v1277
  %v1280 = vadd.f32 %v1266, %v1277
  %v1281 = vadd.f32 %v1267, %v1277
  %v1282 = vadd.f32 %v1268, %v1277
  %v1283 = vadd.f32 %v1269, %v1277
  %v1284 = vadd.f32 %v1270, %v1277
  %v1285 = vadd.f32 %v1271, %v1277
  %v1286 = vadd.f32 %v1272, %v1277
  %v1287 = vmax.f32 %v1279, 0.0
  %v1288 = vmax.f32 %v1280, 0.0
  %v1289 = vmax.f32 %v1281, 0.0
  %v1290 = vmax.f32 %v1282, 0.0
  %v1291 = vmax.f32 %v1283, 0.0
  %v1292 = vmax.f32 %v1284, 0.0
  %v1293 = vmax.f32 %v1285, 0.0
  %v1294 = vmax.f32 %v1286, 0.0
  %v1295 = vld [vmem:[%s14] sm:$0x1]
  %v1296 = vld [vmem:[%s15] sm:$0x1]
  %v1297 = vsel %vm562, %v1287, 0.0
  %1298 = vadd.xlane.f32.xlu0 %v1297
  %v1299 = vpop.xlane.xlu0 %1298
  %v1300 = vsel %vm562, %v1288, 0.0
  %1301 = vadd.xlane.f32.xlu0 %v1300
  %v1302 = vpop.xlane.xlu0 %1301
  %v1303 = vsel %vm562, %v1289, 0.0
  %1304 = vadd.xlane.f32.xlu0 %v1303
  %v1305 = vpop.xlane.xlu0 %1304
  %v1306 = vsel %vm562, %v1290, 0.0
  %1307 = vadd.xlane.f32.xlu0 %v1306
  %v1308 = vpop.xlane.xlu0 %1307
  %v1309 = vsel %vm562, %v1291, 0.0
  %1310 = vadd.xlane.f32.xlu0 %v1309
  %v1311 = vpop.xlane.xlu0 %1310
  %v1312 = vsel %vm562, %v1292, 0.0
  %1313 = vadd.xlane.f32.xlu0 %v1312
  %v1314 = vpop.xlane.xlu0 %1313
  %v1315 = vsel %vm562, %v1293, 0.0
  %1316 = vadd.xlane.f32.xlu0 %v1315
  %v1317 = vpop.xlane.xlu0 %1316
  %v1318 = vsel %vm562, %v1294, 0.0
  %1319 = vadd.xlane.f32.xlu0 %v1318
  %v1320 = vpop.xlane.xlu0 %1319
  %v1321 = vmul.f32 %v1299, %v756
  %v1322 = vmul.f32 %v1302, %v756
  %v1323 = vmul.f32 %v1305, %v756
  %v1324 = vmul.f32 %v1308, %v756
  %v1325 = vmul.f32 %v1311, %v756
  %v1326 = vmul.f32 %v1314, %v756
  %v1327 = vmul.f32 %v1317, %v756
  %v1328 = vmul.f32 %v1320, %v756
  %v1329 = vsub.f32 %v1287, %v1321
  %v1330 = vsub.f32 %v1288, %v1322
  %v1331 = vsub.f32 %v1289, %v1323
  %v1332 = vsub.f32 %v1290, %v1324
  %v1333 = vsub.f32 %v1291, %v1325
  %v1334 = vsub.f32 %v1292, %v1326
  %v1335 = vsub.f32 %v1293, %v1327
  %v1336 = vsub.f32 %v1294, %v1328
  %v1337 = vmul.f32 %v1329, %v1329
  %v1338 = vmul.f32 %v1330, %v1330
  %v1339 = vmul.f32 %v1331, %v1331
  %v1340 = vmul.f32 %v1332, %v1332
  %v1341 = vmul.f32 %v1333, %v1333
  %v1342 = vmul.f32 %v1334, %v1334
  %v1343 = vmul.f32 %v1335, %v1335
  %v1344 = vmul.f32 %v1336, %v1336
  %v1345 = vsel %vm562, %v1337, 0.0
  %1346 = vadd.xlane.f32.xlu0 %v1345
  %v1347 = vpop.xlane.xlu0 %1346
  %v1348 = vsel %vm562, %v1338, 0.0
  %1349 = vadd.xlane.f32.xlu0 %v1348
  %v1350 = vpop.xlane.xlu0 %1349
  %v1351 = vsel %vm562, %v1339, 0.0
  %1352 = vadd.xlane.f32.xlu0 %v1351
  %v1353 = vpop.xlane.xlu0 %1352
  %v1354 = vsel %vm562, %v1340, 0.0
  %1355 = vadd.xlane.f32.xlu0 %v1354
  %v1356 = vpop.xlane.xlu0 %1355
  %v1357 = vsel %vm562, %v1341, 0.0
  %1358 = vadd.xlane.f32.xlu0 %v1357
  %v1359 = vpop.xlane.xlu0 %1358
  %v1360 = vsel %vm562, %v1342, 0.0
  %1361 = vadd.xlane.f32.xlu0 %v1360
  %v1362 = vpop.xlane.xlu0 %1361
  %v1363 = vsel %vm562, %v1343, 0.0
  %1364 = vadd.xlane.f32.xlu0 %v1363
  %v1365 = vpop.xlane.xlu0 %1364
  %v1366 = vsel %vm562, %v1344, 0.0
  %1367 = vadd.xlane.f32.xlu0 %v1366
  %v1368 = vpop.xlane.xlu0 %1367
  %v1369 = vmul.f32 %v1347, %v756
  %v1370 = vmul.f32 %v1350, %v756
  %v1371 = vmul.f32 %v1353, %v756
  %v1372 = vmul.f32 %v1356, %v756
  %v1373 = vmul.f32 %v1359, %v756
  %v1374 = vmul.f32 %v1362, %v756
  %v1375 = vmul.f32 %v1365, %v756
  %v1376 = vmul.f32 %v1368, %v756
  %v1377 = vadd.f32 %v1369, 1e-05
  %v1378 = vadd.f32 %v1370, 1e-05
  %v1379 = vadd.f32 %v1371, 1e-05
  %v1380 = vadd.f32 %v1372, 1e-05
  %v1381 = vadd.f32 %v1373, 1e-05
  %v1382 = vadd.f32 %v1374, 1e-05
  %v1383 = vadd.f32 %v1375, 1e-05
  %v1384 = vadd.f32 %v1376, 1e-05
  %v1385 = vrsqrt.pop %v1377
  %v1386 = vrsqrt.pop %v1378
  %v1387 = vrsqrt.pop %v1379
  %v1388 = vrsqrt.pop %v1380
  %v1389 = vrsqrt.pop %v1381
  %v1390 = vrsqrt.pop %v1382
  %v1391 = vrsqrt.pop %v1383
  %v1392 = vrsqrt.pop %v1384
  %v1393 = vmul.f32 %v1329, %v1385
  %v1394 = vmul.f32 %v1330, %v1386
  %v1395 = vmul.f32 %v1331, %v1387
  %v1396 = vmul.f32 %v1332, %v1388
  %v1397 = vmul.f32 %v1333, %v1389
  %v1398 = vmul.f32 %v1334, %v1390
  %v1399 = vmul.f32 %v1335, %v1391
  %v1400 = vmul.f32 %v1336, %v1392
  %v1402 = vlaneseq
  %v1403 = vshrl.u32 %v1402, 7
  %v1404 = vsub.s32 0, %v1403
  %v1405 = vrot.slane %v1295, %v1404
  %v1407 = vmul.f32 %v1393, %v1405
  %v1408 = vmul.f32 %v1394, %v1405
  %v1409 = vmul.f32 %v1395, %v1405
  %v1410 = vmul.f32 %v1396, %v1405
  %v1411 = vmul.f32 %v1397, %v1405
  %v1412 = vmul.f32 %v1398, %v1405
  %v1413 = vmul.f32 %v1399, %v1405
  %v1414 = vmul.f32 %v1400, %v1405
  %v1416 = vlaneseq
  %v1417 = vshrl.u32 %v1416, 7
  %v1418 = vsub.s32 0, %v1417
  %v1419 = vrot.slane %v1296, %v1418
  %v1421 = vadd.f32 %v1407, %v1419
  %v1422 = vadd.f32 %v1408, %v1419
  %v1423 = vadd.f32 %v1409, %v1419
  %v1424 = vadd.f32 %v1410, %v1419
  %v1425 = vadd.f32 %v1411, %v1419
  %v1426 = vadd.f32 %v1412, %v1419
  %v1427 = vadd.f32 %v1413, %v1419
  %v1428 = vadd.f32 %v1414, %v1419
  %v1429 = vld [vmem:[%s16] sm:$0xff]
  %v1430 = vld [vmem:[%s16 + $0x8] sm:$0xff]
  %v1431 = vld [vmem:[%s16 + $0x10] sm:$0xff]
  %v1432 = vld [vmem:[%s16 + $0x18] sm:$0xff]
  %v1433 = vld [vmem:[%s17] sm:$0x1]
  %v1435 = vlaneseq
  %v1436 = vshrl.u32 %v1435, 7
  %v1437 = vsub.s32 0, %v1436
  %v1438 = vrot.slane %v1433, %v1437
  %v1441 = vsel %vm562, %v1421, 0
  %v1444 = vsel %vm562, %v1422, 0
  %v1447 = vsel %vm562, %v1423, 0
  %v1450 = vsel %vm562, %v1424, 0
  %v1453 = vsel %vm562, %v1425, 0
  %v1456 = vsel %vm562, %v1426, 0
  %v1459 = vsel %vm562, %v1427, 0
  %v1462 = vsel %vm562, %v1428, 0
  %1464 = vmatprep.subr.mxu0 0.0
  %1465 = vmatpush1.msra.mxu0 %v1429
  %1466 = vmatprep.subr.mxu0 0.0
  %1467 = vmatpush1.msra.mxu0 %v1430
  %1468 = vmatprep.subr.mxu0 0.0
  %1469 = vmatpush1.msra.mxu0 %v1431
  %1470 = vmatprep.subr.mxu0 0.0
  %1471 = vmatpush1.msra.mxu0 %v1432
  %1472 = vmatprep.subr.mxu0 0.0
  %1473 = vmatpush1.msra.mxu0 0.0
  %1474 = vmatprep.subr.mxu0 0.0
  %1475 = vmatpush1.msra.mxu0 0.0
  %1476 = vmatprep.subr.mxu0 0.0
  %1477 = vmatpush1.msra.mxu0 0.0
  %1478 = vmatprep.subr.mxu0 0.0
  %1479 = vmatpush1.msra.mxu0 0.0
  %1480 = vmatprep.subr.mxu0 0.0
  %1481 = vmatpush1.msra.mxu0 0.0
  %1482 = vmatprep.subr.mxu0 0.0
  %1483 = vmatpush1.msra.mxu0 0.0
  %1484 = vmatprep.subr.mxu0 0.0
  %1485 = vmatpush1.msra.mxu0 0.0
  %1486 = vmatprep.subr.mxu0 0.0
  %1487 = vmatpush1.msra.mxu0 0.0
  %1488 = vmatprep.subr.mxu0 0.0
  %1489 = vmatpush1.msra.mxu0 0.0
  %1490 = vmatprep.subr.mxu0 0.0
  %1491 = vmatpush1.msra.mxu0 0.0
  %1492 = vmatprep.subr.mxu0 0.0
  %1493 = vmatpush1.msra.mxu0 0.0
  %1494 = vmatprep.subr.mxu0 0.0
  %1495 = vmatpush1.msra.mxu0 0.0
  %1496 = vmatprep.subr.mxu0 0.0
  %1497 = vmatpush1.msra.mxu0 0.0
  %1498 = vmatprep.subr.mxu0 0.0
  %1499 = vmatpush1.msra.mxu0 0.0
  %1500 = vmatprep.subr.mxu0 0.0
  %1501 = vmatpush1.msra.mxu0 0.0
  %1502 = vmatprep.subr.mxu0 0.0
  %1503 = vmatpush1.msra.mxu0 0.0
  %1504 = vmatprep.subr.mxu0 0.0
  %1505 = vmatpush1.msra.mxu0 0.0
  %1506 = vmatprep.subr.mxu0 0.0
  %1507 = vmatpush1.msra.mxu0 0.0
  %1508 = vmatprep.subr.mxu0 0.0
  %1509 = vmatpush1.msra.mxu0 0.0
  %1510 = vmatprep.subr.mxu0 0.0
  %1511 = vmatpush1.msra.mxu0 0.0
  %1512 = vmatprep.subr.mxu0 0.0
  %1513 = vmatpush1.msra.mxu0 0.0
  %1514 = vmatprep.subr.mxu0 0.0
  %1515 = vmatpush1.msra.mxu0 0.0
  %1516 = vmatprep.subr.mxu0 0.0
  %1517 = vmatpush1.msra.mxu0 0.0
  %1518 = vmatprep.subr.mxu0 0.0
  %1519 = vmatpush1.msra.mxu0 0.0
  %1520 = vmatprep.subr.mxu0 0.0
  %1521 = vmatpush1.msra.mxu0 0.0
  %1522 = vmatprep.subr.mxu0 0.0
  %1523 = vmatpush1.msra.mxu0 0.0
  %1524 = vmatprep.subr.mxu0 0.0
  %1525 = vmatpush1.msra.mxu0 0.0
  %1526 = vmatprep.subr.mxu0 0.0
  %1527 = vmatpush1.msra.mxu0 0.0
  %1528 = vmatprep.mubr.f32.mxu0 0.0
  %1529 = vmatmul.mubr.f32.gmra.mrb[0].mxu0 %v1441
  %v1530 = vpop.f32.mrb[0].mxu0
  %v1531 = vadd.f32 %v1438, %v1530
  %v1532 = vpop.f32.mrb[0].mxu0
  %1533 = vmatprep.mubr.f32.mxu0 0.0
  %1534 = vmatmul.mubr.f32.gmra.mrb[0].mxu0 %v1444
  %v1535 = vpop.f32.mrb[0].mxu0
  %v1536 = vadd.f32 %v1438, %v1535
  %v1537 = vpop.f32.mrb[0].mxu0
  %1538 = vmatprep.mubr.f32.mxu0 0.0
  %1539 = vmatmul.mubr.f32.gmra.mrb[0].mxu0 %v1447
  %v1540 = vpop.f32.mrb[0].mxu0
  %v1541 = vadd.f32 %v1438, %v1540
  %v1542 = vpop.f32.mrb[0].mxu0
  %1543 = vmatprep.mubr.f32.mxu0 0.0
  %1544 = vmatmul.mubr.f32.gmra.mrb[0].mxu0 %v1450
  %v1545 = vpop.f32.mrb[0].mxu0
  %v1546 = vadd.f32 %v1438, %v1545
  %v1547 = vpop.f32.mrb[0].mxu0
  %1548 = vmatprep.mubr.f32.mxu0 0.0
  %1549 = vmatmul.mubr.f32.gmra.mrb[0].mxu0 %v1453
  %v1550 = vpop.f32.mrb[0].mxu0
  %v1551 = vadd.f32 %v1438, %v1550
  %v1552 = vpop.f32.mrb[0].mxu0
  %1553 = vmatprep.mubr.f32.mxu0 0.0
  %1554 = vmatmul.mubr.f32.gmra.mrb[0].mxu0 %v1456
  %v1555 = vpop.f32.mrb[0].mxu0
  %v1556 = vadd.f32 %v1438, %v1555
  %v1557 = vpop.f32.mrb[0].mxu0
  %1558 = vmatprep.mubr.f32.mxu0 0.0
  %1559 = vmatmul.mubr.f32.gmra.mrb[0].mxu0 %v1459
  %v1560 = vpop.f32.mrb[0].mxu0
  %v1561 = vadd.f32 %v1438, %v1560
  %v1562 = vpop.f32.mrb[0].mxu0
  %1563 = vmatprep.mubr.f32.mxu0 0.0
  %1564 = vmatmul.mubr.f32.gmra.mrb[0].mxu0 %v1462
  %v1565 = vpop.f32.mrb[0].mxu0
  %v1566 = vadd.f32 %v1438, %v1565
  %v1567 = vpop.f32.mrb[0].mxu0
  %1568 = vdwg.mxu0
  %v1569 = vld [vmem:[%s18] sm:$0xff]
  %v1570 = vld [vmem:[%s18 + $0x8] sm:$0xff]
  %v1571 = vld [vmem:[%s18 + $0x10] sm:$0xff]
  %v1572 = vld [vmem:[%s18 + $0x18] sm:$0xff]
  %v1573 = vld [vmem:[%s19] sm:$0x1]
  %v1575 = vlaneseq
  %v1576 = vshrl.u32 %v1575, 7
  %v1577 = vsub.s32 0, %v1576
  %v1578 = vrot.slane %v1573, %v1577
  %1580 = vmatprep.subr.mxu0 0.0
  %1581 = vmatpush1.msra.mxu0 %v1569
  %1582 = vmatprep.subr.mxu0 0.0
  %1583 = vmatpush1.msra.mxu0 %v1570
  %1584 = vmatprep.subr.mxu0 0.0
  %1585 = vmatpush1.msra.mxu0 %v1571
  %1586 = vmatprep.subr.mxu0 0.0
  %1587 = vmatpush1.msra.mxu0 %v1572
  %1588 = vmatprep.subr.mxu0 0.0
  %1589 = vmatpush1.msra.mxu0 0.0
  %1590 = vmatprep.subr.mxu0 0.0
  %1591 = vmatpush1.msra.mxu0 0.0
  %1592 = vmatprep.subr.mxu0 0.0
  %1593 = vmatpush1.msra.mxu0 0.0
  %1594 = vmatprep.subr.mxu0 0.0
  %1595 = vmatpush1.msra.mxu0 0.0
  %1596 = vmatprep.subr.mxu0 0.0
  %1597 = vmatpush1.msra.mxu0 0.0
  %1598 = vmatprep.subr.mxu0 0.0
  %1599 = vmatpush1.msra.mxu0 0.0
  %1600 = vmatprep.subr.mxu0 0.0
  %1601 = vmatpush1.msra.mxu0 0.0
  %1602 = vmatprep.subr.mxu0 0.0
  %1603 = vmatpush1.msra.mxu0 0.0
  %1604 = vmatprep.subr.mxu0 0.0
  %1605 = vmatpush1.msra.mxu0 0.0
  %1606 = vmatprep.subr.mxu0 0.0
  %1607 = vmatpush1.msra.mxu0 0.0
  %1608 = vmatprep.subr.mxu0 0.0
  %1609 = vmatpush1.msra.mxu0 0.0
  %1610 = vmatprep.subr.mxu0 0.0
  %1611 = vmatpush1.msra.mxu0 0.0
  %1612 = vmatprep.subr.mxu0 0.0
  %1613 = vmatpush1.msra.mxu0 0.0
  %1614 = vmatprep.subr.mxu0 0.0
  %1615 = vmatpush1.msra.mxu0 0.0
  %1616 = vmatprep.subr.mxu0 0.0
  %1617 = vmatpush1.msra.mxu0 0.0
  %1618 = vmatprep.subr.mxu0 0.0
  %1619 = vmatpush1.msra.mxu0 0.0
  %1620 = vmatprep.subr.mxu0 0.0
  %1621 = vmatpush1.msra.mxu0 0.0
  %1622 = vmatprep.subr.mxu0 0.0
  %1623 = vmatpush1.msra.mxu0 0.0
  %1624 = vmatprep.subr.mxu0 0.0
  %1625 = vmatpush1.msra.mxu0 0.0
  %1626 = vmatprep.subr.mxu0 0.0
  %1627 = vmatpush1.msra.mxu0 0.0
  %1628 = vmatprep.subr.mxu0 0.0
  %1629 = vmatpush1.msra.mxu0 0.0
  %1630 = vmatprep.subr.mxu0 0.0
  %1631 = vmatpush1.msra.mxu0 0.0
  %1632 = vmatprep.subr.mxu0 0.0
  %1633 = vmatpush1.msra.mxu0 0.0
  %1634 = vmatprep.subr.mxu0 0.0
  %1635 = vmatpush1.msra.mxu0 0.0
  %1636 = vmatprep.subr.mxu0 0.0
  %1637 = vmatpush1.msra.mxu0 0.0
  %1638 = vmatprep.subr.mxu0 0.0
  %1639 = vmatpush1.msra.mxu0 0.0
  %1640 = vmatprep.subr.mxu0 0.0
  %1641 = vmatpush1.msra.mxu0 0.0
  %1642 = vmatprep.subr.mxu0 0.0
  %1643 = vmatpush1.msra.mxu0 0.0
  %1644 = vmatprep.mubr.f32.mxu0 0.0
  %1645 = vmatmul.mubr.f32.gmra.mrb[0].mxu0 %v1441
  %v1646 = vpop.f32.mrb[0].mxu0
  %v1647 = vadd.f32 %v1578, %v1646
  %v1648 = vpop.f32.mrb[0].mxu0
  %1649 = vmatprep.mubr.f32.mxu0 0.0
  %1650 = vmatmul.mubr.f32.gmra.mrb[0].mxu0 %v1444
  %v1651 = vpop.f32.mrb[0].mxu0
  %v1652 = vadd.f32 %v1578, %v1651
  %v1653 = vpop.f32.mrb[0].mxu0
  %1654 = vmatprep.mubr.f32.mxu0 0.0
  %1655 = vmatmul.mubr.f32.gmra.mrb[0].mxu0 %v1447
  %v1656 = vpop.f32.mrb[0].mxu0
  %v1657 = vadd.f32 %v1578, %v1656
  %v1658 = vpop.f32.mrb[0].mxu0
  %1659 = vmatprep.mubr.f32.mxu0 0.0
  %1660 = vmatmul.mubr.f32.gmra.mrb[0].mxu0 %v1450
  %v1661 = vpop.f32.mrb[0].mxu0
  %v1662 = vadd.f32 %v1578, %v1661
  %v1663 = vpop.f32.mrb[0].mxu0
  %1664 = vmatprep.mubr.f32.mxu0 0.0
  %1665 = vmatmul.mubr.f32.gmra.mrb[0].mxu0 %v1453
  %v1666 = vpop.f32.mrb[0].mxu0
  %v1667 = vadd.f32 %v1578, %v1666
  %v1668 = vpop.f32.mrb[0].mxu0
  %1669 = vmatprep.mubr.f32.mxu0 0.0
  %1670 = vmatmul.mubr.f32.gmra.mrb[0].mxu0 %v1456
  %v1671 = vpop.f32.mrb[0].mxu0
  %v1672 = vadd.f32 %v1578, %v1671
  %v1673 = vpop.f32.mrb[0].mxu0
  %1674 = vmatprep.mubr.f32.mxu0 0.0
  %1675 = vmatmul.mubr.f32.gmra.mrb[0].mxu0 %v1459
  %v1676 = vpop.f32.mrb[0].mxu0
  %v1677 = vadd.f32 %v1578, %v1676
  %v1678 = vpop.f32.mrb[0].mxu0
  %1679 = vmatprep.mubr.f32.mxu0 0.0
  %1680 = vmatmul.mubr.f32.gmra.mrb[0].mxu0 %v1462
  %v1681 = vpop.f32.mrb[0].mxu0
  %v1682 = vadd.f32 %v1578, %v1681
  %v1683 = vpop.f32.mrb[0].mxu0
  %1684 = vdwg.mxu0
  %v1685 = vld [vmem:[%s4] sm:$0xff]
  %v1686 = vld [vmem:[%s4 + $0x8] sm:$0xff]
  %v1687 = vld [vmem:[%s4 + $0x10] sm:$0xff]
  %v1688 = vld [vmem:[%s4 + $0x18] sm:$0xff]
  %v1689 = vld [vmem:[%s4 + $0x20] sm:$0xff]
  %v1690 = vld [vmem:[%s4 + $0x28] sm:$0xff]
  %v1691 = vld [vmem:[%s4 + $0x30] sm:$0xff]
  %v1692 = vld [vmem:[%s4 + $0x38] sm:$0xff]
  %1701 = vrot.lane.b32.xlu0 %v1531, 96
  %v1702 = vpop.permute.xlu0 %1701
  %1703 = vrot.lane.b32.xlu0 %v1536, 96
  %v1704 = vpop.permute.xlu0 %1703
  %1705 = vrot.lane.b32.xlu0 %v1541, 96
  %v1706 = vpop.permute.xlu0 %1705
  %1707 = vrot.lane.b32.xlu0 %v1546, 96
  %v1708 = vpop.permute.xlu0 %1707
  %1709 = vrot.lane.b32.xlu0 %v1551, 96
  %v1710 = vpop.permute.xlu0 %1709
  %1711 = vrot.lane.b32.xlu0 %v1556, 96
  %v1712 = vpop.permute.xlu0 %1711
  %1713 = vrot.lane.b32.xlu0 %v1561, 96
  %v1714 = vpop.permute.xlu0 %1713
  %1715 = vrot.lane.b32.xlu0 %v1566, 96
  %v1716 = vpop.permute.xlu0 %1715
  %vm1717 = vcmask 64512
  %v1718 = vsel %vm1717, %v1531, 0
  %v1720 = vsel %vm1717, %v1536, 0
  %v1722 = vsel %vm1717, %v1541, 0
  %v1724 = vsel %vm1717, %v1546, 0
  %v1726 = vsel %vm1717, %v1551, 0
  %v1728 = vsel %vm1717, %v1556, 0
  %v1730 = vsel %vm1717, %v1561, 0
  %v1732 = vsel %vm1717, %v1566, 0
  %v1734 = vsel %vm1717, %v1702, 0
  %v1736 = vsel %vm1717, %v1704, 0
  %v1738 = vsel %vm1717, %v1706, 0
  %v1740 = vsel %vm1717, %v1708, 0
  %v1742 = vsel %vm1717, %v1710, 0
  %v1744 = vsel %vm1717, %v1712, 0
  %v1746 = vsel %vm1717, %v1714, 0
  %v1748 = vsel %vm1717, %v1716, 0
  %1750 = vmatprep.subr.mxu0 0.0
  %1751 = vmatpush1.xpose.msra.mxu0 %v1734
  %1752 = vmatprep.subr.mxu0 0.0
  %1753 = vmatpush1.xpose.msra.mxu0 %v1736
  %1754 = vmatprep.subr.mxu0 0.0
  %1755 = vmatpush1.xpose.msra.mxu0 %v1738
  %1756 = vmatprep.subr.mxu0 0.0
  %1757 = vmatpush1.xpose.msra.mxu0 %v1740
  %1758 = vmatprep.subr.mxu0 0.0
  %1759 = vmatpush1.xpose.msra.mxu0 %v1742
  %1760 = vmatprep.subr.mxu0 0.0
  %1761 = vmatpush1.xpose.msra.mxu0 %v1744
  %1762 = vmatprep.subr.mxu0 0.0
  %1763 = vmatpush1.xpose.msra.mxu0 %v1746
  %1764 = vmatprep.subr.mxu0 0.0
  %1765 = vmatpush1.xpose.msra.mxu0 %v1748
  %1766 = vmatprep.subr.mxu0 0.0
  %1767 = vmatpush1.xpose.msra.mxu0 0.0
  %1768 = vmatprep.subr.mxu0 0.0
  %1769 = vmatpush1.xpose.msra.mxu0 0.0
  %1770 = vmatprep.subr.mxu0 0.0
  %1771 = vmatpush1.xpose.msra.mxu0 0.0
  %1772 = vmatprep.subr.mxu0 0.0
  %1773 = vmatpush1.xpose.msra.mxu0 0.0
  %1774 = vmatprep.subr.mxu0 0.0
  %1775 = vmatpush1.xpose.msra.mxu0 0.0
  %1776 = vmatprep.subr.mxu0 0.0
  %1777 = vmatpush1.xpose.msra.mxu0 0.0
  %1778 = vmatprep.subr.mxu0 0.0
  %1779 = vmatpush1.xpose.msra.mxu0 0.0
  %1780 = vmatprep.subr.mxu0 0.0
  %1781 = vmatpush1.xpose.msra.mxu0 0.0
  %1782 = vmatprep.subr.mxu0 0.0
  %1783 = vmatpush1.xpose.msra.mxu0 0.0
  %1784 = vmatprep.subr.mxu0 0.0
  %1785 = vmatpush1.xpose.msra.mxu0 0.0
  %1786 = vmatprep.subr.mxu0 0.0
  %1787 = vmatpush1.xpose.msra.mxu0 0.0
  %1788 = vmatprep.subr.mxu0 0.0
  %1789 = vmatpush1.xpose.msra.mxu0 0.0
  %1790 = vmatprep.subr.mxu0 0.0
  %1791 = vmatpush1.xpose.msra.mxu0 0.0
  %1792 = vmatprep.subr.mxu0 0.0
  %1793 = vmatpush1.xpose.msra.mxu0 0.0
  %1794 = vmatprep.subr.mxu0 0.0
  %1795 = vmatpush1.xpose.msra.mxu0 0.0
  %1796 = vmatprep.subr.mxu0 0.0
  %1797 = vmatpush1.xpose.msra.mxu0 0.0
  %1798 = vmatprep.subr.mxu0 0.0
  %1799 = vmatpush1.xpose.msra.mxu0 0.0
  %1800 = vmatprep.subr.mxu0 0.0
  %1801 = vmatpush1.xpose.msra.mxu0 0.0
  %1802 = vmatprep.subr.mxu0 0.0
  %1803 = vmatpush1.xpose.msra.mxu0 0.0
  %1804 = vmatprep.subr.mxu0 0.0
  %1805 = vmatpush1.xpose.msra.mxu0 0.0
  %1806 = vmatprep.subr.mxu0 0.0
  %1807 = vmatpush1.xpose.msra.mxu0 0.0
  %1808 = vmatprep.subr.mxu0 0.0
  %1809 = vmatpush1.xpose.msra.mxu0 0.0
  %1810 = vmatprep.subr.mxu0 0.0
  %1811 = vmatpush1.xpose.msra.mxu0 0.0
  %1812 = vmatprep.subr.mxu0 0.0
  %1813 = vmatpush1.xpose.msra.mxu0 0.0
  %1814 = vmatprep.mubr.f32.mxu0 0.0
  %1815 = vmatmul.mubr.f32.gmra.mrb[0].mxu0 %v1718
  %v1816 = vpop.f32.mrb[0].mxu0
  %v1817 = vadd.f32 0.0, %v1816
  %v1818 = vpop.f32.mrb[0].mxu0
  %1819 = vmatprep.mubr.f32.mxu0 0.0
  %1820 = vmatmul.mubr.f32.gmra.mrb[0].mxu0 %v1720
  %v1821 = vpop.f32.mrb[0].mxu0
  %v1822 = vadd.f32 0.0, %v1821
  %v1823 = vpop.f32.mrb[0].mxu0
  %1824 = vmatprep.mubr.f32.mxu0 0.0
  %1825 = vmatmul.mubr.f32.gmra.mrb[0].mxu0 %v1722
  %v1826 = vpop.f32.mrb[0].mxu0
  %v1827 = vadd.f32 0.0, %v1826
  %v1828 = vpop.f32.mrb[0].mxu0
  %1829 = vmatprep.mubr.f32.mxu0 0.0
  %1830 = vmatmul.mubr.f32.gmra.mrb[0].mxu0 %v1724
  %v1831 = vpop.f32.mrb[0].mxu0
  %v1832 = vadd.f32 0.0, %v1831
  %v1833 = vpop.f32.mrb[0].mxu0
  %1834 = vmatprep.mubr.f32.mxu0 0.0
  %1835 = vmatmul.mubr.f32.gmra.mrb[0].mxu0 %v1726
  %v1836 = vpop.f32.mrb[0].mxu0
  %v1837 = vadd.f32 0.0, %v1836
  %v1838 = vpop.f32.mrb[0].mxu0
  %1839 = vmatprep.mubr.f32.mxu0 0.0
  %1840 = vmatmul.mubr.f32.gmra.mrb[0].mxu0 %v1728
  %v1841 = vpop.f32.mrb[0].mxu0
  %v1842 = vadd.f32 0.0, %v1841
  %v1843 = vpop.f32.mrb[0].mxu0
  %1844 = vmatprep.mubr.f32.mxu0 0.0
  %1845 = vmatmul.mubr.f32.gmra.mrb[0].mxu0 %v1730
  %v1846 = vpop.f32.mrb[0].mxu0
  %v1847 = vadd.f32 0.0, %v1846
  %v1848 = vpop.f32.mrb[0].mxu0
  %1849 = vmatprep.mubr.f32.mxu0 0.0
  %1850 = vmatmul.mubr.f32.gmra.mrb[0].mxu0 %v1732
  %v1851 = vpop.f32.mrb[0].mxu0
  %v1852 = vadd.f32 0.0, %v1851
  %v1853 = vpop.f32.mrb[0].mxu0
  %1854 = vdwg.mxu0
  %v1855 = vmul.f32 %v1817, 0.35355338
  %v1856 = vmul.f32 %v1822, 0.35355338
  %v1857 = vmul.f32 %v1827, 0.35355338
  %v1858 = vmul.f32 %v1832, 0.35355338
  %v1859 = vmul.f32 %v1837, 0.35355338
  %v1860 = vmul.f32 %v1842, 0.35355338
  %v1861 = vmul.f32 %v1847, 0.35355338
  %v1862 = vmul.f32 %v1852, 0.35355338
  %v1863 = vadd.f32 %v1855, %v1685
  %v1864 = vadd.f32 %v1856, %v1686
  %v1865 = vadd.f32 %v1857, %v1687
  %v1866 = vadd.f32 %v1858, %v1688
  %v1867 = vadd.f32 %v1859, %v1689
  %v1868 = vadd.f32 %v1860, %v1690
  %v1869 = vadd.f32 %v1861, %v1691
  %v1870 = vadd.f32 %v1862, %v1692
  %v1871 = vsel %vm571, %v1863, -inf
  %1872 = vmax.xlane.f32.xlu0 %v1871
  %v1873 = vpop.xlane.xlu0 %1872
  %v1874 = vsel %vm571, %v1864, -inf
  %1875 = vmax.xlane.f32.xlu0 %v1874
  %v1876 = vpop.xlane.xlu0 %1875
  %v1877 = vsel %vm571, %v1865, -inf
  %1878 = vmax.xlane.f32.xlu0 %v1877
  %v1879 = vpop.xlane.xlu0 %1878
  %v1880 = vsel %vm571, %v1866, -inf
  %1881 = vmax.xlane.f32.xlu0 %v1880
  %v1882 = vpop.xlane.xlu0 %1881
  %v1883 = vsel %vm571, %v1867, -inf
  %1884 = vmax.xlane.f32.xlu0 %v1883
  %v1885 = vpop.xlane.xlu0 %1884
  %v1886 = vsel %vm571, %v1868, -inf
  %1887 = vmax.xlane.f32.xlu0 %v1886
  %v1888 = vpop.xlane.xlu0 %1887
  %v1889 = vsel %vm571, %v1869, -inf
  %1890 = vmax.xlane.f32.xlu0 %v1889
  %v1891 = vpop.xlane.xlu0 %1890
  %v1892 = vsel %vm571, %v1870, -inf
  %1893 = vmax.xlane.f32.xlu0 %v1892
  %v1894 = vpop.xlane.xlu0 %1893
  %v1895 = vsub.f32 %v1863, %v1873
  %v1896 = vsub.f32 %v1864, %v1876
  %v1897 = vsub.f32 %v1865, %v1879
  %v1898 = vsub.f32 %v1866, %v1882
  %v1899 = vsub.f32 %v1867, %v1885
  %v1900 = vsub.f32 %v1868, %v1888
  %v1901 = vsub.f32 %v1869, %v1891
  %v1902 = vsub.f32 %v1870, %v1894
  %v1903 = vmul.f32 %v1895, 1.442695
  %v1904 = vpow.pop %v1903
  %v1905 = vmul.f32 %v1896, 1.442695
  %v1906 = vpow.pop %v1905
  %v1907 = vmul.f32 %v1897, 1.442695
  %v1908 = vpow.pop %v1907
  %v1909 = vmul.f32 %v1898, 1.442695
  %v1910 = vpow.pop %v1909
  %v1911 = vmul.f32 %v1899, 1.442695
  %v1912 = vpow.pop %v1911
  %v1913 = vmul.f32 %v1900, 1.442695
  %v1914 = vpow.pop %v1913
  %v1915 = vmul.f32 %v1901, 1.442695
  %v1916 = vpow.pop %v1915
  %v1917 = vmul.f32 %v1902, 1.442695
  %v1918 = vpow.pop %v1917
  %v1919 = vsel %vm571, %v1904, 0.0
  %1920 = vadd.xlane.f32.xlu0 %v1919
  %v1921 = vpop.xlane.xlu0 %1920
  %v1922 = vsel %vm571, %v1906, 0.0
  %1923 = vadd.xlane.f32.xlu0 %v1922
  %v1924 = vpop.xlane.xlu0 %1923
  %v1925 = vsel %vm571, %v1908, 0.0
  %1926 = vadd.xlane.f32.xlu0 %v1925
  %v1927 = vpop.xlane.xlu0 %1926
  %v1928 = vsel %vm571, %v1910, 0.0
  %1929 = vadd.xlane.f32.xlu0 %v1928
  %v1930 = vpop.xlane.xlu0 %1929
  %v1931 = vsel %vm571, %v1912, 0.0
  %1932 = vadd.xlane.f32.xlu0 %v1931
  %v1933 = vpop.xlane.xlu0 %1932
  %v1934 = vsel %vm571, %v1914, 0.0
  %1935 = vadd.xlane.f32.xlu0 %v1934
  %v1936 = vpop.xlane.xlu0 %1935
  %v1937 = vsel %vm571, %v1916, 0.0
  %1938 = vadd.xlane.f32.xlu0 %v1937
  %v1939 = vpop.xlane.xlu0 %1938
  %v1940 = vsel %vm571, %v1918, 0.0
  %1941 = vadd.xlane.f32.xlu0 %v1940
  %v1942 = vpop.xlane.xlu0 %1941
  %v1943 = vrcp.pop %v1921
  %v1944 = vrcp.pop %v1924
  %v1945 = vrcp.pop %v1927
  %v1946 = vrcp.pop %v1930
  %v1947 = vrcp.pop %v1933
  %v1948 = vrcp.pop %v1936
  %v1949 = vrcp.pop %v1939
  %v1950 = vrcp.pop %v1942
  %v1951 = vmul.f32 %v1904, %v1943
  %v1952 = vmul.f32 %v1906, %v1944
  %v1953 = vmul.f32 %v1908, %v1945
  %v1954 = vmul.f32 %v1910, %v1946
  %v1955 = vmul.f32 %v1912, %v1947
  %v1956 = vmul.f32 %v1914, %v1948
  %v1957 = vmul.f32 %v1916, %v1949
  %v1958 = vmul.f32 %v1918, %v1950
  %1959 = vrot.lane.b32.xlu0 %v1531, 120
  %v1960 = vpop.permute.xlu0 %1959
  %1961 = vrot.lane.b32.xlu0 %v1536, 120
  %v1962 = vpop.permute.xlu0 %1961
  %1963 = vrot.lane.b32.xlu0 %v1541, 120
  %v1964 = vpop.permute.xlu0 %1963
  %1965 = vrot.lane.b32.xlu0 %v1546, 120
  %v1966 = vpop.permute.xlu0 %1965
  %1967 = vrot.lane.b32.xlu0 %v1551, 120
  %v1968 = vpop.permute.xlu0 %1967
  %1969 = vrot.lane.b32.xlu0 %v1556, 120
  %v1970 = vpop.permute.xlu0 %1969
  %1971 = vrot.lane.b32.xlu0 %v1561, 120
  %v1972 = vpop.permute.xlu0 %1971
  %1973 = vrot.lane.b32.xlu0 %v1566, 120
  %v1974 = vpop.permute.xlu0 %1973
  %1975 = vrot.lane.b32.xlu0 %v1531, 88
  %v1976 = vpop.permute.xlu0 %1975
  %1977 = vrot.lane.b32.xlu0 %v1536, 88
  %v1978 = vpop.permute.xlu0 %1977
  %1979 = vrot.lane.b32.xlu0 %v1541, 88
  %v1980 = vpop.permute.xlu0 %1979
  %1981 = vrot.lane.b32.xlu0 %v1546, 88
  %v1982 = vpop.permute.xlu0 %1981
  %1983 = vrot.lane.b32.xlu0 %v1551, 88
  %v1984 = vpop.permute.xlu0 %1983
  %1985 = vrot.lane.b32.xlu0 %v1556, 88
  %v1986 = vpop.permute.xlu0 %1985
  %1987 = vrot.lane.b32.xlu0 %v1561, 88
  %v1988 = vpop.permute.xlu0 %1987
  %1989 = vrot.lane.b32.xlu0 %v1566, 88
  %v1990 = vpop.permute.xlu0 %1989
  %v1991 = vsel %vm1717, %v1960, 0
  %v1993 = vsel %vm1717, %v1962, 0
  %v1995 = vsel %vm1717, %v1964, 0
  %v1997 = vsel %vm1717, %v1966, 0
  %v1999 = vsel %vm1717, %v1968, 0
  %v2001 = vsel %vm1717, %v1970, 0
  %v2003 = vsel %vm1717, %v1972, 0
  %v2005 = vsel %vm1717, %v1974, 0
  %v2007 = vsel %vm1717, %v1976, 0
  %v2009 = vsel %vm1717, %v1978, 0
  %v2011 = vsel %vm1717, %v1980, 0
  %v2013 = vsel %vm1717, %v1982, 0
  %v2015 = vsel %vm1717, %v1984, 0
  %v2017 = vsel %vm1717, %v1986, 0
  %v2019 = vsel %vm1717, %v1988, 0
  %v2021 = vsel %vm1717, %v1990, 0
  %2023 = vmatprep.subr.mxu0 0.0
  %2024 = vmatpush1.xpose.msra.mxu0 %v2007
  %2025 = vmatprep.subr.mxu0 0.0
  %2026 = vmatpush1.xpose.msra.mxu0 %v2009
  %2027 = vmatprep.subr.mxu0 0.0
  %2028 = vmatpush1.xpose.msra.mxu0 %v2011
  %2029 = vmatprep.subr.mxu0 0.0
  %2030 = vmatpush1.xpose.msra.mxu0 %v2013
  %2031 = vmatprep.subr.mxu0 0.0
  %2032 = vmatpush1.xpose.msra.mxu0 %v2015
  %2033 = vmatprep.subr.mxu0 0.0
  %2034 = vmatpush1.xpose.msra.mxu0 %v2017
  %2035 = vmatprep.subr.mxu0 0.0
  %2036 = vmatpush1.xpose.msra.mxu0 %v2019
  %2037 = vmatprep.subr.mxu0 0.0
  %2038 = vmatpush1.xpose.msra.mxu0 %v2021
  %2039 = vmatprep.subr.mxu0 0.0
  %2040 = vmatpush1.xpose.msra.mxu0 0.0
  %2041 = vmatprep.subr.mxu0 0.0
  %2042 = vmatpush1.xpose.msra.mxu0 0.0
  %2043 = vmatprep.subr.mxu0 0.0
  %2044 = vmatpush1.xpose.msra.mxu0 0.0
  %2045 = vmatprep.subr.mxu0 0.0
  %2046 = vmatpush1.xpose.msra.mxu0 0.0
  %2047 = vmatprep.subr.mxu0 0.0
  %2048 = vmatpush1.xpose.msra.mxu0 0.0
  %2049 = vmatprep.subr.mxu0 0.0
  %2050 = vmatpush1.xpose.msra.mxu0 0.0
  %2051 = vmatprep.subr.mxu0 0.0
  %2052 = vmatpush1.xpose.msra.mxu0 0.0
  %2053 = vmatprep.subr.mxu0 0.0
  %2054 = vmatpush1.xpose.msra.mxu0 0.0
  %2055 = vmatprep.subr.mxu0 0.0
  %2056 = vmatpush1.xpose.msra.mxu0 0.0
  %2057 = vmatprep.subr.mxu0 0.0
  %2058 = vmatpush1.xpose.msra.mxu0 0.0
  %2059 = vmatprep.subr.mxu0 0.0
  %2060 = vmatpush1.xpose.msra.mxu0 0.0
  %2061 = vmatprep.subr.mxu0 0.0
  %2062 = vmatpush1.xpose.msra.mxu0 0.0
  %2063 = vmatprep.subr.mxu0 0.0
  %2064 = vmatpush1.xpose.msra.mxu0 0.0
  %2065 = vmatprep.subr.mxu0 0.0
  %2066 = vmatpush1.xpose.msra.mxu0 0.0
  %2067 = vmatprep.subr.mxu0 0.0
  %2068 = vmatpush1.xpose.msra.mxu0 0.0
  %2069 = vmatprep.subr.mxu0 0.0
  %2070 = vmatpush1.xpose.msra.mxu0 0.0
  %2071 = vmatprep.subr.mxu0 0.0
  %2072 = vmatpush1.xpose.msra.mxu0 0.0
  %2073 = vmatprep.subr.mxu0 0.0
  %2074 = vmatpush1.xpose.msra.mxu0 0.0
  %2075 = vmatprep.subr.mxu0 0.0
  %2076 = vmatpush1.xpose.msra.mxu0 0.0
  %2077 = vmatprep.subr.mxu0 0.0
  %2078 = vmatpush1.xpose.msra.mxu0 0.0
  %2079 = vmatprep.subr.mxu0 0.0
  %2080 = vmatpush1.xpose.msra.mxu0 0.0
  %2081 = vmatprep.subr.mxu0 0.0
  %2082 = vmatpush1.xpose.msra.mxu0 0.0
  %2083 = vmatprep.subr.mxu0 0.0
  %2084 = vmatpush1.xpose.msra.mxu0 0.0
  %2085 = vmatprep.subr.mxu0 0.0
  %2086 = vmatpush1.xpose.msra.mxu0 0.0
  %2087 = vmatprep.mubr.f32.mxu0 0.0
  %2088 = vmatmul.mubr.f32.gmra.mrb[0].mxu0 %v1991
  %v2089 = vpop.f32.mrb[0].mxu0
  %v2090 = vadd.f32 0.0, %v2089
  %v2091 = vpop.f32.mrb[0].mxu0
  %2092 = vmatprep.mubr.f32.mxu0 0.0
  %2093 = vmatmul.mubr.f32.gmra.mrb[0].mxu0 %v1993
  %v2094 = vpop.f32.mrb[0].mxu0
  %v2095 = vadd.f32 0.0, %v2094
  %v2096 = vpop.f32.mrb[0].mxu0
  %2097 = vmatprep.mubr.f32.mxu0 0.0
  %2098 = vmatmul.mubr.f32.gmra.mrb[0].mxu0 %v1995
  %v2099 = vpop.f32.mrb[0].mxu0
  %v2100 = vadd.f32 0.0, %v2099
  %v2101 = vpop.f32.mrb[0].mxu0
  %2102 = vmatprep.mubr.f32.mxu0 0.0
  %2103 = vmatmul.mubr.f32.gmra.mrb[0].mxu0 %v1997
  %v2104 = vpop.f32.mrb[0].mxu0
  %v2105 = vadd.f32 0.0, %v2104
  %v2106 = vpop.f32.mrb[0].mxu0
  %2107 = vmatprep.mubr.f32.mxu0 0.0
  %2108 = vmatmul.mubr.f32.gmra.mrb[0].mxu0 %v1999
  %v2109 = vpop.f32.mrb[0].mxu0
  %v2110 = vadd.f32 0.0, %v2109
  %v2111 = vpop.f32.mrb[0].mxu0
  %2112 = vmatprep.mubr.f32.mxu0 0.0
  %2113 = vmatmul.mubr.f32.gmra.mrb[0].mxu0 %v2001
  %v2114 = vpop.f32.mrb[0].mxu0
  %v2115 = vadd.f32 0.0, %v2114
  %v2116 = vpop.f32.mrb[0].mxu0
  %2117 = vmatprep.mubr.f32.mxu0 0.0
  %2118 = vmatmul.mubr.f32.gmra.mrb[0].mxu0 %v2003
  %v2119 = vpop.f32.mrb[0].mxu0
  %v2120 = vadd.f32 0.0, %v2119
  %v2121 = vpop.f32.mrb[0].mxu0
  %2122 = vmatprep.mubr.f32.mxu0 0.0
  %2123 = vmatmul.mubr.f32.gmra.mrb[0].mxu0 %v2005
  %v2124 = vpop.f32.mrb[0].mxu0
  %v2125 = vadd.f32 0.0, %v2124
  %v2126 = vpop.f32.mrb[0].mxu0
  %2127 = vdwg.mxu0
  %v2128 = vmul.f32 %v2090, 0.35355338
  %v2129 = vmul.f32 %v2095, 0.35355338
  %v2130 = vmul.f32 %v2100, 0.35355338
  %v2131 = vmul.f32 %v2105, 0.35355338
  %v2132 = vmul.f32 %v2110, 0.35355338
  %v2133 = vmul.f32 %v2115, 0.35355338
  %v2134 = vmul.f32 %v2120, 0.35355338
  %v2135 = vmul.f32 %v2125, 0.35355338
  %v2136 = vadd.f32 %v2128, %v1685
  %v2137 = vadd.f32 %v2129, %v1686
  %v2138 = vadd.f32 %v2130, %v1687
  %v2139 = vadd.f32 %v2131, %v1688
  %v2140 = vadd.f32 %v2132, %v1689
  %v2141 = vadd.f32 %v2133, %v1690
  %v2142 = vadd.f32 %v2134, %v1691
  %v2143 = vadd.f32 %v2135, %v1692
  %v2144 = vsel %vm571, %v2136, -inf
  %2145 = vmax.xlane.f32.xlu0 %v2144
  %v2146 = vpop.xlane.xlu0 %2145
  %v2147 = vsel %vm571, %v2137, -inf
  %2148 = vmax.xlane.f32.xlu0 %v2147
  %v2149 = vpop.xlane.xlu0 %2148
  %v2150 = vsel %vm571, %v2138, -inf
  %2151 = vmax.xlane.f32.xlu0 %v2150
  %v2152 = vpop.xlane.xlu0 %2151
  %v2153 = vsel %vm571, %v2139, -inf
  %2154 = vmax.xlane.f32.xlu0 %v2153
  %v2155 = vpop.xlane.xlu0 %2154
  %v2156 = vsel %vm571, %v2140, -inf
  %2157 = vmax.xlane.f32.xlu0 %v2156
  %v2158 = vpop.xlane.xlu0 %2157
  %v2159 = vsel %vm571, %v2141, -inf
  %2160 = vmax.xlane.f32.xlu0 %v2159
  %v2161 = vpop.xlane.xlu0 %2160
  %v2162 = vsel %vm571, %v2142, -inf
  %2163 = vmax.xlane.f32.xlu0 %v2162
  %v2164 = vpop.xlane.xlu0 %2163
  %v2165 = vsel %vm571, %v2143, -inf
  %2166 = vmax.xlane.f32.xlu0 %v2165
  %v2167 = vpop.xlane.xlu0 %2166
  %v2168 = vsub.f32 %v2136, %v2146
  %v2169 = vsub.f32 %v2137, %v2149
  %v2170 = vsub.f32 %v2138, %v2152
  %v2171 = vsub.f32 %v2139, %v2155
  %v2172 = vsub.f32 %v2140, %v2158
  %v2173 = vsub.f32 %v2141, %v2161
  %v2174 = vsub.f32 %v2142, %v2164
  %v2175 = vsub.f32 %v2143, %v2167
  %v2176 = vmul.f32 %v2168, 1.442695
  %v2177 = vpow.pop %v2176
  %v2178 = vmul.f32 %v2169, 1.442695
  %v2179 = vpow.pop %v2178
  %v2180 = vmul.f32 %v2170, 1.442695
  %v2181 = vpow.pop %v2180
  %v2182 = vmul.f32 %v2171, 1.442695
  %v2183 = vpow.pop %v2182
  %v2184 = vmul.f32 %v2172, 1.442695
  %v2185 = vpow.pop %v2184
  %v2186 = vmul.f32 %v2173, 1.442695
  %v2187 = vpow.pop %v2186
  %v2188 = vmul.f32 %v2174, 1.442695
  %v2189 = vpow.pop %v2188
  %v2190 = vmul.f32 %v2175, 1.442695
  %v2191 = vpow.pop %v2190
  %v2192 = vsel %vm571, %v2177, 0.0
  %2193 = vadd.xlane.f32.xlu0 %v2192
  %v2194 = vpop.xlane.xlu0 %2193
  %v2195 = vsel %vm571, %v2179, 0.0
  %2196 = vadd.xlane.f32.xlu0 %v2195
  %v2197 = vpop.xlane.xlu0 %2196
  %v2198 = vsel %vm571, %v2181, 0.0
  %2199 = vadd.xlane.f32.xlu0 %v2198
  %v2200 = vpop.xlane.xlu0 %2199
  %v2201 = vsel %vm571, %v2183, 0.0
  %2202 = vadd.xlane.f32.xlu0 %v2201
  %v2203 = vpop.xlane.xlu0 %2202
  %v2204 = vsel %vm571, %v2185, 0.0
  %2205 = vadd.xlane.f32.xlu0 %v2204
  %v2206 = vpop.xlane.xlu0 %2205
  %v2207 = vsel %vm571, %v2187, 0.0
  %2208 = vadd.xlane.f32.xlu0 %v2207
  %v2209 = vpop.xlane.xlu0 %2208
  %v2210 = vsel %vm571, %v2189, 0.0
  %2211 = vadd.xlane.f32.xlu0 %v2210
  %v2212 = vpop.xlane.xlu0 %2211
  %v2213 = vsel %vm571, %v2191, 0.0
  %2214 = vadd.xlane.f32.xlu0 %v2213
  %v2215 = vpop.xlane.xlu0 %2214
  %v2216 = vrcp.pop %v2194
  %v2217 = vrcp.pop %v2197
  %v2218 = vrcp.pop %v2200
  %v2219 = vrcp.pop %v2203
  %v2220 = vrcp.pop %v2206
  %v2221 = vrcp.pop %v2209
  %v2222 = vrcp.pop %v2212
  %v2223 = vrcp.pop %v2215
  %v2224 = vmul.f32 %v2177, %v2216
  %v2225 = vmul.f32 %v2179, %v2217
  %v2226 = vmul.f32 %v2181, %v2218
  %v2227 = vmul.f32 %v2183, %v2219
  %v2228 = vmul.f32 %v2185, %v2220
  %v2229 = vmul.f32 %v2187, %v2221
  %v2230 = vmul.f32 %v2189, %v2222
  %v2231 = vmul.f32 %v2191, %v2223
  %2240 = vrot.lane.b32.xlu0 %v1647, 96
  %v2241 = vpop.permute.xlu0 %2240
  %2242 = vrot.lane.b32.xlu0 %v1652, 96
  %v2243 = vpop.permute.xlu0 %2242
  %2244 = vrot.lane.b32.xlu0 %v1657, 96
  %v2245 = vpop.permute.xlu0 %2244
  %2246 = vrot.lane.b32.xlu0 %v1662, 96
  %v2247 = vpop.permute.xlu0 %2246
  %2248 = vrot.lane.b32.xlu0 %v1667, 96
  %v2249 = vpop.permute.xlu0 %2248
  %2250 = vrot.lane.b32.xlu0 %v1672, 96
  %v2251 = vpop.permute.xlu0 %2250
  %2252 = vrot.lane.b32.xlu0 %v1677, 96
  %v2253 = vpop.permute.xlu0 %2252
  %2254 = vrot.lane.b32.xlu0 %v1682, 96
  %v2255 = vpop.permute.xlu0 %2254
  %v2265 = vsel %vm571, %v2224, 0
  %v2268 = vsel %vm571, %v2225, 0
  %v2271 = vsel %vm571, %v2226, 0
  %v2274 = vsel %vm571, %v2227, 0
  %v2277 = vsel %vm571, %v2228, 0
  %v2280 = vsel %vm571, %v2229, 0
  %v2283 = vsel %vm571, %v2230, 0
  %v2286 = vsel %vm571, %v2231, 0
  %2288 = vmatprep.subr.mxu0 0.0
  %2289 = vmatpush1.msra.mxu0 %v2241
  %2290 = vmatprep.subr.mxu0 0.0
  %2291 = vmatpush1.msra.mxu0 %v2243
  %2292 = vmatprep.subr.mxu0 0.0
  %2293 = vmatpush1.msra.mxu0 %v2245
  %2294 = vmatprep.subr.mxu0 0.0
  %2295 = vmatpush1.msra.mxu0 %v2247
  %2296 = vmatprep.subr.mxu0 0.0
  %2297 = vmatpush1.msra.mxu0 %v2249
  %2298 = vmatprep.subr.mxu0 0.0
  %2299 = vmatpush1.msra.mxu0 %v2251
  %2300 = vmatprep.subr.mxu0 0.0
  %2301 = vmatpush1.msra.mxu0 %v2253
  %2302 = vmatprep.subr.mxu0 0.0
  %2303 = vmatpush1.msra.mxu0 %v2255
  %2304 = vmatprep.subr.mxu0 0.0
  %2305 = vmatpush1.msra.mxu0 0.0
  %2306 = vmatprep.subr.mxu0 0.0
  %2307 = vmatpush1.msra.mxu0 0.0
  %2308 = vmatprep.subr.mxu0 0.0
  %2309 = vmatpush1.msra.mxu0 0.0
  %2310 = vmatprep.subr.mxu0 0.0
  %2311 = vmatpush1.msra.mxu0 0.0
  %2312 = vmatprep.subr.mxu0 0.0
  %2313 = vmatpush1.msra.mxu0 0.0
  %2314 = vmatprep.subr.mxu0 0.0
  %2315 = vmatpush1.msra.mxu0 0.0
  %2316 = vmatprep.subr.mxu0 0.0
  %2317 = vmatpush1.msra.mxu0 0.0
  %2318 = vmatprep.subr.mxu0 0.0
  %2319 = vmatpush1.msra.mxu0 0.0
  %2320 = vmatprep.subr.mxu0 0.0
  %2321 = vmatpush1.msra.mxu0 0.0
  %2322 = vmatprep.subr.mxu0 0.0
  %2323 = vmatpush1.msra.mxu0 0.0
  %2324 = vmatprep.subr.mxu0 0.0
  %2325 = vmatpush1.msra.mxu0 0.0
  %2326 = vmatprep.subr.mxu0 0.0
  %2327 = vmatpush1.msra.mxu0 0.0
  %2328 = vmatprep.subr.mxu0 0.0
  %2329 = vmatpush1.msra.mxu0 0.0
  %2330 = vmatprep.subr.mxu0 0.0
  %2331 = vmatpush1.msra.mxu0 0.0
  %2332 = vmatprep.subr.mxu0 0.0
  %2333 = vmatpush1.msra.mxu0 0.0
  %2334 = vmatprep.subr.mxu0 0.0
  %2335 = vmatpush1.msra.mxu0 0.0
  %2336 = vmatprep.subr.mxu0 0.0
  %2337 = vmatpush1.msra.mxu0 0.0
  %2338 = vmatprep.subr.mxu0 0.0
  %2339 = vmatpush1.msra.mxu0 0.0
  %2340 = vmatprep.subr.mxu0 0.0
  %2341 = vmatpush1.msra.mxu0 0.0
  %2342 = vmatprep.subr.mxu0 0.0
  %2343 = vmatpush1.msra.mxu0 0.0
  %2344 = vmatprep.subr.mxu0 0.0
  %2345 = vmatpush1.msra.mxu0 0.0
  %2346 = vmatprep.subr.mxu0 0.0
  %2347 = vmatpush1.msra.mxu0 0.0
  %2348 = vmatprep.subr.mxu0 0.0
  %2349 = vmatpush1.msra.mxu0 0.0
  %2350 = vmatprep.subr.mxu0 0.0
  %2351 = vmatpush1.msra.mxu0 0.0
  %2352 = vmatprep.mubr.f32.mxu0 0.0
  %2353 = vmatmul.mubr.f32.gmra.mrb[0].mxu0 %v2265
  %v2354 = vpop.f32.mrb[0].mxu0
  %v2355 = vadd.f32 0.0, %v2354
  %v2356 = vpop.f32.mrb[0].mxu0
  %2357 = vmatprep.mubr.f32.mxu0 0.0
  %2358 = vmatmul.mubr.f32.gmra.mrb[0].mxu0 %v2268
  %v2359 = vpop.f32.mrb[0].mxu0
  %v2360 = vadd.f32 0.0, %v2359
  %v2361 = vpop.f32.mrb[0].mxu0
  %2362 = vmatprep.mubr.f32.mxu0 0.0
  %2363 = vmatmul.mubr.f32.gmra.mrb[0].mxu0 %v2271
  %v2364 = vpop.f32.mrb[0].mxu0
  %v2365 = vadd.f32 0.0, %v2364
  %v2366 = vpop.f32.mrb[0].mxu0
  %2367 = vmatprep.mubr.f32.mxu0 0.0
  %2368 = vmatmul.mubr.f32.gmra.mrb[0].mxu0 %v2274
  %v2369 = vpop.f32.mrb[0].mxu0
  %v2370 = vadd.f32 0.0, %v2369
  %v2371 = vpop.f32.mrb[0].mxu0
  %2372 = vmatprep.mubr.f32.mxu0 0.0
  %2373 = vmatmul.mubr.f32.gmra.mrb[0].mxu0 %v2277
  %v2374 = vpop.f32.mrb[0].mxu0
  %v2375 = vadd.f32 0.0, %v2374
  %v2376 = vpop.f32.mrb[0].mxu0
  %2377 = vmatprep.mubr.f32.mxu0 0.0
  %2378 = vmatmul.mubr.f32.gmra.mrb[0].mxu0 %v2280
  %v2379 = vpop.f32.mrb[0].mxu0
  %v2380 = vadd.f32 0.0, %v2379
  %v2381 = vpop.f32.mrb[0].mxu0
  %2382 = vmatprep.mubr.f32.mxu0 0.0
  %2383 = vmatmul.mubr.f32.gmra.mrb[0].mxu0 %v2283
  %v2384 = vpop.f32.mrb[0].mxu0
  %v2385 = vadd.f32 0.0, %v2384
  %v2386 = vpop.f32.mrb[0].mxu0
  %2387 = vmatprep.mubr.f32.mxu0 0.0
  %2388 = vmatmul.mubr.f32.gmra.mrb[0].mxu0 %v2286
  %v2389 = vpop.f32.mrb[0].mxu0
  %v2390 = vadd.f32 0.0, %v2389
  %v2391 = vpop.f32.mrb[0].mxu0
  %2392 = vdwg.mxu0
  %v2394 = vsel %vm571, %v1951, 0
  %v2397 = vsel %vm571, %v1952, 0
  %v2400 = vsel %vm571, %v1953, 0
  %v2403 = vsel %vm571, %v1954, 0
  %v2406 = vsel %vm571, %v1955, 0
  %v2409 = vsel %vm571, %v1956, 0
  %v2412 = vsel %vm571, %v1957, 0
  %v2415 = vsel %vm571, %v1958, 0
  %2417 = vmatprep.subr.mxu0 0.0
  %2418 = vmatpush1.msra.mxu0 %v1647
  %2419 = vmatprep.subr.mxu0 0.0
  %2420 = vmatpush1.msra.mxu0 %v1652
  %2421 = vmatprep.subr.mxu0 0.0
  %2422 = vmatpush1.msra.mxu0 %v1657
  %2423 = vmatprep.subr.mxu0 0.0
  %2424 = vmatpush1.msra.mxu0 %v1662
  %2425 = vmatprep.subr.mxu0 0.0
  %2426 = vmatpush1.msra.mxu0 %v1667
  %2427 = vmatprep.subr.mxu0 0.0
  %2428 = vmatpush1.msra.mxu0 %v1672
  %2429 = vmatprep.subr.mxu0 0.0
  %2430 = vmatpush1.msra.mxu0 %v1677
  %2431 = vmatprep.subr.mxu0 0.0
  %2432 = vmatpush1.msra.mxu0 %v1682
  %2433 = vmatprep.subr.mxu0 0.0
  %2434 = vmatpush1.msra.mxu0 0.0
  %2435 = vmatprep.subr.mxu0 0.0
  %2436 = vmatpush1.msra.mxu0 0.0
  %2437 = vmatprep.subr.mxu0 0.0
  %2438 = vmatpush1.msra.mxu0 0.0
  %2439 = vmatprep.subr.mxu0 0.0
  %2440 = vmatpush1.msra.mxu0 0.0
  %2441 = vmatprep.subr.mxu0 0.0
  %2442 = vmatpush1.msra.mxu0 0.0
  %2443 = vmatprep.subr.mxu0 0.0
  %2444 = vmatpush1.msra.mxu0 0.0
  %2445 = vmatprep.subr.mxu0 0.0
  %2446 = vmatpush1.msra.mxu0 0.0
  %2447 = vmatprep.subr.mxu0 0.0
  %2448 = vmatpush1.msra.mxu0 0.0
  %2449 = vmatprep.subr.mxu0 0.0
  %2450 = vmatpush1.msra.mxu0 0.0
  %2451 = vmatprep.subr.mxu0 0.0
  %2452 = vmatpush1.msra.mxu0 0.0
  %2453 = vmatprep.subr.mxu0 0.0
  %2454 = vmatpush1.msra.mxu0 0.0
  %2455 = vmatprep.subr.mxu0 0.0
  %2456 = vmatpush1.msra.mxu0 0.0
  %2457 = vmatprep.subr.mxu0 0.0
  %2458 = vmatpush1.msra.mxu0 0.0
  %2459 = vmatprep.subr.mxu0 0.0
  %2460 = vmatpush1.msra.mxu0 0.0
  %2461 = vmatprep.subr.mxu0 0.0
  %2462 = vmatpush1.msra.mxu0 0.0
  %2463 = vmatprep.subr.mxu0 0.0
  %2464 = vmatpush1.msra.mxu0 0.0
  %2465 = vmatprep.subr.mxu0 0.0
  %2466 = vmatpush1.msra.mxu0 0.0
  %2467 = vmatprep.subr.mxu0 0.0
  %2468 = vmatpush1.msra.mxu0 0.0
  %2469 = vmatprep.subr.mxu0 0.0
  %2470 = vmatpush1.msra.mxu0 0.0
  %2471 = vmatprep.subr.mxu0 0.0
  %2472 = vmatpush1.msra.mxu0 0.0
  %2473 = vmatprep.subr.mxu0 0.0
  %2474 = vmatpush1.msra.mxu0 0.0
  %2475 = vmatprep.subr.mxu0 0.0
  %2476 = vmatpush1.msra.mxu0 0.0
  %2477 = vmatprep.subr.mxu0 0.0
  %2478 = vmatpush1.msra.mxu0 0.0
  %2479 = vmatprep.subr.mxu0 0.0
  %2480 = vmatpush1.msra.mxu0 0.0
  %2481 = vmatprep.mubr.f32.mxu0 0.0
  %2482 = vmatmul.mubr.f32.gmra.mrb[0].mxu0 %v2394
  %v2483 = vpop.f32.mrb[0].mxu0
  %v2484 = vadd.f32 %v2355, %v2483
  %v2485 = vpop.f32.mrb[0].mxu0
  %2486 = vmatprep.mubr.f32.mxu0 0.0
  %2487 = vmatmul.mubr.f32.gmra.mrb[0].mxu0 %v2397
  %v2488 = vpop.f32.mrb[0].mxu0
  %v2489 = vadd.f32 %v2360, %v2488
  %v2490 = vpop.f32.mrb[0].mxu0
  %2491 = vmatprep.mubr.f32.mxu0 0.0
  %2492 = vmatmul.mubr.f32.gmra.mrb[0].mxu0 %v2400
  %v2493 = vpop.f32.mrb[0].mxu0
  %v2494 = vadd.f32 %v2365, %v2493
  %v2495 = vpop.f32.mrb[0].mxu0
  %2496 = vmatprep.mubr.f32.mxu0 0.0
  %2497 = vmatmul.mubr.f32.gmra.mrb[0].mxu0 %v2403
  %v2498 = vpop.f32.mrb[0].mxu0
  %v2499 = vadd.f32 %v2370, %v2498
  %v2500 = vpop.f32.mrb[0].mxu0
  %2501 = vmatprep.mubr.f32.mxu0 0.0
  %2502 = vmatmul.mubr.f32.gmra.mrb[0].mxu0 %v2406
  %v2503 = vpop.f32.mrb[0].mxu0
  %v2504 = vadd.f32 %v2375, %v2503
  %v2505 = vpop.f32.mrb[0].mxu0
  %2506 = vmatprep.mubr.f32.mxu0 0.0
  %2507 = vmatmul.mubr.f32.gmra.mrb[0].mxu0 %v2409
  %v2508 = vpop.f32.mrb[0].mxu0
  %v2509 = vadd.f32 %v2380, %v2508
  %v2510 = vpop.f32.mrb[0].mxu0
  %2511 = vmatprep.mubr.f32.mxu0 0.0
  %2512 = vmatmul.mubr.f32.gmra.mrb[0].mxu0 %v2412
  %v2513 = vpop.f32.mrb[0].mxu0
  %v2514 = vadd.f32 %v2385, %v2513
  %v2515 = vpop.f32.mrb[0].mxu0
  %2516 = vmatprep.mubr.f32.mxu0 0.0
  %2517 = vmatmul.mubr.f32.gmra.mrb[0].mxu0 %v2415
  %v2518 = vpop.f32.mrb[0].mxu0
  %v2519 = vadd.f32 %v2390, %v2518
  %v2520 = vpop.f32.mrb[0].mxu0
  %2521 = vdwg.mxu0
  %2522 = vrot.lane.b32.xlu0 %v1531, 112
  %v2523 = vpop.permute.xlu0 %2522
  %2524 = vrot.lane.b32.xlu0 %v1536, 112
  %v2525 = vpop.permute.xlu0 %2524
  %2526 = vrot.lane.b32.xlu0 %v1541, 112
  %v2527 = vpop.permute.xlu0 %2526
  %2528 = vrot.lane.b32.xlu0 %v1546, 112
  %v2529 = vpop.permute.xlu0 %2528
  %2530 = vrot.lane.b32.xlu0 %v1551, 112
  %v2531 = vpop.permute.xlu0 %2530
  %2532 = vrot.lane.b32.xlu0 %v1556, 112
  %v2533 = vpop.permute.xlu0 %2532
  %2534 = vrot.lane.b32.xlu0 %v1561, 112
  %v2535 = vpop.permute.xlu0 %2534
  %2536 = vrot.lane.b32.xlu0 %v1566, 112
  %v2537 = vpop.permute.xlu0 %2536
  %2538 = vrot.lane.b32.xlu0 %v1531, 80
  %v2539 = vpop.permute.xlu0 %2538
  %2540 = vrot.lane.b32.xlu0 %v1536, 80
  %v2541 = vpop.permute.xlu0 %2540
  %2542 = vrot.lane.b32.xlu0 %v1541, 80
  %v2543 = vpop.permute.xlu0 %2542
  %2544 = vrot.lane.b32.xlu0 %v1546, 80
  %v2545 = vpop.permute.xlu0 %2544
  %2546 = vrot.lane.b32.xlu0 %v1551, 80
  %v2547 = vpop.permute.xlu0 %2546
  %2548 = vrot.lane.b32.xlu0 %v1556, 80
  %v2549 = vpop.permute.xlu0 %2548
  %2550 = vrot.lane.b32.xlu0 %v1561, 80
  %v2551 = vpop.permute.xlu0 %2550
  %2552 = vrot.lane.b32.xlu0 %v1566, 80
  %v2553 = vpop.permute.xlu0 %2552
  %v2554 = vsel %vm1717, %v2523, 0
  %v2556 = vsel %vm1717, %v2525, 0
  %v2558 = vsel %vm1717, %v2527, 0
  %v2560 = vsel %vm1717, %v2529, 0
  %v2562 = vsel %vm1717, %v2531, 0
  %v2564 = vsel %vm1717, %v2533, 0
  %v2566 = vsel %vm1717, %v2535, 0
  %v2568 = vsel %vm1717, %v2537, 0
  %v2570 = vsel %vm1717, %v2539, 0
  %v2572 = vsel %vm1717, %v2541, 0
  %v2574 = vsel %vm1717, %v2543, 0
  %v2576 = vsel %vm1717, %v2545, 0
  %v2578 = vsel %vm1717, %v2547, 0
  %v2580 = vsel %vm1717, %v2549, 0
  %v2582 = vsel %vm1717, %v2551, 0
  %v2584 = vsel %vm1717, %v2553, 0
  %2586 = vmatprep.subr.mxu0 0.0
  %2587 = vmatpush1.xpose.msra.mxu0 %v2570
  %2588 = vmatprep.subr.mxu0 0.0
  %2589 = vmatpush1.xpose.msra.mxu0 %v2572
  %2590 = vmatprep.subr.mxu0 0.0
  %2591 = vmatpush1.xpose.msra.mxu0 %v2574
  %2592 = vmatprep.subr.mxu0 0.0
  %2593 = vmatpush1.xpose.msra.mxu0 %v2576
  %2594 = vmatprep.subr.mxu0 0.0
  %2595 = vmatpush1.xpose.msra.mxu0 %v2578
  %2596 = vmatprep.subr.mxu0 0.0
  %2597 = vmatpush1.xpose.msra.mxu0 %v2580
  %2598 = vmatprep.subr.mxu0 0.0
  %2599 = vmatpush1.xpose.msra.mxu0 %v2582
  %2600 = vmatprep.subr.mxu0 0.0
  %2601 = vmatpush1.xpose.msra.mxu0 %v2584
  %2602 = vmatprep.subr.mxu0 0.0
  %2603 = vmatpush1.xpose.msra.mxu0 0.0
  %2604 = vmatprep.subr.mxu0 0.0
  %2605 = vmatpush1.xpose.msra.mxu0 0.0
  %2606 = vmatprep.subr.mxu0 0.0
  %2607 = vmatpush1.xpose.msra.mxu0 0.0
  %2608 = vmatprep.subr.mxu0 0.0
  %2609 = vmatpush1.xpose.msra.mxu0 0.0
  %2610 = vmatprep.subr.mxu0 0.0
  %2611 = vmatpush1.xpose.msra.mxu0 0.0
  %2612 = vmatprep.subr.mxu0 0.0
  %2613 = vmatpush1.xpose.msra.mxu0 0.0
  %2614 = vmatprep.subr.mxu0 0.0
  %2615 = vmatpush1.xpose.msra.mxu0 0.0
  %2616 = vmatprep.subr.mxu0 0.0
  %2617 = vmatpush1.xpose.msra.mxu0 0.0
  %2618 = vmatprep.subr.mxu0 0.0
  %2619 = vmatpush1.xpose.msra.mxu0 0.0
  %2620 = vmatprep.subr.mxu0 0.0
  %2621 = vmatpush1.xpose.msra.mxu0 0.0
  %2622 = vmatprep.subr.mxu0 0.0
  %2623 = vmatpush1.xpose.msra.mxu0 0.0
  %2624 = vmatprep.subr.mxu0 0.0
  %2625 = vmatpush1.xpose.msra.mxu0 0.0
  %2626 = vmatprep.subr.mxu0 0.0
  %2627 = vmatpush1.xpose.msra.mxu0 0.0
  %2628 = vmatprep.subr.mxu0 0.0
  %2629 = vmatpush1.xpose.msra.mxu0 0.0
  %2630 = vmatprep.subr.mxu0 0.0
  %2631 = vmatpush1.xpose.msra.mxu0 0.0
  %2632 = vmatprep.subr.mxu0 0.0
  %2633 = vmatpush1.xpose.msra.mxu0 0.0
  %2634 = vmatprep.subr.mxu0 0.0
  %2635 = vmatpush1.xpose.msra.mxu0 0.0
  %2636 = vmatprep.subr.mxu0 0.0
  %2637 = vmatpush1.xpose.msra.mxu0 0.0
  %2638 = vmatprep.subr.mxu0 0.0
  %2639 = vmatpush1.xpose.msra.mxu0 0.0
  %2640 = vmatprep.subr.mxu0 0.0
  %2641 = vmatpush1.xpose.msra.mxu0 0.0
  %2642 = vmatprep.subr.mxu0 0.0
  %2643 = vmatpush1.xpose.msra.mxu0 0.0
  %2644 = vmatprep.subr.mxu0 0.0
  %2645 = vmatpush1.xpose.msra.mxu0 0.0
  %2646 = vmatprep.subr.mxu0 0.0
  %2647 = vmatpush1.xpose.msra.mxu0 0.0
  %2648 = vmatprep.subr.mxu0 0.0
  %2649 = vmatpush1.xpose.msra.mxu0 0.0
  %2650 = vmatprep.mubr.f32.mxu0 0.0
  %2651 = vmatmul.mubr.f32.gmra.mrb[0].mxu0 %v2554
  %v2652 = vpop.f32.mrb[0].mxu0
  %v2653 = vadd.f32 0.0, %v2652
  %v2654 = vpop.f32.mrb[0].mxu0
  %2655 = vmatprep.mubr.f32.mxu0 0.0
  %2656 = vmatmul.mubr.f32.gmra.mrb[0].mxu0 %v2556
  %v2657 = vpop.f32.mrb[0].mxu0
  %v2658 = vadd.f32 0.0, %v2657
  %v2659 = vpop.f32.mrb[0].mxu0
  %2660 = vmatprep.mubr.f32.mxu0 0.0
  %2661 = vmatmul.mubr.f32.gmra.mrb[0].mxu0 %v2558
  %v2662 = vpop.f32.mrb[0].mxu0
  %v2663 = vadd.f32 0.0, %v2662
  %v2664 = vpop.f32.mrb[0].mxu0
  %2665 = vmatprep.mubr.f32.mxu0 0.0
  %2666 = vmatmul.mubr.f32.gmra.mrb[0].mxu0 %v2560
  %v2667 = vpop.f32.mrb[0].mxu0
  %v2668 = vadd.f32 0.0, %v2667
  %v2669 = vpop.f32.mrb[0].mxu0
  %2670 = vmatprep.mubr.f32.mxu0 0.0
  %2671 = vmatmul.mubr.f32.gmra.mrb[0].mxu0 %v2562
  %v2672 = vpop.f32.mrb[0].mxu0
  %v2673 = vadd.f32 0.0, %v2672
  %v2674 = vpop.f32.mrb[0].mxu0
  %2675 = vmatprep.mubr.f32.mxu0 0.0
  %2676 = vmatmul.mubr.f32.gmra.mrb[0].mxu0 %v2564
  %v2677 = vpop.f32.mrb[0].mxu0
  %v2678 = vadd.f32 0.0, %v2677
  %v2679 = vpop.f32.mrb[0].mxu0
  %2680 = vmatprep.mubr.f32.mxu0 0.0
  %2681 = vmatmul.mubr.f32.gmra.mrb[0].mxu0 %v2566
  %v2682 = vpop.f32.mrb[0].mxu0
  %v2683 = vadd.f32 0.0, %v2682
  %v2684 = vpop.f32.mrb[0].mxu0
  %2685 = vmatprep.mubr.f32.mxu0 0.0
  %2686 = vmatmul.mubr.f32.gmra.mrb[0].mxu0 %v2568
  %v2687 = vpop.f32.mrb[0].mxu0
  %v2688 = vadd.f32 0.0, %v2687
  %v2689 = vpop.f32.mrb[0].mxu0
  %2690 = vdwg.mxu0
  %v2691 = vmul.f32 %v2653, 0.35355338
  %v2692 = vmul.f32 %v2658, 0.35355338
  %v2693 = vmul.f32 %v2663, 0.35355338
  %v2694 = vmul.f32 %v2668, 0.35355338
  %v2695 = vmul.f32 %v2673, 0.35355338
  %v2696 = vmul.f32 %v2678, 0.35355338
  %v2697 = vmul.f32 %v2683, 0.35355338
  %v2698 = vmul.f32 %v2688, 0.35355338
  %v2699 = vadd.f32 %v2691, %v1685
  %v2700 = vadd.f32 %v2692, %v1686
  %v2701 = vadd.f32 %v2693, %v1687
  %v2702 = vadd.f32 %v2694, %v1688
  %v2703 = vadd.f32 %v2695, %v1689
  %v2704 = vadd.f32 %v2696, %v1690
  %v2705 = vadd.f32 %v2697, %v1691
  %v2706 = vadd.f32 %v2698, %v1692
  %v2707 = vsel %vm571, %v2699, -inf
  %2708 = vmax.xlane.f32.xlu0 %v2707
  %v2709 = vpop.xlane.xlu0 %2708
  %v2710 = vsel %vm571, %v2700, -inf
  %2711 = vmax.xlane.f32.xlu0 %v2710
  %v2712 = vpop.xlane.xlu0 %2711
  %v2713 = vsel %vm571, %v2701, -inf
  %2714 = vmax.xlane.f32.xlu0 %v2713
  %v2715 = vpop.xlane.xlu0 %2714
  %v2716 = vsel %vm571, %v2702, -inf
  %2717 = vmax.xlane.f32.xlu0 %v2716
  %v2718 = vpop.xlane.xlu0 %2717
  %v2719 = vsel %vm571, %v2703, -inf
  %2720 = vmax.xlane.f32.xlu0 %v2719
  %v2721 = vpop.xlane.xlu0 %2720
  %v2722 = vsel %vm571, %v2704, -inf
  %2723 = vmax.xlane.f32.xlu0 %v2722
  %v2724 = vpop.xlane.xlu0 %2723
  %v2725 = vsel %vm571, %v2705, -inf
  %2726 = vmax.xlane.f32.xlu0 %v2725
  %v2727 = vpop.xlane.xlu0 %2726
  %v2728 = vsel %vm571, %v2706, -inf
  %2729 = vmax.xlane.f32.xlu0 %v2728
  %v2730 = vpop.xlane.xlu0 %2729
  %v2731 = vsub.f32 %v2699, %v2709
  %v2732 = vsub.f32 %v2700, %v2712
  %v2733 = vsub.f32 %v2701, %v2715
  %v2734 = vsub.f32 %v2702, %v2718
  %v2735 = vsub.f32 %v2703, %v2721
  %v2736 = vsub.f32 %v2704, %v2724
  %v2737 = vsub.f32 %v2705, %v2727
  %v2738 = vsub.f32 %v2706, %v2730
  %v2739 = vmul.f32 %v2731, 1.442695
  %v2740 = vpow.pop %v2739
  %v2741 = vmul.f32 %v2732, 1.442695
  %v2742 = vpow.pop %v2741
  %v2743 = vmul.f32 %v2733, 1.442695
  %v2744 = vpow.pop %v2743
  %v2745 = vmul.f32 %v2734, 1.442695
  %v2746 = vpow.pop %v2745
  %v2747 = vmul.f32 %v2735, 1.442695
  %v2748 = vpow.pop %v2747
  %v2749 = vmul.f32 %v2736, 1.442695
  %v2750 = vpow.pop %v2749
  %v2751 = vmul.f32 %v2737, 1.442695
  %v2752 = vpow.pop %v2751
  %v2753 = vmul.f32 %v2738, 1.442695
  %v2754 = vpow.pop %v2753
  %v2755 = vsel %vm571, %v2740, 0.0
  %2756 = vadd.xlane.f32.xlu0 %v2755
  %v2757 = vpop.xlane.xlu0 %2756
  %v2758 = vsel %vm571, %v2742, 0.0
  %2759 = vadd.xlane.f32.xlu0 %v2758
  %v2760 = vpop.xlane.xlu0 %2759
  %v2761 = vsel %vm571, %v2744, 0.0
  %2762 = vadd.xlane.f32.xlu0 %v2761
  %v2763 = vpop.xlane.xlu0 %2762
  %v2764 = vsel %vm571, %v2746, 0.0
  %2765 = vadd.xlane.f32.xlu0 %v2764
  %v2766 = vpop.xlane.xlu0 %2765
  %v2767 = vsel %vm571, %v2748, 0.0
  %2768 = vadd.xlane.f32.xlu0 %v2767
  %v2769 = vpop.xlane.xlu0 %2768
  %v2770 = vsel %vm571, %v2750, 0.0
  %2771 = vadd.xlane.f32.xlu0 %v2770
  %v2772 = vpop.xlane.xlu0 %2771
  %v2773 = vsel %vm571, %v2752, 0.0
  %2774 = vadd.xlane.f32.xlu0 %v2773
  %v2775 = vpop.xlane.xlu0 %2774
  %v2776 = vsel %vm571, %v2754, 0.0
  %2777 = vadd.xlane.f32.xlu0 %v2776
  %v2778 = vpop.xlane.xlu0 %2777
  %v2779 = vrcp.pop %v2757
  %v2780 = vrcp.pop %v2760
  %v2781 = vrcp.pop %v2763
  %v2782 = vrcp.pop %v2766
  %v2783 = vrcp.pop %v2769
  %v2784 = vrcp.pop %v2772
  %v2785 = vrcp.pop %v2775
  %v2786 = vrcp.pop %v2778
  %v2787 = vmul.f32 %v2740, %v2779
  %v2788 = vmul.f32 %v2742, %v2780
  %v2789 = vmul.f32 %v2744, %v2781
  %v2790 = vmul.f32 %v2746, %v2782
  %v2791 = vmul.f32 %v2748, %v2783
  %v2792 = vmul.f32 %v2750, %v2784
  %v2793 = vmul.f32 %v2752, %v2785
  %v2794 = vmul.f32 %v2754, %v2786
  %2795 = vrot.lane.b32.xlu0 %v1647, 64
  %v2796 = vpop.permute.xlu0 %2795
  %2797 = vrot.lane.b32.xlu0 %v1652, 64
  %v2798 = vpop.permute.xlu0 %2797
  %2799 = vrot.lane.b32.xlu0 %v1657, 64
  %v2800 = vpop.permute.xlu0 %2799
  %2801 = vrot.lane.b32.xlu0 %v1662, 64
  %v2802 = vpop.permute.xlu0 %2801
  %2803 = vrot.lane.b32.xlu0 %v1667, 64
  %v2804 = vpop.permute.xlu0 %2803
  %2805 = vrot.lane.b32.xlu0 %v1672, 64
  %v2806 = vpop.permute.xlu0 %2805
  %2807 = vrot.lane.b32.xlu0 %v1677, 64
  %v2808 = vpop.permute.xlu0 %2807
  %2809 = vrot.lane.b32.xlu0 %v1682, 64
  %v2810 = vpop.permute.xlu0 %2809
  %v2820 = vsel %vm571, %v2787, 0
  %v2823 = vsel %vm571, %v2788, 0
  %v2826 = vsel %vm571, %v2789, 0
  %v2829 = vsel %vm571, %v2790, 0
  %v2832 = vsel %vm571, %v2791, 0
  %v2835 = vsel %vm571, %v2792, 0
  %v2838 = vsel %vm571, %v2793, 0
  %v2841 = vsel %vm571, %v2794, 0
  %2843 = vmatprep.subr.mxu0 0.0
  %2844 = vmatpush1.msra.mxu0 %v2796
  %2845 = vmatprep.subr.mxu0 0.0
  %2846 = vmatpush1.msra.mxu0 %v2798
  %2847 = vmatprep.subr.mxu0 0.0
  %2848 = vmatpush1.msra.mxu0 %v2800
  %2849 = vmatprep.subr.mxu0 0.0
  %2850 = vmatpush1.msra.mxu0 %v2802
  %2851 = vmatprep.subr.mxu0 0.0
  %2852 = vmatpush1.msra.mxu0 %v2804
  %2853 = vmatprep.subr.mxu0 0.0
  %2854 = vmatpush1.msra.mxu0 %v2806
  %2855 = vmatprep.subr.mxu0 0.0
  %2856 = vmatpush1.msra.mxu0 %v2808
  %2857 = vmatprep.subr.mxu0 0.0
  %2858 = vmatpush1.msra.mxu0 %v2810
  %2859 = vmatprep.subr.mxu0 0.0
  %2860 = vmatpush1.msra.mxu0 0.0
  %2861 = vmatprep.subr.mxu0 0.0
  %2862 = vmatpush1.msra.mxu0 0.0
  %2863 = vmatprep.subr.mxu0 0.0
  %2864 = vmatpush1.msra.mxu0 0.0
  %2865 = vmatprep.subr.mxu0 0.0
  %2866 = vmatpush1.msra.mxu0 0.0
  %2867 = vmatprep.subr.mxu0 0.0
  %2868 = vmatpush1.msra.mxu0 0.0
  %2869 = vmatprep.subr.mxu0 0.0
  %2870 = vmatpush1.msra.mxu0 0.0
  %2871 = vmatprep.subr.mxu0 0.0
  %2872 = vmatpush1.msra.mxu0 0.0
  %2873 = vmatprep.subr.mxu0 0.0
  %2874 = vmatpush1.msra.mxu0 0.0
  %2875 = vmatprep.subr.mxu0 0.0
  %2876 = vmatpush1.msra.mxu0 0.0
  %2877 = vmatprep.subr.mxu0 0.0
  %2878 = vmatpush1.msra.mxu0 0.0
  %2879 = vmatprep.subr.mxu0 0.0
  %2880 = vmatpush1.msra.mxu0 0.0
  %2881 = vmatprep.subr.mxu0 0.0
  %2882 = vmatpush1.msra.mxu0 0.0
  %2883 = vmatprep.subr.mxu0 0.0
  %2884 = vmatpush1.msra.mxu0 0.0
  %2885 = vmatprep.subr.mxu0 0.0
  %2886 = vmatpush1.msra.mxu0 0.0
  %2887 = vmatprep.subr.mxu0 0.0
  %2888 = vmatpush1.msra.mxu0 0.0
  %2889 = vmatprep.subr.mxu0 0.0
  %2890 = vmatpush1.msra.mxu0 0.0
  %2891 = vmatprep.subr.mxu0 0.0
  %2892 = vmatpush1.msra.mxu0 0.0
  %2893 = vmatprep.subr.mxu0 0.0
  %2894 = vmatpush1.msra.mxu0 0.0
  %2895 = vmatprep.subr.mxu0 0.0
  %2896 = vmatpush1.msra.mxu0 0.0
  %2897 = vmatprep.subr.mxu0 0.0
  %2898 = vmatpush1.msra.mxu0 0.0
  %2899 = vmatprep.subr.mxu0 0.0
  %2900 = vmatpush1.msra.mxu0 0.0
  %2901 = vmatprep.subr.mxu0 0.0
  %2902 = vmatpush1.msra.mxu0 0.0
  %2903 = vmatprep.subr.mxu0 0.0
  %2904 = vmatpush1.msra.mxu0 0.0
  %2905 = vmatprep.subr.mxu0 0.0
  %2906 = vmatpush1.msra.mxu0 0.0
  %2907 = vmatprep.mubr.f32.mxu0 0.0
  %2908 = vmatmul.mubr.f32.gmra.mrb[0].mxu0 %v2820
  %v2909 = vpop.f32.mrb[0].mxu0
  %v2910 = vadd.f32 0.0, %v2909
  %v2911 = vpop.f32.mrb[0].mxu0
  %2912 = vmatprep.mubr.f32.mxu0 0.0
  %2913 = vmatmul.mubr.f32.gmra.mrb[0].mxu0 %v2823
  %v2914 = vpop.f32.mrb[0].mxu0
  %v2915 = vadd.f32 0.0, %v2914
  %v2916 = vpop.f32.mrb[0].mxu0
  %2917 = vmatprep.mubr.f32.mxu0 0.0
  %2918 = vmatmul.mubr.f32.gmra.mrb[0].mxu0 %v2826
  %v2919 = vpop.f32.mrb[0].mxu0
  %v2920 = vadd.f32 0.0, %v2919
  %v2921 = vpop.f32.mrb[0].mxu0
  %2922 = vmatprep.mubr.f32.mxu0 0.0
  %2923 = vmatmul.mubr.f32.gmra.mrb[0].mxu0 %v2829
  %v2924 = vpop.f32.mrb[0].mxu0
  %v2925 = vadd.f32 0.0, %v2924
  %v2926 = vpop.f32.mrb[0].mxu0
  %2927 = vmatprep.mubr.f32.mxu0 0.0
  %2928 = vmatmul.mubr.f32.gmra.mrb[0].mxu0 %v2832
  %v2929 = vpop.f32.mrb[0].mxu0
  %v2930 = vadd.f32 0.0, %v2929
  %v2931 = vpop.f32.mrb[0].mxu0
  %2932 = vmatprep.mubr.f32.mxu0 0.0
  %2933 = vmatmul.mubr.f32.gmra.mrb[0].mxu0 %v2835
  %v2934 = vpop.f32.mrb[0].mxu0
  %v2935 = vadd.f32 0.0, %v2934
  %v2936 = vpop.f32.mrb[0].mxu0
  %2937 = vmatprep.mubr.f32.mxu0 0.0
  %2938 = vmatmul.mubr.f32.gmra.mrb[0].mxu0 %v2838
  %v2939 = vpop.f32.mrb[0].mxu0
  %v2940 = vadd.f32 0.0, %v2939
  %v2941 = vpop.f32.mrb[0].mxu0
  %2942 = vmatprep.mubr.f32.mxu0 0.0
  %2943 = vmatmul.mubr.f32.gmra.mrb[0].mxu0 %v2841
  %v2944 = vpop.f32.mrb[0].mxu0
  %v2945 = vadd.f32 0.0, %v2944
  %v2946 = vpop.f32.mrb[0].mxu0
  %2947 = vdwg.mxu0
  %v2948 = vadd.f32 %v2484, %v2910
  %v2949 = vadd.f32 %v2489, %v2915
  %v2950 = vadd.f32 %v2494, %v2920
  %v2951 = vadd.f32 %v2499, %v2925
  %v2952 = vadd.f32 %v2504, %v2930
  %v2953 = vadd.f32 %v2509, %v2935
  %v2954 = vadd.f32 %v2514, %v2940
  %v2955 = vadd.f32 %v2519, %v2945
  %2956 = vrot.lane.b32.xlu0 %v1531, 104
  %v2957 = vpop.permute.xlu0 %2956
  %2958 = vrot.lane.b32.xlu0 %v1536, 104
  %v2959 = vpop.permute.xlu0 %2958
  %2960 = vrot.lane.b32.xlu0 %v1541, 104
  %v2961 = vpop.permute.xlu0 %2960
  %2962 = vrot.lane.b32.xlu0 %v1546, 104
  %v2963 = vpop.permute.xlu0 %2962
  %2964 = vrot.lane.b32.xlu0 %v1551, 104
  %v2965 = vpop.permute.xlu0 %2964
  %2966 = vrot.lane.b32.xlu0 %v1556, 104
  %v2967 = vpop.permute.xlu0 %2966
  %2968 = vrot.lane.b32.xlu0 %v1561, 104
  %v2969 = vpop.permute.xlu0 %2968
  %2970 = vrot.lane.b32.xlu0 %v1566, 104
  %v2971 = vpop.permute.xlu0 %2970
  %2972 = vrot.lane.b32.xlu0 %v1531, 72
  %v2973 = vpop.permute.xlu0 %2972
  %2974 = vrot.lane.b32.xlu0 %v1536, 72
  %v2975 = vpop.permute.xlu0 %2974
  %2976 = vrot.lane.b32.xlu0 %v1541, 72
  %v2977 = vpop.permute.xlu0 %2976
  %2978 = vrot.lane.b32.xlu0 %v1546, 72
  %v2979 = vpop.permute.xlu0 %2978
  %2980 = vrot.lane.b32.xlu0 %v1551, 72
  %v2981 = vpop.permute.xlu0 %2980
  %2982 = vrot.lane.b32.xlu0 %v1556, 72
  %v2983 = vpop.permute.xlu0 %2982
  %2984 = vrot.lane.b32.xlu0 %v1561, 72
  %v2985 = vpop.permute.xlu0 %2984
  %2986 = vrot.lane.b32.xlu0 %v1566, 72
  %v2987 = vpop.permute.xlu0 %2986
  %v2988 = vsel %vm1717, %v2957, 0
  %v2990 = vsel %vm1717, %v2959, 0
  %v2992 = vsel %vm1717, %v2961, 0
  %v2994 = vsel %vm1717, %v2963, 0
  %v2996 = vsel %vm1717, %v2965, 0
  %v2998 = vsel %vm1717, %v2967, 0
  %v3000 = vsel %vm1717, %v2969, 0
  %v3002 = vsel %vm1717, %v2971, 0
  %v3004 = vsel %vm1717, %v2973, 0
  %v3006 = vsel %vm1717, %v2975, 0
  %v3008 = vsel %vm1717, %v2977, 0
  %v3010 = vsel %vm1717, %v2979, 0
  %v3012 = vsel %vm1717, %v2981, 0
  %v3014 = vsel %vm1717, %v2983, 0
  %v3016 = vsel %vm1717, %v2985, 0
  %v3018 = vsel %vm1717, %v2987, 0
  %3020 = vmatprep.subr.mxu0 0.0
  %3021 = vmatpush1.xpose.msra.mxu0 %v3004
  %3022 = vmatprep.subr.mxu0 0.0
  %3023 = vmatpush1.xpose.msra.mxu0 %v3006
  %3024 = vmatprep.subr.mxu0 0.0
  %3025 = vmatpush1.xpose.msra.mxu0 %v3008
  %3026 = vmatprep.subr.mxu0 0.0
  %3027 = vmatpush1.xpose.msra.mxu0 %v3010
  %3028 = vmatprep.subr.mxu0 0.0
  %3029 = vmatpush1.xpose.msra.mxu0 %v3012
  %3030 = vmatprep.subr.mxu0 0.0
  %3031 = vmatpush1.xpose.msra.mxu0 %v3014
  %3032 = vmatprep.subr.mxu0 0.0
  %3033 = vmatpush1.xpose.msra.mxu0 %v3016
  %3034 = vmatprep.subr.mxu0 0.0
  %3035 = vmatpush1.xpose.msra.mxu0 %v3018
  %3036 = vmatprep.subr.mxu0 0.0
  %3037 = vmatpush1.xpose.msra.mxu0 0.0
  %3038 = vmatprep.subr.mxu0 0.0
  %3039 = vmatpush1.xpose.msra.mxu0 0.0
  %3040 = vmatprep.subr.mxu0 0.0
  %3041 = vmatpush1.xpose.msra.mxu0 0.0
  %3042 = vmatprep.subr.mxu0 0.0
  %3043 = vmatpush1.xpose.msra.mxu0 0.0
  %3044 = vmatprep.subr.mxu0 0.0
  %3045 = vmatpush1.xpose.msra.mxu0 0.0
  %3046 = vmatprep.subr.mxu0 0.0
  %3047 = vmatpush1.xpose.msra.mxu0 0.0
  %3048 = vmatprep.subr.mxu0 0.0
  %3049 = vmatpush1.xpose.msra.mxu0 0.0
  %3050 = vmatprep.subr.mxu0 0.0
  %3051 = vmatpush1.xpose.msra.mxu0 0.0
  %3052 = vmatprep.subr.mxu0 0.0
  %3053 = vmatpush1.xpose.msra.mxu0 0.0
  %3054 = vmatprep.subr.mxu0 0.0
  %3055 = vmatpush1.xpose.msra.mxu0 0.0
  %3056 = vmatprep.subr.mxu0 0.0
  %3057 = vmatpush1.xpose.msra.mxu0 0.0
  %3058 = vmatprep.subr.mxu0 0.0
  %3059 = vmatpush1.xpose.msra.mxu0 0.0
  %3060 = vmatprep.subr.mxu0 0.0
  %3061 = vmatpush1.xpose.msra.mxu0 0.0
  %3062 = vmatprep.subr.mxu0 0.0
  %3063 = vmatpush1.xpose.msra.mxu0 0.0
  %3064 = vmatprep.subr.mxu0 0.0
  %3065 = vmatpush1.xpose.msra.mxu0 0.0
  %3066 = vmatprep.subr.mxu0 0.0
  %3067 = vmatpush1.xpose.msra.mxu0 0.0
  %3068 = vmatprep.subr.mxu0 0.0
  %3069 = vmatpush1.xpose.msra.mxu0 0.0
  %3070 = vmatprep.subr.mxu0 0.0
  %3071 = vmatpush1.xpose.msra.mxu0 0.0
  %3072 = vmatprep.subr.mxu0 0.0
  %3073 = vmatpush1.xpose.msra.mxu0 0.0
  %3074 = vmatprep.subr.mxu0 0.0
  %3075 = vmatpush1.xpose.msra.mxu0 0.0
  %3076 = vmatprep.subr.mxu0 0.0
  %3077 = vmatpush1.xpose.msra.mxu0 0.0
  %3078 = vmatprep.subr.mxu0 0.0
  %3079 = vmatpush1.xpose.msra.mxu0 0.0
  %3080 = vmatprep.subr.mxu0 0.0
  %3081 = vmatpush1.xpose.msra.mxu0 0.0
  %3082 = vmatprep.subr.mxu0 0.0
  %3083 = vmatpush1.xpose.msra.mxu0 0.0
  %3084 = vmatprep.mubr.f32.mxu0 0.0
  %3085 = vmatmul.mubr.f32.gmra.mrb[0].mxu0 %v2988
  %v3086 = vpop.f32.mrb[0].mxu0
  %v3087 = vadd.f32 0.0, %v3086
  %v3088 = vpop.f32.mrb[0].mxu0
  %3089 = vmatprep.mubr.f32.mxu0 0.0
  %3090 = vmatmul.mubr.f32.gmra.mrb[0].mxu0 %v2990
  %v3091 = vpop.f32.mrb[0].mxu0
  %v3092 = vadd.f32 0.0, %v3091
  %v3093 = vpop.f32.mrb[0].mxu0
  %3094 = vmatprep.mubr.f32.mxu0 0.0
  %3095 = vmatmul.mubr.f32.gmra.mrb[0].mxu0 %v2992
  %v3096 = vpop.f32.mrb[0].mxu0
  %v3097 = vadd.f32 0.0, %v3096
  %v3098 = vpop.f32.mrb[0].mxu0
  %3099 = vmatprep.mubr.f32.mxu0 0.0
  %3100 = vmatmul.mubr.f32.gmra.mrb[0].mxu0 %v2994
  %v3101 = vpop.f32.mrb[0].mxu0
  %v3102 = vadd.f32 0.0, %v3101
  %v3103 = vpop.f32.mrb[0].mxu0
  %3104 = vmatprep.mubr.f32.mxu0 0.0
  %3105 = vmatmul.mubr.f32.gmra.mrb[0].mxu0 %v2996
  %v3106 = vpop.f32.mrb[0].mxu0
  %v3107 = vadd.f32 0.0, %v3106
  %v3108 = vpop.f32.mrb[0].mxu0
  %3109 = vmatprep.mubr.f32.mxu0 0.0
  %3110 = vmatmul.mubr.f32.gmra.mrb[0].mxu0 %v2998
  %v3111 = vpop.f32.mrb[0].mxu0
  %v3112 = vadd.f32 0.0, %v3111
  %v3113 = vpop.f32.mrb[0].mxu0
  %3114 = vmatprep.mubr.f32.mxu0 0.0
  %3115 = vmatmul.mubr.f32.gmra.mrb[0].mxu0 %v3000
  %v3116 = vpop.f32.mrb[0].mxu0
  %v3117 = vadd.f32 0.0, %v3116
  %v3118 = vpop.f32.mrb[0].mxu0
  %3119 = vmatprep.mubr.f32.mxu0 0.0
  %3120 = vmatmul.mubr.f32.gmra.mrb[0].mxu0 %v3002
  %v3121 = vpop.f32.mrb[0].mxu0
  %v3122 = vadd.f32 0.0, %v3121
  %v3123 = vpop.f32.mrb[0].mxu0
  %3124 = vdwg.mxu0
  %v3125 = vmul.f32 %v3087, 0.35355338
  %v3126 = vmul.f32 %v3092, 0.35355338
  %v3127 = vmul.f32 %v3097, 0.35355338
  %v3128 = vmul.f32 %v3102, 0.35355338
  %v3129 = vmul.f32 %v3107, 0.35355338
  %v3130 = vmul.f32 %v3112, 0.35355338
  %v3131 = vmul.f32 %v3117, 0.35355338
  %v3132 = vmul.f32 %v3122, 0.35355338
  %v3133 = vadd.f32 %v3125, %v1685
  %v3134 = vadd.f32 %v3126, %v1686
  %v3135 = vadd.f32 %v3127, %v1687
  %v3136 = vadd.f32 %v3128, %v1688
  %v3137 = vadd.f32 %v3129, %v1689
  %v3138 = vadd.f32 %v3130, %v1690
  %v3139 = vadd.f32 %v3131, %v1691
  %v3140 = vadd.f32 %v3132, %v1692
  %v3141 = vsel %vm571, %v3133, -inf
  %3142 = vmax.xlane.f32.xlu0 %v3141
  %v3143 = vpop.xlane.xlu0 %3142
  %v3144 = vsel %vm571, %v3134, -inf
  %3145 = vmax.xlane.f32.xlu0 %v3144
  %v3146 = vpop.xlane.xlu0 %3145
  %v3147 = vsel %vm571, %v3135, -inf
  %3148 = vmax.xlane.f32.xlu0 %v3147
  %v3149 = vpop.xlane.xlu0 %3148
  %v3150 = vsel %vm571, %v3136, -inf
  %3151 = vmax.xlane.f32.xlu0 %v3150
  %v3152 = vpop.xlane.xlu0 %3151
  %v3153 = vsel %vm571, %v3137, -inf
  %3154 = vmax.xlane.f32.xlu0 %v3153
  %v3155 = vpop.xlane.xlu0 %3154
  %v3156 = vsel %vm571, %v3138, -inf
  %3157 = vmax.xlane.f32.xlu0 %v3156
  %v3158 = vpop.xlane.xlu0 %3157
  %v3159 = vsel %vm571, %v3139, -inf
  %3160 = vmax.xlane.f32.xlu0 %v3159
  %v3161 = vpop.xlane.xlu0 %3160
  %v3162 = vsel %vm571, %v3140, -inf
  %3163 = vmax.xlane.f32.xlu0 %v3162
  %v3164 = vpop.xlane.xlu0 %3163
  %v3165 = vsub.f32 %v3133, %v3143
  %v3166 = vsub.f32 %v3134, %v3146
  %v3167 = vsub.f32 %v3135, %v3149
  %v3168 = vsub.f32 %v3136, %v3152
  %v3169 = vsub.f32 %v3137, %v3155
  %v3170 = vsub.f32 %v3138, %v3158
  %v3171 = vsub.f32 %v3139, %v3161
  %v3172 = vsub.f32 %v3140, %v3164
  %v3173 = vmul.f32 %v3165, 1.442695
  %v3174 = vpow.pop %v3173
  %v3175 = vmul.f32 %v3166, 1.442695
  %v3176 = vpow.pop %v3175
  %v3177 = vmul.f32 %v3167, 1.442695
  %v3178 = vpow.pop %v3177
  %v3179 = vmul.f32 %v3168, 1.442695
  %v3180 = vpow.pop %v3179
  %v3181 = vmul.f32 %v3169, 1.442695
  %v3182 = vpow.pop %v3181
  %v3183 = vmul.f32 %v3170, 1.442695
  %v3184 = vpow.pop %v3183
  %v3185 = vmul.f32 %v3171, 1.442695
  %v3186 = vpow.pop %v3185
  %v3187 = vmul.f32 %v3172, 1.442695
  %v3188 = vpow.pop %v3187
  %v3189 = vsel %vm571, %v3174, 0.0
  %3190 = vadd.xlane.f32.xlu0 %v3189
  %v3191 = vpop.xlane.xlu0 %3190
  %v3192 = vsel %vm571, %v3176, 0.0
  %3193 = vadd.xlane.f32.xlu0 %v3192
  %v3194 = vpop.xlane.xlu0 %3193
  %v3195 = vsel %vm571, %v3178, 0.0
  %3196 = vadd.xlane.f32.xlu0 %v3195
  %v3197 = vpop.xlane.xlu0 %3196
  %v3198 = vsel %vm571, %v3180, 0.0
  %3199 = vadd.xlane.f32.xlu0 %v3198
  %v3200 = vpop.xlane.xlu0 %3199
  %v3201 = vsel %vm571, %v3182, 0.0
  %3202 = vadd.xlane.f32.xlu0 %v3201
  %v3203 = vpop.xlane.xlu0 %3202
  %v3204 = vsel %vm571, %v3184, 0.0
  %3205 = vadd.xlane.f32.xlu0 %v3204
  %v3206 = vpop.xlane.xlu0 %3205
  %v3207 = vsel %vm571, %v3186, 0.0
  %3208 = vadd.xlane.f32.xlu0 %v3207
  %v3209 = vpop.xlane.xlu0 %3208
  %v3210 = vsel %vm571, %v3188, 0.0
  %3211 = vadd.xlane.f32.xlu0 %v3210
  %v3212 = vpop.xlane.xlu0 %3211
  %v3213 = vrcp.pop %v3191
  %v3214 = vrcp.pop %v3194
  %v3215 = vrcp.pop %v3197
  %v3216 = vrcp.pop %v3200
  %v3217 = vrcp.pop %v3203
  %v3218 = vrcp.pop %v3206
  %v3219 = vrcp.pop %v3209
  %v3220 = vrcp.pop %v3212
  %v3221 = vmul.f32 %v3174, %v3213
  %v3222 = vmul.f32 %v3176, %v3214
  %v3223 = vmul.f32 %v3178, %v3215
  %v3224 = vmul.f32 %v3180, %v3216
  %v3225 = vmul.f32 %v3182, %v3217
  %v3226 = vmul.f32 %v3184, %v3218
  %v3227 = vmul.f32 %v3186, %v3219
  %v3228 = vmul.f32 %v3188, %v3220
  %3229 = vrot.lane.b32.xlu0 %v1647, 32
  %v3230 = vpop.permute.xlu0 %3229
  %3231 = vrot.lane.b32.xlu0 %v1652, 32
  %v3232 = vpop.permute.xlu0 %3231
  %3233 = vrot.lane.b32.xlu0 %v1657, 32
  %v3234 = vpop.permute.xlu0 %3233
  %3235 = vrot.lane.b32.xlu0 %v1662, 32
  %v3236 = vpop.permute.xlu0 %3235
  %3237 = vrot.lane.b32.xlu0 %v1667, 32
  %v3238 = vpop.permute.xlu0 %3237
  %3239 = vrot.lane.b32.xlu0 %v1672, 32
  %v3240 = vpop.permute.xlu0 %3239
  %3241 = vrot.lane.b32.xlu0 %v1677, 32
  %v3242 = vpop.permute.xlu0 %3241
  %3243 = vrot.lane.b32.xlu0 %v1682, 32
  %v3244 = vpop.permute.xlu0 %3243
  %v3254 = vsel %vm571, %v3221, 0
  %v3257 = vsel %vm571, %v3222, 0
  %v3260 = vsel %vm571, %v3223, 0
  %v3263 = vsel %vm571, %v3224, 0
  %v3266 = vsel %vm571, %v3225, 0
  %v3269 = vsel %vm571, %v3226, 0
  %v3272 = vsel %vm571, %v3227, 0
  %v3275 = vsel %vm571, %v3228, 0
  %3277 = vmatprep.subr.mxu0 0.0
  %3278 = vmatpush1.msra.mxu0 %v3230
  %3279 = vmatprep.subr.mxu0 0.0
  %3280 = vmatpush1.msra.mxu0 %v3232
  %3281 = vmatprep.subr.mxu0 0.0
  %3282 = vmatpush1.msra.mxu0 %v3234
  %3283 = vmatprep.subr.mxu0 0.0
  %3284 = vmatpush1.msra.mxu0 %v3236
  %3285 = vmatprep.subr.mxu0 0.0
  %3286 = vmatpush1.msra.mxu0 %v3238
  %3287 = vmatprep.subr.mxu0 0.0
  %3288 = vmatpush1.msra.mxu0 %v3240
  %3289 = vmatprep.subr.mxu0 0.0
  %3290 = vmatpush1.msra.mxu0 %v3242
  %3291 = vmatprep.subr.mxu0 0.0
  %3292 = vmatpush1.msra.mxu0 %v3244
  %3293 = vmatprep.subr.mxu0 0.0
  %3294 = vmatpush1.msra.mxu0 0.0
  %3295 = vmatprep.subr.mxu0 0.0
  %3296 = vmatpush1.msra.mxu0 0.0
  %3297 = vmatprep.subr.mxu0 0.0
  %3298 = vmatpush1.msra.mxu0 0.0
  %3299 = vmatprep.subr.mxu0 0.0
  %3300 = vmatpush1.msra.mxu0 0.0
  %3301 = vmatprep.subr.mxu0 0.0
  %3302 = vmatpush1.msra.mxu0 0.0
  %3303 = vmatprep.subr.mxu0 0.0
  %3304 = vmatpush1.msra.mxu0 0.0
  %3305 = vmatprep.subr.mxu0 0.0
  %3306 = vmatpush1.msra.mxu0 0.0
  %3307 = vmatprep.subr.mxu0 0.0
  %3308 = vmatpush1.msra.mxu0 0.0
  %3309 = vmatprep.subr.mxu0 0.0
  %3310 = vmatpush1.msra.mxu0 0.0
  %3311 = vmatprep.subr.mxu0 0.0
  %3312 = vmatpush1.msra.mxu0 0.0
  %3313 = vmatprep.subr.mxu0 0.0
  %3314 = vmatpush1.msra.mxu0 0.0
  %3315 = vmatprep.subr.mxu0 0.0
  %3316 = vmatpush1.msra.mxu0 0.0
  %3317 = vmatprep.subr.mxu0 0.0
  %3318 = vmatpush1.msra.mxu0 0.0
  %3319 = vmatprep.subr.mxu0 0.0
  %3320 = vmatpush1.msra.mxu0 0.0
  %3321 = vmatprep.subr.mxu0 0.0
  %3322 = vmatpush1.msra.mxu0 0.0
  %3323 = vmatprep.subr.mxu0 0.0
  %3324 = vmatpush1.msra.mxu0 0.0
  %3325 = vmatprep.subr.mxu0 0.0
  %3326 = vmatpush1.msra.mxu0 0.0
  %3327 = vmatprep.subr.mxu0 0.0
  %3328 = vmatpush1.msra.mxu0 0.0
  %3329 = vmatprep.subr.mxu0 0.0
  %3330 = vmatpush1.msra.mxu0 0.0
  %3331 = vmatprep.subr.mxu0 0.0
  %3332 = vmatpush1.msra.mxu0 0.0
  %3333 = vmatprep.subr.mxu0 0.0
  %3334 = vmatpush1.msra.mxu0 0.0
  %3335 = vmatprep.subr.mxu0 0.0
  %3336 = vmatpush1.msra.mxu0 0.0
  %3337 = vmatprep.subr.mxu0 0.0
  %3338 = vmatpush1.msra.mxu0 0.0
  %3339 = vmatprep.subr.mxu0 0.0
  %3340 = vmatpush1.msra.mxu0 0.0
  %3341 = vmatprep.mubr.f32.mxu0 0.0
  %3342 = vmatmul.mubr.f32.gmra.mrb[0].mxu0 %v3254
  %v3343 = vpop.f32.mrb[0].mxu0
  %v3344 = vadd.f32 0.0, %v3343
  %v3345 = vpop.f32.mrb[0].mxu0
  %3346 = vmatprep.mubr.f32.mxu0 0.0
  %3347 = vmatmul.mubr.f32.gmra.mrb[0].mxu0 %v3257
  %v3348 = vpop.f32.mrb[0].mxu0
  %v3349 = vadd.f32 0.0, %v3348
  %v3350 = vpop.f32.mrb[0].mxu0
  %3351 = vmatprep.mubr.f32.mxu0 0.0
  %3352 = vmatmul.mubr.f32.gmra.mrb[0].mxu0 %v3260
  %v3353 = vpop.f32.mrb[0].mxu0
  %v3354 = vadd.f32 0.0, %v3353
  %v3355 = vpop.f32.mrb[0].mxu0
  %3356 = vmatprep.mubr.f32.mxu0 0.0
  %3357 = vmatmul.mubr.f32.gmra.mrb[0].mxu0 %v3263
  %v3358 = vpop.f32.mrb[0].mxu0
  %v3359 = vadd.f32 0.0, %v3358
  %v3360 = vpop.f32.mrb[0].mxu0
  %3361 = vmatprep.mubr.f32.mxu0 0.0
  %3362 = vmatmul.mubr.f32.gmra.mrb[0].mxu0 %v3266
  %v3363 = vpop.f32.mrb[0].mxu0
  %v3364 = vadd.f32 0.0, %v3363
  %v3365 = vpop.f32.mrb[0].mxu0
  %3366 = vmatprep.mubr.f32.mxu0 0.0
  %3367 = vmatmul.mubr.f32.gmra.mrb[0].mxu0 %v3269
  %v3368 = vpop.f32.mrb[0].mxu0
  %v3369 = vadd.f32 0.0, %v3368
  %v3370 = vpop.f32.mrb[0].mxu0
  %3371 = vmatprep.mubr.f32.mxu0 0.0
  %3372 = vmatmul.mubr.f32.gmra.mrb[0].mxu0 %v3272
  %v3373 = vpop.f32.mrb[0].mxu0
  %v3374 = vadd.f32 0.0, %v3373
  %v3375 = vpop.f32.mrb[0].mxu0
  %3376 = vmatprep.mubr.f32.mxu0 0.0
  %3377 = vmatmul.mubr.f32.gmra.mrb[0].mxu0 %v3275
  %v3378 = vpop.f32.mrb[0].mxu0
  %v3379 = vadd.f32 0.0, %v3378
  %v3380 = vpop.f32.mrb[0].mxu0
  %3381 = vdwg.mxu0
  %v3382 = vadd.f32 %v2948, %v3344
  %v3383 = vadd.f32 %v2949, %v3349
  %v3384 = vadd.f32 %v2950, %v3354
  %v3385 = vadd.f32 %v2951, %v3359
  %v3386 = vadd.f32 %v2952, %v3364
  %v3387 = vadd.f32 %v2953, %v3369
  %v3388 = vadd.f32 %v2954, %v3374
  %v3389 = vadd.f32 %v2955, %v3379
  %v3390 = vmul.f32 %v1287, %v250
  %v3391 = vmul.f32 %v1288, %v255
  %v3392 = vmul.f32 %v1289, %v260
  %v3393 = vmul.f32 %v1290, %v265
  %v3394 = vmul.f32 %v1291, %v270
  %v3395 = vmul.f32 %v1292, %v275
  %v3396 = vmul.f32 %v1293, %v280
  %v3397 = vmul.f32 %v1294, %v285
  %v3398 = vld [vmem:[%s20] sm:$0x1]
  %v3400 = vlaneseq
  %v3401 = vshrl.u32 %v3400, 7
  %v3402 = vsub.s32 0, %v3401
  %v3403 = vrot.slane %v3398, %v3402
  %v3405 = vadd.f32 %v3382, %v3403
  %v3406 = vadd.f32 %v3383, %v3403
  %v3407 = vadd.f32 %v3384, %v3403
  %v3408 = vadd.f32 %v3385, %v3403
  %v3409 = vadd.f32 %v3386, %v3403
  %v3410 = vadd.f32 %v3387, %v3403
  %v3411 = vadd.f32 %v3388, %v3403
  %v3412 = vadd.f32 %v3389, %v3403
  %v3413 = vmul.f32 %v3405, %v250
  %v3414 = vmul.f32 %v3406, %v255
  %v3415 = vmul.f32 %v3407, %v260
  %v3416 = vmul.f32 %v3408, %v265
  %v3417 = vmul.f32 %v3409, %v270
  %v3418 = vmul.f32 %v3410, %v275
  %v3419 = vmul.f32 %v3411, %v280
  %v3420 = vmul.f32 %v3412, %v285
  %v3421 = vadd.f32 %v3390, %v3413
  %v3422 = vadd.f32 %v3391, %v3414
  %v3423 = vadd.f32 %v3392, %v3415
  %v3424 = vadd.f32 %v3393, %v3416
  %v3425 = vadd.f32 %v3394, %v3417
  %v3426 = vadd.f32 %v3395, %v3418
  %v3427 = vadd.f32 %v3396, %v3419
  %v3428 = vadd.f32 %v3397, %v3420
  %v3429 = vld [vmem:[%s21] sm:$0x1]
  %v3430 = vld [vmem:[%s22] sm:$0x1]
  %v3431 = vsel %vm562, %v3421, 0.0
  %3432 = vadd.xlane.f32.xlu0 %v3431
  %v3433 = vpop.xlane.xlu0 %3432
  %v3434 = vsel %vm562, %v3422, 0.0
  %3435 = vadd.xlane.f32.xlu0 %v3434
  %v3436 = vpop.xlane.xlu0 %3435
  %v3437 = vsel %vm562, %v3423, 0.0
  %3438 = vadd.xlane.f32.xlu0 %v3437
  %v3439 = vpop.xlane.xlu0 %3438
  %v3440 = vsel %vm562, %v3424, 0.0
  %3441 = vadd.xlane.f32.xlu0 %v3440
  %v3442 = vpop.xlane.xlu0 %3441
  %v3443 = vsel %vm562, %v3425, 0.0
  %3444 = vadd.xlane.f32.xlu0 %v3443
  %v3445 = vpop.xlane.xlu0 %3444
  %v3446 = vsel %vm562, %v3426, 0.0
  %3447 = vadd.xlane.f32.xlu0 %v3446
  %v3448 = vpop.xlane.xlu0 %3447
  %v3449 = vsel %vm562, %v3427, 0.0
  %3450 = vadd.xlane.f32.xlu0 %v3449
  %v3451 = vpop.xlane.xlu0 %3450
  %v3452 = vsel %vm562, %v3428, 0.0
  %3453 = vadd.xlane.f32.xlu0 %v3452
  %v3454 = vpop.xlane.xlu0 %3453
  %v3455 = vmul.f32 %v3433, %v756
  %v3456 = vmul.f32 %v3436, %v756
  %v3457 = vmul.f32 %v3439, %v756
  %v3458 = vmul.f32 %v3442, %v756
  %v3459 = vmul.f32 %v3445, %v756
  %v3460 = vmul.f32 %v3448, %v756
  %v3461 = vmul.f32 %v3451, %v756
  %v3462 = vmul.f32 %v3454, %v756
  %v3463 = vsub.f32 %v3421, %v3455
  %v3464 = vsub.f32 %v3422, %v3456
  %v3465 = vsub.f32 %v3423, %v3457
  %v3466 = vsub.f32 %v3424, %v3458
  %v3467 = vsub.f32 %v3425, %v3459
  %v3468 = vsub.f32 %v3426, %v3460
  %v3469 = vsub.f32 %v3427, %v3461
  %v3470 = vsub.f32 %v3428, %v3462
  %v3471 = vmul.f32 %v3463, %v3463
  %v3472 = vmul.f32 %v3464, %v3464
  %v3473 = vmul.f32 %v3465, %v3465
  %v3474 = vmul.f32 %v3466, %v3466
  %v3475 = vmul.f32 %v3467, %v3467
  %v3476 = vmul.f32 %v3468, %v3468
  %v3477 = vmul.f32 %v3469, %v3469
  %v3478 = vmul.f32 %v3470, %v3470
  %v3479 = vsel %vm562, %v3471, 0.0
  %3480 = vadd.xlane.f32.xlu0 %v3479
  %v3481 = vpop.xlane.xlu0 %3480
  %v3482 = vsel %vm562, %v3472, 0.0
  %3483 = vadd.xlane.f32.xlu0 %v3482
  %v3484 = vpop.xlane.xlu0 %3483
  %v3485 = vsel %vm562, %v3473, 0.0
  %3486 = vadd.xlane.f32.xlu0 %v3485
  %v3487 = vpop.xlane.xlu0 %3486
  %v3488 = vsel %vm562, %v3474, 0.0
  %3489 = vadd.xlane.f32.xlu0 %v3488
  %v3490 = vpop.xlane.xlu0 %3489
  %v3491 = vsel %vm562, %v3475, 0.0
  %3492 = vadd.xlane.f32.xlu0 %v3491
  %v3493 = vpop.xlane.xlu0 %3492
  %v3494 = vsel %vm562, %v3476, 0.0
  %3495 = vadd.xlane.f32.xlu0 %v3494
  %v3496 = vpop.xlane.xlu0 %3495
  %v3497 = vsel %vm562, %v3477, 0.0
  %3498 = vadd.xlane.f32.xlu0 %v3497
  %v3499 = vpop.xlane.xlu0 %3498
  %v3500 = vsel %vm562, %v3478, 0.0
  %3501 = vadd.xlane.f32.xlu0 %v3500
  %v3502 = vpop.xlane.xlu0 %3501
  %v3503 = vmul.f32 %v3481, %v756
  %v3504 = vmul.f32 %v3484, %v756
  %v3505 = vmul.f32 %v3487, %v756
  %v3506 = vmul.f32 %v3490, %v756
  %v3507 = vmul.f32 %v3493, %v756
  %v3508 = vmul.f32 %v3496, %v756
  %v3509 = vmul.f32 %v3499, %v756
  %v3510 = vmul.f32 %v3502, %v756
  %v3511 = vadd.f32 %v3503, 1e-05
  %v3512 = vadd.f32 %v3504, 1e-05
  %v3513 = vadd.f32 %v3505, 1e-05
  %v3514 = vadd.f32 %v3506, 1e-05
  %v3515 = vadd.f32 %v3507, 1e-05
  %v3516 = vadd.f32 %v3508, 1e-05
  %v3517 = vadd.f32 %v3509, 1e-05
  %v3518 = vadd.f32 %v3510, 1e-05
  %v3519 = vrsqrt.pop %v3511
  %v3520 = vrsqrt.pop %v3512
  %v3521 = vrsqrt.pop %v3513
  %v3522 = vrsqrt.pop %v3514
  %v3523 = vrsqrt.pop %v3515
  %v3524 = vrsqrt.pop %v3516
  %v3525 = vrsqrt.pop %v3517
  %v3526 = vrsqrt.pop %v3518
  %v3527 = vmul.f32 %v3463, %v3519
  %v3528 = vmul.f32 %v3464, %v3520
  %v3529 = vmul.f32 %v3465, %v3521
  %v3530 = vmul.f32 %v3466, %v3522
  %v3531 = vmul.f32 %v3467, %v3523
  %v3532 = vmul.f32 %v3468, %v3524
  %v3533 = vmul.f32 %v3469, %v3525
  %v3534 = vmul.f32 %v3470, %v3526
  %v3536 = vlaneseq
  %v3537 = vshrl.u32 %v3536, 7
  %v3538 = vsub.s32 0, %v3537
  %v3539 = vrot.slane %v3429, %v3538
  %v3541 = vmul.f32 %v3527, %v3539
  %v3542 = vmul.f32 %v3528, %v3539
  %v3543 = vmul.f32 %v3529, %v3539
  %v3544 = vmul.f32 %v3530, %v3539
  %v3545 = vmul.f32 %v3531, %v3539
  %v3546 = vmul.f32 %v3532, %v3539
  %v3547 = vmul.f32 %v3533, %v3539
  %v3548 = vmul.f32 %v3534, %v3539
  %v3550 = vlaneseq
  %v3551 = vshrl.u32 %v3550, 7
  %v3552 = vsub.s32 0, %v3551
  %v3553 = vrot.slane %v3430, %v3552
  %v3555 = vadd.f32 %v3541, %v3553
  %v3556 = vadd.f32 %v3542, %v3553
  %v3557 = vadd.f32 %v3543, %v3553
  %v3558 = vadd.f32 %v3544, %v3553
  %v3559 = vadd.f32 %v3545, %v3553
  %v3560 = vadd.f32 %v3546, %v3553
  %v3561 = vadd.f32 %v3547, %v3553
  %v3562 = vadd.f32 %v3548, %v3553
  %v3563 = vld [vmem:[%s23] sm:$0xff]
  %v3564 = vld [vmem:[%s23 + $0x8] sm:$0xff]
  %v3565 = vld [vmem:[%s23 + $0x10] sm:$0xff]
  %v3566 = vld [vmem:[%s23 + $0x18] sm:$0xff]
  %v3567 = vld [vmem:[%s24] sm:$0x1]
  %v3569 = vlaneseq
  %v3570 = vshrl.u32 %v3569, 7
  %v3571 = vsub.s32 0, %v3570
  %v3572 = vrot.slane %v3567, %v3571
  %v3575 = vsel %vm562, %v3555, 0
  %v3578 = vsel %vm562, %v3556, 0
  %v3581 = vsel %vm562, %v3557, 0
  %v3584 = vsel %vm562, %v3558, 0
  %v3587 = vsel %vm562, %v3559, 0
  %v3590 = vsel %vm562, %v3560, 0
  %v3593 = vsel %vm562, %v3561, 0
  %v3596 = vsel %vm562, %v3562, 0
  %3598 = vmatprep.subr.mxu0 0.0
  %3599 = vmatpush1.msra.mxu0 %v3563
  %3600 = vmatprep.subr.mxu0 0.0
  %3601 = vmatpush1.msra.mxu0 %v3564
  %3602 = vmatprep.subr.mxu0 0.0
  %3603 = vmatpush1.msra.mxu0 %v3565
  %3604 = vmatprep.subr.mxu0 0.0
  %3605 = vmatpush1.msra.mxu0 %v3566
  %3606 = vmatprep.subr.mxu0 0.0
  %3607 = vmatpush1.msra.mxu0 0.0
  %3608 = vmatprep.subr.mxu0 0.0
  %3609 = vmatpush1.msra.mxu0 0.0
  %3610 = vmatprep.subr.mxu0 0.0
  %3611 = vmatpush1.msra.mxu0 0.0
  %3612 = vmatprep.subr.mxu0 0.0
  %3613 = vmatpush1.msra.mxu0 0.0
  %3614 = vmatprep.subr.mxu0 0.0
  %3615 = vmatpush1.msra.mxu0 0.0
  %3616 = vmatprep.subr.mxu0 0.0
  %3617 = vmatpush1.msra.mxu0 0.0
  %3618 = vmatprep.subr.mxu0 0.0
  %3619 = vmatpush1.msra.mxu0 0.0
  %3620 = vmatprep.subr.mxu0 0.0
  %3621 = vmatpush1.msra.mxu0 0.0
  %3622 = vmatprep.subr.mxu0 0.0
  %3623 = vmatpush1.msra.mxu0 0.0
  %3624 = vmatprep.subr.mxu0 0.0
  %3625 = vmatpush1.msra.mxu0 0.0
  %3626 = vmatprep.subr.mxu0 0.0
  %3627 = vmatpush1.msra.mxu0 0.0
  %3628 = vmatprep.subr.mxu0 0.0
  %3629 = vmatpush1.msra.mxu0 0.0
  %3630 = vmatprep.subr.mxu0 0.0
  %3631 = vmatpush1.msra.mxu0 0.0
  %3632 = vmatprep.subr.mxu0 0.0
  %3633 = vmatpush1.msra.mxu0 0.0
  %3634 = vmatprep.subr.mxu0 0.0
  %3635 = vmatpush1.msra.mxu0 0.0
  %3636 = vmatprep.subr.mxu0 0.0
  %3637 = vmatpush1.msra.mxu0 0.0
  %3638 = vmatprep.subr.mxu0 0.0
  %3639 = vmatpush1.msra.mxu0 0.0
  %3640 = vmatprep.subr.mxu0 0.0
  %3641 = vmatpush1.msra.mxu0 0.0
  %3642 = vmatprep.subr.mxu0 0.0
  %3643 = vmatpush1.msra.mxu0 0.0
  %3644 = vmatprep.subr.mxu0 0.0
  %3645 = vmatpush1.msra.mxu0 0.0
  %3646 = vmatprep.subr.mxu0 0.0
  %3647 = vmatpush1.msra.mxu0 0.0
  %3648 = vmatprep.subr.mxu0 0.0
  %3649 = vmatpush1.msra.mxu0 0.0
  %3650 = vmatprep.subr.mxu0 0.0
  %3651 = vmatpush1.msra.mxu0 0.0
  %3652 = vmatprep.subr.mxu0 0.0
  %3653 = vmatpush1.msra.mxu0 0.0
  %3654 = vmatprep.subr.mxu0 0.0
  %3655 = vmatpush1.msra.mxu0 0.0
  %3656 = vmatprep.subr.mxu0 0.0
  %3657 = vmatpush1.msra.mxu0 0.0
  %3658 = vmatprep.subr.mxu0 0.0
  %3659 = vmatpush1.msra.mxu0 0.0
  %3660 = vmatprep.subr.mxu0 0.0
  %3661 = vmatpush1.msra.mxu0 0.0
  %3662 = vmatprep.mubr.f32.mxu0 0.0
  %3663 = vmatmul.mubr.f32.gmra.mrb[0].mxu0 %v3575
  %v3664 = vpop.f32.mrb[0].mxu0
  %v3665 = vadd.f32 %v3572, %v3664
  %v3666 = vpop.f32.mrb[0].mxu0
  %3667 = vmatprep.mubr.f32.mxu0 0.0
  %3668 = vmatmul.mubr.f32.gmra.mrb[0].mxu0 %v3578
  %v3669 = vpop.f32.mrb[0].mxu0
  %v3670 = vadd.f32 %v3572, %v3669
  %v3671 = vpop.f32.mrb[0].mxu0
  %3672 = vmatprep.mubr.f32.mxu0 0.0
  %3673 = vmatmul.mubr.f32.gmra.mrb[0].mxu0 %v3581
  %v3674 = vpop.f32.mrb[0].mxu0
  %v3675 = vadd.f32 %v3572, %v3674
  %v3676 = vpop.f32.mrb[0].mxu0
  %3677 = vmatprep.mubr.f32.mxu0 0.0
  %3678 = vmatmul.mubr.f32.gmra.mrb[0].mxu0 %v3584
  %v3679 = vpop.f32.mrb[0].mxu0
  %v3680 = vadd.f32 %v3572, %v3679
  %v3681 = vpop.f32.mrb[0].mxu0
  %3682 = vmatprep.mubr.f32.mxu0 0.0
  %3683 = vmatmul.mubr.f32.gmra.mrb[0].mxu0 %v3587
  %v3684 = vpop.f32.mrb[0].mxu0
  %v3685 = vadd.f32 %v3572, %v3684
  %v3686 = vpop.f32.mrb[0].mxu0
  %3687 = vmatprep.mubr.f32.mxu0 0.0
  %3688 = vmatmul.mubr.f32.gmra.mrb[0].mxu0 %v3590
  %v3689 = vpop.f32.mrb[0].mxu0
  %v3690 = vadd.f32 %v3572, %v3689
  %v3691 = vpop.f32.mrb[0].mxu0
  %3692 = vmatprep.mubr.f32.mxu0 0.0
  %3693 = vmatmul.mubr.f32.gmra.mrb[0].mxu0 %v3593
  %v3694 = vpop.f32.mrb[0].mxu0
  %v3695 = vadd.f32 %v3572, %v3694
  %v3696 = vpop.f32.mrb[0].mxu0
  %3697 = vmatprep.mubr.f32.mxu0 0.0
  %3698 = vmatmul.mubr.f32.gmra.mrb[0].mxu0 %v3596
  %v3699 = vpop.f32.mrb[0].mxu0
  %v3700 = vadd.f32 %v3572, %v3699
  %v3701 = vpop.f32.mrb[0].mxu0
  %3702 = vdwg.mxu0
  %v3703 = vmul.f32 %v3665, 0.5
  %v3704 = vmul.f32 %v3670, 0.5
  %v3705 = vmul.f32 %v3675, 0.5
  %v3706 = vmul.f32 %v3680, 0.5
  %v3707 = vmul.f32 %v3685, 0.5
  %v3708 = vmul.f32 %v3690, 0.5
  %v3709 = vmul.f32 %v3695, 0.5
  %v3710 = vmul.f32 %v3700, 0.5
  %v3711 = vmul.f32 %v3665, 0.044715
  %v3712 = vmul.f32 %v3670, 0.044715
  %v3713 = vmul.f32 %v3675, 0.044715
  %v3714 = vmul.f32 %v3680, 0.044715
  %v3715 = vmul.f32 %v3685, 0.044715
  %v3716 = vmul.f32 %v3690, 0.044715
  %v3717 = vmul.f32 %v3695, 0.044715
  %v3718 = vmul.f32 %v3700, 0.044715
  %v3719 = vmul.f32 %v3711, %v3665
  %v3720 = vmul.f32 %v3712, %v3670
  %v3721 = vmul.f32 %v3713, %v3675
  %v3722 = vmul.f32 %v3714, %v3680
  %v3723 = vmul.f32 %v3715, %v3685
  %v3724 = vmul.f32 %v3716, %v3690
  %v3725 = vmul.f32 %v3717, %v3695
  %v3726 = vmul.f32 %v3718, %v3700
  %v3727 = vmul.f32 %v3719, %v3665
  %v3728 = vmul.f32 %v3720, %v3670
  %v3729 = vmul.f32 %v3721, %v3675
  %v3730 = vmul.f32 %v3722, %v3680
  %v3731 = vmul.f32 %v3723, %v3685
  %v3732 = vmul.f32 %v3724, %v3690
  %v3733 = vmul.f32 %v3725, %v3695
  %v3734 = vmul.f32 %v3726, %v3700
  %v3735 = vadd.f32 %v3665, %v3727
  %v3736 = vadd.f32 %v3670, %v3728
  %v3737 = vadd.f32 %v3675, %v3729
  %v3738 = vadd.f32 %v3680, %v3730
  %v3739 = vadd.f32 %v3685, %v3731
  %v3740 = vadd.f32 %v3690, %v3732
  %v3741 = vadd.f32 %v3695, %v3733
  %v3742 = vadd.f32 %v3700, %v3734
  %v3743 = vmul.f32 %v3735, 0.7978846
  %v3744 = vmul.f32 %v3736, 0.7978846
  %v3745 = vmul.f32 %v3737, 0.7978846
  %v3746 = vmul.f32 %v3738, 0.7978846
  %v3747 = vmul.f32 %v3739, 0.7978846
  %v3748 = vmul.f32 %v3740, 0.7978846
  %v3749 = vmul.f32 %v3741, 0.7978846
  %v3750 = vmul.f32 %v3742, 0.7978846
  %v3751 = vtanh.pop %v3743
  %v3752 = vtanh.pop %v3744
  %v3753 = vtanh.pop %v3745
  %v3754 = vtanh.pop %v3746
  %v3755 = vtanh.pop %v3747
  %v3756 = vtanh.pop %v3748
  %v3757 = vtanh.pop %v3749
  %v3758 = vtanh.pop %v3750
  %v3759 = vadd.f32 %v3751, 1.0
  %v3760 = vadd.f32 %v3752, 1.0
  %v3761 = vadd.f32 %v3753, 1.0
  %v3762 = vadd.f32 %v3754, 1.0
  %v3763 = vadd.f32 %v3755, 1.0
  %v3764 = vadd.f32 %v3756, 1.0
  %v3765 = vadd.f32 %v3757, 1.0
  %v3766 = vadd.f32 %v3758, 1.0
  %v3767 = vmul.f32 %v3703, %v3759
  %v3768 = vmul.f32 %v3704, %v3760
  %v3769 = vmul.f32 %v3705, %v3761
  %v3770 = vmul.f32 %v3706, %v3762
  %v3771 = vmul.f32 %v3707, %v3763
  %v3772 = vmul.f32 %v3708, %v3764
  %v3773 = vmul.f32 %v3709, %v3765
  %v3774 = vmul.f32 %v3710, %v3766
  %v3775 = vmul.f32 %v3767, %v250
  %v3776 = vmul.f32 %v3768, %v255
  %v3777 = vmul.f32 %v3769, %v260
  %v3778 = vmul.f32 %v3770, %v265
  %v3779 = vmul.f32 %v3771, %v270
  %v3780 = vmul.f32 %v3772, %v275
  %v3781 = vmul.f32 %v3773, %v280
  %v3782 = vmul.f32 %v3774, %v285
  %v3783 = vld [vmem:[%s25] sm:$0xff]
  %v3784 = vld [vmem:[%s25 + $0x8] sm:$0xff]
  %v3785 = vld [vmem:[%s25 + $0x10] sm:$0xff]
  %v3786 = vld [vmem:[%s25 + $0x18] sm:$0xff]
  %v3787 = vld [vmem:[%s25 + $0x20] sm:$0xff]
  %v3788 = vld [vmem:[%s25 + $0x28] sm:$0xff]
  %v3789 = vld [vmem:[%s25 + $0x30] sm:$0xff]
  %v3790 = vld [vmem:[%s25 + $0x38] sm:$0xff]
  %v3791 = vld [vmem:[%s25 + $0x40] sm:$0xff]
  %v3792 = vld [vmem:[%s25 + $0x48] sm:$0xff]
  %v3793 = vld [vmem:[%s25 + $0x50] sm:$0xff]
  %v3794 = vld [vmem:[%s25 + $0x58] sm:$0xff]
  %v3795 = vld [vmem:[%s25 + $0x60] sm:$0xff]
  %v3796 = vld [vmem:[%s25 + $0x68] sm:$0xff]
  %v3797 = vld [vmem:[%s25 + $0x70] sm:$0xff]
  %v3798 = vld [vmem:[%s25 + $0x78] sm:$0xff]
  %v3799 = vld [vmem:[%s26] sm:$0x1]
  %v3801 = vlaneseq
  %v3802 = vshrl.u32 %v3801, 7
  %v3803 = vsub.s32 0, %v3802
  %v3804 = vrot.slane %v3799, %v3803
  %3806 = vmatprep.subr.mxu0 0.0
  %3807 = vmatpush1.msra.mxu0 %v3783
  %3808 = vmatprep.subr.mxu0 0.0
  %3809 = vmatpush1.msra.mxu0 %v3784
  %3810 = vmatprep.subr.mxu0 0.0
  %3811 = vmatpush1.msra.mxu0 %v3785
  %3812 = vmatprep.subr.mxu0 0.0
  %3813 = vmatpush1.msra.mxu0 %v3786
  %3814 = vmatprep.subr.mxu0 0.0
  %3815 = vmatpush1.msra.mxu0 %v3787
  %3816 = vmatprep.subr.mxu0 0.0
  %3817 = vmatpush1.msra.mxu0 %v3788
  %3818 = vmatprep.subr.mxu0 0.0
  %3819 = vmatpush1.msra.mxu0 %v3789
  %3820 = vmatprep.subr.mxu0 0.0
  %3821 = vmatpush1.msra.mxu0 %v3790
  %3822 = vmatprep.subr.mxu0 0.0
  %3823 = vmatpush1.msra.mxu0 %v3791
  %3824 = vmatprep.subr.mxu0 0.0
  %3825 = vmatpush1.msra.mxu0 %v3792
  %3826 = vmatprep.subr.mxu0 0.0
  %3827 = vmatpush1.msra.mxu0 %v3793
  %3828 = vmatprep.subr.mxu0 0.0
  %3829 = vmatpush1.msra.mxu0 %v3794
  %3830 = vmatprep.subr.mxu0 0.0
  %3831 = vmatpush1.msra.mxu0 %v3795
  %3832 = vmatprep.subr.mxu0 0.0
  %3833 = vmatpush1.msra.mxu0 %v3796
  %3834 = vmatprep.subr.mxu0 0.0
  %3835 = vmatpush1.msra.mxu0 %v3797
  %3836 = vmatprep.subr.mxu0 0.0
  %3837 = vmatpush1.msra.mxu0 %v3798
  %3838 = vmatprep.subr.mxu0 0.0
  %3839 = vmatpush1.msra.mxu0 0.0
  %3840 = vmatprep.subr.mxu0 0.0
  %3841 = vmatpush1.msra.mxu0 0.0
  %3842 = vmatprep.subr.mxu0 0.0
  %3843 = vmatpush1.msra.mxu0 0.0
  %3844 = vmatprep.subr.mxu0 0.0
  %3845 = vmatpush1.msra.mxu0 0.0
  %3846 = vmatprep.subr.mxu0 0.0
  %3847 = vmatpush1.msra.mxu0 0.0
  %3848 = vmatprep.subr.mxu0 0.0
  %3849 = vmatpush1.msra.mxu0 0.0
  %3850 = vmatprep.subr.mxu0 0.0
  %3851 = vmatpush1.msra.mxu0 0.0
  %3852 = vmatprep.subr.mxu0 0.0
  %3853 = vmatpush1.msra.mxu0 0.0
  %3854 = vmatprep.subr.mxu0 0.0
  %3855 = vmatpush1.msra.mxu0 0.0
  %3856 = vmatprep.subr.mxu0 0.0
  %3857 = vmatpush1.msra.mxu0 0.0
  %3858 = vmatprep.subr.mxu0 0.0
  %3859 = vmatpush1.msra.mxu0 0.0
  %3860 = vmatprep.subr.mxu0 0.0
  %3861 = vmatpush1.msra.mxu0 0.0
  %3862 = vmatprep.subr.mxu0 0.0
  %3863 = vmatpush1.msra.mxu0 0.0
  %3864 = vmatprep.subr.mxu0 0.0
  %3865 = vmatpush1.msra.mxu0 0.0
  %3866 = vmatprep.subr.mxu0 0.0
  %3867 = vmatpush1.msra.mxu0 0.0
  %3868 = vmatprep.subr.mxu0 0.0
  %3869 = vmatpush1.msra.mxu0 0.0
  %3870 = vmatprep.mubr.f32.mxu0 0.0
  %3871 = vmatmul.mubr.f32.gmra.mrb[0].mxu0 %v3775
  %v3872 = vpop.f32.mrb[0].mxu0
  %v3873 = vadd.f32 %v3804, %v3872
  %v3874 = vpop.f32.mrb[0].mxu0
  %3875 = vmatprep.mubr.f32.mxu0 0.0
  %3876 = vmatmul.mubr.f32.gmra.mrb[0].mxu0 %v3776
  %v3877 = vpop.f32.mrb[0].mxu0
  %v3878 = vadd.f32 %v3804, %v3877
  %v3879 = vpop.f32.mrb[0].mxu0
  %3880 = vmatprep.mubr.f32.mxu0 0.0
  %3881 = vmatmul.mubr.f32.gmra.mrb[0].mxu0 %v3777
  %v3882 = vpop.f32.mrb[0].mxu0
  %v3883 = vadd.f32 %v3804, %v3882
  %v3884 = vpop.f32.mrb[0].mxu0
  %3885 = vmatprep.mubr.f32.mxu0 0.0
  %3886 = vmatmul.mubr.f32.gmra.mrb[0].mxu0 %v3778
  %v3887 = vpop.f32.mrb[0].mxu0
  %v3888 = vadd.f32 %v3804, %v3887
  %v3889 = vpop.f32.mrb[0].mxu0
  %3890 = vmatprep.mubr.f32.mxu0 0.0
  %3891 = vmatmul.mubr.f32.gmra.mrb[0].mxu0 %v3779
  %v3892 = vpop.f32.mrb[0].mxu0
  %v3893 = vadd.f32 %v3804, %v3892
  %v3894 = vpop.f32.mrb[0].mxu0
  %3895 = vmatprep.mubr.f32.mxu0 0.0
  %3896 = vmatmul.mubr.f32.gmra.mrb[0].mxu0 %v3780
  %v3897 = vpop.f32.mrb[0].mxu0
  %v3898 = vadd.f32 %v3804, %v3897
  %v3899 = vpop.f32.mrb[0].mxu0
  %3900 = vmatprep.mubr.f32.mxu0 0.0
  %3901 = vmatmul.mubr.f32.gmra.mrb[0].mxu0 %v3781
  %v3902 = vpop.f32.mrb[0].mxu0
  %v3903 = vadd.f32 %v3804, %v3902
  %v3904 = vpop.f32.mrb[0].mxu0
  %3905 = vmatprep.mubr.f32.mxu0 0.0
  %3906 = vmatmul.mubr.f32.gmra.mrb[0].mxu0 %v3782
  %v3907 = vpop.f32.mrb[0].mxu0
  %v3908 = vadd.f32 %v3804, %v3907
  %v3909 = vpop.f32.mrb[0].mxu0
  %3910 = vdwg.mxu0
  %v3911 = vmul.f32 %v3873, %v250
  %v3912 = vmul.f32 %v3878, %v255
  %v3913 = vmul.f32 %v3883, %v260
  %v3914 = vmul.f32 %v3888, %v265
  %v3915 = vmul.f32 %v3893, %v270
  %v3916 = vmul.f32 %v3898, %v275
  %v3917 = vmul.f32 %v3903, %v280
  %v3918 = vmul.f32 %v3908, %v285
  %v3919 = vadd.f32 %v3421, %v3911
  %v3920 = vadd.f32 %v3422, %v3912
  %v3921 = vadd.f32 %v3423, %v3913
  %v3922 = vadd.f32 %v3424, %v3914
  %v3923 = vadd.f32 %v3425, %v3915
  %v3924 = vadd.f32 %v3426, %v3916
  %v3925 = vadd.f32 %v3427, %v3917
  %v3926 = vadd.f32 %v3428, %v3918
  %s3927 = scalar_lea.vmem %s14, 1
  %v3928 = vld [vmem:[%s3927] sm:$0x1]
  %s3929 = scalar_lea.vmem %s15, 1
  %v3930 = vld [vmem:[%s3929] sm:$0x1]
  %v3931 = vsel %vm562, %v3919, 0.0
  %3932 = vadd.xlane.f32.xlu0 %v3931
  %v3933 = vpop.xlane.xlu0 %3932
  %v3934 = vsel %vm562, %v3920, 0.0
  %3935 = vadd.xlane.f32.xlu0 %v3934
  %v3936 = vpop.xlane.xlu0 %3935
  %v3937 = vsel %vm562, %v3921, 0.0
  %3938 = vadd.xlane.f32.xlu0 %v3937
  %v3939 = vpop.xlane.xlu0 %3938
  %v3940 = vsel %vm562, %v3922, 0.0
  %3941 = vadd.xlane.f32.xlu0 %v3940
  %v3942 = vpop.xlane.xlu0 %3941
  %v3943 = vsel %vm562, %v3923, 0.0
  %3944 = vadd.xlane.f32.xlu0 %v3943
  %v3945 = vpop.xlane.xlu0 %3944
  %v3946 = vsel %vm562, %v3924, 0.0
  %3947 = vadd.xlane.f32.xlu0 %v3946
  %v3948 = vpop.xlane.xlu0 %3947
  %v3949 = vsel %vm562, %v3925, 0.0
  %3950 = vadd.xlane.f32.xlu0 %v3949
  %v3951 = vpop.xlane.xlu0 %3950
  %v3952 = vsel %vm562, %v3926, 0.0
  %3953 = vadd.xlane.f32.xlu0 %v3952
  %v3954 = vpop.xlane.xlu0 %3953
  %v3955 = vmul.f32 %v3933, %v756
  %v3956 = vmul.f32 %v3936, %v756
  %v3957 = vmul.f32 %v3939, %v756
  %v3958 = vmul.f32 %v3942, %v756
  %v3959 = vmul.f32 %v3945, %v756
  %v3960 = vmul.f32 %v3948, %v756
  %v3961 = vmul.f32 %v3951, %v756
  %v3962 = vmul.f32 %v3954, %v756
  %v3963 = vsub.f32 %v3919, %v3955
  %v3964 = vsub.f32 %v3920, %v3956
  %v3965 = vsub.f32 %v3921, %v3957
  %v3966 = vsub.f32 %v3922, %v3958
  %v3967 = vsub.f32 %v3923, %v3959
  %v3968 = vsub.f32 %v3924, %v3960
  %v3969 = vsub.f32 %v3925, %v3961
  %v3970 = vsub.f32 %v3926, %v3962
  %v3971 = vmul.f32 %v3963, %v3963
  %v3972 = vmul.f32 %v3964, %v3964
  %v3973 = vmul.f32 %v3965, %v3965
  %v3974 = vmul.f32 %v3966, %v3966
  %v3975 = vmul.f32 %v3967, %v3967
  %v3976 = vmul.f32 %v3968, %v3968
  %v3977 = vmul.f32 %v3969, %v3969
  %v3978 = vmul.f32 %v3970, %v3970
  %v3979 = vsel %vm562, %v3971, 0.0
  %3980 = vadd.xlane.f32.xlu0 %v3979
  %v3981 = vpop.xlane.xlu0 %3980
  %v3982 = vsel %vm562, %v3972, 0.0
  %3983 = vadd.xlane.f32.xlu0 %v3982
  %v3984 = vpop.xlane.xlu0 %3983
  %v3985 = vsel %vm562, %v3973, 0.0
  %3986 = vadd.xlane.f32.xlu0 %v3985
  %v3987 = vpop.xlane.xlu0 %3986
  %v3988 = vsel %vm562, %v3974, 0.0
  %3989 = vadd.xlane.f32.xlu0 %v3988
  %v3990 = vpop.xlane.xlu0 %3989
  %v3991 = vsel %vm562, %v3975, 0.0
  %3992 = vadd.xlane.f32.xlu0 %v3991
  %v3993 = vpop.xlane.xlu0 %3992
  %v3994 = vsel %vm562, %v3976, 0.0
  %3995 = vadd.xlane.f32.xlu0 %v3994
  %v3996 = vpop.xlane.xlu0 %3995
  %v3997 = vsel %vm562, %v3977, 0.0
  %3998 = vadd.xlane.f32.xlu0 %v3997
  %v3999 = vpop.xlane.xlu0 %3998
  %v4000 = vsel %vm562, %v3978, 0.0
  %4001 = vadd.xlane.f32.xlu0 %v4000
  %v4002 = vpop.xlane.xlu0 %4001
  %v4003 = vmul.f32 %v3981, %v756
  %v4004 = vmul.f32 %v3984, %v756
  %v4005 = vmul.f32 %v3987, %v756
  %v4006 = vmul.f32 %v3990, %v756
  %v4007 = vmul.f32 %v3993, %v756
  %v4008 = vmul.f32 %v3996, %v756
  %v4009 = vmul.f32 %v3999, %v756
  %v4010 = vmul.f32 %v4002, %v756
  %v4011 = vadd.f32 %v4003, 1e-05
  %v4012 = vadd.f32 %v4004, 1e-05
  %v4013 = vadd.f32 %v4005, 1e-05
  %v4014 = vadd.f32 %v4006, 1e-05
  %v4015 = vadd.f32 %v4007, 1e-05
  %v4016 = vadd.f32 %v4008, 1e-05
  %v4017 = vadd.f32 %v4009, 1e-05
  %v4018 = vadd.f32 %v4010, 1e-05
  %v4019 = vrsqrt.pop %v4011
  %v4020 = vrsqrt.pop %v4012
  %v4021 = vrsqrt.pop %v4013
  %v4022 = vrsqrt.pop %v4014
  %v4023 = vrsqrt.pop %v4015
  %v4024 = vrsqrt.pop %v4016
  %v4025 = vrsqrt.pop %v4017
  %v4026 = vrsqrt.pop %v4018
  %v4027 = vmul.f32 %v3963, %v4019
  %v4028 = vmul.f32 %v3964, %v4020
  %v4029 = vmul.f32 %v3965, %v4021
  %v4030 = vmul.f32 %v3966, %v4022
  %v4031 = vmul.f32 %v3967, %v4023
  %v4032 = vmul.f32 %v3968, %v4024
  %v4033 = vmul.f32 %v3969, %v4025
  %v4034 = vmul.f32 %v3970, %v4026
  %v4036 = vlaneseq
  %v4037 = vshrl.u32 %v4036, 7
  %v4038 = vsub.s32 0, %v4037
  %v4039 = vrot.slane %v3928, %v4038
  %v4041 = vmul.f32 %v4027, %v4039
  %v4042 = vmul.f32 %v4028, %v4039
  %v4043 = vmul.f32 %v4029, %v4039
  %v4044 = vmul.f32 %v4030, %v4039
  %v4045 = vmul.f32 %v4031, %v4039
  %v4046 = vmul.f32 %v4032, %v4039
  %v4047 = vmul.f32 %v4033, %v4039
  %v4048 = vmul.f32 %v4034, %v4039
  %v4050 = vlaneseq
  %v4051 = vshrl.u32 %v4050, 7
  %v4052 = vsub.s32 0, %v4051
  %v4053 = vrot.slane %v3930, %v4052
  %v4055 = vadd.f32 %v4041, %v4053
  %v4056 = vadd.f32 %v4042, %v4053
  %v4057 = vadd.f32 %v4043, %v4053
  %v4058 = vadd.f32 %v4044, %v4053
  %v4059 = vadd.f32 %v4045, %v4053
  %v4060 = vadd.f32 %v4046, %v4053
  %v4061 = vadd.f32 %v4047, %v4053
  %v4062 = vadd.f32 %v4048, %v4053
  %s4063 = scalar_lea.vmem %s16, 32
  %v4064 = vld [vmem:[%s4063] sm:$0xff]
  %v4065 = vld [vmem:[%s4063 + $0x8] sm:$0xff]
  %v4066 = vld [vmem:[%s4063 + $0x10] sm:$0xff]
  %v4067 = vld [vmem:[%s4063 + $0x18] sm:$0xff]
  %s4068 = scalar_lea.vmem %s17, 1
  %v4069 = vld [vmem:[%s4068] sm:$0x1]
  %v4071 = vlaneseq
  %v4072 = vshrl.u32 %v4071, 7
  %v4073 = vsub.s32 0, %v4072
  %v4074 = vrot.slane %v4069, %v4073
  %v4077 = vsel %vm562, %v4055, 0
  %v4080 = vsel %vm562, %v4056, 0
  %v4083 = vsel %vm562, %v4057, 0
  %v4086 = vsel %vm562, %v4058, 0
  %v4089 = vsel %vm562, %v4059, 0
  %v4092 = vsel %vm562, %v4060, 0
  %v4095 = vsel %vm562, %v4061, 0
  %v4098 = vsel %vm562, %v4062, 0
  %4100 = vmatprep.subr.mxu0 0.0
  %4101 = vmatpush1.msra.mxu0 %v4064
  %4102 = vmatprep.subr.mxu0 0.0
  %4103 = vmatpush1.msra.mxu0 %v4065
  %4104 = vmatprep.subr.mxu0 0.0
  %4105 = vmatpush1.msra.mxu0 %v4066
  %4106 = vmatprep.subr.mxu0 0.0
  %4107 = vmatpush1.msra.mxu0 %v4067
  %4108 = vmatprep.subr.mxu0 0.0
  %4109 = vmatpush1.msra.mxu0 0.0
  %4110 = vmatprep.subr.mxu0 0.0
  %4111 = vmatpush1.msra.mxu0 0.0
  %4112 = vmatprep.subr.mxu0 0.0
  %4113 = vmatpush1.msra.mxu0 0.0
  %4114 = vmatprep.subr.mxu0 0.0
  %4115 = vmatpush1.msra.mxu0 0.0
  %4116 = vmatprep.subr.mxu0 0.0
  %4117 = vmatpush1.msra.mxu0 0.0
  %4118 = vmatprep.subr.mxu0 0.0
  %4119 = vmatpush1.msra.mxu0 0.0
  %4120 = vmatprep.subr.mxu0 0.0
  %4121 = vmatpush1.msra.mxu0 0.0
  %4122 = vmatprep.subr.mxu0 0.0
  %4123 = vmatpush1.msra.mxu0 0.0
  %4124 = vmatprep.subr.mxu0 0.0
  %4125 = vmatpush1.msra.mxu0 0.0
  %4126 = vmatprep.subr.mxu0 0.0
  %4127 = vmatpush1.msra.mxu0 0.0
  %4128 = vmatprep.subr.mxu0 0.0
  %4129 = vmatpush1.msra.mxu0 0.0
  %4130 = vmatprep.subr.mxu0 0.0
  %4131 = vmatpush1.msra.mxu0 0.0
  %4132 = vmatprep.subr.mxu0 0.0
  %4133 = vmatpush1.msra.mxu0 0.0
  %4134 = vmatprep.subr.mxu0 0.0
  %4135 = vmatpush1.msra.mxu0 0.0
  %4136 = vmatprep.subr.mxu0 0.0
  %4137 = vmatpush1.msra.mxu0 0.0
  %4138 = vmatprep.subr.mxu0 0.0
  %4139 = vmatpush1.msra.mxu0 0.0
  %4140 = vmatprep.subr.mxu0 0.0
  %4141 = vmatpush1.msra.mxu0 0.0
  %4142 = vmatprep.subr.mxu0 0.0
  %4143 = vmatpush1.msra.mxu0 0.0
  %4144 = vmatprep.subr.mxu0 0.0
  %4145 = vmatpush1.msra.mxu0 0.0
  %4146 = vmatprep.subr.mxu0 0.0
  %4147 = vmatpush1.msra.mxu0 0.0
  %4148 = vmatprep.subr.mxu0 0.0
  %4149 = vmatpush1.msra.mxu0 0.0
  %4150 = vmatprep.subr.mxu0 0.0
  %4151 = vmatpush1.msra.mxu0 0.0
  %4152 = vmatprep.subr.mxu0 0.0
  %4153 = vmatpush1.msra.mxu0 0.0
  %4154 = vmatprep.subr.mxu0 0.0
  %4155 = vmatpush1.msra.mxu0 0.0
  %4156 = vmatprep.subr.mxu0 0.0
  %4157 = vmatpush1.msra.mxu0 0.0
  %4158 = vmatprep.subr.mxu0 0.0
  %4159 = vmatpush1.msra.mxu0 0.0
  %4160 = vmatprep.subr.mxu0 0.0
  %4161 = vmatpush1.msra.mxu0 0.0
  %4162 = vmatprep.subr.mxu0 0.0
  %4163 = vmatpush1.msra.mxu0 0.0
  %4164 = vmatprep.mubr.f32.mxu0 0.0
  %4165 = vmatmul.mubr.f32.gmra.mrb[0].mxu0 %v4077
  %v4166 = vpop.f32.mrb[0].mxu0
  %v4167 = vadd.f32 %v4074, %v4166
  %v4168 = vpop.f32.mrb[0].mxu0
  %4169 = vmatprep.mubr.f32.mxu0 0.0
  %4170 = vmatmul.mubr.f32.gmra.mrb[0].mxu0 %v4080
  %v4171 = vpop.f32.mrb[0].mxu0
  %v4172 = vadd.f32 %v4074, %v4171
  %v4173 = vpop.f32.mrb[0].mxu0
  %4174 = vmatprep.mubr.f32.mxu0 0.0
  %4175 = vmatmul.mubr.f32.gmra.mrb[0].mxu0 %v4083
  %v4176 = vpop.f32.mrb[0].mxu0
  %v4177 = vadd.f32 %v4074, %v4176
  %v4178 = vpop.f32.mrb[0].mxu0
  %4179 = vmatprep.mubr.f32.mxu0 0.0
  %4180 = vmatmul.mubr.f32.gmra.mrb[0].mxu0 %v4086
  %v4181 = vpop.f32.mrb[0].mxu0
  %v4182 = vadd.f32 %v4074, %v4181
  %v4183 = vpop.f32.mrb[0].mxu0
  %4184 = vmatprep.mubr.f32.mxu0 0.0
  %4185 = vmatmul.mubr.f32.gmra.mrb[0].mxu0 %v4089
  %v4186 = vpop.f32.mrb[0].mxu0
  %v4187 = vadd.f32 %v4074, %v4186
  %v4188 = vpop.f32.mrb[0].mxu0
  %4189 = vmatprep.mubr.f32.mxu0 0.0
  %4190 = vmatmul.mubr.f32.gmra.mrb[0].mxu0 %v4092
  %v4191 = vpop.f32.mrb[0].mxu0
  %v4192 = vadd.f32 %v4074, %v4191
  %v4193 = vpop.f32.mrb[0].mxu0
  %4194 = vmatprep.mubr.f32.mxu0 0.0
  %4195 = vmatmul.mubr.f32.gmra.mrb[0].mxu0 %v4095
  %v4196 = vpop.f32.mrb[0].mxu0
  %v4197 = vadd.f32 %v4074, %v4196
  %v4198 = vpop.f32.mrb[0].mxu0
  %4199 = vmatprep.mubr.f32.mxu0 0.0
  %4200 = vmatmul.mubr.f32.gmra.mrb[0].mxu0 %v4098
  %v4201 = vpop.f32.mrb[0].mxu0
  %v4202 = vadd.f32 %v4074, %v4201
  %v4203 = vpop.f32.mrb[0].mxu0
  %4204 = vdwg.mxu0
  %s4205 = scalar_lea.vmem %s18, 32
  %v4206 = vld [vmem:[%s4205] sm:$0xff]
  %v4207 = vld [vmem:[%s4205 + $0x8] sm:$0xff]
  %v4208 = vld [vmem:[%s4205 + $0x10] sm:$0xff]
  %v4209 = vld [vmem:[%s4205 + $0x18] sm:$0xff]
  %s4210 = scalar_lea.vmem %s19, 1
  %v4211 = vld [vmem:[%s4210] sm:$0x1]
  %v4213 = vlaneseq
  %v4214 = vshrl.u32 %v4213, 7
  %v4215 = vsub.s32 0, %v4214
  %v4216 = vrot.slane %v4211, %v4215
  %4218 = vmatprep.subr.mxu0 0.0
  %4219 = vmatpush1.msra.mxu0 %v4206
  %4220 = vmatprep.subr.mxu0 0.0
  %4221 = vmatpush1.msra.mxu0 %v4207
  %4222 = vmatprep.subr.mxu0 0.0
  %4223 = vmatpush1.msra.mxu0 %v4208
  %4224 = vmatprep.subr.mxu0 0.0
  %4225 = vmatpush1.msra.mxu0 %v4209
  %4226 = vmatprep.subr.mxu0 0.0
  %4227 = vmatpush1.msra.mxu0 0.0
  %4228 = vmatprep.subr.mxu0 0.0
  %4229 = vmatpush1.msra.mxu0 0.0
  %4230 = vmatprep.subr.mxu0 0.0
  %4231 = vmatpush1.msra.mxu0 0.0
  %4232 = vmatprep.subr.mxu0 0.0
  %4233 = vmatpush1.msra.mxu0 0.0
  %4234 = vmatprep.subr.mxu0 0.0
  %4235 = vmatpush1.msra.mxu0 0.0
  %4236 = vmatprep.subr.mxu0 0.0
  %4237 = vmatpush1.msra.mxu0 0.0
  %4238 = vmatprep.subr.mxu0 0.0
  %4239 = vmatpush1.msra.mxu0 0.0
  %4240 = vmatprep.subr.mxu0 0.0
  %4241 = vmatpush1.msra.mxu0 0.0
  %4242 = vmatprep.subr.mxu0 0.0
  %4243 = vmatpush1.msra.mxu0 0.0
  %4244 = vmatprep.subr.mxu0 0.0
  %4245 = vmatpush1.msra.mxu0 0.0
  %4246 = vmatprep.subr.mxu0 0.0
  %4247 = vmatpush1.msra.mxu0 0.0
  %4248 = vmatprep.subr.mxu0 0.0
  %4249 = vmatpush1.msra.mxu0 0.0
  %4250 = vmatprep.subr.mxu0 0.0
  %4251 = vmatpush1.msra.mxu0 0.0
  %4252 = vmatprep.subr.mxu0 0.0
  %4253 = vmatpush1.msra.mxu0 0.0
  %4254 = vmatprep.subr.mxu0 0.0
  %4255 = vmatpush1.msra.mxu0 0.0
  %4256 = vmatprep.subr.mxu0 0.0
  %4257 = vmatpush1.msra.mxu0 0.0
  %4258 = vmatprep.subr.mxu0 0.0
  %4259 = vmatpush1.msra.mxu0 0.0
  %4260 = vmatprep.subr.mxu0 0.0
  %4261 = vmatpush1.msra.mxu0 0.0
  %4262 = vmatprep.subr.mxu0 0.0
  %4263 = vmatpush1.msra.mxu0 0.0
  %4264 = vmatprep.subr.mxu0 0.0
  %4265 = vmatpush1.msra.mxu0 0.0
  %4266 = vmatprep.subr.mxu0 0.0
  %4267 = vmatpush1.msra.mxu0 0.0
  %4268 = vmatprep.subr.mxu0 0.0
  %4269 = vmatpush1.msra.mxu0 0.0
  %4270 = vmatprep.subr.mxu0 0.0
  %4271 = vmatpush1.msra.mxu0 0.0
  %4272 = vmatprep.subr.mxu0 0.0
  %4273 = vmatpush1.msra.mxu0 0.0
  %4274 = vmatprep.subr.mxu0 0.0
  %4275 = vmatpush1.msra.mxu0 0.0
  %4276 = vmatprep.subr.mxu0 0.0
  %4277 = vmatpush1.msra.mxu0 0.0
  %4278 = vmatprep.subr.mxu0 0.0
  %4279 = vmatpush1.msra.mxu0 0.0
  %4280 = vmatprep.subr.mxu0 0.0
  %4281 = vmatpush1.msra.mxu0 0.0
  %4282 = vmatprep.mubr.f32.mxu0 0.0
  %4283 = vmatmul.mubr.f32.gmra.mrb[0].mxu0 %v4077
  %v4284 = vpop.f32.mrb[0].mxu0
  %v4285 = vadd.f32 %v4216, %v4284
  %v4286 = vpop.f32.mrb[0].mxu0
  %4287 = vmatprep.mubr.f32.mxu0 0.0
  %4288 = vmatmul.mubr.f32.gmra.mrb[0].mxu0 %v4080
  %v4289 = vpop.f32.mrb[0].mxu0
  %v4290 = vadd.f32 %v4216, %v4289
  %v4291 = vpop.f32.mrb[0].mxu0
  %4292 = vmatprep.mubr.f32.mxu0 0.0
  %4293 = vmatmul.mubr.f32.gmra.mrb[0].mxu0 %v4083
  %v4294 = vpop.f32.mrb[0].mxu0
  %v4295 = vadd.f32 %v4216, %v4294
  %v4296 = vpop.f32.mrb[0].mxu0
  %4297 = vmatprep.mubr.f32.mxu0 0.0
  %4298 = vmatmul.mubr.f32.gmra.mrb[0].mxu0 %v4086
  %v4299 = vpop.f32.mrb[0].mxu0
  %v4300 = vadd.f32 %v4216, %v4299
  %v4301 = vpop.f32.mrb[0].mxu0
  %4302 = vmatprep.mubr.f32.mxu0 0.0
  %4303 = vmatmul.mubr.f32.gmra.mrb[0].mxu0 %v4089
  %v4304 = vpop.f32.mrb[0].mxu0
  %v4305 = vadd.f32 %v4216, %v4304
  %v4306 = vpop.f32.mrb[0].mxu0
  %4307 = vmatprep.mubr.f32.mxu0 0.0
  %4308 = vmatmul.mubr.f32.gmra.mrb[0].mxu0 %v4092
  %v4309 = vpop.f32.mrb[0].mxu0
  %v4310 = vadd.f32 %v4216, %v4309
  %v4311 = vpop.f32.mrb[0].mxu0
  %4312 = vmatprep.mubr.f32.mxu0 0.0
  %4313 = vmatmul.mubr.f32.gmra.mrb[0].mxu0 %v4095
  %v4314 = vpop.f32.mrb[0].mxu0
  %v4315 = vadd.f32 %v4216, %v4314
  %v4316 = vpop.f32.mrb[0].mxu0
  %4317 = vmatprep.mubr.f32.mxu0 0.0
  %4318 = vmatmul.mubr.f32.gmra.mrb[0].mxu0 %v4098
  %v4319 = vpop.f32.mrb[0].mxu0
  %v4320 = vadd.f32 %v4216, %v4319
  %v4321 = vpop.f32.mrb[0].mxu0
  %4322 = vdwg.mxu0
  %4331 = vrot.lane.b32.xlu0 %v4167, 96
  %v4332 = vpop.permute.xlu0 %4331
  %4333 = vrot.lane.b32.xlu0 %v4172, 96
  %v4334 = vpop.permute.xlu0 %4333
  %4335 = vrot.lane.b32.xlu0 %v4177, 96
  %v4336 = vpop.permute.xlu0 %4335
  %4337 = vrot.lane.b32.xlu0 %v4182, 96
  %v4338 = vpop.permute.xlu0 %4337
  %4339 = vrot.lane.b32.xlu0 %v4187, 96
  %v4340 = vpop.permute.xlu0 %4339
  %4341 = vrot.lane.b32.xlu0 %v4192, 96
  %v4342 = vpop.permute.xlu0 %4341
  %4343 = vrot.lane.b32.xlu0 %v4197, 96
  %v4344 = vpop.permute.xlu0 %4343
  %4345 = vrot.lane.b32.xlu0 %v4202, 96
  %v4346 = vpop.permute.xlu0 %4345
  %v4347 = vsel %vm1717, %v4167, 0
  %v4349 = vsel %vm1717, %v4172, 0
  %v4351 = vsel %vm1717, %v4177, 0
  %v4353 = vsel %vm1717, %v4182, 0
  %v4355 = vsel %vm1717, %v4187, 0
  %v4357 = vsel %vm1717, %v4192, 0
  %v4359 = vsel %vm1717, %v4197, 0
  %v4361 = vsel %vm1717, %v4202, 0
  %v4363 = vsel %vm1717, %v4332, 0
  %v4365 = vsel %vm1717, %v4334, 0
  %v4367 = vsel %vm1717, %v4336, 0
  %v4369 = vsel %vm1717, %v4338, 0
  %v4371 = vsel %vm1717, %v4340, 0
  %v4373 = vsel %vm1717, %v4342, 0
  %v4375 = vsel %vm1717, %v4344, 0
  %v4377 = vsel %vm1717, %v4346, 0
  %4379 = vmatprep.subr.mxu0 0.0
  %4380 = vmatpush1.xpose.msra.mxu0 %v4363
  %4381 = vmatprep.subr.mxu0 0.0
  %4382 = vmatpush1.xpose.msra.mxu0 %v4365
  %4383 = vmatprep.subr.mxu0 0.0
  %4384 = vmatpush1.xpose.msra.mxu0 %v4367
  %4385 = vmatprep.subr.mxu0 0.0
  %4386 = vmatpush1.xpose.msra.mxu0 %v4369
  %4387 = vmatprep.subr.mxu0 0.0
  %4388 = vmatpush1.xpose.msra.mxu0 %v4371
  %4389 = vmatprep.subr.mxu0 0.0
  %4390 = vmatpush1.xpose.msra.mxu0 %v4373
  %4391 = vmatprep.subr.mxu0 0.0
  %4392 = vmatpush1.xpose.msra.mxu0 %v4375
  %4393 = vmatprep.subr.mxu0 0.0
  %4394 = vmatpush1.xpose.msra.mxu0 %v4377
  %4395 = vmatprep.subr.mxu0 0.0
  %4396 = vmatpush1.xpose.msra.mxu0 0.0
  %4397 = vmatprep.subr.mxu0 0.0
  %4398 = vmatpush1.xpose.msra.mxu0 0.0
  %4399 = vmatprep.subr.mxu0 0.0
  %4400 = vmatpush1.xpose.msra.mxu0 0.0
  %4401 = vmatprep.subr.mxu0 0.0
  %4402 = vmatpush1.xpose.msra.mxu0 0.0
  %4403 = vmatprep.subr.mxu0 0.0
  %4404 = vmatpush1.xpose.msra.mxu0 0.0
  %4405 = vmatprep.subr.mxu0 0.0
  %4406 = vmatpush1.xpose.msra.mxu0 0.0
  %4407 = vmatprep.subr.mxu0 0.0
  %4408 = vmatpush1.xpose.msra.mxu0 0.0
  %4409 = vmatprep.subr.mxu0 0.0
  %4410 = vmatpush1.xpose.msra.mxu0 0.0
  %4411 = vmatprep.subr.mxu0 0.0
  %4412 = vmatpush1.xpose.msra.mxu0 0.0
  %4413 = vmatprep.subr.mxu0 0.0
  %4414 = vmatpush1.xpose.msra.mxu0 0.0
  %4415 = vmatprep.subr.mxu0 0.0
  %4416 = vmatpush1.xpose.msra.mxu0 0.0
  %4417 = vmatprep.subr.mxu0 0.0
  %4418 = vmatpush1.xpose.msra.mxu0 0.0
  %4419 = vmatprep.subr.mxu0 0.0
  %4420 = vmatpush1.xpose.msra.mxu0 0.0
  %4421 = vmatprep.subr.mxu0 0.0
  %4422 = vmatpush1.xpose.msra.mxu0 0.0
  %4423 = vmatprep.subr.mxu0 0.0
  %4424 = vmatpush1.xpose.msra.mxu0 0.0
  %4425 = vmatprep.subr.mxu0 0.0
  %4426 = vmatpush1.xpose.msra.mxu0 0.0
  %4427 = vmatprep.subr.mxu0 0.0
  %4428 = vmatpush1.xpose.msra.mxu0 0.0
  %4429 = vmatprep.subr.mxu0 0.0
  %4430 = vmatpush1.xpose.msra.mxu0 0.0
  %4431 = vmatprep.subr.mxu0 0.0
  %4432 = vmatpush1.xpose.msra.mxu0 0.0
  %4433 = vmatprep.subr.mxu0 0.0
  %4434 = vmatpush1.xpose.msra.mxu0 0.0
  %4435 = vmatprep.subr.mxu0 0.0
  %4436 = vmatpush1.xpose.msra.mxu0 0.0
  %4437 = vmatprep.subr.mxu0 0.0
  %4438 = vmatpush1.xpose.msra.mxu0 0.0
  %4439 = vmatprep.subr.mxu0 0.0
  %4440 = vmatpush1.xpose.msra.mxu0 0.0
  %4441 = vmatprep.subr.mxu0 0.0
  %4442 = vmatpush1.xpose.msra.mxu0 0.0
  %4443 = vmatprep.mubr.f32.mxu0 0.0
  %4444 = vmatmul.mubr.f32.gmra.mrb[0].mxu0 %v4347
  %v4445 = vpop.f32.mrb[0].mxu0
  %v4446 = vadd.f32 0.0, %v4445
  %v4447 = vpop.f32.mrb[0].mxu0
  %4448 = vmatprep.mubr.f32.mxu0 0.0
  %4449 = vmatmul.mubr.f32.gmra.mrb[0].mxu0 %v4349
  %v4450 = vpop.f32.mrb[0].mxu0
  %v4451 = vadd.f32 0.0, %v4450
  %v4452 = vpop.f32.mrb[0].mxu0
  %4453 = vmatprep.mubr.f32.mxu0 0.0
  %4454 = vmatmul.mubr.f32.gmra.mrb[0].mxu0 %v4351
  %v4455 = vpop.f32.mrb[0].mxu0
  %v4456 = vadd.f32 0.0, %v4455
  %v4457 = vpop.f32.mrb[0].mxu0
  %4458 = vmatprep.mubr.f32.mxu0 0.0
  %4459 = vmatmul.mubr.f32.gmra.mrb[0].mxu0 %v4353
  %v4460 = vpop.f32.mrb[0].mxu0
  %v4461 = vadd.f32 0.0, %v4460
  %v4462 = vpop.f32.mrb[0].mxu0
  %4463 = vmatprep.mubr.f32.mxu0 0.0
  %4464 = vmatmul.mubr.f32.gmra.mrb[0].mxu0 %v4355
  %v4465 = vpop.f32.mrb[0].mxu0
  %v4466 = vadd.f32 0.0, %v4465
  %v4467 = vpop.f32.mrb[0].mxu0
  %4468 = vmatprep.mubr.f32.mxu0 0.0
  %4469 = vmatmul.mubr.f32.gmra.mrb[0].mxu0 %v4357
  %v4470 = vpop.f32.mrb[0].mxu0
  %v4471 = vadd.f32 0.0, %v4470
  %v4472 = vpop.f32.mrb[0].mxu0
  %4473 = vmatprep.mubr.f32.mxu0 0.0
  %4474 = vmatmul.mubr.f32.gmra.mrb[0].mxu0 %v4359
  %v4475 = vpop.f32.mrb[0].mxu0
  %v4476 = vadd.f32 0.0, %v4475
  %v4477 = vpop.f32.mrb[0].mxu0
  %4478 = vmatprep.mubr.f32.mxu0 0.0
  %4479 = vmatmul.mubr.f32.gmra.mrb[0].mxu0 %v4361
  %v4480 = vpop.f32.mrb[0].mxu0
  %v4481 = vadd.f32 0.0, %v4480
  %v4482 = vpop.f32.mrb[0].mxu0
  %4483 = vdwg.mxu0
  %v4484 = vmul.f32 %v4446, 0.35355338
  %v4485 = vmul.f32 %v4451, 0.35355338
  %v4486 = vmul.f32 %v4456, 0.35355338
  %v4487 = vmul.f32 %v4461, 0.35355338
  %v4488 = vmul.f32 %v4466, 0.35355338
  %v4489 = vmul.f32 %v4471, 0.35355338
  %v4490 = vmul.f32 %v4476, 0.35355338
  %v4491 = vmul.f32 %v4481, 0.35355338
  %v4492 = vadd.f32 %v4484, %v1685
  %v4493 = vadd.f32 %v4485, %v1686
  %v4494 = vadd.f32 %v4486, %v1687
  %v4495 = vadd.f32 %v4487, %v1688
  %v4496 = vadd.f32 %v4488, %v1689
  %v4497 = vadd.f32 %v4489, %v1690
  %v4498 = vadd.f32 %v4490, %v1691
  %v4499 = vadd.f32 %v4491, %v1692
  %v4500 = vsel %vm571, %v4492, -inf
  %4501 = vmax.xlane.f32.xlu0 %v4500
  %v4502 = vpop.xlane.xlu0 %4501
  %v4503 = vsel %vm571, %v4493, -inf
  %4504 = vmax.xlane.f32.xlu0 %v4503
  %v4505 = vpop.xlane.xlu0 %4504
  %v4506 = vsel %vm571, %v4494, -inf
  %4507 = vmax.xlane.f32.xlu0 %v4506
  %v4508 = vpop.xlane.xlu0 %4507
  %v4509 = vsel %vm571, %v4495, -inf
  %4510 = vmax.xlane.f32.xlu0 %v4509
  %v4511 = vpop.xlane.xlu0 %4510
  %v4512 = vsel %vm571, %v4496, -inf
  %4513 = vmax.xlane.f32.xlu0 %v4512
  %v4514 = vpop.xlane.xlu0 %4513
  %v4515 = vsel %vm571, %v4497, -inf
  %4516 = vmax.xlane.f32.xlu0 %v4515
  %v4517 = vpop.xlane.xlu0 %4516
  %v4518 = vsel %vm571, %v4498, -inf
  %4519 = vmax.xlane.f32.xlu0 %v4518
  %v4520 = vpop.xlane.xlu0 %4519
  %v4521 = vsel %vm571, %v4499, -inf
  %4522 = vmax.xlane.f32.xlu0 %v4521
  %v4523 = vpop.xlane.xlu0 %4522
  %v4524 = vsub.f32 %v4492, %v4502
  %v4525 = vsub.f32 %v4493, %v4505
  %v4526 = vsub.f32 %v4494, %v4508
  %v4527 = vsub.f32 %v4495, %v4511
  %v4528 = vsub.f32 %v4496, %v4514
  %v4529 = vsub.f32 %v4497, %v4517
  %v4530 = vsub.f32 %v4498, %v4520
  %v4531 = vsub.f32 %v4499, %v4523
  %v4532 = vmul.f32 %v4524, 1.442695
  %v4533 = vpow.pop %v4532
  %v4534 = vmul.f32 %v4525, 1.442695
  %v4535 = vpow.pop %v4534
  %v4536 = vmul.f32 %v4526, 1.442695
  %v4537 = vpow.pop %v4536
  %v4538 = vmul.f32 %v4527, 1.442695
  %v4539 = vpow.pop %v4538
  %v4540 = vmul.f32 %v4528, 1.442695
  %v4541 = vpow.pop %v4540
  %v4542 = vmul.f32 %v4529, 1.442695
  %v4543 = vpow.pop %v4542
  %v4544 = vmul.f32 %v4530, 1.442695
  %v4545 = vpow.pop %v4544
  %v4546 = vmul.f32 %v4531, 1.442695
  %v4547 = vpow.pop %v4546
  %v4548 = vsel %vm571, %v4533, 0.0
  %4549 = vadd.xlane.f32.xlu0 %v4548
  %v4550 = vpop.xlane.xlu0 %4549
  %v4551 = vsel %vm571, %v4535, 0.0
  %4552 = vadd.xlane.f32.xlu0 %v4551
  %v4553 = vpop.xlane.xlu0 %4552
  %v4554 = vsel %vm571, %v4537, 0.0
  %4555 = vadd.xlane.f32.xlu0 %v4554
  %v4556 = vpop.xlane.xlu0 %4555
  %v4557 = vsel %vm571, %v4539, 0.0
  %4558 = vadd.xlane.f32.xlu0 %v4557
  %v4559 = vpop.xlane.xlu0 %4558
  %v4560 = vsel %vm571, %v4541, 0.0
  %4561 = vadd.xlane.f32.xlu0 %v4560
  %v4562 = vpop.xlane.xlu0 %4561
  %v4563 = vsel %vm571, %v4543, 0.0
  %4564 = vadd.xlane.f32.xlu0 %v4563
  %v4565 = vpop.xlane.xlu0 %4564
  %v4566 = vsel %vm571, %v4545, 0.0
  %4567 = vadd.xlane.f32.xlu0 %v4566
  %v4568 = vpop.xlane.xlu0 %4567
  %v4569 = vsel %vm571, %v4547, 0.0
  %4570 = vadd.xlane.f32.xlu0 %v4569
  %v4571 = vpop.xlane.xlu0 %4570
  %v4572 = vrcp.pop %v4550
  %v4573 = vrcp.pop %v4553
  %v4574 = vrcp.pop %v4556
  %v4575 = vrcp.pop %v4559
  %v4576 = vrcp.pop %v4562
  %v4577 = vrcp.pop %v4565
  %v4578 = vrcp.pop %v4568
  %v4579 = vrcp.pop %v4571
  %v4580 = vmul.f32 %v4533, %v4572
  %v4581 = vmul.f32 %v4535, %v4573
  %v4582 = vmul.f32 %v4537, %v4574
  %v4583 = vmul.f32 %v4539, %v4575
  %v4584 = vmul.f32 %v4541, %v4576
  %v4585 = vmul.f32 %v4543, %v4577
  %v4586 = vmul.f32 %v4545, %v4578
  %v4587 = vmul.f32 %v4547, %v4579
  %4588 = vrot.lane.b32.xlu0 %v4167, 120
  %v4589 = vpop.permute.xlu0 %4588
  %4590 = vrot.lane.b32.xlu0 %v4172, 120
  %v4591 = vpop.permute.xlu0 %4590
  %4592 = vrot.lane.b32.xlu0 %v4177, 120
  %v4593 = vpop.permute.xlu0 %4592
  %4594 = vrot.lane.b32.xlu0 %v4182, 120
  %v4595 = vpop.permute.xlu0 %4594
  %4596 = vrot.lane.b32.xlu0 %v4187, 120
  %v4597 = vpop.permute.xlu0 %4596
  %4598 = vrot.lane.b32.xlu0 %v4192, 120
  %v4599 = vpop.permute.xlu0 %4598
  %4600 = vrot.lane.b32.xlu0 %v4197, 120
  %v4601 = vpop.permute.xlu0 %4600
  %4602 = vrot.lane.b32.xlu0 %v4202, 120
  %v4603 = vpop.permute.xlu0 %4602
  %4604 = vrot.lane.b32.xlu0 %v4167, 88
  %v4605 = vpop.permute.xlu0 %4604
  %4606 = vrot.lane.b32.xlu0 %v4172, 88
  %v4607 = vpop.permute.xlu0 %4606
  %4608 = vrot.lane.b32.xlu0 %v4177, 88
  %v4609 = vpop.permute.xlu0 %4608
  %4610 = vrot.lane.b32.xlu0 %v4182, 88
  %v4611 = vpop.permute.xlu0 %4610
  %4612 = vrot.lane.b32.xlu0 %v4187, 88
  %v4613 = vpop.permute.xlu0 %4612
  %4614 = vrot.lane.b32.xlu0 %v4192, 88
  %v4615 = vpop.permute.xlu0 %4614
  %4616 = vrot.lane.b32.xlu0 %v4197, 88
  %v4617 = vpop.permute.xlu0 %4616
  %4618 = vrot.lane.b32.xlu0 %v4202, 88
  %v4619 = vpop.permute.xlu0 %4618
  %v4620 = vsel %vm1717, %v4589, 0
  %v4622 = vsel %vm1717, %v4591, 0
  %v4624 = vsel %vm1717, %v4593, 0
  %v4626 = vsel %vm1717, %v4595, 0
  %v4628 = vsel %vm1717, %v4597, 0
  %v4630 = vsel %vm1717, %v4599, 0
  %v4632 = vsel %vm1717, %v4601, 0
  %v4634 = vsel %vm1717, %v4603, 0
  %v4636 = vsel %vm1717, %v4605, 0
  %v4638 = vsel %vm1717, %v4607, 0
  %v4640 = vsel %vm1717, %v4609, 0
  %v4642 = vsel %vm1717, %v4611, 0
  %v4644 = vsel %vm1717, %v4613, 0
  %v4646 = vsel %vm1717, %v4615, 0
  %v4648 = vsel %vm1717, %v4617, 0
  %v4650 = vsel %vm1717, %v4619, 0
  %4652 = vmatprep.subr.mxu0 0.0
  %4653 = vmatpush1.xpose.msra.mxu0 %v4636
  %4654 = vmatprep.subr.mxu0 0.0
  %4655 = vmatpush1.xpose.msra.mxu0 %v4638
  %4656 = vmatprep.subr.mxu0 0.0
  %4657 = vmatpush1.xpose.msra.mxu0 %v4640
  %4658 = vmatprep.subr.mxu0 0.0
  %4659 = vmatpush1.xpose.msra.mxu0 %v4642
  %4660 = vmatprep.subr.mxu0 0.0
  %4661 = vmatpush1.xpose.msra.mxu0 %v4644
  %4662 = vmatprep.subr.mxu0 0.0
  %4663 = vmatpush1.xpose.msra.mxu0 %v4646
  %4664 = vmatprep.subr.mxu0 0.0
  %4665 = vmatpush1.xpose.msra.mxu0 %v4648
  %4666 = vmatprep.subr.mxu0 0.0
  %4667 = vmatpush1.xpose.msra.mxu0 %v4650
  %4668 = vmatprep.subr.mxu0 0.0
  %4669 = vmatpush1.xpose.msra.mxu0 0.0
  %4670 = vmatprep.subr.mxu0 0.0
  %4671 = vmatpush1.xpose.msra.mxu0 0.0
  %4672 = vmatprep.subr.mxu0 0.0
  %4673 = vmatpush1.xpose.msra.mxu0 0.0
  %4674 = vmatprep.subr.mxu0 0.0
  %4675 = vmatpush1.xpose.msra.mxu0 0.0
  %4676 = vmatprep.subr.mxu0 0.0
  %4677 = vmatpush1.xpose.msra.mxu0 0.0
  %4678 = vmatprep.subr.mxu0 0.0
  %4679 = vmatpush1.xpose.msra.mxu0 0.0
  %4680 = vmatprep.subr.mxu0 0.0
  %4681 = vmatpush1.xpose.msra.mxu0 0.0
  %4682 = vmatprep.subr.mxu0 0.0
  %4683 = vmatpush1.xpose.msra.mxu0 0.0
  %4684 = vmatprep.subr.mxu0 0.0
  %4685 = vmatpush1.xpose.msra.mxu0 0.0
  %4686 = vmatprep.subr.mxu0 0.0
  %4687 = vmatpush1.xpose.msra.mxu0 0.0
  %4688 = vmatprep.subr.mxu0 0.0
  %4689 = vmatpush1.xpose.msra.mxu0 0.0
  %4690 = vmatprep.subr.mxu0 0.0
  %4691 = vmatpush1.xpose.msra.mxu0 0.0
  %4692 = vmatprep.subr.mxu0 0.0
  %4693 = vmatpush1.xpose.msra.mxu0 0.0
  %4694 = vmatprep.subr.mxu0 0.0
  %4695 = vmatpush1.xpose.msra.mxu0 0.0
  %4696 = vmatprep.subr.mxu0 0.0
  %4697 = vmatpush1.xpose.msra.mxu0 0.0
  %4698 = vmatprep.subr.mxu0 0.0
  %4699 = vmatpush1.xpose.msra.mxu0 0.0
  %4700 = vmatprep.subr.mxu0 0.0
  %4701 = vmatpush1.xpose.msra.mxu0 0.0
  %4702 = vmatprep.subr.mxu0 0.0
  %4703 = vmatpush1.xpose.msra.mxu0 0.0
  %4704 = vmatprep.subr.mxu0 0.0
  %4705 = vmatpush1.xpose.msra.mxu0 0.0
  %4706 = vmatprep.subr.mxu0 0.0
  %4707 = vmatpush1.xpose.msra.mxu0 0.0
  %4708 = vmatprep.subr.mxu0 0.0
  %4709 = vmatpush1.xpose.msra.mxu0 0.0
  %4710 = vmatprep.subr.mxu0 0.0
  %4711 = vmatpush1.xpose.msra.mxu0 0.0
  %4712 = vmatprep.subr.mxu0 0.0
  %4713 = vmatpush1.xpose.msra.mxu0 0.0
  %4714 = vmatprep.subr.mxu0 0.0
  %4715 = vmatpush1.xpose.msra.mxu0 0.0
  %4716 = vmatprep.mubr.f32.mxu0 0.0
  %4717 = vmatmul.mubr.f32.gmra.mrb[0].mxu0 %v4620
  %v4718 = vpop.f32.mrb[0].mxu0
  %v4719 = vadd.f32 0.0, %v4718
  %v4720 = vpop.f32.mrb[0].mxu0
  %4721 = vmatprep.mubr.f32.mxu0 0.0
  %4722 = vmatmul.mubr.f32.gmra.mrb[0].mxu0 %v4622
  %v4723 = vpop.f32.mrb[0].mxu0
  %v4724 = vadd.f32 0.0, %v4723
  %v4725 = vpop.f32.mrb[0].mxu0
  %4726 = vmatprep.mubr.f32.mxu0 0.0
  %4727 = vmatmul.mubr.f32.gmra.mrb[0].mxu0 %v4624
  %v4728 = vpop.f32.mrb[0].mxu0
  %v4729 = vadd.f32 0.0, %v4728
  %v4730 = vpop.f32.mrb[0].mxu0
  %4731 = vmatprep.mubr.f32.mxu0 0.0
  %4732 = vmatmul.mubr.f32.gmra.mrb[0].mxu0 %v4626
  %v4733 = vpop.f32.mrb[0].mxu0
  %v4734 = vadd.f32 0.0, %v4733
  %v4735 = vpop.f32.mrb[0].mxu0
  %4736 = vmatprep.mubr.f32.mxu0 0.0
  %4737 = vmatmul.mubr.f32.gmra.mrb[0].mxu0 %v4628
  %v4738 = vpop.f32.mrb[0].mxu0
  %v4739 = vadd.f32 0.0, %v4738
  %v4740 = vpop.f32.mrb[0].mxu0
  %4741 = vmatprep.mubr.f32.mxu0 0.0
  %4742 = vmatmul.mubr.f32.gmra.mrb[0].mxu0 %v4630
  %v4743 = vpop.f32.mrb[0].mxu0
  %v4744 = vadd.f32 0.0, %v4743
  %v4745 = vpop.f32.mrb[0].mxu0
  %4746 = vmatprep.mubr.f32.mxu0 0.0
  %4747 = vmatmul.mubr.f32.gmra.mrb[0].mxu0 %v4632
  %v4748 = vpop.f32.mrb[0].mxu0
  %v4749 = vadd.f32 0.0, %v4748
  %v4750 = vpop.f32.mrb[0].mxu0
  %4751 = vmatprep.mubr.f32.mxu0 0.0
  %4752 = vmatmul.mubr.f32.gmra.mrb[0].mxu0 %v4634
  %v4753 = vpop.f32.mrb[0].mxu0
  %v4754 = vadd.f32 0.0, %v4753
  %v4755 = vpop.f32.mrb[0].mxu0
  %4756 = vdwg.mxu0
  %v4757 = vmul.f32 %v4719, 0.35355338
  %v4758 = vmul.f32 %v4724, 0.35355338
  %v4759 = vmul.f32 %v4729, 0.35355338
  %v4760 = vmul.f32 %v4734, 0.35355338
  %v4761 = vmul.f32 %v4739, 0.35355338
  %v4762 = vmul.f32 %v4744, 0.35355338
  %v4763 = vmul.f32 %v4749, 0.35355338
  %v4764 = vmul.f32 %v4754, 0.35355338
  %v4765 = vadd.f32 %v4757, %v1685
  %v4766 = vadd.f32 %v4758, %v1686
  %v4767 = vadd.f32 %v4759, %v1687
  %v4768 = vadd.f32 %v4760, %v1688
  %v4769 = vadd.f32 %v4761, %v1689
  %v4770 = vadd.f32 %v4762, %v1690
  %v4771 = vadd.f32 %v4763, %v1691
  %v4772 = vadd.f32 %v4764, %v1692
  %v4773 = vsel %vm571, %v4765, -inf
  %4774 = vmax.xlane.f32.xlu0 %v4773
  %v4775 = vpop.xlane.xlu0 %4774
  %v4776 = vsel %vm571, %v4766, -inf
  %4777 = vmax.xlane.f32.xlu0 %v4776
  %v4778 = vpop.xlane.xlu0 %4777
  %v4779 = vsel %vm571, %v4767, -inf
  %4780 = vmax.xlane.f32.xlu0 %v4779
  %v4781 = vpop.xlane.xlu0 %4780
  %v4782 = vsel %vm571, %v4768, -inf
  %4783 = vmax.xlane.f32.xlu0 %v4782
  %v4784 = vpop.xlane.xlu0 %4783
  %v4785 = vsel %vm571, %v4769, -inf
  %4786 = vmax.xlane.f32.xlu0 %v4785
  %v4787 = vpop.xlane.xlu0 %4786
  %v4788 = vsel %vm571, %v4770, -inf
  %4789 = vmax.xlane.f32.xlu0 %v4788
  %v4790 = vpop.xlane.xlu0 %4789
  %v4791 = vsel %vm571, %v4771, -inf
  %4792 = vmax.xlane.f32.xlu0 %v4791
  %v4793 = vpop.xlane.xlu0 %4792
  %v4794 = vsel %vm571, %v4772, -inf
  %4795 = vmax.xlane.f32.xlu0 %v4794
  %v4796 = vpop.xlane.xlu0 %4795
  %v4797 = vsub.f32 %v4765, %v4775
  %v4798 = vsub.f32 %v4766, %v4778
  %v4799 = vsub.f32 %v4767, %v4781
  %v4800 = vsub.f32 %v4768, %v4784
  %v4801 = vsub.f32 %v4769, %v4787
  %v4802 = vsub.f32 %v4770, %v4790
  %v4803 = vsub.f32 %v4771, %v4793
  %v4804 = vsub.f32 %v4772, %v4796
  %v4805 = vmul.f32 %v4797, 1.442695
  %v4806 = vpow.pop %v4805
  %v4807 = vmul.f32 %v4798, 1.442695
  %v4808 = vpow.pop %v4807
  %v4809 = vmul.f32 %v4799, 1.442695
  %v4810 = vpow.pop %v4809
  %v4811 = vmul.f32 %v4800, 1.442695
  %v4812 = vpow.pop %v4811
  %v4813 = vmul.f32 %v4801, 1.442695
  %v4814 = vpow.pop %v4813
  %v4815 = vmul.f32 %v4802, 1.442695
  %v4816 = vpow.pop %v4815
  %v4817 = vmul.f32 %v4803, 1.442695
  %v4818 = vpow.pop %v4817
  %v4819 = vmul.f32 %v4804, 1.442695
  %v4820 = vpow.pop %v4819
  %v4821 = vsel %vm571, %v4806, 0.0
  %4822 = vadd.xlane.f32.xlu0 %v4821
  %v4823 = vpop.xlane.xlu0 %4822
  %v4824 = vsel %vm571, %v4808, 0.0
  %4825 = vadd.xlane.f32.xlu0 %v4824
  %v4826 = vpop.xlane.xlu0 %4825
  %v4827 = vsel %vm571, %v4810, 0.0
  %4828 = vadd.xlane.f32.xlu0 %v4827
  %v4829 = vpop.xlane.xlu0 %4828
  %v4830 = vsel %vm571, %v4812, 0.0
  %4831 = vadd.xlane.f32.xlu0 %v4830
  %v4832 = vpop.xlane.xlu0 %4831
  %v4833 = vsel %vm571, %v4814, 0.0
  %4834 = vadd.xlane.f32.xlu0 %v4833
  %v4835 = vpop.xlane.xlu0 %4834
  %v4836 = vsel %vm571, %v4816, 0.0
  %4837 = vadd.xlane.f32.xlu0 %v4836
  %v4838 = vpop.xlane.xlu0 %4837
  %v4839 = vsel %vm571, %v4818, 0.0
  %4840 = vadd.xlane.f32.xlu0 %v4839
  %v4841 = vpop.xlane.xlu0 %4840
  %v4842 = vsel %vm571, %v4820, 0.0
  %4843 = vadd.xlane.f32.xlu0 %v4842
  %v4844 = vpop.xlane.xlu0 %4843
  %v4845 = vrcp.pop %v4823
  %v4846 = vrcp.pop %v4826
  %v4847 = vrcp.pop %v4829
  %v4848 = vrcp.pop %v4832
  %v4849 = vrcp.pop %v4835
  %v4850 = vrcp.pop %v4838
  %v4851 = vrcp.pop %v4841
  %v4852 = vrcp.pop %v4844
  %v4853 = vmul.f32 %v4806, %v4845
  %v4854 = vmul.f32 %v4808, %v4846
  %v4855 = vmul.f32 %v4810, %v4847
  %v4856 = vmul.f32 %v4812, %v4848
  %v4857 = vmul.f32 %v4814, %v4849
  %v4858 = vmul.f32 %v4816, %v4850
  %v4859 = vmul.f32 %v4818, %v4851
  %v4860 = vmul.f32 %v4820, %v4852
  %4869 = vrot.lane.b32.xlu0 %v4285, 96
  %v4870 = vpop.permute.xlu0 %4869
  %4871 = vrot.lane.b32.xlu0 %v4290, 96
  %v4872 = vpop.permute.xlu0 %4871
  %4873 = vrot.lane.b32.xlu0 %v4295, 96
  %v4874 = vpop.permute.xlu0 %4873
  %4875 = vrot.lane.b32.xlu0 %v4300, 96
  %v4876 = vpop.permute.xlu0 %4875
  %4877 = vrot.lane.b32.xlu0 %v4305, 96
  %v4878 = vpop.permute.xlu0 %4877
  %4879 = vrot.lane.b32.xlu0 %v4310, 96
  %v4880 = vpop.permute.xlu0 %4879
  %4881 = vrot.lane.b32.xlu0 %v4315, 96
  %v4882 = vpop.permute.xlu0 %4881
  %4883 = vrot.lane.b32.xlu0 %v4320, 96
  %v4884 = vpop.permute.xlu0 %4883
  %v4894 = vsel %vm571, %v4853, 0
  %v4897 = vsel %vm571, %v4854, 0
  %v4900 = vsel %vm571, %v4855, 0
  %v4903 = vsel %vm571, %v4856, 0
  %v4906 = vsel %vm571, %v4857, 0
  %v4909 = vsel %vm571, %v4858, 0
  %v4912 = vsel %vm571, %v4859, 0
  %v4915 = vsel %vm571, %v4860, 0
  %4917 = vmatprep.subr.mxu0 0.0
  %4918 = vmatpush1.msra.mxu0 %v4870
  %4919 = vmatprep.subr.mxu0 0.0
  %4920 = vmatpush1.msra.mxu0 %v4872
  %4921 = vmatprep.subr.mxu0 0.0
  %4922 = vmatpush1.msra.mxu0 %v4874
  %4923 = vmatprep.subr.mxu0 0.0
  %4924 = vmatpush1.msra.mxu0 %v4876
  %4925 = vmatprep.subr.mxu0 0.0
  %4926 = vmatpush1.msra.mxu0 %v4878
  %4927 = vmatprep.subr.mxu0 0.0
  %4928 = vmatpush1.msra.mxu0 %v4880
  %4929 = vmatprep.subr.mxu0 0.0
  %4930 = vmatpush1.msra.mxu0 %v4882
  %4931 = vmatprep.subr.mxu0 0.0
  %4932 = vmatpush1.msra.mxu0 %v4884
  %4933 = vmatprep.subr.mxu0 0.0
  %4934 = vmatpush1.msra.mxu0 0.0
  %4935 = vmatprep.subr.mxu0 0.0
  %4936 = vmatpush1.msra.mxu0 0.0
  %4937 = vmatprep.subr.mxu0 0.0
  %4938 = vmatpush1.msra.mxu0 0.0
  %4939 = vmatprep.subr.mxu0 0.0
  %4940 = vmatpush1.msra.mxu0 0.0
  %4941 = vmatprep.subr.mxu0 0.0
  %4942 = vmatpush1.msra.mxu0 0.0
  %4943 = vmatprep.subr.mxu0 0.0
  %4944 = vmatpush1.msra.mxu0 0.0
  %4945 = vmatprep.subr.mxu0 0.0
  %4946 = vmatpush1.msra.mxu0 0.0
  %4947 = vmatprep.subr.mxu0 0.0
  %4948 = vmatpush1.msra.mxu0 0.0
  %4949 = vmatprep.subr.mxu0 0.0
  %4950 = vmatpush1.msra.mxu0 0.0
  %4951 = vmatprep.subr.mxu0 0.0
  %4952 = vmatpush1.msra.mxu0 0.0
  %4953 = vmatprep.subr.mxu0 0.0
  %4954 = vmatpush1.msra.mxu0 0.0
  %4955 = vmatprep.subr.mxu0 0.0
  %4956 = vmatpush1.msra.mxu0 0.0
  %4957 = vmatprep.subr.mxu0 0.0
  %4958 = vmatpush1.msra.mxu0 0.0
  %4959 = vmatprep.subr.mxu0 0.0
  %4960 = vmatpush1.msra.mxu0 0.0
  %4961 = vmatprep.subr.mxu0 0.0
  %4962 = vmatpush1.msra.mxu0 0.0
  %4963 = vmatprep.subr.mxu0 0.0
  %4964 = vmatpush1.msra.mxu0 0.0
  %4965 = vmatprep.subr.mxu0 0.0
  %4966 = vmatpush1.msra.mxu0 0.0
  %4967 = vmatprep.subr.mxu0 0.0
  %4968 = vmatpush1.msra.mxu0 0.0
  %4969 = vmatprep.subr.mxu0 0.0
  %4970 = vmatpush1.msra.mxu0 0.0
  %4971 = vmatprep.subr.mxu0 0.0
  %4972 = vmatpush1.msra.mxu0 0.0
  %4973 = vmatprep.subr.mxu0 0.0
  %4974 = vmatpush1.msra.mxu0 0.0
  %4975 = vmatprep.subr.mxu0 0.0
  %4976 = vmatpush1.msra.mxu0 0.0
  %4977 = vmatprep.subr.mxu0 0.0
  %4978 = vmatpush1.msra.mxu0 0.0
  %4979 = vmatprep.subr.mxu0 0.0
  %4980 = vmatpush1.msra.mxu0 0.0
  %4981 = vmatprep.mubr.f32.mxu0 0.0
  %4982 = vmatmul.mubr.f32.gmra.mrb[0].mxu0 %v4894
  %v4983 = vpop.f32.mrb[0].mxu0
  %v4984 = vadd.f32 0.0, %v4983
  %v4985 = vpop.f32.mrb[0].mxu0
  %4986 = vmatprep.mubr.f32.mxu0 0.0
  %4987 = vmatmul.mubr.f32.gmra.mrb[0].mxu0 %v4897
  %v4988 = vpop.f32.mrb[0].mxu0
  %v4989 = vadd.f32 0.0, %v4988
  %v4990 = vpop.f32.mrb[0].mxu0
  %4991 = vmatprep.mubr.f32.mxu0 0.0
  %4992 = vmatmul.mubr.f32.gmra.mrb[0].mxu0 %v4900
  %v4993 = vpop.f32.mrb[0].mxu0
  %v4994 = vadd.f32 0.0, %v4993
  %v4995 = vpop.f32.mrb[0].mxu0
  %4996 = vmatprep.mubr.f32.mxu0 0.0
  %4997 = vmatmul.mubr.f32.gmra.mrb[0].mxu0 %v4903
  %v4998 = vpop.f32.mrb[0].mxu0
  %v4999 = vadd.f32 0.0, %v4998
  %v5000 = vpop.f32.mrb[0].mxu0
  %5001 = vmatprep.mubr.f32.mxu0 0.0
  %5002 = vmatmul.mubr.f32.gmra.mrb[0].mxu0 %v4906
  %v5003 = vpop.f32.mrb[0].mxu0
  %v5004 = vadd.f32 0.0, %v5003
  %v5005 = vpop.f32.mrb[0].mxu0
  %5006 = vmatprep.mubr.f32.mxu0 0.0
  %5007 = vmatmul.mubr.f32.gmra.mrb[0].mxu0 %v4909
  %v5008 = vpop.f32.mrb[0].mxu0
  %v5009 = vadd.f32 0.0, %v5008
  %v5010 = vpop.f32.mrb[0].mxu0
  %5011 = vmatprep.mubr.f32.mxu0 0.0
  %5012 = vmatmul.mubr.f32.gmra.mrb[0].mxu0 %v4912
  %v5013 = vpop.f32.mrb[0].mxu0
  %v5014 = vadd.f32 0.0, %v5013
  %v5015 = vpop.f32.mrb[0].mxu0
  %5016 = vmatprep.mubr.f32.mxu0 0.0
  %5017 = vmatmul.mubr.f32.gmra.mrb[0].mxu0 %v4915
  %v5018 = vpop.f32.mrb[0].mxu0
  %v5019 = vadd.f32 0.0, %v5018
  %v5020 = vpop.f32.mrb[0].mxu0
  %5021 = vdwg.mxu0
  %v5023 = vsel %vm571, %v4580, 0
  %v5026 = vsel %vm571, %v4581, 0
  %v5029 = vsel %vm571, %v4582, 0
  %v5032 = vsel %vm571, %v4583, 0
  %v5035 = vsel %vm571, %v4584, 0
  %v5038 = vsel %vm571, %v4585, 0
  %v5041 = vsel %vm571, %v4586, 0
  %v5044 = vsel %vm571, %v4587, 0
  %5046 = vmatprep.subr.mxu0 0.0
  %5047 = vmatpush1.msra.mxu0 %v4285
  %5048 = vmatprep.subr.mxu0 0.0
  %5049 = vmatpush1.msra.mxu0 %v4290
  %5050 = vmatprep.subr.mxu0 0.0
  %5051 = vmatpush1.msra.mxu0 %v4295
  %5052 = vmatprep.subr.mxu0 0.0
  %5053 = vmatpush1.msra.mxu0 %v4300
  %5054 = vmatprep.subr.mxu0 0.0
  %5055 = vmatpush1.msra.mxu0 %v4305
  %5056 = vmatprep.subr.mxu0 0.0
  %5057 = vmatpush1.msra.mxu0 %v4310
  %5058 = vmatprep.subr.mxu0 0.0
  %5059 = vmatpush1.msra.mxu0 %v4315
  %5060 = vmatprep.subr.mxu0 0.0
  %5061 = vmatpush1.msra.mxu0 %v4320
  %5062 = vmatprep.subr.mxu0 0.0
  %5063 = vmatpush1.msra.mxu0 0.0
  %5064 = vmatprep.subr.mxu0 0.0
  %5065 = vmatpush1.msra.mxu0 0.0
  %5066 = vmatprep.subr.mxu0 0.0
  %5067 = vmatpush1.msra.mxu0 0.0
  %5068 = vmatprep.subr.mxu0 0.0
  %5069 = vmatpush1.msra.mxu0 0.0
  %5070 = vmatprep.subr.mxu0 0.0
  %5071 = vmatpush1.msra.mxu0 0.0
  %5072 = vmatprep.subr.mxu0 0.0
  %5073 = vmatpush1.msra.mxu0 0.0
  %5074 = vmatprep.subr.mxu0 0.0
  %5075 = vmatpush1.msra.mxu0 0.0
  %5076 = vmatprep.subr.mxu0 0.0
  %5077 = vmatpush1.msra.mxu0 0.0
  %5078 = vmatprep.subr.mxu0 0.0
  %5079 = vmatpush1.msra.mxu0 0.0
  %5080 = vmatprep.subr.mxu0 0.0
  %5081 = vmatpush1.msra.mxu0 0.0
  %5082 = vmatprep.subr.mxu0 0.0
  %5083 = vmatpush1.msra.mxu0 0.0
  %5084 = vmatprep.subr.mxu0 0.0
  %5085 = vmatpush1.msra.mxu0 0.0
  %5086 = vmatprep.subr.mxu0 0.0
  %5087 = vmatpush1.msra.mxu0 0.0
  %5088 = vmatprep.subr.mxu0 0.0
  %5089 = vmatpush1.msra.mxu0 0.0
  %5090 = vmatprep.subr.mxu0 0.0
  %5091 = vmatpush1.msra.mxu0 0.0
  %5092 = vmatprep.subr.mxu0 0.0
  %5093 = vmatpush1.msra.mxu0 0.0
  %5094 = vmatprep.subr.mxu0 0.0
  %5095 = vmatpush1.msra.mxu0 0.0
  %5096 = vmatprep.subr.mxu0 0.0
  %5097 = vmatpush1.msra.mxu0 0.0
  %5098 = vmatprep.subr.mxu0 0.0
  %5099 = vmatpush1.msra.mxu0 0.0
  %5100 = vmatprep.subr.mxu0 0.0
  %5101 = vmatpush1.msra.mxu0 0.0
  %5102 = vmatprep.subr.mxu0 0.0
  %5103 = vmatpush1.msra.mxu0 0.0
  %5104 = vmatprep.subr.mxu0 0.0
  %5105 = vmatpush1.msra.mxu0 0.0
  %5106 = vmatprep.subr.mxu0 0.0
  %5107 = vmatpush1.msra.mxu0 0.0
  %5108 = vmatprep.subr.mxu0 0.0
  %5109 = vmatpush1.msra.mxu0 0.0
  %5110 = vmatprep.mubr.f32.mxu0 0.0
  %5111 = vmatmul.mubr.f32.gmra.mrb[0].mxu0 %v5023
  %v5112 = vpop.f32.mrb[0].mxu0
  %v5113 = vadd.f32 %v4984, %v5112
  %v5114 = vpop.f32.mrb[0].mxu0
  %5115 = vmatprep.mubr.f32.mxu0 0.0
  %5116 = vmatmul.mubr.f32.gmra.mrb[0].mxu0 %v5026
  %v5117 = vpop.f32.mrb[0].mxu0
  %v5118 = vadd.f32 %v4989, %v5117
  %v5119 = vpop.f32.mrb[0].mxu0
  %5120 = vmatprep.mubr.f32.mxu0 0.0
  %5121 = vmatmul.mubr.f32.gmra.mrb[0].mxu0 %v5029
  %v5122 = vpop.f32.mrb[0].mxu0
  %v5123 = vadd.f32 %v4994, %v5122
  %v5124 = vpop.f32.mrb[0].mxu0
  %5125 = vmatprep.mubr.f32.mxu0 0.0
  %5126 = vmatmul.mubr.f32.gmra.mrb[0].mxu0 %v5032
  %v5127 = vpop.f32.mrb[0].mxu0
  %v5128 = vadd.f32 %v4999, %v5127
  %v5129 = vpop.f32.mrb[0].mxu0
  %5130 = vmatprep.mubr.f32.mxu0 0.0
  %5131 = vmatmul.mubr.f32.gmra.mrb[0].mxu0 %v5035
  %v5132 = vpop.f32.mrb[0].mxu0
  %v5133 = vadd.f32 %v5004, %v5132
  %v5134 = vpop.f32.mrb[0].mxu0
  %5135 = vmatprep.mubr.f32.mxu0 0.0
  %5136 = vmatmul.mubr.f32.gmra.mrb[0].mxu0 %v5038
  %v5137 = vpop.f32.mrb[0].mxu0
  %v5138 = vadd.f32 %v5009, %v5137
  %v5139 = vpop.f32.mrb[0].mxu0
  %5140 = vmatprep.mubr.f32.mxu0 0.0
  %5141 = vmatmul.mubr.f32.gmra.mrb[0].mxu0 %v5041
  %v5142 = vpop.f32.mrb[0].mxu0
  %v5143 = vadd.f32 %v5014, %v5142
  %v5144 = vpop.f32.mrb[0].mxu0
  %5145 = vmatprep.mubr.f32.mxu0 0.0
  %5146 = vmatmul.mubr.f32.gmra.mrb[0].mxu0 %v5044
  %v5147 = vpop.f32.mrb[0].mxu0
  %v5148 = vadd.f32 %v5019, %v5147
  %v5149 = vpop.f32.mrb[0].mxu0
  %5150 = vdwg.mxu0
  %5151 = vrot.lane.b32.xlu0 %v4167, 112
  %v5152 = vpop.permute.xlu0 %5151
  %5153 = vrot.lane.b32.xlu0 %v4172, 112
  %v5154 = vpop.permute.xlu0 %5153
  %5155 = vrot.lane.b32.xlu0 %v4177, 112
  %v5156 = vpop.permute.xlu0 %5155
  %5157 = vrot.lane.b32.xlu0 %v4182, 112
  %v5158 = vpop.permute.xlu0 %5157
  %5159 = vrot.lane.b32.xlu0 %v4187, 112
  %v5160 = vpop.permute.xlu0 %5159
  %5161 = vrot.lane.b32.xlu0 %v4192, 112
  %v5162 = vpop.permute.xlu0 %5161
  %5163 = vrot.lane.b32.xlu0 %v4197, 112
  %v5164 = vpop.permute.xlu0 %5163
  %5165 = vrot.lane.b32.xlu0 %v4202, 112
  %v5166 = vpop.permute.xlu0 %5165
  %5167 = vrot.lane.b32.xlu0 %v4167, 80
  %v5168 = vpop.permute.xlu0 %5167
  %5169 = vrot.lane.b32.xlu0 %v4172, 80
  %v5170 = vpop.permute.xlu0 %5169
  %5171 = vrot.lane.b32.xlu0 %v4177, 80
  %v5172 = vpop.permute.xlu0 %5171
  %5173 = vrot.lane.b32.xlu0 %v4182, 80
  %v5174 = vpop.permute.xlu0 %5173
  %5175 = vrot.lane.b32.xlu0 %v4187, 80
  %v5176 = vpop.permute.xlu0 %5175
  %5177 = vrot.lane.b32.xlu0 %v4192, 80
  %v5178 = vpop.permute.xlu0 %5177
  %5179 = vrot.lane.b32.xlu0 %v4197, 80
  %v5180 = vpop.permute.xlu0 %5179
  %5181 = vrot.lane.b32.xlu0 %v4202, 80
  %v5182 = vpop.permute.xlu0 %5181
  %v5183 = vsel %vm1717, %v5152, 0
  %v5185 = vsel %vm1717, %v5154, 0
  %v5187 = vsel %vm1717, %v5156, 0
  %v5189 = vsel %vm1717, %v5158, 0
  %v5191 = vsel %vm1717, %v5160, 0
  %v5193 = vsel %vm1717, %v5162, 0
  %v5195 = vsel %vm1717, %v5164, 0
  %v5197 = vsel %vm1717, %v5166, 0
  %v5199 = vsel %vm1717, %v5168, 0
  %v5201 = vsel %vm1717, %v5170, 0
  %v5203 = vsel %vm1717, %v5172, 0
  %v5205 = vsel %vm1717, %v5174, 0
  %v5207 = vsel %vm1717, %v5176, 0
  %v5209 = vsel %vm1717, %v5178, 0
  %v5211 = vsel %vm1717, %v5180, 0
  %v5213 = vsel %vm1717, %v5182, 0
  %5215 = vmatprep.subr.mxu0 0.0
  %5216 = vmatpush1.xpose.msra.mxu0 %v5199
  %5217 = vmatprep.subr.mxu0 0.0
  %5218 = vmatpush1.xpose.msra.mxu0 %v5201
  %5219 = vmatprep.subr.mxu0 0.0
  %5220 = vmatpush1.xpose.msra.mxu0 %v5203
  %5221 = vmatprep.subr.mxu0 0.0
  %5222 = vmatpush1.xpose.msra.mxu0 %v5205
  %5223 = vmatprep.subr.mxu0 0.0
  %5224 = vmatpush1.xpose.msra.mxu0 %v5207
  %5225 = vmatprep.subr.mxu0 0.0
  %5226 = vmatpush1.xpose.msra.mxu0 %v5209
  %5227 = vmatprep.subr.mxu0 0.0
  %5228 = vmatpush1.xpose.msra.mxu0 %v5211
  %5229 = vmatprep.subr.mxu0 0.0
  %5230 = vmatpush1.xpose.msra.mxu0 %v5213
  %5231 = vmatprep.subr.mxu0 0.0
  %5232 = vmatpush1.xpose.msra.mxu0 0.0
  %5233 = vmatprep.subr.mxu0 0.0
  %5234 = vmatpush1.xpose.msra.mxu0 0.0
  %5235 = vmatprep.subr.mxu0 0.0
  %5236 = vmatpush1.xpose.msra.mxu0 0.0
  %5237 = vmatprep.subr.mxu0 0.0
  %5238 = vmatpush1.xpose.msra.mxu0 0.0
  %5239 = vmatprep.subr.mxu0 0.0
  %5240 = vmatpush1.xpose.msra.mxu0 0.0
  %5241 = vmatprep.subr.mxu0 0.0
  %5242 = vmatpush1.xpose.msra.mxu0 0.0
  %5243 = vmatprep.subr.mxu0 0.0
  %5244 = vmatpush1.xpose.msra.mxu0 0.0
  %5245 = vmatprep.subr.mxu0 0.0
  %5246 = vmatpush1.xpose.msra.mxu0 0.0
  %5247 = vmatprep.subr.mxu0 0.0
  %5248 = vmatpush1.xpose.msra.mxu0 0.0
  %5249 = vmatprep.subr.mxu0 0.0
  %5250 = vmatpush1.xpose.msra.mxu0 0.0
  %5251 = vmatprep.subr.mxu0 0.0
  %5252 = vmatpush1.xpose.msra.mxu0 0.0
  %5253 = vmatprep.subr.mxu0 0.0
  %5254 = vmatpush1.xpose.msra.mxu0 0.0
  %5255 = vmatprep.subr.mxu0 0.0
  %5256 = vmatpush1.xpose.msra.mxu0 0.0
  %5257 = vmatprep.subr.mxu0 0.0
  %5258 = vmatpush1.xpose.msra.mxu0 0.0
  %5259 = vmatprep.subr.mxu0 0.0
  %5260 = vmatpush1.xpose.msra.mxu0 0.0
  %5261 = vmatprep.subr.mxu0 0.0
  %5262 = vmatpush1.xpose.msra.mxu0 0.0
  %5263 = vmatprep.subr.mxu0 0.0
  %5264 = vmatpush1.xpose.msra.mxu0 0.0
  %5265 = vmatprep.subr.mxu0 0.0
  %5266 = vmatpush1.xpose.msra.mxu0 0.0
  %5267 = vmatprep.subr.mxu0 0.0
  %5268 = vmatpush1.xpose.msra.mxu0 0.0
  %5269 = vmatprep.subr.mxu0 0.0
  %5270 = vmatpush1.xpose.msra.mxu0 0.0
  %5271 = vmatprep.subr.mxu0 0.0
  %5272 = vmatpush1.xpose.msra.mxu0 0.0
  %5273 = vmatprep.subr.mxu0 0.0
  %5274 = vmatpush1.xpose.msra.mxu0 0.0
  %5275 = vmatprep.subr.mxu0 0.0
  %5276 = vmatpush1.xpose.msra.mxu0 0.0
  %5277 = vmatprep.subr.mxu0 0.0
  %5278 = vmatpush1.xpose.msra.mxu0 0.0
  %5279 = vmatprep.mubr.f32.mxu0 0.0
  %5280 = vmatmul.mubr.f32.gmra.mrb[0].mxu0 %v5183
  %v5281 = vpop.f32.mrb[0].mxu0
  %v5282 = vadd.f32 0.0, %v5281
  %v5283 = vpop.f32.mrb[0].mxu0
  %5284 = vmatprep.mubr.f32.mxu0 0.0
  %5285 = vmatmul.mubr.f32.gmra.mrb[0].mxu0 %v5185
  %v5286 = vpop.f32.mrb[0].mxu0
  %v5287 = vadd.f32 0.0, %v5286
  %v5288 = vpop.f32.mrb[0].mxu0
  %5289 = vmatprep.mubr.f32.mxu0 0.0
  %5290 = vmatmul.mubr.f32.gmra.mrb[0].mxu0 %v5187
  %v5291 = vpop.f32.mrb[0].mxu0
  %v5292 = vadd.f32 0.0, %v5291
  %v5293 = vpop.f32.mrb[0].mxu0
  %5294 = vmatprep.mubr.f32.mxu0 0.0
  %5295 = vmatmul.mubr.f32.gmra.mrb[0].mxu0 %v5189
  %v5296 = vpop.f32.mrb[0].mxu0
  %v5297 = vadd.f32 0.0, %v5296
  %v5298 = vpop.f32.mrb[0].mxu0
  %5299 = vmatprep.mubr.f32.mxu0 0.0
  %5300 = vmatmul.mubr.f32.gmra.mrb[0].mxu0 %v5191
  %v5301 = vpop.f32.mrb[0].mxu0
  %v5302 = vadd.f32 0.0, %v5301
  %v5303 = vpop.f32.mrb[0].mxu0
  %5304 = vmatprep.mubr.f32.mxu0 0.0
  %5305 = vmatmul.mubr.f32.gmra.mrb[0].mxu0 %v5193
  %v5306 = vpop.f32.mrb[0].mxu0
  %v5307 = vadd.f32 0.0, %v5306
  %v5308 = vpop.f32.mrb[0].mxu0
  %5309 = vmatprep.mubr.f32.mxu0 0.0
  %5310 = vmatmul.mubr.f32.gmra.mrb[0].mxu0 %v5195
  %v5311 = vpop.f32.mrb[0].mxu0
  %v5312 = vadd.f32 0.0, %v5311
  %v5313 = vpop.f32.mrb[0].mxu0
  %5314 = vmatprep.mubr.f32.mxu0 0.0
  %5315 = vmatmul.mubr.f32.gmra.mrb[0].mxu0 %v5197
  %v5316 = vpop.f32.mrb[0].mxu0
  %v5317 = vadd.f32 0.0, %v5316
  %v5318 = vpop.f32.mrb[0].mxu0
  %5319 = vdwg.mxu0
  %v5320 = vmul.f32 %v5282, 0.35355338
  %v5321 = vmul.f32 %v5287, 0.35355338
  %v5322 = vmul.f32 %v5292, 0.35355338
  %v5323 = vmul.f32 %v5297, 0.35355338
  %v5324 = vmul.f32 %v5302, 0.35355338
  %v5325 = vmul.f32 %v5307, 0.35355338
  %v5326 = vmul.f32 %v5312, 0.35355338
  %v5327 = vmul.f32 %v5317, 0.35355338
  %v5328 = vadd.f32 %v5320, %v1685
  %v5329 = vadd.f32 %v5321, %v1686
  %v5330 = vadd.f32 %v5322, %v1687
  %v5331 = vadd.f32 %v5323, %v1688
  %v5332 = vadd.f32 %v5324, %v1689
  %v5333 = vadd.f32 %v5325, %v1690
  %v5334 = vadd.f32 %v5326, %v1691
  %v5335 = vadd.f32 %v5327, %v1692
  %v5336 = vsel %vm571, %v5328, -inf
  %5337 = vmax.xlane.f32.xlu0 %v5336
  %v5338 = vpop.xlane.xlu0 %5337
  %v5339 = vsel %vm571, %v5329, -inf
  %5340 = vmax.xlane.f32.xlu0 %v5339
  %v5341 = vpop.xlane.xlu0 %5340
  %v5342 = vsel %vm571, %v5330, -inf
  %5343 = vmax.xlane.f32.xlu0 %v5342
  %v5344 = vpop.xlane.xlu0 %5343
  %v5345 = vsel %vm571, %v5331, -inf
  %5346 = vmax.xlane.f32.xlu0 %v5345
  %v5347 = vpop.xlane.xlu0 %5346
  %v5348 = vsel %vm571, %v5332, -inf
  %5349 = vmax.xlane.f32.xlu0 %v5348
  %v5350 = vpop.xlane.xlu0 %5349
  %v5351 = vsel %vm571, %v5333, -inf
  %5352 = vmax.xlane.f32.xlu0 %v5351
  %v5353 = vpop.xlane.xlu0 %5352
  %v5354 = vsel %vm571, %v5334, -inf
  %5355 = vmax.xlane.f32.xlu0 %v5354
  %v5356 = vpop.xlane.xlu0 %5355
  %v5357 = vsel %vm571, %v5335, -inf
  %5358 = vmax.xlane.f32.xlu0 %v5357
  %v5359 = vpop.xlane.xlu0 %5358
  %v5360 = vsub.f32 %v5328, %v5338
  %v5361 = vsub.f32 %v5329, %v5341
  %v5362 = vsub.f32 %v5330, %v5344
  %v5363 = vsub.f32 %v5331, %v5347
  %v5364 = vsub.f32 %v5332, %v5350
  %v5365 = vsub.f32 %v5333, %v5353
  %v5366 = vsub.f32 %v5334, %v5356
  %v5367 = vsub.f32 %v5335, %v5359
  %v5368 = vmul.f32 %v5360, 1.442695
  %v5369 = vpow.pop %v5368
  %v5370 = vmul.f32 %v5361, 1.442695
  %v5371 = vpow.pop %v5370
  %v5372 = vmul.f32 %v5362, 1.442695
  %v5373 = vpow.pop %v5372
  %v5374 = vmul.f32 %v5363, 1.442695
  %v5375 = vpow.pop %v5374
  %v5376 = vmul.f32 %v5364, 1.442695
  %v5377 = vpow.pop %v5376
  %v5378 = vmul.f32 %v5365, 1.442695
  %v5379 = vpow.pop %v5378
  %v5380 = vmul.f32 %v5366, 1.442695
  %v5381 = vpow.pop %v5380
  %v5382 = vmul.f32 %v5367, 1.442695
  %v5383 = vpow.pop %v5382
  %v5384 = vsel %vm571, %v5369, 0.0
  %5385 = vadd.xlane.f32.xlu0 %v5384
  %v5386 = vpop.xlane.xlu0 %5385
  %v5387 = vsel %vm571, %v5371, 0.0
  %5388 = vadd.xlane.f32.xlu0 %v5387
  %v5389 = vpop.xlane.xlu0 %5388
  %v5390 = vsel %vm571, %v5373, 0.0
  %5391 = vadd.xlane.f32.xlu0 %v5390
  %v5392 = vpop.xlane.xlu0 %5391
  %v5393 = vsel %vm571, %v5375, 0.0
  %5394 = vadd.xlane.f32.xlu0 %v5393
  %v5395 = vpop.xlane.xlu0 %5394
  %v5396 = vsel %vm571, %v5377, 0.0
  %5397 = vadd.xlane.f32.xlu0 %v5396
  %v5398 = vpop.xlane.xlu0 %5397
  %v5399 = vsel %vm571, %v5379, 0.0
  %5400 = vadd.xlane.f32.xlu0 %v5399
  %v5401 = vpop.xlane.xlu0 %5400
  %v5402 = vsel %vm571, %v5381, 0.0
  %5403 = vadd.xlane.f32.xlu0 %v5402
  %v5404 = vpop.xlane.xlu0 %5403
  %v5405 = vsel %vm571, %v5383, 0.0
  %5406 = vadd.xlane.f32.xlu0 %v5405
  %v5407 = vpop.xlane.xlu0 %5406
  %v5408 = vrcp.pop %v5386
  %v5409 = vrcp.pop %v5389
  %v5410 = vrcp.pop %v5392
  %v5411 = vrcp.pop %v5395
  %v5412 = vrcp.pop %v5398
  %v5413 = vrcp.pop %v5401
  %v5414 = vrcp.pop %v5404
  %v5415 = vrcp.pop %v5407
  %v5416 = vmul.f32 %v5369, %v5408
  %v5417 = vmul.f32 %v5371, %v5409
  %v5418 = vmul.f32 %v5373, %v5410
  %v5419 = vmul.f32 %v5375, %v5411
  %v5420 = vmul.f32 %v5377, %v5412
  %v5421 = vmul.f32 %v5379, %v5413
  %v5422 = vmul.f32 %v5381, %v5414
  %v5423 = vmul.f32 %v5383, %v5415
  %5424 = vrot.lane.b32.xlu0 %v4285, 64
  %v5425 = vpop.permute.xlu0 %5424
  %5426 = vrot.lane.b32.xlu0 %v4290, 64
  %v5427 = vpop.permute.xlu0 %5426
  %5428 = vrot.lane.b32.xlu0 %v4295, 64
  %v5429 = vpop.permute.xlu0 %5428
  %5430 = vrot.lane.b32.xlu0 %v4300, 64
  %v5431 = vpop.permute.xlu0 %5430
  %5432 = vrot.lane.b32.xlu0 %v4305, 64
  %v5433 = vpop.permute.xlu0 %5432
  %5434 = vrot.lane.b32.xlu0 %v4310, 64
  %v5435 = vpop.permute.xlu0 %5434
  %5436 = vrot.lane.b32.xlu0 %v4315, 64
  %v5437 = vpop.permute.xlu0 %5436
  %5438 = vrot.lane.b32.xlu0 %v4320, 64
  %v5439 = vpop.permute.xlu0 %5438
  %v5449 = vsel %vm571, %v5416, 0
  %v5452 = vsel %vm571, %v5417, 0
  %v5455 = vsel %vm571, %v5418, 0
  %v5458 = vsel %vm571, %v5419, 0
  %v5461 = vsel %vm571, %v5420, 0
  %v5464 = vsel %vm571, %v5421, 0
  %v5467 = vsel %vm571, %v5422, 0
  %v5470 = vsel %vm571, %v5423, 0
  %5472 = vmatprep.subr.mxu0 0.0
  %5473 = vmatpush1.msra.mxu0 %v5425
  %5474 = vmatprep.subr.mxu0 0.0
  %5475 = vmatpush1.msra.mxu0 %v5427
  %5476 = vmatprep.subr.mxu0 0.0
  %5477 = vmatpush1.msra.mxu0 %v5429
  %5478 = vmatprep.subr.mxu0 0.0
  %5479 = vmatpush1.msra.mxu0 %v5431
  %5480 = vmatprep.subr.mxu0 0.0
  %5481 = vmatpush1.msra.mxu0 %v5433
  %5482 = vmatprep.subr.mxu0 0.0
  %5483 = vmatpush1.msra.mxu0 %v5435
  %5484 = vmatprep.subr.mxu0 0.0
  %5485 = vmatpush1.msra.mxu0 %v5437
  %5486 = vmatprep.subr.mxu0 0.0
  %5487 = vmatpush1.msra.mxu0 %v5439
  %5488 = vmatprep.subr.mxu0 0.0
  %5489 = vmatpush1.msra.mxu0 0.0
  %5490 = vmatprep.subr.mxu0 0.0
  %5491 = vmatpush1.msra.mxu0 0.0
  %5492 = vmatprep.subr.mxu0 0.0
  %5493 = vmatpush1.msra.mxu0 0.0
  %5494 = vmatprep.subr.mxu0 0.0
  %5495 = vmatpush1.msra.mxu0 0.0
  %5496 = vmatprep.subr.mxu0 0.0
  %5497 = vmatpush1.msra.mxu0 0.0
  %5498 = vmatprep.subr.mxu0 0.0
  %5499 = vmatpush1.msra.mxu0 0.0
  %5500 = vmatprep.subr.mxu0 0.0
  %5501 = vmatpush1.msra.mxu0 0.0
  %5502 = vmatprep.subr.mxu0 0.0
  %5503 = vmatpush1.msra.mxu0 0.0
  %5504 = vmatprep.subr.mxu0 0.0
  %5505 = vmatpush1.msra.mxu0 0.0
  %5506 = vmatprep.subr.mxu0 0.0
  %5507 = vmatpush1.msra.mxu0 0.0
  %5508 = vmatprep.subr.mxu0 0.0
  %5509 = vmatpush1.msra.mxu0 0.0
  %5510 = vmatprep.subr.mxu0 0.0
  %5511 = vmatpush1.msra.mxu0 0.0
  %5512 = vmatprep.subr.mxu0 0.0
  %5513 = vmatpush1.msra.mxu0 0.0
  %5514 = vmatprep.subr.mxu0 0.0
  %5515 = vmatpush1.msra.mxu0 0.0
  %5516 = vmatprep.subr.mxu0 0.0
  %5517 = vmatpush1.msra.mxu0 0.0
  %5518 = vmatprep.subr.mxu0 0.0
  %5519 = vmatpush1.msra.mxu0 0.0
  %5520 = vmatprep.subr.mxu0 0.0
  %5521 = vmatpush1.msra.mxu0 0.0
  %5522 = vmatprep.subr.mxu0 0.0
  %5523 = vmatpush1.msra.mxu0 0.0
  %5524 = vmatprep.subr.mxu0 0.0
  %5525 = vmatpush1.msra.mxu0 0.0
  %5526 = vmatprep.subr.mxu0 0.0
  %5527 = vmatpush1.msra.mxu0 0.0
  %5528 = vmatprep.subr.mxu0 0.0
  %5529 = vmatpush1.msra.mxu0 0.0
  %5530 = vmatprep.subr.mxu0 0.0
  %5531 = vmatpush1.msra.mxu0 0.0
  %5532 = vmatprep.subr.mxu0 0.0
  %5533 = vmatpush1.msra.mxu0 0.0
  %5534 = vmatprep.subr.mxu0 0.0
  %5535 = vmatpush1.msra.mxu0 0.0
  %5536 = vmatprep.mubr.f32.mxu0 0.0
  %5537 = vmatmul.mubr.f32.gmra.mrb[0].mxu0 %v5449
  %v5538 = vpop.f32.mrb[0].mxu0
  %v5539 = vadd.f32 0.0, %v5538
  %v5540 = vpop.f32.mrb[0].mxu0
  %5541 = vmatprep.mubr.f32.mxu0 0.0
  %5542 = vmatmul.mubr.f32.gmra.mrb[0].mxu0 %v5452
  %v5543 = vpop.f32.mrb[0].mxu0
  %v5544 = vadd.f32 0.0, %v5543
  %v5545 = vpop.f32.mrb[0].mxu0
  %5546 = vmatprep.mubr.f32.mxu0 0.0
  %5547 = vmatmul.mubr.f32.gmra.mrb[0].mxu0 %v5455
  %v5548 = vpop.f32.mrb[0].mxu0
  %v5549 = vadd.f32 0.0, %v5548
  %v5550 = vpop.f32.mrb[0].mxu0
  %5551 = vmatprep.mubr.f32.mxu0 0.0
  %5552 = vmatmul.mubr.f32.gmra.mrb[0].mxu0 %v5458
  %v5553 = vpop.f32.mrb[0].mxu0
  %v5554 = vadd.f32 0.0, %v5553
  %v5555 = vpop.f32.mrb[0].mxu0
  %5556 = vmatprep.mubr.f32.mxu0 0.0
  %5557 = vmatmul.mubr.f32.gmra.mrb[0].mxu0 %v5461
  %v5558 = vpop.f32.mrb[0].mxu0
  %v5559 = vadd.f32 0.0, %v5558
  %v5560 = vpop.f32.mrb[0].mxu0
  %5561 = vmatprep.mubr.f32.mxu0 0.0
  %5562 = vmatmul.mubr.f32.gmra.mrb[0].mxu0 %v5464
  %v5563 = vpop.f32.mrb[0].mxu0
  %v5564 = vadd.f32 0.0, %v5563
  %v5565 = vpop.f32.mrb[0].mxu0
  %5566 = vmatprep.mubr.f32.mxu0 0.0
  %5567 = vmatmul.mubr.f32.gmra.mrb[0].mxu0 %v5467
  %v5568 = vpop.f32.mrb[0].mxu0
  %v5569 = vadd.f32 0.0, %v5568
  %v5570 = vpop.f32.mrb[0].mxu0
  %5571 = vmatprep.mubr.f32.mxu0 0.0
  %5572 = vmatmul.mubr.f32.gmra.mrb[0].mxu0 %v5470
  %v5573 = vpop.f32.mrb[0].mxu0
  %v5574 = vadd.f32 0.0, %v5573
  %v5575 = vpop.f32.mrb[0].mxu0
  %5576 = vdwg.mxu0
  %v5577 = vadd.f32 %v5113, %v5539
  %v5578 = vadd.f32 %v5118, %v5544
  %v5579 = vadd.f32 %v5123, %v5549
  %v5580 = vadd.f32 %v5128, %v5554
  %v5581 = vadd.f32 %v5133, %v5559
  %v5582 = vadd.f32 %v5138, %v5564
  %v5583 = vadd.f32 %v5143, %v5569
  %v5584 = vadd.f32 %v5148, %v5574
  %5585 = vrot.lane.b32.xlu0 %v4167, 104
  %v5586 = vpop.permute.xlu0 %5585
  %5587 = vrot.lane.b32.xlu0 %v4172, 104
  %v5588 = vpop.permute.xlu0 %5587
  %5589 = vrot.lane.b32.xlu0 %v4177, 104
  %v5590 = vpop.permute.xlu0 %5589
  %5591 = vrot.lane.b32.xlu0 %v4182, 104
  %v5592 = vpop.permute.xlu0 %5591
  %5593 = vrot.lane.b32.xlu0 %v4187, 104
  %v5594 = vpop.permute.xlu0 %5593
  %5595 = vrot.lane.b32.xlu0 %v4192, 104
  %v5596 = vpop.permute.xlu0 %5595
  %5597 = vrot.lane.b32.xlu0 %v4197, 104
  %v5598 = vpop.permute.xlu0 %5597
  %5599 = vrot.lane.b32.xlu0 %v4202, 104
  %v5600 = vpop.permute.xlu0 %5599
  %5601 = vrot.lane.b32.xlu0 %v4167, 72
  %v5602 = vpop.permute.xlu0 %5601
  %5603 = vrot.lane.b32.xlu0 %v4172, 72
  %v5604 = vpop.permute.xlu0 %5603
  %5605 = vrot.lane.b32.xlu0 %v4177, 72
  %v5606 = vpop.permute.xlu0 %5605
  %5607 = vrot.lane.b32.xlu0 %v4182, 72
  %v5608 = vpop.permute.xlu0 %5607
  %5609 = vrot.lane.b32.xlu0 %v4187, 72
  %v5610 = vpop.permute.xlu0 %5609
  %5611 = vrot.lane.b32.xlu0 %v4192, 72
  %v5612 = vpop.permute.xlu0 %5611
  %5613 = vrot.lane.b32.xlu0 %v4197, 72
  %v5614 = vpop.permute.xlu0 %5613
  %5615 = vrot.lane.b32.xlu0 %v4202, 72
  %v5616 = vpop.permute.xlu0 %5615
  %v5617 = vsel %vm1717, %v5586, 0
  %v5619 = vsel %vm1717, %v5588, 0
  %v5621 = vsel %vm1717, %v5590, 0
  %v5623 = vsel %vm1717, %v5592, 0
  %v5625 = vsel %vm1717, %v5594, 0
  %v5627 = vsel %vm1717, %v5596, 0
  %v5629 = vsel %vm1717, %v5598, 0
  %v5631 = vsel %vm1717, %v5600, 0
  %v5633 = vsel %vm1717, %v5602, 0
  %v5635 = vsel %vm1717, %v5604, 0
  %v5637 = vsel %vm1717, %v5606, 0
  %v5639 = vsel %vm1717, %v5608, 0
  %v5641 = vsel %vm1717, %v5610, 0
  %v5643 = vsel %vm1717, %v5612, 0
  %v5645 = vsel %vm1717, %v5614, 0
  %v5647 = vsel %vm1717, %v5616, 0
  %5649 = vmatprep.subr.mxu0 0.0
  %5650 = vmatpush1.xpose.msra.mxu0 %v5633
  %5651 = vmatprep.subr.mxu0 0.0
  %5652 = vmatpush1.xpose.msra.mxu0 %v5635
  %5653 = vmatprep.subr.mxu0 0.0
  %5654 = vmatpush1.xpose.msra.mxu0 %v5637
  %5655 = vmatprep.subr.mxu0 0.0
  %5656 = vmatpush1.xpose.msra.mxu0 %v5639
  %5657 = vmatprep.subr.mxu0 0.0
  %5658 = vmatpush1.xpose.msra.mxu0 %v5641
  %5659 = vmatprep.subr.mxu0 0.0
  %5660 = vmatpush1.xpose.msra.mxu0 %v5643
  %5661 = vmatprep.subr.mxu0 0.0
  %5662 = vmatpush1.xpose.msra.mxu0 %v5645
  %5663 = vmatprep.subr.mxu0 0.0
  %5664 = vmatpush1.xpose.msra.mxu0 %v5647
  %5665 = vmatprep.subr.mxu0 0.0
  %5666 = vmatpush1.xpose.msra.mxu0 0.0
  %5667 = vmatprep.subr.mxu0 0.0
  %5668 = vmatpush1.xpose.msra.mxu0 0.0
  %5669 = vmatprep.subr.mxu0 0.0
  %5670 = vmatpush1.xpose.msra.mxu0 0.0
  %5671 = vmatprep.subr.mxu0 0.0
  %5672 = vmatpush1.xpose.msra.mxu0 0.0
  %5673 = vmatprep.subr.mxu0 0.0
  %5674 = vmatpush1.xpose.msra.mxu0 0.0
  %5675 = vmatprep.subr.mxu0 0.0
  %5676 = vmatpush1.xpose.msra.mxu0 0.0
  %5677 = vmatprep.subr.mxu0 0.0
  %5678 = vmatpush1.xpose.msra.mxu0 0.0
  %5679 = vmatprep.subr.mxu0 0.0
  %5680 = vmatpush1.xpose.msra.mxu0 0.0
  %5681 = vmatprep.subr.mxu0 0.0
  %5682 = vmatpush1.xpose.msra.mxu0 0.0
  %5683 = vmatprep.subr.mxu0 0.0
  %5684 = vmatpush1.xpose.msra.mxu0 0.0
  %5685 = vmatprep.subr.mxu0 0.0
  %5686 = vmatpush1.xpose.msra.mxu0 0.0
  %5687 = vmatprep.subr.mxu0 0.0
  %5688 = vmatpush1.xpose.msra.mxu0 0.0
  %5689 = vmatprep.subr.mxu0 0.0
  %5690 = vmatpush1.xpose.msra.mxu0 0.0
  %5691 = vmatprep.subr.mxu0 0.0
  %5692 = vmatpush1.xpose.msra.mxu0 0.0
  %5693 = vmatprep.subr.mxu0 0.0
  %5694 = vmatpush1.xpose.msra.mxu0 0.0
  %5695 = vmatprep.subr.mxu0 0.0
  %5696 = vmatpush1.xpose.msra.mxu0 0.0
  %5697 = vmatprep.subr.mxu0 0.0
  %5698 = vmatpush1.xpose.msra.mxu0 0.0
  %5699 = vmatprep.subr.mxu0 0.0
  %5700 = vmatpush1.xpose.msra.mxu0 0.0
  %5701 = vmatprep.subr.mxu0 0.0
  %5702 = vmatpush1.xpose.msra.mxu0 0.0
  %5703 = vmatprep.subr.mxu0 0.0
  %5704 = vmatpush1.xpose.msra.mxu0 0.0
  %5705 = vmatprep.subr.mxu0 0.0
  %5706 = vmatpush1.xpose.msra.mxu0 0.0
  %5707 = vmatprep.subr.mxu0 0.0
  %5708 = vmatpush1.xpose.msra.mxu0 0.0
  %5709 = vmatprep.subr.mxu0 0.0
  %5710 = vmatpush1.xpose.msra.mxu0 0.0
  %5711 = vmatprep.subr.mxu0 0.0
  %5712 = vmatpush1.xpose.msra.mxu0 0.0
  %5713 = vmatprep.mubr.f32.mxu0 0.0
  %5714 = vmatmul.mubr.f32.gmra.mrb[0].mxu0 %v5617
  %v5715 = vpop.f32.mrb[0].mxu0
  %v5716 = vadd.f32 0.0, %v5715
  %v5717 = vpop.f32.mrb[0].mxu0
  %5718 = vmatprep.mubr.f32.mxu0 0.0
  %5719 = vmatmul.mubr.f32.gmra.mrb[0].mxu0 %v5619
  %v5720 = vpop.f32.mrb[0].mxu0
  %v5721 = vadd.f32 0.0, %v5720
  %v5722 = vpop.f32.mrb[0].mxu0
  %5723 = vmatprep.mubr.f32.mxu0 0.0
  %5724 = vmatmul.mubr.f32.gmra.mrb[0].mxu0 %v5621
  %v5725 = vpop.f32.mrb[0].mxu0
  %v5726 = vadd.f32 0.0, %v5725
  %v5727 = vpop.f32.mrb[0].mxu0
  %5728 = vmatprep.mubr.f32.mxu0 0.0
  %5729 = vmatmul.mubr.f32.gmra.mrb[0].mxu0 %v5623
  %v5730 = vpop.f32.mrb[0].mxu0
  %v5731 = vadd.f32 0.0, %v5730
  %v5732 = vpop.f32.mrb[0].mxu0
  %5733 = vmatprep.mubr.f32.mxu0 0.0
  %5734 = vmatmul.mubr.f32.gmra.mrb[0].mxu0 %v5625
  %v5735 = vpop.f32.mrb[0].mxu0
  %v5736 = vadd.f32 0.0, %v5735
  %v5737 = vpop.f32.mrb[0].mxu0
  %5738 = vmatprep.mubr.f32.mxu0 0.0
  %5739 = vmatmul.mubr.f32.gmra.mrb[0].mxu0 %v5627
  %v5740 = vpop.f32.mrb[0].mxu0
  %v5741 = vadd.f32 0.0, %v5740
  %v5742 = vpop.f32.mrb[0].mxu0
  %5743 = vmatprep.mubr.f32.mxu0 0.0
  %5744 = vmatmul.mubr.f32.gmra.mrb[0].mxu0 %v5629
  %v5745 = vpop.f32.mrb[0].mxu0
  %v5746 = vadd.f32 0.0, %v5745
  %v5747 = vpop.f32.mrb[0].mxu0
  %5748 = vmatprep.mubr.f32.mxu0 0.0
  %5749 = vmatmul.mubr.f32.gmra.mrb[0].mxu0 %v5631
  %v5750 = vpop.f32.mrb[0].mxu0
  %v5751 = vadd.f32 0.0, %v5750
  %v5752 = vpop.f32.mrb[0].mxu0
  %5753 = vdwg.mxu0
  %v5754 = vmul.f32 %v5716, 0.35355338
  %v5755 = vmul.f32 %v5721, 0.35355338
  %v5756 = vmul.f32 %v5726, 0.35355338
  %v5757 = vmul.f32 %v5731, 0.35355338
  %v5758 = vmul.f32 %v5736, 0.35355338
  %v5759 = vmul.f32 %v5741, 0.35355338
  %v5760 = vmul.f32 %v5746, 0.35355338
  %v5761 = vmul.f32 %v5751, 0.35355338
  %v5762 = vadd.f32 %v5754, %v1685
  %v5763 = vadd.f32 %v5755, %v1686
  %v5764 = vadd.f32 %v5756, %v1687
  %v5765 = vadd.f32 %v5757, %v1688
  %v5766 = vadd.f32 %v5758, %v1689
  %v5767 = vadd.f32 %v5759, %v1690
  %v5768 = vadd.f32 %v5760, %v1691
  %v5769 = vadd.f32 %v5761, %v1692
  %v5770 = vsel %vm571, %v5762, -inf
  %5771 = vmax.xlane.f32.xlu0 %v5770
  %v5772 = vpop.xlane.xlu0 %5771
  %v5773 = vsel %vm571, %v5763, -inf
  %5774 = vmax.xlane.f32.xlu0 %v5773
  %v5775 = vpop.xlane.xlu0 %5774
  %v5776 = vsel %vm571, %v5764, -inf
  %5777 = vmax.xlane.f32.xlu0 %v5776
  %v5778 = vpop.xlane.xlu0 %5777
  %v5779 = vsel %vm571, %v5765, -inf
  %5780 = vmax.xlane.f32.xlu0 %v5779
  %v5781 = vpop.xlane.xlu0 %5780
  %v5782 = vsel %vm571, %v5766, -inf
  %5783 = vmax.xlane.f32.xlu0 %v5782
  %v5784 = vpop.xlane.xlu0 %5783
  %v5785 = vsel %vm571, %v5767, -inf
  %5786 = vmax.xlane.f32.xlu0 %v5785
  %v5787 = vpop.xlane.xlu0 %5786
  %v5788 = vsel %vm571, %v5768, -inf
  %5789 = vmax.xlane.f32.xlu0 %v5788
  %v5790 = vpop.xlane.xlu0 %5789
  %v5791 = vsel %vm571, %v5769, -inf
  %5792 = vmax.xlane.f32.xlu0 %v5791
  %v5793 = vpop.xlane.xlu0 %5792
  %v5794 = vsub.f32 %v5762, %v5772
  %v5795 = vsub.f32 %v5763, %v5775
  %v5796 = vsub.f32 %v5764, %v5778
  %v5797 = vsub.f32 %v5765, %v5781
  %v5798 = vsub.f32 %v5766, %v5784
  %v5799 = vsub.f32 %v5767, %v5787
  %v5800 = vsub.f32 %v5768, %v5790
  %v5801 = vsub.f32 %v5769, %v5793
  %v5802 = vmul.f32 %v5794, 1.442695
  %v5803 = vpow.pop %v5802
  %v5804 = vmul.f32 %v5795, 1.442695
  %v5805 = vpow.pop %v5804
  %v5806 = vmul.f32 %v5796, 1.442695
  %v5807 = vpow.pop %v5806
  %v5808 = vmul.f32 %v5797, 1.442695
  %v5809 = vpow.pop %v5808
  %v5810 = vmul.f32 %v5798, 1.442695
  %v5811 = vpow.pop %v5810
  %v5812 = vmul.f32 %v5799, 1.442695
  %v5813 = vpow.pop %v5812
  %v5814 = vmul.f32 %v5800, 1.442695
  %v5815 = vpow.pop %v5814
  %v5816 = vmul.f32 %v5801, 1.442695
  %v5817 = vpow.pop %v5816
  %v5818 = vsel %vm571, %v5803, 0.0
  %5819 = vadd.xlane.f32.xlu0 %v5818
  %v5820 = vpop.xlane.xlu0 %5819
  %v5821 = vsel %vm571, %v5805, 0.0
  %5822 = vadd.xlane.f32.xlu0 %v5821
  %v5823 = vpop.xlane.xlu0 %5822
  %v5824 = vsel %vm571, %v5807, 0.0
  %5825 = vadd.xlane.f32.xlu0 %v5824
  %v5826 = vpop.xlane.xlu0 %5825
  %v5827 = vsel %vm571, %v5809, 0.0
  %5828 = vadd.xlane.f32.xlu0 %v5827
  %v5829 = vpop.xlane.xlu0 %5828
  %v5830 = vsel %vm571, %v5811, 0.0
  %5831 = vadd.xlane.f32.xlu0 %v5830
  %v5832 = vpop.xlane.xlu0 %5831
  %v5833 = vsel %vm571, %v5813, 0.0
  %5834 = vadd.xlane.f32.xlu0 %v5833
  %v5835 = vpop.xlane.xlu0 %5834
  %v5836 = vsel %vm571, %v5815, 0.0
  %5837 = vadd.xlane.f32.xlu0 %v5836
  %v5838 = vpop.xlane.xlu0 %5837
  %v5839 = vsel %vm571, %v5817, 0.0
  %5840 = vadd.xlane.f32.xlu0 %v5839
  %v5841 = vpop.xlane.xlu0 %5840
  %v5842 = vrcp.pop %v5820
  %v5843 = vrcp.pop %v5823
  %v5844 = vrcp.pop %v5826
  %v5845 = vrcp.pop %v5829
  %v5846 = vrcp.pop %v5832
  %v5847 = vrcp.pop %v5835
  %v5848 = vrcp.pop %v5838
  %v5849 = vrcp.pop %v5841
  %v5850 = vmul.f32 %v5803, %v5842
  %v5851 = vmul.f32 %v5805, %v5843
  %v5852 = vmul.f32 %v5807, %v5844
  %v5853 = vmul.f32 %v5809, %v5845
  %v5854 = vmul.f32 %v5811, %v5846
  %v5855 = vmul.f32 %v5813, %v5847
  %v5856 = vmul.f32 %v5815, %v5848
  %v5857 = vmul.f32 %v5817, %v5849
  %5858 = vrot.lane.b32.xlu0 %v4285, 32
  %v5859 = vpop.permute.xlu0 %5858
  %5860 = vrot.lane.b32.xlu0 %v4290, 32
  %v5861 = vpop.permute.xlu0 %5860
  %5862 = vrot.lane.b32.xlu0 %v4295, 32
  %v5863 = vpop.permute.xlu0 %5862
  %5864 = vrot.lane.b32.xlu0 %v4300, 32
  %v5865 = vpop.permute.xlu0 %5864
  %5866 = vrot.lane.b32.xlu0 %v4305, 32
  %v5867 = vpop.permute.xlu0 %5866
  %5868 = vrot.lane.b32.xlu0 %v4310, 32
  %v5869 = vpop.permute.xlu0 %5868
  %5870 = vrot.lane.b32.xlu0 %v4315, 32
  %v5871 = vpop.permute.xlu0 %5870
  %5872 = vrot.lane.b32.xlu0 %v4320, 32
  %v5873 = vpop.permute.xlu0 %5872
  %v5883 = vsel %vm571, %v5850, 0
  %v5886 = vsel %vm571, %v5851, 0
  %v5889 = vsel %vm571, %v5852, 0
  %v5892 = vsel %vm571, %v5853, 0
  %v5895 = vsel %vm571, %v5854, 0
  %v5898 = vsel %vm571, %v5855, 0
  %v5901 = vsel %vm571, %v5856, 0
  %v5904 = vsel %vm571, %v5857, 0
  %5906 = vmatprep.subr.mxu0 0.0
  %5907 = vmatpush1.msra.mxu0 %v5859
  %5908 = vmatprep.subr.mxu0 0.0
  %5909 = vmatpush1.msra.mxu0 %v5861
  %5910 = vmatprep.subr.mxu0 0.0
  %5911 = vmatpush1.msra.mxu0 %v5863
  %5912 = vmatprep.subr.mxu0 0.0
  %5913 = vmatpush1.msra.mxu0 %v5865
  %5914 = vmatprep.subr.mxu0 0.0
  %5915 = vmatpush1.msra.mxu0 %v5867
  %5916 = vmatprep.subr.mxu0 0.0
  %5917 = vmatpush1.msra.mxu0 %v5869
  %5918 = vmatprep.subr.mxu0 0.0
  %5919 = vmatpush1.msra.mxu0 %v5871
  %5920 = vmatprep.subr.mxu0 0.0
  %5921 = vmatpush1.msra.mxu0 %v5873
  %5922 = vmatprep.subr.mxu0 0.0
  %5923 = vmatpush1.msra.mxu0 0.0
  %5924 = vmatprep.subr.mxu0 0.0
  %5925 = vmatpush1.msra.mxu0 0.0
  %5926 = vmatprep.subr.mxu0 0.0
  %5927 = vmatpush1.msra.mxu0 0.0
  %5928 = vmatprep.subr.mxu0 0.0
  %5929 = vmatpush1.msra.mxu0 0.0
  %5930 = vmatprep.subr.mxu0 0.0
  %5931 = vmatpush1.msra.mxu0 0.0
  %5932 = vmatprep.subr.mxu0 0.0
  %5933 = vmatpush1.msra.mxu0 0.0
  %5934 = vmatprep.subr.mxu0 0.0
  %5935 = vmatpush1.msra.mxu0 0.0
  %5936 = vmatprep.subr.mxu0 0.0
  %5937 = vmatpush1.msra.mxu0 0.0
  %5938 = vmatprep.subr.mxu0 0.0
  %5939 = vmatpush1.msra.mxu0 0.0
  %5940 = vmatprep.subr.mxu0 0.0
  %5941 = vmatpush1.msra.mxu0 0.0
  %5942 = vmatprep.subr.mxu0 0.0
  %5943 = vmatpush1.msra.mxu0 0.0
  %5944 = vmatprep.subr.mxu0 0.0
  %5945 = vmatpush1.msra.mxu0 0.0
  %5946 = vmatprep.subr.mxu0 0.0
  %5947 = vmatpush1.msra.mxu0 0.0
  %5948 = vmatprep.subr.mxu0 0.0
  %5949 = vmatpush1.msra.mxu0 0.0
  %5950 = vmatprep.subr.mxu0 0.0
  %5951 = vmatpush1.msra.mxu0 0.0
  %5952 = vmatprep.subr.mxu0 0.0
  %5953 = vmatpush1.msra.mxu0 0.0
  %5954 = vmatprep.subr.mxu0 0.0
  %5955 = vmatpush1.msra.mxu0 0.0
  %5956 = vmatprep.subr.mxu0 0.0
  %5957 = vmatpush1.msra.mxu0 0.0
  %5958 = vmatprep.subr.mxu0 0.0
  %5959 = vmatpush1.msra.mxu0 0.0
  %5960 = vmatprep.subr.mxu0 0.0
  %5961 = vmatpush1.msra.mxu0 0.0
  %5962 = vmatprep.subr.mxu0 0.0
  %5963 = vmatpush1.msra.mxu0 0.0
  %5964 = vmatprep.subr.mxu0 0.0
  %5965 = vmatpush1.msra.mxu0 0.0
  %5966 = vmatprep.subr.mxu0 0.0
  %5967 = vmatpush1.msra.mxu0 0.0
  %5968 = vmatprep.subr.mxu0 0.0
  %5969 = vmatpush1.msra.mxu0 0.0
  %5970 = vmatprep.mubr.f32.mxu0 0.0
  %5971 = vmatmul.mubr.f32.gmra.mrb[0].mxu0 %v5883
  %v5972 = vpop.f32.mrb[0].mxu0
  %v5973 = vadd.f32 0.0, %v5972
  %v5974 = vpop.f32.mrb[0].mxu0
  %5975 = vmatprep.mubr.f32.mxu0 0.0
  %5976 = vmatmul.mubr.f32.gmra.mrb[0].mxu0 %v5886
  %v5977 = vpop.f32.mrb[0].mxu0
  %v5978 = vadd.f32 0.0, %v5977
  %v5979 = vpop.f32.mrb[0].mxu0
  %5980 = vmatprep.mubr.f32.mxu0 0.0
  %5981 = vmatmul.mubr.f32.gmra.mrb[0].mxu0 %v5889
  %v5982 = vpop.f32.mrb[0].mxu0
  %v5983 = vadd.f32 0.0, %v5982
  %v5984 = vpop.f32.mrb[0].mxu0
  %5985 = vmatprep.mubr.f32.mxu0 0.0
  %5986 = vmatmul.mubr.f32.gmra.mrb[0].mxu0 %v5892
  %v5987 = vpop.f32.mrb[0].mxu0
  %v5988 = vadd.f32 0.0, %v5987
  %v5989 = vpop.f32.mrb[0].mxu0
  %5990 = vmatprep.mubr.f32.mxu0 0.0
  %5991 = vmatmul.mubr.f32.gmra.mrb[0].mxu0 %v5895
  %v5992 = vpop.f32.mrb[0].mxu0
  %v5993 = vadd.f32 0.0, %v5992
  %v5994 = vpop.f32.mrb[0].mxu0
  %5995 = vmatprep.mubr.f32.mxu0 0.0
  %5996 = vmatmul.mubr.f32.gmra.mrb[0].mxu0 %v5898
  %v5997 = vpop.f32.mrb[0].mxu0
  %v5998 = vadd.f32 0.0, %v5997
  %v5999 = vpop.f32.mrb[0].mxu0
  %6000 = vmatprep.mubr.f32.mxu0 0.0
  %6001 = vmatmul.mubr.f32.gmra.mrb[0].mxu0 %v5901
  %v6002 = vpop.f32.mrb[0].mxu0
  %v6003 = vadd.f32 0.0, %v6002
  %v6004 = vpop.f32.mrb[0].mxu0
  %6005 = vmatprep.mubr.f32.mxu0 0.0
  %6006 = vmatmul.mubr.f32.gmra.mrb[0].mxu0 %v5904
  %v6007 = vpop.f32.mrb[0].mxu0
  %v6008 = vadd.f32 0.0, %v6007
  %v6009 = vpop.f32.mrb[0].mxu0
  %6010 = vdwg.mxu0
  %v6011 = vadd.f32 %v5577, %v5973
  %v6012 = vadd.f32 %v5578, %v5978
  %v6013 = vadd.f32 %v5579, %v5983
  %v6014 = vadd.f32 %v5580, %v5988
  %v6015 = vadd.f32 %v5581, %v5993
  %v6016 = vadd.f32 %v5582, %v5998
  %v6017 = vadd.f32 %v5583, %v6003
  %v6018 = vadd.f32 %v5584, %v6008
  %v6019 = vmul.f32 %v3919, %v250
  %v6020 = vmul.f32 %v3920, %v255
  %v6021 = vmul.f32 %v3921, %v260
  %v6022 = vmul.f32 %v3922, %v265
  %v6023 = vmul.f32 %v3923, %v270
  %v6024 = vmul.f32 %v3924, %v275
  %v6025 = vmul.f32 %v3925, %v280
  %v6026 = vmul.f32 %v3926, %v285
  %s6027 = scalar_lea.vmem %s20, 1
  %v6028 = vld [vmem:[%s6027] sm:$0x1]
  %v6030 = vlaneseq
  %v6031 = vshrl.u32 %v6030, 7
  %v6032 = vsub.s32 0, %v6031
  %v6033 = vrot.slane %v6028, %v6032
  %v6035 = vadd.f32 %v6011, %v6033
  %v6036 = vadd.f32 %v6012, %v6033
  %v6037 = vadd.f32 %v6013, %v6033
  %v6038 = vadd.f32 %v6014, %v6033
  %v6039 = vadd.f32 %v6015, %v6033
  %v6040 = vadd.f32 %v6016, %v6033
  %v6041 = vadd.f32 %v6017, %v6033
  %v6042 = vadd.f32 %v6018, %v6033
  %v6043 = vmul.f32 %v6035, %v250
  %v6044 = vmul.f32 %v6036, %v255
  %v6045 = vmul.f32 %v6037, %v260
  %v6046 = vmul.f32 %v6038, %v265
  %v6047 = vmul.f32 %v6039, %v270
  %v6048 = vmul.f32 %v6040, %v275
  %v6049 = vmul.f32 %v6041, %v280
  %v6050 = vmul.f32 %v6042, %v285
  %v6051 = vadd.f32 %v6019, %v6043
  %v6052 = vadd.f32 %v6020, %v6044
  %v6053 = vadd.f32 %v6021, %v6045
  %v6054 = vadd.f32 %v6022, %v6046
  %v6055 = vadd.f32 %v6023, %v6047
  %v6056 = vadd.f32 %v6024, %v6048
  %v6057 = vadd.f32 %v6025, %v6049
  %v6058 = vadd.f32 %v6026, %v6050
  %s6059 = scalar_lea.vmem %s21, 1
  %v6060 = vld [vmem:[%s6059] sm:$0x1]
  %s6061 = scalar_lea.vmem %s22, 1
  %v6062 = vld [vmem:[%s6061] sm:$0x1]
  %v6063 = vsel %vm562, %v6051, 0.0
  %6064 = vadd.xlane.f32.xlu0 %v6063
  %v6065 = vpop.xlane.xlu0 %6064
  %v6066 = vsel %vm562, %v6052, 0.0
  %6067 = vadd.xlane.f32.xlu0 %v6066
  %v6068 = vpop.xlane.xlu0 %6067
  %v6069 = vsel %vm562, %v6053, 0.0
  %6070 = vadd.xlane.f32.xlu0 %v6069
  %v6071 = vpop.xlane.xlu0 %6070
  %v6072 = vsel %vm562, %v6054, 0.0
  %6073 = vadd.xlane.f32.xlu0 %v6072
  %v6074 = vpop.xlane.xlu0 %6073
  %v6075 = vsel %vm562, %v6055, 0.0
  %6076 = vadd.xlane.f32.xlu0 %v6075
  %v6077 = vpop.xlane.xlu0 %6076
  %v6078 = vsel %vm562, %v6056, 0.0
  %6079 = vadd.xlane.f32.xlu0 %v6078
  %v6080 = vpop.xlane.xlu0 %6079
  %v6081 = vsel %vm562, %v6057, 0.0
  %6082 = vadd.xlane.f32.xlu0 %v6081
  %v6083 = vpop.xlane.xlu0 %6082
  %v6084 = vsel %vm562, %v6058, 0.0
  %6085 = vadd.xlane.f32.xlu0 %v6084
  %v6086 = vpop.xlane.xlu0 %6085
  %v6087 = vmul.f32 %v6065, %v756
  %v6088 = vmul.f32 %v6068, %v756
  %v6089 = vmul.f32 %v6071, %v756
  %v6090 = vmul.f32 %v6074, %v756
  %v6091 = vmul.f32 %v6077, %v756
  %v6092 = vmul.f32 %v6080, %v756
  %v6093 = vmul.f32 %v6083, %v756
  %v6094 = vmul.f32 %v6086, %v756
  %v6095 = vsub.f32 %v6051, %v6087
  %v6096 = vsub.f32 %v6052, %v6088
  %v6097 = vsub.f32 %v6053, %v6089
  %v6098 = vsub.f32 %v6054, %v6090
  %v6099 = vsub.f32 %v6055, %v6091
  %v6100 = vsub.f32 %v6056, %v6092
  %v6101 = vsub.f32 %v6057, %v6093
  %v6102 = vsub.f32 %v6058, %v6094
  %v6103 = vmul.f32 %v6095, %v6095
  %v6104 = vmul.f32 %v6096, %v6096
  %v6105 = vmul.f32 %v6097, %v6097
  %v6106 = vmul.f32 %v6098, %v6098
  %v6107 = vmul.f32 %v6099, %v6099
  %v6108 = vmul.f32 %v6100, %v6100
  %v6109 = vmul.f32 %v6101, %v6101
  %v6110 = vmul.f32 %v6102, %v6102
  %v6111 = vsel %vm562, %v6103, 0.0
  %6112 = vadd.xlane.f32.xlu0 %v6111
  %v6113 = vpop.xlane.xlu0 %6112
  %v6114 = vsel %vm562, %v6104, 0.0
  %6115 = vadd.xlane.f32.xlu0 %v6114
  %v6116 = vpop.xlane.xlu0 %6115
  %v6117 = vsel %vm562, %v6105, 0.0
  %6118 = vadd.xlane.f32.xlu0 %v6117
  %v6119 = vpop.xlane.xlu0 %6118
  %v6120 = vsel %vm562, %v6106, 0.0
  %6121 = vadd.xlane.f32.xlu0 %v6120
  %v6122 = vpop.xlane.xlu0 %6121
  %v6123 = vsel %vm562, %v6107, 0.0
  %6124 = vadd.xlane.f32.xlu0 %v6123
  %v6125 = vpop.xlane.xlu0 %6124
  %v6126 = vsel %vm562, %v6108, 0.0
  %6127 = vadd.xlane.f32.xlu0 %v6126
  %v6128 = vpop.xlane.xlu0 %6127
  %v6129 = vsel %vm562, %v6109, 0.0
  %6130 = vadd.xlane.f32.xlu0 %v6129
  %v6131 = vpop.xlane.xlu0 %6130
  %v6132 = vsel %vm562, %v6110, 0.0
  %6133 = vadd.xlane.f32.xlu0 %v6132
  %v6134 = vpop.xlane.xlu0 %6133
  %v6135 = vmul.f32 %v6113, %v756
  %v6136 = vmul.f32 %v6116, %v756
  %v6137 = vmul.f32 %v6119, %v756
  %v6138 = vmul.f32 %v6122, %v756
  %v6139 = vmul.f32 %v6125, %v756
  %v6140 = vmul.f32 %v6128, %v756
  %v6141 = vmul.f32 %v6131, %v756
  %v6142 = vmul.f32 %v6134, %v756
  %v6143 = vadd.f32 %v6135, 1e-05
  %v6144 = vadd.f32 %v6136, 1e-05
  %v6145 = vadd.f32 %v6137, 1e-05
  %v6146 = vadd.f32 %v6138, 1e-05
  %v6147 = vadd.f32 %v6139, 1e-05
  %v6148 = vadd.f32 %v6140, 1e-05
  %v6149 = vadd.f32 %v6141, 1e-05
  %v6150 = vadd.f32 %v6142, 1e-05
  %v6151 = vrsqrt.pop %v6143
  %v6152 = vrsqrt.pop %v6144
  %v6153 = vrsqrt.pop %v6145
  %v6154 = vrsqrt.pop %v6146
  %v6155 = vrsqrt.pop %v6147
  %v6156 = vrsqrt.pop %v6148
  %v6157 = vrsqrt.pop %v6149
  %v6158 = vrsqrt.pop %v6150
  %v6159 = vmul.f32 %v6095, %v6151
  %v6160 = vmul.f32 %v6096, %v6152
  %v6161 = vmul.f32 %v6097, %v6153
  %v6162 = vmul.f32 %v6098, %v6154
  %v6163 = vmul.f32 %v6099, %v6155
  %v6164 = vmul.f32 %v6100, %v6156
  %v6165 = vmul.f32 %v6101, %v6157
  %v6166 = vmul.f32 %v6102, %v6158
  %v6168 = vlaneseq
  %v6169 = vshrl.u32 %v6168, 7
  %v6170 = vsub.s32 0, %v6169
  %v6171 = vrot.slane %v6060, %v6170
  %v6173 = vmul.f32 %v6159, %v6171
  %v6174 = vmul.f32 %v6160, %v6171
  %v6175 = vmul.f32 %v6161, %v6171
  %v6176 = vmul.f32 %v6162, %v6171
  %v6177 = vmul.f32 %v6163, %v6171
  %v6178 = vmul.f32 %v6164, %v6171
  %v6179 = vmul.f32 %v6165, %v6171
  %v6180 = vmul.f32 %v6166, %v6171
  %v6182 = vlaneseq
  %v6183 = vshrl.u32 %v6182, 7
  %v6184 = vsub.s32 0, %v6183
  %v6185 = vrot.slane %v6062, %v6184
  %v6187 = vadd.f32 %v6173, %v6185
  %v6188 = vadd.f32 %v6174, %v6185
  %v6189 = vadd.f32 %v6175, %v6185
  %v6190 = vadd.f32 %v6176, %v6185
  %v6191 = vadd.f32 %v6177, %v6185
  %v6192 = vadd.f32 %v6178, %v6185
  %v6193 = vadd.f32 %v6179, %v6185
  %v6194 = vadd.f32 %v6180, %v6185
  %s6195 = scalar_lea.vmem %s23, 32
  %v6196 = vld [vmem:[%s6195] sm:$0xff]
  %v6197 = vld [vmem:[%s6195 + $0x8] sm:$0xff]
  %v6198 = vld [vmem:[%s6195 + $0x10] sm:$0xff]
  %v6199 = vld [vmem:[%s6195 + $0x18] sm:$0xff]
  %s6200 = scalar_lea.vmem %s24, 1
  %v6201 = vld [vmem:[%s6200] sm:$0x1]
  %v6203 = vlaneseq
  %v6204 = vshrl.u32 %v6203, 7
  %v6205 = vsub.s32 0, %v6204
  %v6206 = vrot.slane %v6201, %v6205
  %v6209 = vsel %vm562, %v6187, 0
  %v6212 = vsel %vm562, %v6188, 0
  %v6215 = vsel %vm562, %v6189, 0
  %v6218 = vsel %vm562, %v6190, 0
  %v6221 = vsel %vm562, %v6191, 0
  %v6224 = vsel %vm562, %v6192, 0
  %v6227 = vsel %vm562, %v6193, 0
  %v6230 = vsel %vm562, %v6194, 0
  %6232 = vmatprep.subr.mxu0 0.0
  %6233 = vmatpush1.msra.mxu0 %v6196
  %6234 = vmatprep.subr.mxu0 0.0
  %6235 = vmatpush1.msra.mxu0 %v6197
  %6236 = vmatprep.subr.mxu0 0.0
  %6237 = vmatpush1.msra.mxu0 %v6198
  %6238 = vmatprep.subr.mxu0 0.0
  %6239 = vmatpush1.msra.mxu0 %v6199
  %6240 = vmatprep.subr.mxu0 0.0
  %6241 = vmatpush1.msra.mxu0 0.0
  %6242 = vmatprep.subr.mxu0 0.0
  %6243 = vmatpush1.msra.mxu0 0.0
  %6244 = vmatprep.subr.mxu0 0.0
  %6245 = vmatpush1.msra.mxu0 0.0
  %6246 = vmatprep.subr.mxu0 0.0
  %6247 = vmatpush1.msra.mxu0 0.0
  %6248 = vmatprep.subr.mxu0 0.0
  %6249 = vmatpush1.msra.mxu0 0.0
  %6250 = vmatprep.subr.mxu0 0.0
  %6251 = vmatpush1.msra.mxu0 0.0
  %6252 = vmatprep.subr.mxu0 0.0
  %6253 = vmatpush1.msra.mxu0 0.0
  %6254 = vmatprep.subr.mxu0 0.0
  %6255 = vmatpush1.msra.mxu0 0.0
  %6256 = vmatprep.subr.mxu0 0.0
  %6257 = vmatpush1.msra.mxu0 0.0
  %6258 = vmatprep.subr.mxu0 0.0
  %6259 = vmatpush1.msra.mxu0 0.0
  %6260 = vmatprep.subr.mxu0 0.0
  %6261 = vmatpush1.msra.mxu0 0.0
  %6262 = vmatprep.subr.mxu0 0.0
  %6263 = vmatpush1.msra.mxu0 0.0
  %6264 = vmatprep.subr.mxu0 0.0
  %6265 = vmatpush1.msra.mxu0 0.0
  %6266 = vmatprep.subr.mxu0 0.0
  %6267 = vmatpush1.msra.mxu0 0.0
  %6268 = vmatprep.subr.mxu0 0.0
  %6269 = vmatpush1.msra.mxu0 0.0
  %6270 = vmatprep.subr.mxu0 0.0
  %6271 = vmatpush1.msra.mxu0 0.0
  %6272 = vmatprep.subr.mxu0 0.0
  %6273 = vmatpush1.msra.mxu0 0.0
  %6274 = vmatprep.subr.mxu0 0.0
  %6275 = vmatpush1.msra.mxu0 0.0
  %6276 = vmatprep.subr.mxu0 0.0
  %6277 = vmatpush1.msra.mxu0 0.0
  %6278 = vmatprep.subr.mxu0 0.0
  %6279 = vmatpush1.msra.mxu0 0.0
  %6280 = vmatprep.subr.mxu0 0.0
  %6281 = vmatpush1.msra.mxu0 0.0
  %6282 = vmatprep.subr.mxu0 0.0
  %6283 = vmatpush1.msra.mxu0 0.0
  %6284 = vmatprep.subr.mxu0 0.0
  %6285 = vmatpush1.msra.mxu0 0.0
  %6286 = vmatprep.subr.mxu0 0.0
  %6287 = vmatpush1.msra.mxu0 0.0
  %6288 = vmatprep.subr.mxu0 0.0
  %6289 = vmatpush1.msra.mxu0 0.0
  %6290 = vmatprep.subr.mxu0 0.0
  %6291 = vmatpush1.msra.mxu0 0.0
  %6292 = vmatprep.subr.mxu0 0.0
  %6293 = vmatpush1.msra.mxu0 0.0
  %6294 = vmatprep.subr.mxu0 0.0
  %6295 = vmatpush1.msra.mxu0 0.0
  %6296 = vmatprep.mubr.f32.mxu0 0.0
  %6297 = vmatmul.mubr.f32.gmra.mrb[0].mxu0 %v6209
  %v6298 = vpop.f32.mrb[0].mxu0
  %v6299 = vadd.f32 %v6206, %v6298
  %v6300 = vpop.f32.mrb[0].mxu0
  %6301 = vmatprep.mubr.f32.mxu0 0.0
  %6302 = vmatmul.mubr.f32.gmra.mrb[0].mxu0 %v6212
  %v6303 = vpop.f32.mrb[0].mxu0
  %v6304 = vadd.f32 %v6206, %v6303
  %v6305 = vpop.f32.mrb[0].mxu0
  %6306 = vmatprep.mubr.f32.mxu0 0.0
  %6307 = vmatmul.mubr.f32.gmra.mrb[0].mxu0 %v6215
  %v6308 = vpop.f32.mrb[0].mxu0
  %v6309 = vadd.f32 %v6206, %v6308
  %v6310 = vpop.f32.mrb[0].mxu0
  %6311 = vmatprep.mubr.f32.mxu0 0.0
  %6312 = vmatmul.mubr.f32.gmra.mrb[0].mxu0 %v6218
  %v6313 = vpop.f32.mrb[0].mxu0
  %v6314 = vadd.f32 %v6206, %v6313
  %v6315 = vpop.f32.mrb[0].mxu0
  %6316 = vmatprep.mubr.f32.mxu0 0.0
  %6317 = vmatmul.mubr.f32.gmra.mrb[0].mxu0 %v6221
  %v6318 = vpop.f32.mrb[0].mxu0
  %v6319 = vadd.f32 %v6206, %v6318
  %v6320 = vpop.f32.mrb[0].mxu0
  %6321 = vmatprep.mubr.f32.mxu0 0.0
  %6322 = vmatmul.mubr.f32.gmra.mrb[0].mxu0 %v6224
  %v6323 = vpop.f32.mrb[0].mxu0
  %v6324 = vadd.f32 %v6206, %v6323
  %v6325 = vpop.f32.mrb[0].mxu0
  %6326 = vmatprep.mubr.f32.mxu0 0.0
  %6327 = vmatmul.mubr.f32.gmra.mrb[0].mxu0 %v6227
  %v6328 = vpop.f32.mrb[0].mxu0
  %v6329 = vadd.f32 %v6206, %v6328
  %v6330 = vpop.f32.mrb[0].mxu0
  %6331 = vmatprep.mubr.f32.mxu0 0.0
  %6332 = vmatmul.mubr.f32.gmra.mrb[0].mxu0 %v6230
  %v6333 = vpop.f32.mrb[0].mxu0
  %v6334 = vadd.f32 %v6206, %v6333
  %v6335 = vpop.f32.mrb[0].mxu0
  %6336 = vdwg.mxu0
  %v6337 = vmul.f32 %v6299, 0.5
  %v6338 = vmul.f32 %v6304, 0.5
  %v6339 = vmul.f32 %v6309, 0.5
  %v6340 = vmul.f32 %v6314, 0.5
  %v6341 = vmul.f32 %v6319, 0.5
  %v6342 = vmul.f32 %v6324, 0.5
  %v6343 = vmul.f32 %v6329, 0.5
  %v6344 = vmul.f32 %v6334, 0.5
  %v6345 = vmul.f32 %v6299, 0.044715
  %v6346 = vmul.f32 %v6304, 0.044715
  %v6347 = vmul.f32 %v6309, 0.044715
  %v6348 = vmul.f32 %v6314, 0.044715
  %v6349 = vmul.f32 %v6319, 0.044715
  %v6350 = vmul.f32 %v6324, 0.044715
  %v6351 = vmul.f32 %v6329, 0.044715
  %v6352 = vmul.f32 %v6334, 0.044715
  %v6353 = vmul.f32 %v6345, %v6299
  %v6354 = vmul.f32 %v6346, %v6304
  %v6355 = vmul.f32 %v6347, %v6309
  %v6356 = vmul.f32 %v6348, %v6314
  %v6357 = vmul.f32 %v6349, %v6319
  %v6358 = vmul.f32 %v6350, %v6324
  %v6359 = vmul.f32 %v6351, %v6329
  %v6360 = vmul.f32 %v6352, %v6334
  %v6361 = vmul.f32 %v6353, %v6299
  %v6362 = vmul.f32 %v6354, %v6304
  %v6363 = vmul.f32 %v6355, %v6309
  %v6364 = vmul.f32 %v6356, %v6314
  %v6365 = vmul.f32 %v6357, %v6319
  %v6366 = vmul.f32 %v6358, %v6324
  %v6367 = vmul.f32 %v6359, %v6329
  %v6368 = vmul.f32 %v6360, %v6334
  %v6369 = vadd.f32 %v6299, %v6361
  %v6370 = vadd.f32 %v6304, %v6362
  %v6371 = vadd.f32 %v6309, %v6363
  %v6372 = vadd.f32 %v6314, %v6364
  %v6373 = vadd.f32 %v6319, %v6365
  %v6374 = vadd.f32 %v6324, %v6366
  %v6375 = vadd.f32 %v6329, %v6367
  %v6376 = vadd.f32 %v6334, %v6368
  %v6377 = vmul.f32 %v6369, 0.7978846
  %v6378 = vmul.f32 %v6370, 0.7978846
  %v6379 = vmul.f32 %v6371, 0.7978846
  %v6380 = vmul.f32 %v6372, 0.7978846
  %v6381 = vmul.f32 %v6373, 0.7978846
  %v6382 = vmul.f32 %v6374, 0.7978846
  %v6383 = vmul.f32 %v6375, 0.7978846
  %v6384 = vmul.f32 %v6376, 0.7978846
  %v6385 = vtanh.pop %v6377
  %v6386 = vtanh.pop %v6378
  %v6387 = vtanh.pop %v6379
  %v6388 = vtanh.pop %v6380
  %v6389 = vtanh.pop %v6381
  %v6390 = vtanh.pop %v6382
  %v6391 = vtanh.pop %v6383
  %v6392 = vtanh.pop %v6384
  %v6393 = vadd.f32 %v6385, 1.0
  %v6394 = vadd.f32 %v6386, 1.0
  %v6395 = vadd.f32 %v6387, 1.0
  %v6396 = vadd.f32 %v6388, 1.0
  %v6397 = vadd.f32 %v6389, 1.0
  %v6398 = vadd.f32 %v6390, 1.0
  %v6399 = vadd.f32 %v6391, 1.0
  %v6400 = vadd.f32 %v6392, 1.0
  %v6401 = vmul.f32 %v6337, %v6393
  %v6402 = vmul.f32 %v6338, %v6394
  %v6403 = vmul.f32 %v6339, %v6395
  %v6404 = vmul.f32 %v6340, %v6396
  %v6405 = vmul.f32 %v6341, %v6397
  %v6406 = vmul.f32 %v6342, %v6398
  %v6407 = vmul.f32 %v6343, %v6399
  %v6408 = vmul.f32 %v6344, %v6400
  %v6409 = vmul.f32 %v6401, %v250
  %v6410 = vmul.f32 %v6402, %v255
  %v6411 = vmul.f32 %v6403, %v260
  %v6412 = vmul.f32 %v6404, %v265
  %v6413 = vmul.f32 %v6405, %v270
  %v6414 = vmul.f32 %v6406, %v275
  %v6415 = vmul.f32 %v6407, %v280
  %v6416 = vmul.f32 %v6408, %v285
  %s6417 = scalar_lea.vmem %s25, 128
  %v6418 = vld [vmem:[%s6417] sm:$0xff]
  %v6419 = vld [vmem:[%s6417 + $0x8] sm:$0xff]
  %v6420 = vld [vmem:[%s6417 + $0x10] sm:$0xff]
  %v6421 = vld [vmem:[%s6417 + $0x18] sm:$0xff]
  %v6422 = vld [vmem:[%s6417 + $0x20] sm:$0xff]
  %v6423 = vld [vmem:[%s6417 + $0x28] sm:$0xff]
  %v6424 = vld [vmem:[%s6417 + $0x30] sm:$0xff]
  %v6425 = vld [vmem:[%s6417 + $0x38] sm:$0xff]
  %v6426 = vld [vmem:[%s6417 + $0x40] sm:$0xff]
  %v6427 = vld [vmem:[%s6417 + $0x48] sm:$0xff]
  %v6428 = vld [vmem:[%s6417 + $0x50] sm:$0xff]
  %v6429 = vld [vmem:[%s6417 + $0x58] sm:$0xff]
  %v6430 = vld [vmem:[%s6417 + $0x60] sm:$0xff]
  %v6431 = vld [vmem:[%s6417 + $0x68] sm:$0xff]
  %v6432 = vld [vmem:[%s6417 + $0x70] sm:$0xff]
  %v6433 = vld [vmem:[%s6417 + $0x78] sm:$0xff]
  %s6434 = scalar_lea.vmem %s26, 1
  %v6435 = vld [vmem:[%s6434] sm:$0x1]
  %v6437 = vlaneseq
  %v6438 = vshrl.u32 %v6437, 7
  %v6439 = vsub.s32 0, %v6438
  %v6440 = vrot.slane %v6435, %v6439
  %6442 = vmatprep.subr.mxu0 0.0
  %6443 = vmatpush1.msra.mxu0 %v6418
  %6444 = vmatprep.subr.mxu0 0.0
  %6445 = vmatpush1.msra.mxu0 %v6419
  %6446 = vmatprep.subr.mxu0 0.0
  %6447 = vmatpush1.msra.mxu0 %v6420
  %6448 = vmatprep.subr.mxu0 0.0
  %6449 = vmatpush1.msra.mxu0 %v6421
  %6450 = vmatprep.subr.mxu0 0.0
  %6451 = vmatpush1.msra.mxu0 %v6422
  %6452 = vmatprep.subr.mxu0 0.0
  %6453 = vmatpush1.msra.mxu0 %v6423
  %6454 = vmatprep.subr.mxu0 0.0
  %6455 = vmatpush1.msra.mxu0 %v6424
  %6456 = vmatprep.subr.mxu0 0.0
  %6457 = vmatpush1.msra.mxu0 %v6425
  %6458 = vmatprep.subr.mxu0 0.0
  %6459 = vmatpush1.msra.mxu0 %v6426
  %6460 = vmatprep.subr.mxu0 0.0
  %6461 = vmatpush1.msra.mxu0 %v6427
  %6462 = vmatprep.subr.mxu0 0.0
  %6463 = vmatpush1.msra.mxu0 %v6428
  %6464 = vmatprep.subr.mxu0 0.0
  %6465 = vmatpush1.msra.mxu0 %v6429
  %6466 = vmatprep.subr.mxu0 0.0
  %6467 = vmatpush1.msra.mxu0 %v6430
  %6468 = vmatprep.subr.mxu0 0.0
  %6469 = vmatpush1.msra.mxu0 %v6431
  %6470 = vmatprep.subr.mxu0 0.0
  %6471 = vmatpush1.msra.mxu0 %v6432
  %6472 = vmatprep.subr.mxu0 0.0
  %6473 = vmatpush1.msra.mxu0 %v6433
  %6474 = vmatprep.subr.mxu0 0.0
  %6475 = vmatpush1.msra.mxu0 0.0
  %6476 = vmatprep.subr.mxu0 0.0
  %6477 = vmatpush1.msra.mxu0 0.0
  %6478 = vmatprep.subr.mxu0 0.0
  %6479 = vmatpush1.msra.mxu0 0.0
  %6480 = vmatprep.subr.mxu0 0.0
  %6481 = vmatpush1.msra.mxu0 0.0
  %6482 = vmatprep.subr.mxu0 0.0
  %6483 = vmatpush1.msra.mxu0 0.0
  %6484 = vmatprep.subr.mxu0 0.0
  %6485 = vmatpush1.msra.mxu0 0.0
  %6486 = vmatprep.subr.mxu0 0.0
  %6487 = vmatpush1.msra.mxu0 0.0
  %6488 = vmatprep.subr.mxu0 0.0
  %6489 = vmatpush1.msra.mxu0 0.0
  %6490 = vmatprep.subr.mxu0 0.0
  %6491 = vmatpush1.msra.mxu0 0.0
  %6492 = vmatprep.subr.mxu0 0.0
  %6493 = vmatpush1.msra.mxu0 0.0
  %6494 = vmatprep.subr.mxu0 0.0
  %6495 = vmatpush1.msra.mxu0 0.0
  %6496 = vmatprep.subr.mxu0 0.0
  %6497 = vmatpush1.msra.mxu0 0.0
  %6498 = vmatprep.subr.mxu0 0.0
  %6499 = vmatpush1.msra.mxu0 0.0
  %6500 = vmatprep.subr.mxu0 0.0
  %6501 = vmatpush1.msra.mxu0 0.0
  %6502 = vmatprep.subr.mxu0 0.0
  %6503 = vmatpush1.msra.mxu0 0.0
  %6504 = vmatprep.subr.mxu0 0.0
  %6505 = vmatpush1.msra.mxu0 0.0
  %6506 = vmatprep.mubr.f32.mxu0 0.0
  %6507 = vmatmul.mubr.f32.gmra.mrb[0].mxu0 %v6409
  %v6508 = vpop.f32.mrb[0].mxu0
  %v6509 = vadd.f32 %v6440, %v6508
  %v6510 = vpop.f32.mrb[0].mxu0
  %6511 = vmatprep.mubr.f32.mxu0 0.0
  %6512 = vmatmul.mubr.f32.gmra.mrb[0].mxu0 %v6410
  %v6513 = vpop.f32.mrb[0].mxu0
  %v6514 = vadd.f32 %v6440, %v6513
  %v6515 = vpop.f32.mrb[0].mxu0
  %6516 = vmatprep.mubr.f32.mxu0 0.0
  %6517 = vmatmul.mubr.f32.gmra.mrb[0].mxu0 %v6411
  %v6518 = vpop.f32.mrb[0].mxu0
  %v6519 = vadd.f32 %v6440, %v6518
  %v6520 = vpop.f32.mrb[0].mxu0
  %6521 = vmatprep.mubr.f32.mxu0 0.0
  %6522 = vmatmul.mubr.f32.gmra.mrb[0].mxu0 %v6412
  %v6523 = vpop.f32.mrb[0].mxu0
  %v6524 = vadd.f32 %v6440, %v6523
  %v6525 = vpop.f32.mrb[0].mxu0
  %6526 = vmatprep.mubr.f32.mxu0 0.0
  %6527 = vmatmul.mubr.f32.gmra.mrb[0].mxu0 %v6413
  %v6528 = vpop.f32.mrb[0].mxu0
  %v6529 = vadd.f32 %v6440, %v6528
  %v6530 = vpop.f32.mrb[0].mxu0
  %6531 = vmatprep.mubr.f32.mxu0 0.0
  %6532 = vmatmul.mubr.f32.gmra.mrb[0].mxu0 %v6414
  %v6533 = vpop.f32.mrb[0].mxu0
  %v6534 = vadd.f32 %v6440, %v6533
  %v6535 = vpop.f32.mrb[0].mxu0
  %6536 = vmatprep.mubr.f32.mxu0 0.0
  %6537 = vmatmul.mubr.f32.gmra.mrb[0].mxu0 %v6415
  %v6538 = vpop.f32.mrb[0].mxu0
  %v6539 = vadd.f32 %v6440, %v6538
  %v6540 = vpop.f32.mrb[0].mxu0
  %6541 = vmatprep.mubr.f32.mxu0 0.0
  %6542 = vmatmul.mubr.f32.gmra.mrb[0].mxu0 %v6416
  %v6543 = vpop.f32.mrb[0].mxu0
  %v6544 = vadd.f32 %v6440, %v6543
  %v6545 = vpop.f32.mrb[0].mxu0
  %6546 = vdwg.mxu0
  %v6547 = vmul.f32 %v6509, %v250
  %v6548 = vmul.f32 %v6514, %v255
  %v6549 = vmul.f32 %v6519, %v260
  %v6550 = vmul.f32 %v6524, %v265
  %v6551 = vmul.f32 %v6529, %v270
  %v6552 = vmul.f32 %v6534, %v275
  %v6553 = vmul.f32 %v6539, %v280
  %v6554 = vmul.f32 %v6544, %v285
  %v6555 = vadd.f32 %v6051, %v6547
  %v6556 = vadd.f32 %v6052, %v6548
  %v6557 = vadd.f32 %v6053, %v6549
  %v6558 = vadd.f32 %v6054, %v6550
  %v6559 = vadd.f32 %v6055, %v6551
  %v6560 = vadd.f32 %v6056, %v6552
  %v6561 = vadd.f32 %v6057, %v6553
  %v6562 = vadd.f32 %v6058, %v6554
  %6563 = vst.msk [vmem:[%s27] sm:$0xff] %vm562, %v6555
  %6564 = vst.msk [vmem:[%s27 + $0x8] sm:$0xff] %vm562, %v6556
  %6565 = vst.msk [vmem:[%s27 + $0x10] sm:$0xff] %vm562, %v6557
  %6566 = vst.msk [vmem:[%s27 + $0x18] sm:$0xff] %vm562, %v6558
  %6567 = vst.msk [vmem:[%s27 + $0x20] sm:$0xff] %vm562, %v6559
  %6568 = vst.msk [vmem:[%s27 + $0x28] sm:$0xff] %vm562, %v6560
  %6569 = vst.msk [vmem:[%s27 + $0x30] sm:$0xff] %vm562, %v6561
  %6570 = vst.msk [vmem:[%s27 + $0x38] sm:$0xff] %vm562, %v6562
  %s6571 = scalar_lea.vmem %s14, 2
  %v6572 = vld [vmem:[%s6571] sm:$0x1]
  %s6573 = scalar_lea.vmem %s15, 2
  %v6574 = vld [vmem:[%s6573] sm:$0x1]
  %v6575 = vsel %vm562, %v6555, 0.0
  %6576 = vadd.xlane.f32.xlu0 %v6575
  %v6577 = vpop.xlane.xlu0 %6576
  %v6578 = vsel %vm562, %v6556, 0.0
  %6579 = vadd.xlane.f32.xlu0 %v6578
  %v6580 = vpop.xlane.xlu0 %6579
  %v6581 = vsel %vm562, %v6557, 0.0
  %6582 = vadd.xlane.f32.xlu0 %v6581
  %v6583 = vpop.xlane.xlu0 %6582
  %v6584 = vsel %vm562, %v6558, 0.0
  %6585 = vadd.xlane.f32.xlu0 %v6584
  %v6586 = vpop.xlane.xlu0 %6585
  %v6587 = vsel %vm562, %v6559, 0.0
  %6588 = vadd.xlane.f32.xlu0 %v6587
  %v6589 = vpop.xlane.xlu0 %6588
  %v6590 = vsel %vm562, %v6560, 0.0
  %6591 = vadd.xlane.f32.xlu0 %v6590
  %v6592 = vpop.xlane.xlu0 %6591
  %v6593 = vsel %vm562, %v6561, 0.0
  %6594 = vadd.xlane.f32.xlu0 %v6593
  %v6595 = vpop.xlane.xlu0 %6594
  %v6596 = vsel %vm562, %v6562, 0.0
  %6597 = vadd.xlane.f32.xlu0 %v6596
  %v6598 = vpop.xlane.xlu0 %6597
  %v6599 = vmul.f32 %v6577, %v756
  %v6600 = vmul.f32 %v6580, %v756
  %v6601 = vmul.f32 %v6583, %v756
  %v6602 = vmul.f32 %v6586, %v756
  %v6603 = vmul.f32 %v6589, %v756
  %v6604 = vmul.f32 %v6592, %v756
  %v6605 = vmul.f32 %v6595, %v756
  %v6606 = vmul.f32 %v6598, %v756
  %v6607 = vsub.f32 %v6555, %v6599
  %v6608 = vsub.f32 %v6556, %v6600
  %v6609 = vsub.f32 %v6557, %v6601
  %v6610 = vsub.f32 %v6558, %v6602
  %v6611 = vsub.f32 %v6559, %v6603
  %v6612 = vsub.f32 %v6560, %v6604
  %v6613 = vsub.f32 %v6561, %v6605
  %v6614 = vsub.f32 %v6562, %v6606
  %v6615 = vmul.f32 %v6607, %v6607
  %v6616 = vmul.f32 %v6608, %v6608
  %v6617 = vmul.f32 %v6609, %v6609
  %v6618 = vmul.f32 %v6610, %v6610
  %v6619 = vmul.f32 %v6611, %v6611
  %v6620 = vmul.f32 %v6612, %v6612
  %v6621 = vmul.f32 %v6613, %v6613
  %v6622 = vmul.f32 %v6614, %v6614
  %v6623 = vsel %vm562, %v6615, 0.0
  %6624 = vadd.xlane.f32.xlu0 %v6623
  %v6625 = vpop.xlane.xlu0 %6624
  %v6626 = vsel %vm562, %v6616, 0.0
  %6627 = vadd.xlane.f32.xlu0 %v6626
  %v6628 = vpop.xlane.xlu0 %6627
  %v6629 = vsel %vm562, %v6617, 0.0
  %6630 = vadd.xlane.f32.xlu0 %v6629
  %v6631 = vpop.xlane.xlu0 %6630
  %v6632 = vsel %vm562, %v6618, 0.0
  %6633 = vadd.xlane.f32.xlu0 %v6632
  %v6634 = vpop.xlane.xlu0 %6633
  %v6635 = vsel %vm562, %v6619, 0.0
  %6636 = vadd.xlane.f32.xlu0 %v6635
  %v6637 = vpop.xlane.xlu0 %6636
  %v6638 = vsel %vm562, %v6620, 0.0
  %6639 = vadd.xlane.f32.xlu0 %v6638
  %v6640 = vpop.xlane.xlu0 %6639
  %v6641 = vsel %vm562, %v6621, 0.0
  %6642 = vadd.xlane.f32.xlu0 %v6641
  %v6643 = vpop.xlane.xlu0 %6642
  %v6644 = vsel %vm562, %v6622, 0.0
  %6645 = vadd.xlane.f32.xlu0 %v6644
  %v6646 = vpop.xlane.xlu0 %6645
  %v6647 = vmul.f32 %v6625, %v756
  %v6648 = vmul.f32 %v6628, %v756
  %v6649 = vmul.f32 %v6631, %v756
  %v6650 = vmul.f32 %v6634, %v756
  %v6651 = vmul.f32 %v6637, %v756
  %v6652 = vmul.f32 %v6640, %v756
  %v6653 = vmul.f32 %v6643, %v756
  %v6654 = vmul.f32 %v6646, %v756
  %v6655 = vadd.f32 %v6647, 1e-05
  %v6656 = vadd.f32 %v6648, 1e-05
  %v6657 = vadd.f32 %v6649, 1e-05
  %v6658 = vadd.f32 %v6650, 1e-05
  %v6659 = vadd.f32 %v6651, 1e-05
  %v6660 = vadd.f32 %v6652, 1e-05
  %v6661 = vadd.f32 %v6653, 1e-05
  %v6662 = vadd.f32 %v6654, 1e-05
  %v6663 = vrsqrt.pop %v6655
  %v6664 = vrsqrt.pop %v6656
  %v6665 = vrsqrt.pop %v6657
  %v6666 = vrsqrt.pop %v6658
  %v6667 = vrsqrt.pop %v6659
  %v6668 = vrsqrt.pop %v6660
  %v6669 = vrsqrt.pop %v6661
  %v6670 = vrsqrt.pop %v6662
  %v6671 = vmul.f32 %v6607, %v6663
  %v6672 = vmul.f32 %v6608, %v6664
  %v6673 = vmul.f32 %v6609, %v6665
  %v6674 = vmul.f32 %v6610, %v6666
  %v6675 = vmul.f32 %v6611, %v6667
  %v6676 = vmul.f32 %v6612, %v6668
  %v6677 = vmul.f32 %v6613, %v6669
  %v6678 = vmul.f32 %v6614, %v6670
  %v6680 = vlaneseq
  %v6681 = vshrl.u32 %v6680, 7
  %v6682 = vsub.s32 0, %v6681
  %v6683 = vrot.slane %v6572, %v6682
  %v6685 = vmul.f32 %v6671, %v6683
  %v6686 = vmul.f32 %v6672, %v6683
  %v6687 = vmul.f32 %v6673, %v6683
  %v6688 = vmul.f32 %v6674, %v6683
  %v6689 = vmul.f32 %v6675, %v6683
  %v6690 = vmul.f32 %v6676, %v6683
  %v6691 = vmul.f32 %v6677, %v6683
  %v6692 = vmul.f32 %v6678, %v6683
  %v6694 = vlaneseq
  %v6695 = vshrl.u32 %v6694, 7
  %v6696 = vsub.s32 0, %v6695
  %v6697 = vrot.slane %v6574, %v6696
  %v6699 = vadd.f32 %v6685, %v6697
  %v6700 = vadd.f32 %v6686, %v6697
  %v6701 = vadd.f32 %v6687, %v6697
  %v6702 = vadd.f32 %v6688, %v6697
  %v6703 = vadd.f32 %v6689, %v6697
  %v6704 = vadd.f32 %v6690, %v6697
  %v6705 = vadd.f32 %v6691, %v6697
  %v6706 = vadd.f32 %v6692, %v6697
  %s6707 = scalar_lea.vmem %s16, 64
  %v6708 = vld [vmem:[%s6707] sm:$0xff]
  %v6709 = vld [vmem:[%s6707 + $0x8] sm:$0xff]
  %v6710 = vld [vmem:[%s6707 + $0x10] sm:$0xff]
  %v6711 = vld [vmem:[%s6707 + $0x18] sm:$0xff]
  %s6712 = scalar_lea.vmem %s17, 2
  %v6713 = vld [vmem:[%s6712] sm:$0x1]
  %v6715 = vlaneseq
  %v6716 = vshrl.u32 %v6715, 7
  %v6717 = vsub.s32 0, %v6716
  %v6718 = vrot.slane %v6713, %v6717
  %v6721 = vsel %vm562, %v6699, 0
  %v6724 = vsel %vm562, %v6700, 0
  %v6727 = vsel %vm562, %v6701, 0
  %v6730 = vsel %vm562, %v6702, 0
  %v6733 = vsel %vm562, %v6703, 0
  %v6736 = vsel %vm562, %v6704, 0
  %v6739 = vsel %vm562, %v6705, 0
  %v6742 = vsel %vm562, %v6706, 0
  %6744 = vmatprep.subr.mxu0 0.0
  %6745 = vmatpush1.msra.mxu0 %v6708
  %6746 = vmatprep.subr.mxu0 0.0
  %6747 = vmatpush1.msra.mxu0 %v6709
  %6748 = vmatprep.subr.mxu0 0.0
  %6749 = vmatpush1.msra.mxu0 %v6710
  %6750 = vmatprep.subr.mxu0 0.0
  %6751 = vmatpush1.msra.mxu0 %v6711
  %6752 = vmatprep.subr.mxu0 0.0
  %6753 = vmatpush1.msra.mxu0 0.0
  %6754 = vmatprep.subr.mxu0 0.0
  %6755 = vmatpush1.msra.mxu0 0.0
  %6756 = vmatprep.subr.mxu0 0.0
  %6757 = vmatpush1.msra.mxu0 0.0
  %6758 = vmatprep.subr.mxu0 0.0
  %6759 = vmatpush1.msra.mxu0 0.0
  %6760 = vmatprep.subr.mxu0 0.0
  %6761 = vmatpush1.msra.mxu0 0.0
  %6762 = vmatprep.subr.mxu0 0.0
  %6763 = vmatpush1.msra.mxu0 0.0
  %6764 = vmatprep.subr.mxu0 0.0
  %6765 = vmatpush1.msra.mxu0 0.0
  %6766 = vmatprep.subr.mxu0 0.0
  %6767 = vmatpush1.msra.mxu0 0.0
  %6768 = vmatprep.subr.mxu0 0.0
  %6769 = vmatpush1.msra.mxu0 0.0
  %6770 = vmatprep.subr.mxu0 0.0
  %6771 = vmatpush1.msra.mxu0 0.0
  %6772 = vmatprep.subr.mxu0 0.0
  %6773 = vmatpush1.msra.mxu0 0.0
  %6774 = vmatprep.subr.mxu0 0.0
  %6775 = vmatpush1.msra.mxu0 0.0
  %6776 = vmatprep.subr.mxu0 0.0
  %6777 = vmatpush1.msra.mxu0 0.0
  %6778 = vmatprep.subr.mxu0 0.0
  %6779 = vmatpush1.msra.mxu0 0.0
  %6780 = vmatprep.subr.mxu0 0.0
  %6781 = vmatpush1.msra.mxu0 0.0
  %6782 = vmatprep.subr.mxu0 0.0
  %6783 = vmatpush1.msra.mxu0 0.0
  %6784 = vmatprep.subr.mxu0 0.0
  %6785 = vmatpush1.msra.mxu0 0.0
  %6786 = vmatprep.subr.mxu0 0.0
  %6787 = vmatpush1.msra.mxu0 0.0
  %6788 = vmatprep.subr.mxu0 0.0
  %6789 = vmatpush1.msra.mxu0 0.0
  %6790 = vmatprep.subr.mxu0 0.0
  %6791 = vmatpush1.msra.mxu0 0.0
  %6792 = vmatprep.subr.mxu0 0.0
  %6793 = vmatpush1.msra.mxu0 0.0
  %6794 = vmatprep.subr.mxu0 0.0
  %6795 = vmatpush1.msra.mxu0 0.0
  %6796 = vmatprep.subr.mxu0 0.0
  %6797 = vmatpush1.msra.mxu0 0.0
  %6798 = vmatprep.subr.mxu0 0.0
  %6799 = vmatpush1.msra.mxu0 0.0
  %6800 = vmatprep.subr.mxu0 0.0
  %6801 = vmatpush1.msra.mxu0 0.0
  %6802 = vmatprep.subr.mxu0 0.0
  %6803 = vmatpush1.msra.mxu0 0.0
  %6804 = vmatprep.subr.mxu0 0.0
  %6805 = vmatpush1.msra.mxu0 0.0
  %6806 = vmatprep.subr.mxu0 0.0
  %6807 = vmatpush1.msra.mxu0 0.0
  %6808 = vmatprep.mubr.f32.mxu0 0.0
  %6809 = vmatmul.mubr.f32.gmra.mrb[0].mxu0 %v6721
  %v6810 = vpop.f32.mrb[0].mxu0
  %v6811 = vadd.f32 %v6718, %v6810
  %v6812 = vpop.f32.mrb[0].mxu0
  %6813 = vmatprep.mubr.f32.mxu0 0.0
  %6814 = vmatmul.mubr.f32.gmra.mrb[0].mxu0 %v6724
  %v6815 = vpop.f32.mrb[0].mxu0
  %v6816 = vadd.f32 %v6718, %v6815
  %v6817 = vpop.f32.mrb[0].mxu0
  %6818 = vmatprep.mubr.f32.mxu0 0.0
  %6819 = vmatmul.mubr.f32.gmra.mrb[0].mxu0 %v6727
  %v6820 = vpop.f32.mrb[0].mxu0
  %v6821 = vadd.f32 %v6718, %v6820
  %v6822 = vpop.f32.mrb[0].mxu0
  %6823 = vmatprep.mubr.f32.mxu0 0.0
  %6824 = vmatmul.mubr.f32.gmra.mrb[0].mxu0 %v6730
  %v6825 = vpop.f32.mrb[0].mxu0
  %v6826 = vadd.f32 %v6718, %v6825
  %v6827 = vpop.f32.mrb[0].mxu0
  %6828 = vmatprep.mubr.f32.mxu0 0.0
  %6829 = vmatmul.mubr.f32.gmra.mrb[0].mxu0 %v6733
  %v6830 = vpop.f32.mrb[0].mxu0
  %v6831 = vadd.f32 %v6718, %v6830
  %v6832 = vpop.f32.mrb[0].mxu0
  %6833 = vmatprep.mubr.f32.mxu0 0.0
  %6834 = vmatmul.mubr.f32.gmra.mrb[0].mxu0 %v6736
  %v6835 = vpop.f32.mrb[0].mxu0
  %v6836 = vadd.f32 %v6718, %v6835
  %v6837 = vpop.f32.mrb[0].mxu0
  %6838 = vmatprep.mubr.f32.mxu0 0.0
  %6839 = vmatmul.mubr.f32.gmra.mrb[0].mxu0 %v6739
  %v6840 = vpop.f32.mrb[0].mxu0
  %v6841 = vadd.f32 %v6718, %v6840
  %v6842 = vpop.f32.mrb[0].mxu0
  %6843 = vmatprep.mubr.f32.mxu0 0.0
  %6844 = vmatmul.mubr.f32.gmra.mrb[0].mxu0 %v6742
  %v6845 = vpop.f32.mrb[0].mxu0
  %v6846 = vadd.f32 %v6718, %v6845
  %v6847 = vpop.f32.mrb[0].mxu0
  %6848 = vdwg.mxu0
  %s6849 = scalar_lea.vmem %s18, 64
  %v6850 = vld [vmem:[%s6849] sm:$0xff]
  %v6851 = vld [vmem:[%s6849 + $0x8] sm:$0xff]
  %v6852 = vld [vmem:[%s6849 + $0x10] sm:$0xff]
  %v6853 = vld [vmem:[%s6849 + $0x18] sm:$0xff]
  %s6854 = scalar_lea.vmem %s19, 2
  %v6855 = vld [vmem:[%s6854] sm:$0x1]
  %v6857 = vlaneseq
  %v6858 = vshrl.u32 %v6857, 7
  %v6859 = vsub.s32 0, %v6858
  %v6860 = vrot.slane %v6855, %v6859
  %6862 = vmatprep.subr.mxu0 0.0
  %6863 = vmatpush1.msra.mxu0 %v6850
  %6864 = vmatprep.subr.mxu0 0.0
  %6865 = vmatpush1.msra.mxu0 %v6851
  %6866 = vmatprep.subr.mxu0 0.0
  %6867 = vmatpush1.msra.mxu0 %v6852
  %6868 = vmatprep.subr.mxu0 0.0
  %6869 = vmatpush1.msra.mxu0 %v6853
  %6870 = vmatprep.subr.mxu0 0.0
  %6871 = vmatpush1.msra.mxu0 0.0
  %6872 = vmatprep.subr.mxu0 0.0
  %6873 = vmatpush1.msra.mxu0 0.0
  %6874 = vmatprep.subr.mxu0 0.0
  %6875 = vmatpush1.msra.mxu0 0.0
  %6876 = vmatprep.subr.mxu0 0.0
  %6877 = vmatpush1.msra.mxu0 0.0
  %6878 = vmatprep.subr.mxu0 0.0
  %6879 = vmatpush1.msra.mxu0 0.0
  %6880 = vmatprep.subr.mxu0 0.0
  %6881 = vmatpush1.msra.mxu0 0.0
  %6882 = vmatprep.subr.mxu0 0.0
  %6883 = vmatpush1.msra.mxu0 0.0
  %6884 = vmatprep.subr.mxu0 0.0
  %6885 = vmatpush1.msra.mxu0 0.0
  %6886 = vmatprep.subr.mxu0 0.0
  %6887 = vmatpush1.msra.mxu0 0.0
  %6888 = vmatprep.subr.mxu0 0.0
  %6889 = vmatpush1.msra.mxu0 0.0
  %6890 = vmatprep.subr.mxu0 0.0
  %6891 = vmatpush1.msra.mxu0 0.0
  %6892 = vmatprep.subr.mxu0 0.0
  %6893 = vmatpush1.msra.mxu0 0.0
  %6894 = vmatprep.subr.mxu0 0.0
  %6895 = vmatpush1.msra.mxu0 0.0
  %6896 = vmatprep.subr.mxu0 0.0
  %6897 = vmatpush1.msra.mxu0 0.0
  %6898 = vmatprep.subr.mxu0 0.0
  %6899 = vmatpush1.msra.mxu0 0.0
  %6900 = vmatprep.subr.mxu0 0.0
  %6901 = vmatpush1.msra.mxu0 0.0
  %6902 = vmatprep.subr.mxu0 0.0
  %6903 = vmatpush1.msra.mxu0 0.0
  %6904 = vmatprep.subr.mxu0 0.0
  %6905 = vmatpush1.msra.mxu0 0.0
  %6906 = vmatprep.subr.mxu0 0.0
  %6907 = vmatpush1.msra.mxu0 0.0
  %6908 = vmatprep.subr.mxu0 0.0
  %6909 = vmatpush1.msra.mxu0 0.0
  %6910 = vmatprep.subr.mxu0 0.0
  %6911 = vmatpush1.msra.mxu0 0.0
  %6912 = vmatprep.subr.mxu0 0.0
  %6913 = vmatpush1.msra.mxu0 0.0
  %6914 = vmatprep.subr.mxu0 0.0
  %6915 = vmatpush1.msra.mxu0 0.0
  %6916 = vmatprep.subr.mxu0 0.0
  %6917 = vmatpush1.msra.mxu0 0.0
  %6918 = vmatprep.subr.mxu0 0.0
  %6919 = vmatpush1.msra.mxu0 0.0
  %6920 = vmatprep.subr.mxu0 0.0
  %6921 = vmatpush1.msra.mxu0 0.0
  %6922 = vmatprep.subr.mxu0 0.0
  %6923 = vmatpush1.msra.mxu0 0.0
  %6924 = vmatprep.subr.mxu0 0.0
  %6925 = vmatpush1.msra.mxu0 0.0
  %6926 = vmatprep.mubr.f32.mxu0 0.0
  %6927 = vmatmul.mubr.f32.gmra.mrb[0].mxu0 %v6721
  %v6928 = vpop.f32.mrb[0].mxu0
  %v6929 = vadd.f32 %v6860, %v6928
  %v6930 = vpop.f32.mrb[0].mxu0
  %6931 = vmatprep.mubr.f32.mxu0 0.0
  %6932 = vmatmul.mubr.f32.gmra.mrb[0].mxu0 %v6724
  %v6933 = vpop.f32.mrb[0].mxu0
  %v6934 = vadd.f32 %v6860, %v6933
  %v6935 = vpop.f32.mrb[0].mxu0
  %6936 = vmatprep.mubr.f32.mxu0 0.0
  %6937 = vmatmul.mubr.f32.gmra.mrb[0].mxu0 %v6727
  %v6938 = vpop.f32.mrb[0].mxu0
  %v6939 = vadd.f32 %v6860, %v6938
  %v6940 = vpop.f32.mrb[0].mxu0
  %6941 = vmatprep.mubr.f32.mxu0 0.0
  %6942 = vmatmul.mubr.f32.gmra.mrb[0].mxu0 %v6730
  %v6943 = vpop.f32.mrb[0].mxu0
  %v6944 = vadd.f32 %v6860, %v6943
  %v6945 = vpop.f32.mrb[0].mxu0
  %6946 = vmatprep.mubr.f32.mxu0 0.0
  %6947 = vmatmul.mubr.f32.gmra.mrb[0].mxu0 %v6733
  %v6948 = vpop.f32.mrb[0].mxu0
  %v6949 = vadd.f32 %v6860, %v6948
  %v6950 = vpop.f32.mrb[0].mxu0
  %6951 = vmatprep.mubr.f32.mxu0 0.0
  %6952 = vmatmul.mubr.f32.gmra.mrb[0].mxu0 %v6736
  %v6953 = vpop.f32.mrb[0].mxu0
  %v6954 = vadd.f32 %v6860, %v6953
  %v6955 = vpop.f32.mrb[0].mxu0
  %6956 = vmatprep.mubr.f32.mxu0 0.0
  %6957 = vmatmul.mubr.f32.gmra.mrb[0].mxu0 %v6739
  %v6958 = vpop.f32.mrb[0].mxu0
  %v6959 = vadd.f32 %v6860, %v6958
  %v6960 = vpop.f32.mrb[0].mxu0
  %6961 = vmatprep.mubr.f32.mxu0 0.0
  %6962 = vmatmul.mubr.f32.gmra.mrb[0].mxu0 %v6742
  %v6963 = vpop.f32.mrb[0].mxu0
  %v6964 = vadd.f32 %v6860, %v6963
  %v6965 = vpop.f32.mrb[0].mxu0
  %6966 = vdwg.mxu0
  %v6967 = vld [vmem:[%s7] sm:$0xff]
  %v6968 = vld [vmem:[%s7 + $0x8] sm:$0xff]
  %v6969 = vld [vmem:[%s7 + $0x10] sm:$0xff]
  %v6970 = vld [vmem:[%s7 + $0x18] sm:$0xff]
  %v6972 = vsel %vm571, %v6967, 0
  %v6975 = vsel %vm571, %v6968, 0
  %v6978 = vsel %vm571, %v6969, 0
  %v6981 = vsel %vm571, %v6970, 0
  %6983 = vmatprep.subr.mxu0 0.0
  %6984 = vmatpush1.msra.mxu0 %v6811
  %6985 = vmatprep.subr.mxu0 0.0
  %6986 = vmatpush1.msra.mxu0 %v6816
  %6987 = vmatprep.subr.mxu0 0.0
  %6988 = vmatpush1.msra.mxu0 %v6821
  %6989 = vmatprep.subr.mxu0 0.0
  %6990 = vmatpush1.msra.mxu0 %v6826
  %6991 = vmatprep.subr.mxu0 0.0
  %6992 = vmatpush1.msra.mxu0 %v6831
  %6993 = vmatprep.subr.mxu0 0.0
  %6994 = vmatpush1.msra.mxu0 %v6836
  %6995 = vmatprep.subr.mxu0 0.0
  %6996 = vmatpush1.msra.mxu0 %v6841
  %6997 = vmatprep.subr.mxu0 0.0
  %6998 = vmatpush1.msra.mxu0 %v6846
  %6999 = vmatprep.subr.mxu0 0.0
  %7000 = vmatpush1.msra.mxu0 0.0
  %7001 = vmatprep.subr.mxu0 0.0
  %7002 = vmatpush1.msra.mxu0 0.0
  %7003 = vmatprep.subr.mxu0 0.0
  %7004 = vmatpush1.msra.mxu0 0.0
  %7005 = vmatprep.subr.mxu0 0.0
  %7006 = vmatpush1.msra.mxu0 0.0
  %7007 = vmatprep.subr.mxu0 0.0
  %7008 = vmatpush1.msra.mxu0 0.0
  %7009 = vmatprep.subr.mxu0 0.0
  %7010 = vmatpush1.msra.mxu0 0.0
  %7011 = vmatprep.subr.mxu0 0.0
  %7012 = vmatpush1.msra.mxu0 0.0
  %7013 = vmatprep.subr.mxu0 0.0
  %7014 = vmatpush1.msra.mxu0 0.0
  %7015 = vmatprep.subr.mxu0 0.0
  %7016 = vmatpush1.msra.mxu0 0.0
  %7017 = vmatprep.subr.mxu0 0.0
  %7018 = vmatpush1.msra.mxu0 0.0
  %7019 = vmatprep.subr.mxu0 0.0
  %7020 = vmatpush1.msra.mxu0 0.0
  %7021 = vmatprep.subr.mxu0 0.0
  %7022 = vmatpush1.msra.mxu0 0.0
  %7023 = vmatprep.subr.mxu0 0.0
  %7024 = vmatpush1.msra.mxu0 0.0
  %7025 = vmatprep.subr.mxu0 0.0
  %7026 = vmatpush1.msra.mxu0 0.0
  %7027 = vmatprep.subr.mxu0 0.0
  %7028 = vmatpush1.msra.mxu0 0.0
  %7029 = vmatprep.subr.mxu0 0.0
  %7030 = vmatpush1.msra.mxu0 0.0
  %7031 = vmatprep.subr.mxu0 0.0
  %7032 = vmatpush1.msra.mxu0 0.0
  %7033 = vmatprep.subr.mxu0 0.0
  %7034 = vmatpush1.msra.mxu0 0.0
  %7035 = vmatprep.subr.mxu0 0.0
  %7036 = vmatpush1.msra.mxu0 0.0
  %7037 = vmatprep.subr.mxu0 0.0
  %7038 = vmatpush1.msra.mxu0 0.0
  %7039 = vmatprep.subr.mxu0 0.0
  %7040 = vmatpush1.msra.mxu0 0.0
  %7041 = vmatprep.subr.mxu0 0.0
  %7042 = vmatpush1.msra.mxu0 0.0
  %7043 = vmatprep.subr.mxu0 0.0
  %7044 = vmatpush1.msra.mxu0 0.0
  %7045 = vmatprep.subr.mxu0 0.0
  %7046 = vmatpush1.msra.mxu0 0.0
  %7047 = vmatprep.mubr.f32.mxu0 0.0
  %7048 = vmatmul.mubr.f32.gmra.mrb[0].mxu0 %v6972
  %v7049 = vpop.f32.mrb[0].mxu0
  %v7050 = vadd.f32 0.0, %v7049
  %v7051 = vpop.f32.mrb[0].mxu0
  %7052 = vmatprep.mubr.f32.mxu0 0.0
  %7053 = vmatmul.mubr.f32.gmra.mrb[0].mxu0 %v6975
  %v7054 = vpop.f32.mrb[0].mxu0
  %v7055 = vadd.f32 0.0, %v7054
  %v7056 = vpop.f32.mrb[0].mxu0
  %7057 = vmatprep.mubr.f32.mxu0 0.0
  %7058 = vmatmul.mubr.f32.gmra.mrb[0].mxu0 %v6978
  %v7059 = vpop.f32.mrb[0].mxu0
  %v7060 = vadd.f32 0.0, %v7059
  %v7061 = vpop.f32.mrb[0].mxu0
  %7062 = vmatprep.mubr.f32.mxu0 0.0
  %7063 = vmatmul.mubr.f32.gmra.mrb[0].mxu0 %v6981
  %v7064 = vpop.f32.mrb[0].mxu0
  %v7065 = vadd.f32 0.0, %v7064
  %v7066 = vpop.f32.mrb[0].mxu0
  %7067 = vdwg.mxu0
  %7068 = vmatprep.subr.mxu0 0.0
  %7069 = vmatpush1.msra.mxu0 %v6555
  %7070 = vmatprep.subr.mxu0 0.0
  %7071 = vmatpush1.msra.mxu0 %v6556
  %7072 = vmatprep.subr.mxu0 0.0
  %7073 = vmatpush1.msra.mxu0 %v6557
  %7074 = vmatprep.subr.mxu0 0.0
  %7075 = vmatpush1.msra.mxu0 %v6558
  %7076 = vmatprep.subr.mxu0 0.0
  %7077 = vmatpush1.msra.mxu0 %v6559
  %7078 = vmatprep.subr.mxu0 0.0
  %7079 = vmatpush1.msra.mxu0 %v6560
  %7080 = vmatprep.subr.mxu0 0.0
  %7081 = vmatpush1.msra.mxu0 %v6561
  %7082 = vmatprep.subr.mxu0 0.0
  %7083 = vmatpush1.msra.mxu0 %v6562
  %7084 = vmatprep.subr.mxu0 0.0
  %7085 = vmatpush1.msra.mxu0 0.0
  %7086 = vmatprep.subr.mxu0 0.0
  %7087 = vmatpush1.msra.mxu0 0.0
  %7088 = vmatprep.subr.mxu0 0.0
  %7089 = vmatpush1.msra.mxu0 0.0
  %7090 = vmatprep.subr.mxu0 0.0
  %7091 = vmatpush1.msra.mxu0 0.0
  %7092 = vmatprep.subr.mxu0 0.0
  %7093 = vmatpush1.msra.mxu0 0.0
  %7094 = vmatprep.subr.mxu0 0.0
  %7095 = vmatpush1.msra.mxu0 0.0
  %7096 = vmatprep.subr.mxu0 0.0
  %7097 = vmatpush1.msra.mxu0 0.0
  %7098 = vmatprep.subr.mxu0 0.0
  %7099 = vmatpush1.msra.mxu0 0.0
  %7100 = vmatprep.subr.mxu0 0.0
  %7101 = vmatpush1.msra.mxu0 0.0
  %7102 = vmatprep.subr.mxu0 0.0
  %7103 = vmatpush1.msra.mxu0 0.0
  %7104 = vmatprep.subr.mxu0 0.0
  %7105 = vmatpush1.msra.mxu0 0.0
  %7106 = vmatprep.subr.mxu0 0.0
  %7107 = vmatpush1.msra.mxu0 0.0
  %7108 = vmatprep.subr.mxu0 0.0
  %7109 = vmatpush1.msra.mxu0 0.0
  %7110 = vmatprep.subr.mxu0 0.0
  %7111 = vmatpush1.msra.mxu0 0.0
  %7112 = vmatprep.subr.mxu0 0.0
  %7113 = vmatpush1.msra.mxu0 0.0
  %7114 = vmatprep.subr.mxu0 0.0
  %7115 = vmatpush1.msra.mxu0 0.0
  %7116 = vmatprep.subr.mxu0 0.0
  %7117 = vmatpush1.msra.mxu0 0.0
  %7118 = vmatprep.subr.mxu0 0.0
  %7119 = vmatpush1.msra.mxu0 0.0
  %7120 = vmatprep.subr.mxu0 0.0
  %7121 = vmatpush1.msra.mxu0 0.0
  %7122 = vmatprep.subr.mxu0 0.0
  %7123 = vmatpush1.msra.mxu0 0.0
  %7124 = vmatprep.subr.mxu0 0.0
  %7125 = vmatpush1.msra.mxu0 0.0
  %7126 = vmatprep.subr.mxu0 0.0
  %7127 = vmatpush1.msra.mxu0 0.0
  %7128 = vmatprep.subr.mxu0 0.0
  %7129 = vmatpush1.msra.mxu0 0.0
  %7130 = vmatprep.subr.mxu0 0.0
  %7131 = vmatpush1.msra.mxu0 0.0
  %7132 = vmatprep.mubr.f32.mxu0 0.0
  %7133 = vmatmul.mubr.f32.gmra.mrb[0].mxu0 %v6972
  %v7134 = vpop.f32.mrb[0].mxu0
  %v7135 = vadd.f32 0.0, %v7134
  %v7136 = vpop.f32.mrb[0].mxu0
  %7137 = vmatprep.mubr.f32.mxu0 0.0
  %7138 = vmatmul.mubr.f32.gmra.mrb[0].mxu0 %v6975
  %v7139 = vpop.f32.mrb[0].mxu0
  %v7140 = vadd.f32 0.0, %v7139
  %v7141 = vpop.f32.mrb[0].mxu0
  %7142 = vmatprep.mubr.f32.mxu0 0.0
  %7143 = vmatmul.mubr.f32.gmra.mrb[0].mxu0 %v6978
  %v7144 = vpop.f32.mrb[0].mxu0
  %v7145 = vadd.f32 0.0, %v7144
  %v7146 = vpop.f32.mrb[0].mxu0
  %7147 = vmatprep.mubr.f32.mxu0 0.0
  %7148 = vmatmul.mubr.f32.gmra.mrb[0].mxu0 %v6981
  %v7149 = vpop.f32.mrb[0].mxu0
  %v7150 = vadd.f32 0.0, %v7149
  %v7151 = vpop.f32.mrb[0].mxu0
  %7152 = vdwg.mxu0
  %v7153 = vld [vmem:[%s5] sm:$0xff]
  %v7154 = vld [vmem:[%s5 + $0x8] sm:$0xff]
  %v7155 = vld [vmem:[%s5 + $0x10] sm:$0xff]
  %v7156 = vld [vmem:[%s5 + $0x18] sm:$0xff]
  %7165 = vrot.lane.b32.xlu0 %v6811, 96
  %v7166 = vpop.permute.xlu0 %7165
  %7167 = vrot.lane.b32.xlu0 %v6816, 96
  %v7168 = vpop.permute.xlu0 %7167
  %7169 = vrot.lane.b32.xlu0 %v6821, 96
  %v7170 = vpop.permute.xlu0 %7169
  %7171 = vrot.lane.b32.xlu0 %v6826, 96
  %v7172 = vpop.permute.xlu0 %7171
  %7173 = vrot.lane.b32.xlu0 %v6831, 96
  %v7174 = vpop.permute.xlu0 %7173
  %7175 = vrot.lane.b32.xlu0 %v6836, 96
  %v7176 = vpop.permute.xlu0 %7175
  %7177 = vrot.lane.b32.xlu0 %v6841, 96
  %v7178 = vpop.permute.xlu0 %7177
  %7179 = vrot.lane.b32.xlu0 %v6846, 96
  %v7180 = vpop.permute.xlu0 %7179
  %v7182 = vsel %vm1717, %v7050, 0
  %v7185 = vsel %vm1717, %v7055, 0
  %v7188 = vsel %vm1717, %v7060, 0
  %v7191 = vsel %vm1717, %v7065, 0
  %v7193 = vsel %vm1717, %v7166, 0
  %v7195 = vsel %vm1717, %v7168, 0
  %v7197 = vsel %vm1717, %v7170, 0
  %v7199 = vsel %vm1717, %v7172, 0
  %v7201 = vsel %vm1717, %v7174, 0
  %v7203 = vsel %vm1717, %v7176, 0
  %v7205 = vsel %vm1717, %v7178, 0
  %v7207 = vsel %vm1717, %v7180, 0
  %7209 = vmatprep.subr.mxu0 0.0
  %7210 = vmatpush1.xpose.msra.mxu0 %v7193
  %7211 = vmatprep.subr.mxu0 0.0
  %7212 = vmatpush1.xpose.msra.mxu0 %v7195
  %7213 = vmatprep.subr.mxu0 0.0
  %7214 = vmatpush1.xpose.msra.mxu0 %v7197
  %7215 = vmatprep.subr.mxu0 0.0
  %7216 = vmatpush1.xpose.msra.mxu0 %v7199
  %7217 = vmatprep.subr.mxu0 0.0
  %7218 = vmatpush1.xpose.msra.mxu0 %v7201
  %7219 = vmatprep.subr.mxu0 0.0
  %7220 = vmatpush1.xpose.msra.mxu0 %v7203
  %7221 = vmatprep.subr.mxu0 0.0
  %7222 = vmatpush1.xpose.msra.mxu0 %v7205
  %7223 = vmatprep.subr.mxu0 0.0
  %7224 = vmatpush1.xpose.msra.mxu0 %v7207
  %7225 = vmatprep.subr.mxu0 0.0
  %7226 = vmatpush1.xpose.msra.mxu0 0.0
  %7227 = vmatprep.subr.mxu0 0.0
  %7228 = vmatpush1.xpose.msra.mxu0 0.0
  %7229 = vmatprep.subr.mxu0 0.0
  %7230 = vmatpush1.xpose.msra.mxu0 0.0
  %7231 = vmatprep.subr.mxu0 0.0
  %7232 = vmatpush1.xpose.msra.mxu0 0.0
  %7233 = vmatprep.subr.mxu0 0.0
  %7234 = vmatpush1.xpose.msra.mxu0 0.0
  %7235 = vmatprep.subr.mxu0 0.0
  %7236 = vmatpush1.xpose.msra.mxu0 0.0
  %7237 = vmatprep.subr.mxu0 0.0
  %7238 = vmatpush1.xpose.msra.mxu0 0.0
  %7239 = vmatprep.subr.mxu0 0.0
  %7240 = vmatpush1.xpose.msra.mxu0 0.0
  %7241 = vmatprep.subr.mxu0 0.0
  %7242 = vmatpush1.xpose.msra.mxu0 0.0
  %7243 = vmatprep.subr.mxu0 0.0
  %7244 = vmatpush1.xpose.msra.mxu0 0.0
  %7245 = vmatprep.subr.mxu0 0.0
  %7246 = vmatpush1.xpose.msra.mxu0 0.0
  %7247 = vmatprep.subr.mxu0 0.0
  %7248 = vmatpush1.xpose.msra.mxu0 0.0
  %7249 = vmatprep.subr.mxu0 0.0
  %7250 = vmatpush1.xpose.msra.mxu0 0.0
  %7251 = vmatprep.subr.mxu0 0.0
  %7252 = vmatpush1.xpose.msra.mxu0 0.0
  %7253 = vmatprep.subr.mxu0 0.0
  %7254 = vmatpush1.xpose.msra.mxu0 0.0
  %7255 = vmatprep.subr.mxu0 0.0
  %7256 = vmatpush1.xpose.msra.mxu0 0.0
  %7257 = vmatprep.subr.mxu0 0.0
  %7258 = vmatpush1.xpose.msra.mxu0 0.0
  %7259 = vmatprep.subr.mxu0 0.0
  %7260 = vmatpush1.xpose.msra.mxu0 0.0
  %7261 = vmatprep.subr.mxu0 0.0
  %7262 = vmatpush1.xpose.msra.mxu0 0.0
  %7263 = vmatprep.subr.mxu0 0.0
  %7264 = vmatpush1.xpose.msra.mxu0 0.0
  %7265 = vmatprep.subr.mxu0 0.0
  %7266 = vmatpush1.xpose.msra.mxu0 0.0
  %7267 = vmatprep.subr.mxu0 0.0
  %7268 = vmatpush1.xpose.msra.mxu0 0.0
  %7269 = vmatprep.subr.mxu0 0.0
  %7270 = vmatpush1.xpose.msra.mxu0 0.0
  %7271 = vmatprep.subr.mxu0 0.0
  %7272 = vmatpush1.xpose.msra.mxu0 0.0
  %7273 = vmatprep.mubr.f32.mxu0 0.0
  %7274 = vmatmul.mubr.f32.gmra.mrb[0].mxu0 %v7182
  %v7275 = vpop.f32.mrb[0].mxu0
  %v7276 = vadd.f32 0.0, %v7275
  %v7277 = vpop.f32.mrb[0].mxu0
  %7278 = vmatprep.mubr.f32.mxu0 0.0
  %7279 = vmatmul.mubr.f32.gmra.mrb[0].mxu0 %v7185
  %v7280 = vpop.f32.mrb[0].mxu0
  %v7281 = vadd.f32 0.0, %v7280
  %v7282 = vpop.f32.mrb[0].mxu0
  %7283 = vmatprep.mubr.f32.mxu0 0.0
  %7284 = vmatmul.mubr.f32.gmra.mrb[0].mxu0 %v7188
  %v7285 = vpop.f32.mrb[0].mxu0
  %v7286 = vadd.f32 0.0, %v7285
  %v7287 = vpop.f32.mrb[0].mxu0
  %7288 = vmatprep.mubr.f32.mxu0 0.0
  %7289 = vmatmul.mubr.f32.gmra.mrb[0].mxu0 %v7191
  %v7290 = vpop.f32.mrb[0].mxu0
  %v7291 = vadd.f32 0.0, %v7290
  %v7292 = vpop.f32.mrb[0].mxu0
  %7293 = vdwg.mxu0
  %v7294 = vmul.f32 %v7276, 0.35355338
  %v7295 = vmul.f32 %v7281, 0.35355338
  %v7296 = vmul.f32 %v7286, 0.35355338
  %v7297 = vmul.f32 %v7291, 0.35355338
  %v7298 = vadd.f32 %v7294, %v7153
  %v7299 = vadd.f32 %v7295, %v7154
  %v7300 = vadd.f32 %v7296, %v7155
  %v7301 = vadd.f32 %v7297, %v7156
  %v7302 = vsel %vm571, %v7298, -inf
  %7303 = vmax.xlane.f32.xlu0 %v7302
  %v7304 = vpop.xlane.xlu0 %7303
  %v7305 = vsel %vm571, %v7299, -inf
  %7306 = vmax.xlane.f32.xlu0 %v7305
  %v7307 = vpop.xlane.xlu0 %7306
  %v7308 = vsel %vm571, %v7300, -inf
  %7309 = vmax.xlane.f32.xlu0 %v7308
  %v7310 = vpop.xlane.xlu0 %7309
  %v7311 = vsel %vm571, %v7301, -inf
  %7312 = vmax.xlane.f32.xlu0 %v7311
  %v7313 = vpop.xlane.xlu0 %7312
  %v7314 = vsub.f32 %v7298, %v7304
  %v7315 = vsub.f32 %v7299, %v7307
  %v7316 = vsub.f32 %v7300, %v7310
  %v7317 = vsub.f32 %v7301, %v7313
  %v7318 = vmul.f32 %v7314, 1.442695
  %v7319 = vpow.pop %v7318
  %v7320 = vmul.f32 %v7315, 1.442695
  %v7321 = vpow.pop %v7320
  %v7322 = vmul.f32 %v7316, 1.442695
  %v7323 = vpow.pop %v7322
  %v7324 = vmul.f32 %v7317, 1.442695
  %v7325 = vpow.pop %v7324
  %v7326 = vsel %vm571, %v7319, 0.0
  %7327 = vadd.xlane.f32.xlu0 %v7326
  %v7328 = vpop.xlane.xlu0 %7327
  %v7329 = vsel %vm571, %v7321, 0.0
  %7330 = vadd.xlane.f32.xlu0 %v7329
  %v7331 = vpop.xlane.xlu0 %7330
  %v7332 = vsel %vm571, %v7323, 0.0
  %7333 = vadd.xlane.f32.xlu0 %v7332
  %v7334 = vpop.xlane.xlu0 %7333
  %v7335 = vsel %vm571, %v7325, 0.0
  %7336 = vadd.xlane.f32.xlu0 %v7335
  %v7337 = vpop.xlane.xlu0 %7336
  %v7338 = vrcp.pop %v7328
  %v7339 = vrcp.pop %v7331
  %v7340 = vrcp.pop %v7334
  %v7341 = vrcp.pop %v7337
  %v7342 = vmul.f32 %v7319, %v7338
  %v7343 = vmul.f32 %v7321, %v7339
  %v7344 = vmul.f32 %v7323, %v7340
  %v7345 = vmul.f32 %v7325, %v7341
  %7346 = vrot.lane.b32.xlu0 %v7050, 120
  %v7347 = vpop.permute.xlu0 %7346
  %7348 = vrot.lane.b32.xlu0 %v7055, 120
  %v7349 = vpop.permute.xlu0 %7348
  %7350 = vrot.lane.b32.xlu0 %v7060, 120
  %v7351 = vpop.permute.xlu0 %7350
  %7352 = vrot.lane.b32.xlu0 %v7065, 120
  %v7353 = vpop.permute.xlu0 %7352
  %7354 = vrot.lane.b32.xlu0 %v6811, 88
  %v7355 = vpop.permute.xlu0 %7354
  %7356 = vrot.lane.b32.xlu0 %v6816, 88
  %v7357 = vpop.permute.xlu0 %7356
  %7358 = vrot.lane.b32.xlu0 %v6821, 88
  %v7359 = vpop.permute.xlu0 %7358
  %7360 = vrot.lane.b32.xlu0 %v6826, 88
  %v7361 = vpop.permute.xlu0 %7360
  %7362 = vrot.lane.b32.xlu0 %v6831, 88
  %v7363 = vpop.permute.xlu0 %7362
  %7364 = vrot.lane.b32.xlu0 %v6836, 88
  %v7365 = vpop.permute.xlu0 %7364
  %7366 = vrot.lane.b32.xlu0 %v6841, 88
  %v7367 = vpop.permute.xlu0 %7366
  %7368 = vrot.lane.b32.xlu0 %v6846, 88
  %v7369 = vpop.permute.xlu0 %7368
  %v7370 = vsel %vm1717, %v7347, 0
  %v7372 = vsel %vm1717, %v7349, 0
  %v7374 = vsel %vm1717, %v7351, 0
  %v7376 = vsel %vm1717, %v7353, 0
  %v7378 = vsel %vm1717, %v7355, 0
  %v7380 = vsel %vm1717, %v7357, 0
  %v7382 = vsel %vm1717, %v7359, 0
  %v7384 = vsel %vm1717, %v7361, 0
  %v7386 = vsel %vm1717, %v7363, 0
  %v7388 = vsel %vm1717, %v7365, 0
  %v7390 = vsel %vm1717, %v7367, 0
  %v7392 = vsel %vm1717, %v7369, 0
  %7394 = vmatprep.subr.mxu0 0.0
  %7395 = vmatpush1.xpose.msra.mxu0 %v7378
  %7396 = vmatprep.subr.mxu0 0.0
  %7397 = vmatpush1.xpose.msra.mxu0 %v7380
  %7398 = vmatprep.subr.mxu0 0.0
  %7399 = vmatpush1.xpose.msra.mxu0 %v7382
  %7400 = vmatprep.subr.mxu0 0.0
  %7401 = vmatpush1.xpose.msra.mxu0 %v7384
  %7402 = vmatprep.subr.mxu0 0.0
  %7403 = vmatpush1.xpose.msra.mxu0 %v7386
  %7404 = vmatprep.subr.mxu0 0.0
  %7405 = vmatpush1.xpose.msra.mxu0 %v7388
  %7406 = vmatprep.subr.mxu0 0.0
  %7407 = vmatpush1.xpose.msra.mxu0 %v7390
  %7408 = vmatprep.subr.mxu0 0.0
  %7409 = vmatpush1.xpose.msra.mxu0 %v7392
  %7410 = vmatprep.subr.mxu0 0.0
  %7411 = vmatpush1.xpose.msra.mxu0 0.0
  %7412 = vmatprep.subr.mxu0 0.0
  %7413 = vmatpush1.xpose.msra.mxu0 0.0
  %7414 = vmatprep.subr.mxu0 0.0
  %7415 = vmatpush1.xpose.msra.mxu0 0.0
  %7416 = vmatprep.subr.mxu0 0.0
  %7417 = vmatpush1.xpose.msra.mxu0 0.0
  %7418 = vmatprep.subr.mxu0 0.0
  %7419 = vmatpush1.xpose.msra.mxu0 0.0
  %7420 = vmatprep.subr.mxu0 0.0
  %7421 = vmatpush1.xpose.msra.mxu0 0.0
  %7422 = vmatprep.subr.mxu0 0.0
  %7423 = vmatpush1.xpose.msra.mxu0 0.0
  %7424 = vmatprep.subr.mxu0 0.0
  %7425 = vmatpush1.xpose.msra.mxu0 0.0
  %7426 = vmatprep.subr.mxu0 0.0
  %7427 = vmatpush1.xpose.msra.mxu0 0.0
  %7428 = vmatprep.subr.mxu0 0.0
  %7429 = vmatpush1.xpose.msra.mxu0 0.0
  %7430 = vmatprep.subr.mxu0 0.0
  %7431 = vmatpush1.xpose.msra.mxu0 0.0
  %7432 = vmatprep.subr.mxu0 0.0
  %7433 = vmatpush1.xpose.msra.mxu0 0.0
  %7434 = vmatprep.subr.mxu0 0.0
  %7435 = vmatpush1.xpose.msra.mxu0 0.0
  %7436 = vmatprep.subr.mxu0 0.0
  %7437 = vmatpush1.xpose.msra.mxu0 0.0
  %7438 = vmatprep.subr.mxu0 0.0
  %7439 = vmatpush1.xpose.msra.mxu0 0.0
  %7440 = vmatprep.subr.mxu0 0.0
  %7441 = vmatpush1.xpose.msra.mxu0 0.0
  %7442 = vmatprep.subr.mxu0 0.0
  %7443 = vmatpush1.xpose.msra.mxu0 0.0
  %7444 = vmatprep.subr.mxu0 0.0
  %7445 = vmatpush1.xpose.msra.mxu0 0.0
  %7446 = vmatprep.subr.mxu0 0.0
  %7447 = vmatpush1.xpose.msra.mxu0 0.0
  %7448 = vmatprep.subr.mxu0 0.0
  %7449 = vmatpush1.xpose.msra.mxu0 0.0
  %7450 = vmatprep.subr.mxu0 0.0
  %7451 = vmatpush1.xpose.msra.mxu0 0.0
  %7452 = vmatprep.subr.mxu0 0.0
  %7453 = vmatpush1.xpose.msra.mxu0 0.0
  %7454 = vmatprep.subr.mxu0 0.0
  %7455 = vmatpush1.xpose.msra.mxu0 0.0
  %7456 = vmatprep.subr.mxu0 0.0
  %7457 = vmatpush1.xpose.msra.mxu0 0.0
  %7458 = vmatprep.mubr.f32.mxu0 0.0
  %7459 = vmatmul.mubr.f32.gmra.mrb[0].mxu0 %v7370
  %v7460 = vpop.f32.mrb[0].mxu0
  %v7461 = vadd.f32 0.0, %v7460
  %v7462 = vpop.f32.mrb[0].mxu0
  %7463 = vmatprep.mubr.f32.mxu0 0.0
  %7464 = vmatmul.mubr.f32.gmra.mrb[0].mxu0 %v7372
  %v7465 = vpop.f32.mrb[0].mxu0
  %v7466 = vadd.f32 0.0, %v7465
  %v7467 = vpop.f32.mrb[0].mxu0
  %7468 = vmatprep.mubr.f32.mxu0 0.0
  %7469 = vmatmul.mubr.f32.gmra.mrb[0].mxu0 %v7374
  %v7470 = vpop.f32.mrb[0].mxu0
  %v7471 = vadd.f32 0.0, %v7470
  %v7472 = vpop.f32.mrb[0].mxu0
  %7473 = vmatprep.mubr.f32.mxu0 0.0
  %7474 = vmatmul.mubr.f32.gmra.mrb[0].mxu0 %v7376
  %v7475 = vpop.f32.mrb[0].mxu0
  %v7476 = vadd.f32 0.0, %v7475
  %v7477 = vpop.f32.mrb[0].mxu0
  %7478 = vdwg.mxu0
  %v7479 = vmul.f32 %v7461, 0.35355338
  %v7480 = vmul.f32 %v7466, 0.35355338
  %v7481 = vmul.f32 %v7471, 0.35355338
  %v7482 = vmul.f32 %v7476, 0.35355338
  %v7483 = vadd.f32 %v7479, %v7153
  %v7484 = vadd.f32 %v7480, %v7154
  %v7485 = vadd.f32 %v7481, %v7155
  %v7486 = vadd.f32 %v7482, %v7156
  %v7487 = vsel %vm571, %v7483, -inf
  %7488 = vmax.xlane.f32.xlu0 %v7487
  %v7489 = vpop.xlane.xlu0 %7488
  %v7490 = vsel %vm571, %v7484, -inf
  %7491 = vmax.xlane.f32.xlu0 %v7490
  %v7492 = vpop.xlane.xlu0 %7491
  %v7493 = vsel %vm571, %v7485, -inf
  %7494 = vmax.xlane.f32.xlu0 %v7493
  %v7495 = vpop.xlane.xlu0 %7494
  %v7496 = vsel %vm571, %v7486, -inf
  %7497 = vmax.xlane.f32.xlu0 %v7496
  %v7498 = vpop.xlane.xlu0 %7497
  %v7499 = vsub.f32 %v7483, %v7489
  %v7500 = vsub.f32 %v7484, %v7492
  %v7501 = vsub.f32 %v7485, %v7495
  %v7502 = vsub.f32 %v7486, %v7498
  %v7503 = vmul.f32 %v7499, 1.442695
  %v7504 = vpow.pop %v7503
  %v7505 = vmul.f32 %v7500, 1.442695
  %v7506 = vpow.pop %v7505
  %v7507 = vmul.f32 %v7501, 1.442695
  %v7508 = vpow.pop %v7507
  %v7509 = vmul.f32 %v7502, 1.442695
  %v7510 = vpow.pop %v7509
  %v7511 = vsel %vm571, %v7504, 0.0
  %7512 = vadd.xlane.f32.xlu0 %v7511
  %v7513 = vpop.xlane.xlu0 %7512
  %v7514 = vsel %vm571, %v7506, 0.0
  %7515 = vadd.xlane.f32.xlu0 %v7514
  %v7516 = vpop.xlane.xlu0 %7515
  %v7517 = vsel %vm571, %v7508, 0.0
  %7518 = vadd.xlane.f32.xlu0 %v7517
  %v7519 = vpop.xlane.xlu0 %7518
  %v7520 = vsel %vm571, %v7510, 0.0
  %7521 = vadd.xlane.f32.xlu0 %v7520
  %v7522 = vpop.xlane.xlu0 %7521
  %v7523 = vrcp.pop %v7513
  %v7524 = vrcp.pop %v7516
  %v7525 = vrcp.pop %v7519
  %v7526 = vrcp.pop %v7522
  %v7527 = vmul.f32 %v7504, %v7523
  %v7528 = vmul.f32 %v7506, %v7524
  %v7529 = vmul.f32 %v7508, %v7525
  %v7530 = vmul.f32 %v7510, %v7526
  %7539 = vrot.lane.b32.xlu0 %v6929, 96
  %v7540 = vpop.permute.xlu0 %7539
  %7541 = vrot.lane.b32.xlu0 %v6934, 96
  %v7542 = vpop.permute.xlu0 %7541
  %7543 = vrot.lane.b32.xlu0 %v6939, 96
  %v7544 = vpop.permute.xlu0 %7543
  %7545 = vrot.lane.b32.xlu0 %v6944, 96
  %v7546 = vpop.permute.xlu0 %7545
  %7547 = vrot.lane.b32.xlu0 %v6949, 96
  %v7548 = vpop.permute.xlu0 %7547
  %7549 = vrot.lane.b32.xlu0 %v6954, 96
  %v7550 = vpop.permute.xlu0 %7549
  %7551 = vrot.lane.b32.xlu0 %v6959, 96
  %v7552 = vpop.permute.xlu0 %7551
  %7553 = vrot.lane.b32.xlu0 %v6964, 96
  %v7554 = vpop.permute.xlu0 %7553
  %v7564 = vsel %vm571, %v7527, 0
  %v7567 = vsel %vm571, %v7528, 0
  %v7570 = vsel %vm571, %v7529, 0
  %v7573 = vsel %vm571, %v7530, 0
  %7575 = vmatprep.subr.mxu0 0.0
  %7576 = vmatpush1.msra.mxu0 %v7540
  %7577 = vmatprep.subr.mxu0 0.0
  %7578 = vmatpush1.msra.mxu0 %v7542
  %7579 = vmatprep.subr.mxu0 0.0
  %7580 = vmatpush1.msra.mxu0 %v7544
  %7581 = vmatprep.subr.mxu0 0.0
  %7582 = vmatpush1.msra.mxu0 %v7546
  %7583 = vmatprep.subr.mxu0 0.0
  %7584 = vmatpush1.msra.mxu0 %v7548
  %7585 = vmatprep.subr.mxu0 0.0
  %7586 = vmatpush1.msra.mxu0 %v7550
  %7587 = vmatprep.subr.mxu0 0.0
  %7588 = vmatpush1.msra.mxu0 %v7552
  %7589 = vmatprep.subr.mxu0 0.0
  %7590 = vmatpush1.msra.mxu0 %v7554
  %7591 = vmatprep.subr.mxu0 0.0
  %7592 = vmatpush1.msra.mxu0 0.0
  %7593 = vmatprep.subr.mxu0 0.0
  %7594 = vmatpush1.msra.mxu0 0.0
  %7595 = vmatprep.subr.mxu0 0.0
  %7596 = vmatpush1.msra.mxu0 0.0
  %7597 = vmatprep.subr.mxu0 0.0
  %7598 = vmatpush1.msra.mxu0 0.0
  %7599 = vmatprep.subr.mxu0 0.0
  %7600 = vmatpush1.msra.mxu0 0.0
  %7601 = vmatprep.subr.mxu0 0.0
  %7602 = vmatpush1.msra.mxu0 0.0
  %7603 = vmatprep.subr.mxu0 0.0
  %7604 = vmatpush1.msra.mxu0 0.0
  %7605 = vmatprep.subr.mxu0 0.0
  %7606 = vmatpush1.msra.mxu0 0.0
  %7607 = vmatprep.subr.mxu0 0.0
  %7608 = vmatpush1.msra.mxu0 0.0
  %7609 = vmatprep.subr.mxu0 0.0
  %7610 = vmatpush1.msra.mxu0 0.0
  %7611 = vmatprep.subr.mxu0 0.0
  %7612 = vmatpush1.msra.mxu0 0.0
  %7613 = vmatprep.subr.mxu0 0.0
  %7614 = vmatpush1.msra.mxu0 0.0
  %7615 = vmatprep.subr.mxu0 0.0
  %7616 = vmatpush1.msra.mxu0 0.0
  %7617 = vmatprep.subr.mxu0 0.0
  %7618 = vmatpush1.msra.mxu0 0.0
  %7619 = vmatprep.subr.mxu0 0.0
  %7620 = vmatpush1.msra.mxu0 0.0
  %7621 = vmatprep.subr.mxu0 0.0
  %7622 = vmatpush1.msra.mxu0 0.0
  %7623 = vmatprep.subr.mxu0 0.0
  %7624 = vmatpush1.msra.mxu0 0.0
  %7625 = vmatprep.subr.mxu0 0.0
  %7626 = vmatpush1.msra.mxu0 0.0
  %7627 = vmatprep.subr.mxu0 0.0
  %7628 = vmatpush1.msra.mxu0 0.0
  %7629 = vmatprep.subr.mxu0 0.0
  %7630 = vmatpush1.msra.mxu0 0.0
  %7631 = vmatprep.subr.mxu0 0.0
  %7632 = vmatpush1.msra.mxu0 0.0
  %7633 = vmatprep.subr.mxu0 0.0
  %7634 = vmatpush1.msra.mxu0 0.0
  %7635 = vmatprep.subr.mxu0 0.0
  %7636 = vmatpush1.msra.mxu0 0.0
  %7637 = vmatprep.subr.mxu0 0.0
  %7638 = vmatpush1.msra.mxu0 0.0
  %7639 = vmatprep.mubr.f32.mxu0 0.0
  %7640 = vmatmul.mubr.f32.gmra.mrb[0].mxu0 %v7564
  %v7641 = vpop.f32.mrb[0].mxu0
  %v7642 = vadd.f32 0.0, %v7641
  %v7643 = vpop.f32.mrb[0].mxu0
  %7644 = vmatprep.mubr.f32.mxu0 0.0
  %7645 = vmatmul.mubr.f32.gmra.mrb[0].mxu0 %v7567
  %v7646 = vpop.f32.mrb[0].mxu0
  %v7647 = vadd.f32 0.0, %v7646
  %v7648 = vpop.f32.mrb[0].mxu0
  %7649 = vmatprep.mubr.f32.mxu0 0.0
  %7650 = vmatmul.mubr.f32.gmra.mrb[0].mxu0 %v7570
  %v7651 = vpop.f32.mrb[0].mxu0
  %v7652 = vadd.f32 0.0, %v7651
  %v7653 = vpop.f32.mrb[0].mxu0
  %7654 = vmatprep.mubr.f32.mxu0 0.0
  %7655 = vmatmul.mubr.f32.gmra.mrb[0].mxu0 %v7573
  %v7656 = vpop.f32.mrb[0].mxu0
  %v7657 = vadd.f32 0.0, %v7656
  %v7658 = vpop.f32.mrb[0].mxu0
  %7659 = vdwg.mxu0
  %v7661 = vsel %vm571, %v7342, 0
  %v7664 = vsel %vm571, %v7343, 0
  %v7667 = vsel %vm571, %v7344, 0
  %v7670 = vsel %vm571, %v7345, 0
  %7672 = vmatprep.subr.mxu0 0.0
  %7673 = vmatpush1.msra.mxu0 %v6929
  %7674 = vmatprep.subr.mxu0 0.0
  %7675 = vmatpush1.msra.mxu0 %v6934
  %7676 = vmatprep.subr.mxu0 0.0
  %7677 = vmatpush1.msra.mxu0 %v6939
  %7678 = vmatprep.subr.mxu0 0.0
  %7679 = vmatpush1.msra.mxu0 %v6944
  %7680 = vmatprep.subr.mxu0 0.0
  %7681 = vmatpush1.msra.mxu0 %v6949
  %7682 = vmatprep.subr.mxu0 0.0
  %7683 = vmatpush1.msra.mxu0 %v6954
  %7684 = vmatprep.subr.mxu0 0.0
  %7685 = vmatpush1.msra.mxu0 %v6959
  %7686 = vmatprep.subr.mxu0 0.0
  %7687 = vmatpush1.msra.mxu0 %v6964
  %7688 = vmatprep.subr.mxu0 0.0
  %7689 = vmatpush1.msra.mxu0 0.0
  %7690 = vmatprep.subr.mxu0 0.0
  %7691 = vmatpush1.msra.mxu0 0.0
  %7692 = vmatprep.subr.mxu0 0.0
  %7693 = vmatpush1.msra.mxu0 0.0
  %7694 = vmatprep.subr.mxu0 0.0
  %7695 = vmatpush1.msra.mxu0 0.0
  %7696 = vmatprep.subr.mxu0 0.0
  %7697 = vmatpush1.msra.mxu0 0.0
  %7698 = vmatprep.subr.mxu0 0.0
  %7699 = vmatpush1.msra.mxu0 0.0
  %7700 = vmatprep.subr.mxu0 0.0
  %7701 = vmatpush1.msra.mxu0 0.0
  %7702 = vmatprep.subr.mxu0 0.0
  %7703 = vmatpush1.msra.mxu0 0.0
  %7704 = vmatprep.subr.mxu0 0.0
  %7705 = vmatpush1.msra.mxu0 0.0
  %7706 = vmatprep.subr.mxu0 0.0
  %7707 = vmatpush1.msra.mxu0 0.0
  %7708 = vmatprep.subr.mxu0 0.0
  %7709 = vmatpush1.msra.mxu0 0.0
  %7710 = vmatprep.subr.mxu0 0.0
  %7711 = vmatpush1.msra.mxu0 0.0
  %7712 = vmatprep.subr.mxu0 0.0
  %7713 = vmatpush1.msra.mxu0 0.0
  %7714 = vmatprep.subr.mxu0 0.0
  %7715 = vmatpush1.msra.mxu0 0.0
  %7716 = vmatprep.subr.mxu0 0.0
  %7717 = vmatpush1.msra.mxu0 0.0
  %7718 = vmatprep.subr.mxu0 0.0
  %7719 = vmatpush1.msra.mxu0 0.0
  %7720 = vmatprep.subr.mxu0 0.0
  %7721 = vmatpush1.msra.mxu0 0.0
  %7722 = vmatprep.subr.mxu0 0.0
  %7723 = vmatpush1.msra.mxu0 0.0
  %7724 = vmatprep.subr.mxu0 0.0
  %7725 = vmatpush1.msra.mxu0 0.0
  %7726 = vmatprep.subr.mxu0 0.0
  %7727 = vmatpush1.msra.mxu0 0.0
  %7728 = vmatprep.subr.mxu0 0.0
  %7729 = vmatpush1.msra.mxu0 0.0
  %7730 = vmatprep.subr.mxu0 0.0
  %7731 = vmatpush1.msra.mxu0 0.0
  %7732 = vmatprep.subr.mxu0 0.0
  %7733 = vmatpush1.msra.mxu0 0.0
  %7734 = vmatprep.subr.mxu0 0.0
  %7735 = vmatpush1.msra.mxu0 0.0
  %7736 = vmatprep.mubr.f32.mxu0 0.0
  %7737 = vmatmul.mubr.f32.gmra.mrb[0].mxu0 %v7661
  %v7738 = vpop.f32.mrb[0].mxu0
  %v7739 = vadd.f32 %v7642, %v7738
  %v7740 = vpop.f32.mrb[0].mxu0
  %7741 = vmatprep.mubr.f32.mxu0 0.0
  %7742 = vmatmul.mubr.f32.gmra.mrb[0].mxu0 %v7664
  %v7743 = vpop.f32.mrb[0].mxu0
  %v7744 = vadd.f32 %v7647, %v7743
  %v7745 = vpop.f32.mrb[0].mxu0
  %7746 = vmatprep.mubr.f32.mxu0 0.0
  %7747 = vmatmul.mubr.f32.gmra.mrb[0].mxu0 %v7667
  %v7748 = vpop.f32.mrb[0].mxu0
  %v7749 = vadd.f32 %v7652, %v7748
  %v7750 = vpop.f32.mrb[0].mxu0
  %7751 = vmatprep.mubr.f32.mxu0 0.0
  %7752 = vmatmul.mubr.f32.gmra.mrb[0].mxu0 %v7670
  %v7753 = vpop.f32.mrb[0].mxu0
  %v7754 = vadd.f32 %v7657, %v7753
  %v7755 = vpop.f32.mrb[0].mxu0
  %7756 = vdwg.mxu0
  %7757 = vrot.lane.b32.xlu0 %v7050, 112
  %v7758 = vpop.permute.xlu0 %7757
  %7759 = vrot.lane.b32.xlu0 %v7055, 112
  %v7760 = vpop.permute.xlu0 %7759
  %7761 = vrot.lane.b32.xlu0 %v7060, 112
  %v7762 = vpop.permute.xlu0 %7761
  %7763 = vrot.lane.b32.xlu0 %v7065, 112
  %v7764 = vpop.permute.xlu0 %7763
  %7765 = vrot.lane.b32.xlu0 %v6811, 80
  %v7766 = vpop.permute.xlu0 %7765
  %7767 = vrot.lane.b32.xlu0 %v6816, 80
  %v7768 = vpop.permute.xlu0 %7767
  %7769 = vrot.lane.b32.xlu0 %v6821, 80
  %v7770 = vpop.permute.xlu0 %7769
  %7771 = vrot.lane.b32.xlu0 %v6826, 80
  %v7772 = vpop.permute.xlu0 %7771
  %7773 = vrot.lane.b32.xlu0 %v6831, 80
  %v7774 = vpop.permute.xlu0 %7773
  %7775 = vrot.lane.b32.xlu0 %v6836, 80
  %v7776 = vpop.permute.xlu0 %7775
  %7777 = vrot.lane.b32.xlu0 %v6841, 80
  %v7778 = vpop.permute.xlu0 %7777
  %7779 = vrot.lane.b32.xlu0 %v6846, 80
  %v7780 = vpop.permute.xlu0 %7779
  %v7781 = vsel %vm1717, %v7758, 0
  %v7783 = vsel %vm1717, %v7760, 0
  %v7785 = vsel %vm1717, %v7762, 0
  %v7787 = vsel %vm1717, %v7764, 0
  %v7789 = vsel %vm1717, %v7766, 0
  %v7791 = vsel %vm1717, %v7768, 0
  %v7793 = vsel %vm1717, %v7770, 0
  %v7795 = vsel %vm1717, %v7772, 0
  %v7797 = vsel %vm1717, %v7774, 0
  %v7799 = vsel %vm1717, %v7776, 0
  %v7801 = vsel %vm1717, %v7778, 0
  %v7803 = vsel %vm1717, %v7780, 0
  %7805 = vmatprep.subr.mxu0 0.0
  %7806 = vmatpush1.xpose.msra.mxu0 %v7789
  %7807 = vmatprep.subr.mxu0 0.0
  %7808 = vmatpush1.xpose.msra.mxu0 %v7791
  %7809 = vmatprep.subr.mxu0 0.0
  %7810 = vmatpush1.xpose.msra.mxu0 %v7793
  %7811 = vmatprep.subr.mxu0 0.0
  %7812 = vmatpush1.xpose.msra.mxu0 %v7795
  %7813 = vmatprep.subr.mxu0 0.0
  %7814 = vmatpush1.xpose.msra.mxu0 %v7797
  %7815 = vmatprep.subr.mxu0 0.0
  %7816 = vmatpush1.xpose.msra.mxu0 %v7799
  %7817 = vmatprep.subr.mxu0 0.0
  %7818 = vmatpush1.xpose.msra.mxu0 %v7801
  %7819 = vmatprep.subr.mxu0 0.0
  %7820 = vmatpush1.xpose.msra.mxu0 %v7803
  %7821 = vmatprep.subr.mxu0 0.0
  %7822 = vmatpush1.xpose.msra.mxu0 0.0
  %7823 = vmatprep.subr.mxu0 0.0
  %7824 = vmatpush1.xpose.msra.mxu0 0.0
  %7825 = vmatprep.subr.mxu0 0.0
  %7826 = vmatpush1.xpose.msra.mxu0 0.0
  %7827 = vmatprep.subr.mxu0 0.0
  %7828 = vmatpush1.xpose.msra.mxu0 0.0
  %7829 = vmatprep.subr.mxu0 0.0
  %7830 = vmatpush1.xpose.msra.mxu0 0.0
  %7831 = vmatprep.subr.mxu0 0.0
  %7832 = vmatpush1.xpose.msra.mxu0 0.0
  %7833 = vmatprep.subr.mxu0 0.0
  %7834 = vmatpush1.xpose.msra.mxu0 0.0
  %7835 = vmatprep.subr.mxu0 0.0
  %7836 = vmatpush1.xpose.msra.mxu0 0.0
  %7837 = vmatprep.subr.mxu0 0.0
  %7838 = vmatpush1.xpose.msra.mxu0 0.0
  %7839 = vmatprep.subr.mxu0 0.0
  %7840 = vmatpush1.xpose.msra.mxu0 0.0
  %7841 = vmatprep.subr.mxu0 0.0
  %7842 = vmatpush1.xpose.msra.mxu0 0.0
  %7843 = vmatprep.subr.mxu0 0.0
  %7844 = vmatpush1.xpose.msra.mxu0 0.0
  %7845 = vmatprep.subr.mxu0 0.0
  %7846 = vmatpush1.xpose.msra.mxu0 0.0
  %7847 = vmatprep.subr.mxu0 0.0
  %7848 = vmatpush1.xpose.msra.mxu0 0.0
  %7849 = vmatprep.subr.mxu0 0.0
  %7850 = vmatpush1.xpose.msra.mxu0 0.0
  %7851 = vmatprep.subr.mxu0 0.0
  %7852 = vmatpush1.xpose.msra.mxu0 0.0
  %7853 = vmatprep.subr.mxu0 0.0
  %7854 = vmatpush1.xpose.msra.mxu0 0.0
  %7855 = vmatprep.subr.mxu0 0.0
  %7856 = vmatpush1.xpose.msra.mxu0 0.0
  %7857 = vmatprep.subr.mxu0 0.0
  %7858 = vmatpush1.xpose.msra.mxu0 0.0
  %7859 = vmatprep.subr.mxu0 0.0
  %7860 = vmatpush1.xpose.msra.mxu0 0.0
  %7861 = vmatprep.subr.mxu0 0.0
  %7862 = vmatpush1.xpose.msra.mxu0 0.0
  %7863 = vmatprep.subr.mxu0 0.0
  %7864 = vmatpush1.xpose.msra.mxu0 0.0
  %7865 = vmatprep.subr.mxu0 0.0
  %7866 = vmatpush1.xpose.msra.mxu0 0.0
  %7867 = vmatprep.subr.mxu0 0.0
  %7868 = vmatpush1.xpose.msra.mxu0 0.0
  %7869 = vmatprep.mubr.f32.mxu0 0.0
  %7870 = vmatmul.mubr.f32.gmra.mrb[0].mxu0 %v7781
  %v7871 = vpop.f32.mrb[0].mxu0
  %v7872 = vadd.f32 0.0, %v7871
  %v7873 = vpop.f32.mrb[0].mxu0
  %7874 = vmatprep.mubr.f32.mxu0 0.0
  %7875 = vmatmul.mubr.f32.gmra.mrb[0].mxu0 %v7783
  %v7876 = vpop.f32.mrb[0].mxu0
  %v7877 = vadd.f32 0.0, %v7876
  %v7878 = vpop.f32.mrb[0].mxu0
  %7879 = vmatprep.mubr.f32.mxu0 0.0
  %7880 = vmatmul.mubr.f32.gmra.mrb[0].mxu0 %v7785
  %v7881 = vpop.f32.mrb[0].mxu0
  %v7882 = vadd.f32 0.0, %v7881
  %v7883 = vpop.f32.mrb[0].mxu0
  %7884 = vmatprep.mubr.f32.mxu0 0.0
  %7885 = vmatmul.mubr.f32.gmra.mrb[0].mxu0 %v7787
  %v7886 = vpop.f32.mrb[0].mxu0
  %v7887 = vadd.f32 0.0, %v7886
  %v7888 = vpop.f32.mrb[0].mxu0
  %7889 = vdwg.mxu0
  %v7890 = vmul.f32 %v7872, 0.35355338
  %v7891 = vmul.f32 %v7877, 0.35355338
  %v7892 = vmul.f32 %v7882, 0.35355338
  %v7893 = vmul.f32 %v7887, 0.35355338
  %v7894 = vadd.f32 %v7890, %v7153
  %v7895 = vadd.f32 %v7891, %v7154
  %v7896 = vadd.f32 %v7892, %v7155
  %v7897 = vadd.f32 %v7893, %v7156
  %v7898 = vsel %vm571, %v7894, -inf
  %7899 = vmax.xlane.f32.xlu0 %v7898
  %v7900 = vpop.xlane.xlu0 %7899
  %v7901 = vsel %vm571, %v7895, -inf
  %7902 = vmax.xlane.f32.xlu0 %v7901
  %v7903 = vpop.xlane.xlu0 %7902
  %v7904 = vsel %vm571, %v7896, -inf
  %7905 = vmax.xlane.f32.xlu0 %v7904
  %v7906 = vpop.xlane.xlu0 %7905
  %v7907 = vsel %vm571, %v7897, -inf
  %7908 = vmax.xlane.f32.xlu0 %v7907
  %v7909 = vpop.xlane.xlu0 %7908
  %v7910 = vsub.f32 %v7894, %v7900
  %v7911 = vsub.f32 %v7895, %v7903
  %v7912 = vsub.f32 %v7896, %v7906
  %v7913 = vsub.f32 %v7897, %v7909
  %v7914 = vmul.f32 %v7910, 1.442695
  %v7915 = vpow.pop %v7914
  %v7916 = vmul.f32 %v7911, 1.442695
  %v7917 = vpow.pop %v7916
  %v7918 = vmul.f32 %v7912, 1.442695
  %v7919 = vpow.pop %v7918
  %v7920 = vmul.f32 %v7913, 1.442695
  %v7921 = vpow.pop %v7920
  %v7922 = vsel %vm571, %v7915, 0.0
  %7923 = vadd.xlane.f32.xlu0 %v7922
  %v7924 = vpop.xlane.xlu0 %7923
  %v7925 = vsel %vm571, %v7917, 0.0
  %7926 = vadd.xlane.f32.xlu0 %v7925
  %v7927 = vpop.xlane.xlu0 %7926
  %v7928 = vsel %vm571, %v7919, 0.0
  %7929 = vadd.xlane.f32.xlu0 %v7928
  %v7930 = vpop.xlane.xlu0 %7929
  %v7931 = vsel %vm571, %v7921, 0.0
  %7932 = vadd.xlane.f32.xlu0 %v7931
  %v7933 = vpop.xlane.xlu0 %7932
  %v7934 = vrcp.pop %v7924
  %v7935 = vrcp.pop %v7927
  %v7936 = vrcp.pop %v7930
  %v7937 = vrcp.pop %v7933
  %v7938 = vmul.f32 %v7915, %v7934
  %v7939 = vmul.f32 %v7917, %v7935
  %v7940 = vmul.f32 %v7919, %v7936
  %v7941 = vmul.f32 %v7921, %v7937
  %7942 = vrot.lane.b32.xlu0 %v6929, 64
  %v7943 = vpop.permute.xlu0 %7942
  %7944 = vrot.lane.b32.xlu0 %v6934, 64
  %v7945 = vpop.permute.xlu0 %7944
  %7946 = vrot.lane.b32.xlu0 %v6939, 64
  %v7947 = vpop.permute.xlu0 %7946
  %7948 = vrot.lane.b32.xlu0 %v6944, 64
  %v7949 = vpop.permute.xlu0 %7948
  %7950 = vrot.lane.b32.xlu0 %v6949, 64
  %v7951 = vpop.permute.xlu0 %7950
  %7952 = vrot.lane.b32.xlu0 %v6954, 64
  %v7953 = vpop.permute.xlu0 %7952
  %7954 = vrot.lane.b32.xlu0 %v6959, 64
  %v7955 = vpop.permute.xlu0 %7954
  %7956 = vrot.lane.b32.xlu0 %v6964, 64
  %v7957 = vpop.permute.xlu0 %7956
  %v7967 = vsel %vm571, %v7938, 0
  %v7970 = vsel %vm571, %v7939, 0
  %v7973 = vsel %vm571, %v7940, 0
  %v7976 = vsel %vm571, %v7941, 0
  %7978 = vmatprep.subr.mxu0 0.0
  %7979 = vmatpush1.msra.mxu0 %v7943
  %7980 = vmatprep.subr.mxu0 0.0
  %7981 = vmatpush1.msra.mxu0 %v7945
  %7982 = vmatprep.subr.mxu0 0.0
  %7983 = vmatpush1.msra.mxu0 %v7947
  %7984 = vmatprep.subr.mxu0 0.0
  %7985 = vmatpush1.msra.mxu0 %v7949
  %7986 = vmatprep.subr.mxu0 0.0
  %7987 = vmatpush1.msra.mxu0 %v7951
  %7988 = vmatprep.subr.mxu0 0.0
  %7989 = vmatpush1.msra.mxu0 %v7953
  %7990 = vmatprep.subr.mxu0 0.0
  %7991 = vmatpush1.msra.mxu0 %v7955
  %7992 = vmatprep.subr.mxu0 0.0
  %7993 = vmatpush1.msra.mxu0 %v7957
  %7994 = vmatprep.subr.mxu0 0.0
  %7995 = vmatpush1.msra.mxu0 0.0
  %7996 = vmatprep.subr.mxu0 0.0
  %7997 = vmatpush1.msra.mxu0 0.0
  %7998 = vmatprep.subr.mxu0 0.0
  %7999 = vmatpush1.msra.mxu0 0.0
  %8000 = vmatprep.subr.mxu0 0.0
  %8001 = vmatpush1.msra.mxu0 0.0
  %8002 = vmatprep.subr.mxu0 0.0
  %8003 = vmatpush1.msra.mxu0 0.0
  %8004 = vmatprep.subr.mxu0 0.0
  %8005 = vmatpush1.msra.mxu0 0.0
  %8006 = vmatprep.subr.mxu0 0.0
  %8007 = vmatpush1.msra.mxu0 0.0
  %8008 = vmatprep.subr.mxu0 0.0
  %8009 = vmatpush1.msra.mxu0 0.0
  %8010 = vmatprep.subr.mxu0 0.0
  %8011 = vmatpush1.msra.mxu0 0.0
  %8012 = vmatprep.subr.mxu0 0.0
  %8013 = vmatpush1.msra.mxu0 0.0
  %8014 = vmatprep.subr.mxu0 0.0
  %8015 = vmatpush1.msra.mxu0 0.0
  %8016 = vmatprep.subr.mxu0 0.0
  %8017 = vmatpush1.msra.mxu0 0.0
  %8018 = vmatprep.subr.mxu0 0.0
  %8019 = vmatpush1.msra.mxu0 0.0
  %8020 = vmatprep.subr.mxu0 0.0
  %8021 = vmatpush1.msra.mxu0 0.0
  %8022 = vmatprep.subr.mxu0 0.0
  %8023 = vmatpush1.msra.mxu0 0.0
  %8024 = vmatprep.subr.mxu0 0.0
  %8025 = vmatpush1.msra.mxu0 0.0
  %8026 = vmatprep.subr.mxu0 0.0
  %8027 = vmatpush1.msra.mxu0 0.0
  %8028 = vmatprep.subr.mxu0 0.0
  %8029 = vmatpush1.msra.mxu0 0.0
  %8030 = vmatprep.subr.mxu0 0.0
  %8031 = vmatpush1.msra.mxu0 0.0
  %8032 = vmatprep.subr.mxu0 0.0
  %8033 = vmatpush1.msra.mxu0 0.0
  %8034 = vmatprep.subr.mxu0 0.0
  %8035 = vmatpush1.msra.mxu0 0.0
  %8036 = vmatprep.subr.mxu0 0.0
  %8037 = vmatpush1.msra.mxu0 0.0
  %8038 = vmatprep.subr.mxu0 0.0
  %8039 = vmatpush1.msra.mxu0 0.0
  %8040 = vmatprep.subr.mxu0 0.0
  %8041 = vmatpush1.msra.mxu0 0.0
  %8042 = vmatprep.mubr.f32.mxu0 0.0
  %8043 = vmatmul.mubr.f32.gmra.mrb[0].mxu0 %v7967
  %v8044 = vpop.f32.mrb[0].mxu0
  %v8045 = vadd.f32 0.0, %v8044
  %v8046 = vpop.f32.mrb[0].mxu0
  %8047 = vmatprep.mubr.f32.mxu0 0.0
  %8048 = vmatmul.mubr.f32.gmra.mrb[0].mxu0 %v7970
  %v8049 = vpop.f32.mrb[0].mxu0
  %v8050 = vadd.f32 0.0, %v8049
  %v8051 = vpop.f32.mrb[0].mxu0
  %8052 = vmatprep.mubr.f32.mxu0 0.0
  %8053 = vmatmul.mubr.f32.gmra.mrb[0].mxu0 %v7973
  %v8054 = vpop.f32.mrb[0].mxu0
  %v8055 = vadd.f32 0.0, %v8054
  %v8056 = vpop.f32.mrb[0].mxu0
  %8057 = vmatprep.mubr.f32.mxu0 0.0
  %8058 = vmatmul.mubr.f32.gmra.mrb[0].mxu0 %v7976
  %v8059 = vpop.f32.mrb[0].mxu0
  %v8060 = vadd.f32 0.0, %v8059
  %v8061 = vpop.f32.mrb[0].mxu0
  %8062 = vdwg.mxu0
  %v8063 = vadd.f32 %v7739, %v8045
  %v8064 = vadd.f32 %v7744, %v8050
  %v8065 = vadd.f32 %v7749, %v8055
  %v8066 = vadd.f32 %v7754, %v8060
  %8067 = vrot.lane.b32.xlu0 %v7050, 104
  %v8068 = vpop.permute.xlu0 %8067
  %8069 = vrot.lane.b32.xlu0 %v7055, 104
  %v8070 = vpop.permute.xlu0 %8069
  %8071 = vrot.lane.b32.xlu0 %v7060, 104
  %v8072 = vpop.permute.xlu0 %8071
  %8073 = vrot.lane.b32.xlu0 %v7065, 104
  %v8074 = vpop.permute.xlu0 %8073
  %8075 = vrot.lane.b32.xlu0 %v6811, 72
  %v8076 = vpop.permute.xlu0 %8075
  %8077 = vrot.lane.b32.xlu0 %v6816, 72
  %v8078 = vpop.permute.xlu0 %8077
  %8079 = vrot.lane.b32.xlu0 %v6821, 72
  %v8080 = vpop.permute.xlu0 %8079
  %8081 = vrot.lane.b32.xlu0 %v6826, 72
  %v8082 = vpop.permute.xlu0 %8081
  %8083 = vrot.lane.b32.xlu0 %v6831, 72
  %v8084 = vpop.permute.xlu0 %8083
  %8085 = vrot.lane.b32.xlu0 %v6836, 72
  %v8086 = vpop.permute.xlu0 %8085
  %8087 = vrot.lane.b32.xlu0 %v6841, 72
  %v8088 = vpop.permute.xlu0 %8087
  %8089 = vrot.lane.b32.xlu0 %v6846, 72
  %v8090 = vpop.permute.xlu0 %8089
  %v8091 = vsel %vm1717, %v8068, 0
  %v8093 = vsel %vm1717, %v8070, 0
  %v8095 = vsel %vm1717, %v8072, 0
  %v8097 = vsel %vm1717, %v8074, 0
  %v8099 = vsel %vm1717, %v8076, 0
  %v8101 = vsel %vm1717, %v8078, 0
  %v8103 = vsel %vm1717, %v8080, 0
  %v8105 = vsel %vm1717, %v8082, 0
  %v8107 = vsel %vm1717, %v8084, 0
  %v8109 = vsel %vm1717, %v8086, 0
  %v8111 = vsel %vm1717, %v8088, 0
  %v8113 = vsel %vm1717, %v8090, 0
  %8115 = vmatprep.subr.mxu0 0.0
  %8116 = vmatpush1.xpose.msra.mxu0 %v8099
  %8117 = vmatprep.subr.mxu0 0.0
  %8118 = vmatpush1.xpose.msra.mxu0 %v8101
  %8119 = vmatprep.subr.mxu0 0.0
  %8120 = vmatpush1.xpose.msra.mxu0 %v8103
  %8121 = vmatprep.subr.mxu0 0.0
  %8122 = vmatpush1.xpose.msra.mxu0 %v8105
  %8123 = vmatprep.subr.mxu0 0.0
  %8124 = vmatpush1.xpose.msra.mxu0 %v8107
  %8125 = vmatprep.subr.mxu0 0.0
  %8126 = vmatpush1.xpose.msra.mxu0 %v8109
  %8127 = vmatprep.subr.mxu0 0.0
  %8128 = vmatpush1.xpose.msra.mxu0 %v8111
  %8129 = vmatprep.subr.mxu0 0.0
  %8130 = vmatpush1.xpose.msra.mxu0 %v8113
  %8131 = vmatprep.subr.mxu0 0.0
  %8132 = vmatpush1.xpose.msra.mxu0 0.0
  %8133 = vmatprep.subr.mxu0 0.0
  %8134 = vmatpush1.xpose.msra.mxu0 0.0
  %8135 = vmatprep.subr.mxu0 0.0
  %8136 = vmatpush1.xpose.msra.mxu0 0.0
  %8137 = vmatprep.subr.mxu0 0.0
  %8138 = vmatpush1.xpose.msra.mxu0 0.0
  %8139 = vmatprep.subr.mxu0 0.0
  %8140 = vmatpush1.xpose.msra.mxu0 0.0
  %8141 = vmatprep.subr.mxu0 0.0
  %8142 = vmatpush1.xpose.msra.mxu0 0.0
  %8143 = vmatprep.subr.mxu0 0.0
  %8144 = vmatpush1.xpose.msra.mxu0 0.0
  %8145 = vmatprep.subr.mxu0 0.0
  %8146 = vmatpush1.xpose.msra.mxu0 0.0
  %8147 = vmatprep.subr.mxu0 0.0
  %8148 = vmatpush1.xpose.msra.mxu0 0.0
  %8149 = vmatprep.subr.mxu0 0.0
  %8150 = vmatpush1.xpose.msra.mxu0 0.0
  %8151 = vmatprep.subr.mxu0 0.0
  %8152 = vmatpush1.xpose.msra.mxu0 0.0
  %8153 = vmatprep.subr.mxu0 0.0
  %8154 = vmatpush1.xpose.msra.mxu0 0.0
  %8155 = vmatprep.subr.mxu0 0.0
  %8156 = vmatpush1.xpose.msra.mxu0 0.0
  %8157 = vmatprep.subr.mxu0 0.0
  %8158 = vmatpush1.xpose.msra.mxu0 0.0
  %8159 = vmatprep.subr.mxu0 0.0
  %8160 = vmatpush1.xpose.msra.mxu0 0.0
  %8161 = vmatprep.subr.mxu0 0.0
  %8162 = vmatpush1.xpose.msra.mxu0 0.0
  %8163 = vmatprep.subr.mxu0 0.0
  %8164 = vmatpush1.xpose.msra.mxu0 0.0
  %8165 = vmatprep.subr.mxu0 0.0
  %8166 = vmatpush1.xpose.msra.mxu0 0.0
  %8167 = vmatprep.subr.mxu0 0.0
  %8168 = vmatpush1.xpose.msra.mxu0 0.0
  %8169 = vmatprep.subr.mxu0 0.0
  %8170 = vmatpush1.xpose.msra.mxu0 0.0
  %8171 = vmatprep.subr.mxu0 0.0
  %8172 = vmatpush1.xpose.msra.mxu0 0.0
  %8173 = vmatprep.subr.mxu0 0.0
  %8174 = vmatpush1.xpose.msra.mxu0 0.0
  %8175 = vmatprep.subr.mxu0 0.0
  %8176 = vmatpush1.xpose.msra.mxu0 0.0
  %8177 = vmatprep.subr.mxu0 0.0
  %8178 = vmatpush1.xpose.msra.mxu0 0.0
  %8179 = vmatprep.mubr.f32.mxu0 0.0
  %8180 = vmatmul.mubr.f32.gmra.mrb[0].mxu0 %v8091
  %v8181 = vpop.f32.mrb[0].mxu0
  %v8182 = vadd.f32 0.0, %v8181
  %v8183 = vpop.f32.mrb[0].mxu0
  %8184 = vmatprep.mubr.f32.mxu0 0.0
  %8185 = vmatmul.mubr.f32.gmra.mrb[0].mxu0 %v8093
  %v8186 = vpop.f32.mrb[0].mxu0
  %v8187 = vadd.f32 0.0, %v8186
  %v8188 = vpop.f32.mrb[0].mxu0
  %8189 = vmatprep.mubr.f32.mxu0 0.0
  %8190 = vmatmul.mubr.f32.gmra.mrb[0].mxu0 %v8095
  %v8191 = vpop.f32.mrb[0].mxu0
  %v8192 = vadd.f32 0.0, %v8191
  %v8193 = vpop.f32.mrb[0].mxu0
  %8194 = vmatprep.mubr.f32.mxu0 0.0
  %8195 = vmatmul.mubr.f32.gmra.mrb[0].mxu0 %v8097
  %v8196 = vpop.f32.mrb[0].mxu0
  %v8197 = vadd.f32 0.0, %v8196
  %v8198 = vpop.f32.mrb[0].mxu0
  %8199 = vdwg.mxu0
  %v8200 = vmul.f32 %v8182, 0.35355338
  %v8201 = vmul.f32 %v8187, 0.35355338
  %v8202 = vmul.f32 %v8192, 0.35355338
  %v8203 = vmul.f32 %v8197, 0.35355338
  %v8204 = vadd.f32 %v8200, %v7153
  %v8205 = vadd.f32 %v8201, %v7154
  %v8206 = vadd.f32 %v8202, %v7155
  %v8207 = vadd.f32 %v8203, %v7156
  %v8208 = vsel %vm571, %v8204, -inf
  %8209 = vmax.xlane.f32.xlu0 %v8208
  %v8210 = vpop.xlane.xlu0 %8209
  %v8211 = vsel %vm571, %v8205, -inf
  %8212 = vmax.xlane.f32.xlu0 %v8211
  %v8213 = vpop.xlane.xlu0 %8212
  %v8214 = vsel %vm571, %v8206, -inf
  %8215 = vmax.xlane.f32.xlu0 %v8214
  %v8216 = vpop.xlane.xlu0 %8215
  %v8217 = vsel %vm571, %v8207, -inf
  %8218 = vmax.xlane.f32.xlu0 %v8217
  %v8219 = vpop.xlane.xlu0 %8218
  %v8220 = vsub.f32 %v8204, %v8210
  %v8221 = vsub.f32 %v8205, %v8213
  %v8222 = vsub.f32 %v8206, %v8216
  %v8223 = vsub.f32 %v8207, %v8219
  %v8224 = vmul.f32 %v8220, 1.442695
  %v8225 = vpow.pop %v8224
  %v8226 = vmul.f32 %v8221, 1.442695
  %v8227 = vpow.pop %v8226
  %v8228 = vmul.f32 %v8222, 1.442695
  %v8229 = vpow.pop %v8228
  %v8230 = vmul.f32 %v8223, 1.442695
  %v8231 = vpow.pop %v8230
  %v8232 = vsel %vm571, %v8225, 0.0
  %8233 = vadd.xlane.f32.xlu0 %v8232
  %v8234 = vpop.xlane.xlu0 %8233
  %v8235 = vsel %vm571, %v8227, 0.0
  %8236 = vadd.xlane.f32.xlu0 %v8235
  %v8237 = vpop.xlane.xlu0 %8236
  %v8238 = vsel %vm571, %v8229, 0.0
  %8239 = vadd.xlane.f32.xlu0 %v8238
  %v8240 = vpop.xlane.xlu0 %8239
  %v8241 = vsel %vm571, %v8231, 0.0
  %8242 = vadd.xlane.f32.xlu0 %v8241
  %v8243 = vpop.xlane.xlu0 %8242
  %v8244 = vrcp.pop %v8234
  %v8245 = vrcp.pop %v8237
  %v8246 = vrcp.pop %v8240
  %v8247 = vrcp.pop %v8243
  %v8248 = vmul.f32 %v8225, %v8244
  %v8249 = vmul.f32 %v8227, %v8245
  %v8250 = vmul.f32 %v8229, %v8246
  %v8251 = vmul.f32 %v8231, %v8247
  %8252 = vrot.lane.b32.xlu0 %v6929, 32
  %v8253 = vpop.permute.xlu0 %8252
  %8254 = vrot.lane.b32.xlu0 %v6934, 32
  %v8255 = vpop.permute.xlu0 %8254
  %8256 = vrot.lane.b32.xlu0 %v6939, 32
  %v8257 = vpop.permute.xlu0 %8256
  %8258 = vrot.lane.b32.xlu0 %v6944, 32
  %v8259 = vpop.permute.xlu0 %8258
  %8260 = vrot.lane.b32.xlu0 %v6949, 32
  %v8261 = vpop.permute.xlu0 %8260
  %8262 = vrot.lane.b32.xlu0 %v6954, 32
  %v8263 = vpop.permute.xlu0 %8262
  %8264 = vrot.lane.b32.xlu0 %v6959, 32
  %v8265 = vpop.permute.xlu0 %8264
  %8266 = vrot.lane.b32.xlu0 %v6964, 32
  %v8267 = vpop.permute.xlu0 %8266
  %v8277 = vsel %vm571, %v8248, 0
  %v8280 = vsel %vm571, %v8249, 0
  %v8283 = vsel %vm571, %v8250, 0
  %v8286 = vsel %vm571, %v8251, 0
  %8288 = vmatprep.subr.mxu0 0.0
  %8289 = vmatpush1.msra.mxu0 %v8253
  %8290 = vmatprep.subr.mxu0 0.0
  %8291 = vmatpush1.msra.mxu0 %v8255
  %8292 = vmatprep.subr.mxu0 0.0
  %8293 = vmatpush1.msra.mxu0 %v8257
  %8294 = vmatprep.subr.mxu0 0.0
  %8295 = vmatpush1.msra.mxu0 %v8259
  %8296 = vmatprep.subr.mxu0 0.0
  %8297 = vmatpush1.msra.mxu0 %v8261
  %8298 = vmatprep.subr.mxu0 0.0
  %8299 = vmatpush1.msra.mxu0 %v8263
  %8300 = vmatprep.subr.mxu0 0.0
  %8301 = vmatpush1.msra.mxu0 %v8265
  %8302 = vmatprep.subr.mxu0 0.0
  %8303 = vmatpush1.msra.mxu0 %v8267
  %8304 = vmatprep.subr.mxu0 0.0
  %8305 = vmatpush1.msra.mxu0 0.0
  %8306 = vmatprep.subr.mxu0 0.0
  %8307 = vmatpush1.msra.mxu0 0.0
  %8308 = vmatprep.subr.mxu0 0.0
  %8309 = vmatpush1.msra.mxu0 0.0
  %8310 = vmatprep.subr.mxu0 0.0
  %8311 = vmatpush1.msra.mxu0 0.0
  %8312 = vmatprep.subr.mxu0 0.0
  %8313 = vmatpush1.msra.mxu0 0.0
  %8314 = vmatprep.subr.mxu0 0.0
  %8315 = vmatpush1.msra.mxu0 0.0
  %8316 = vmatprep.subr.mxu0 0.0
  %8317 = vmatpush1.msra.mxu0 0.0
  %8318 = vmatprep.subr.mxu0 0.0
  %8319 = vmatpush1.msra.mxu0 0.0
  %8320 = vmatprep.subr.mxu0 0.0
  %8321 = vmatpush1.msra.mxu0 0.0
  %8322 = vmatprep.subr.mxu0 0.0
  %8323 = vmatpush1.msra.mxu0 0.0
  %8324 = vmatprep.subr.mxu0 0.0
  %8325 = vmatpush1.msra.mxu0 0.0
  %8326 = vmatprep.subr.mxu0 0.0
  %8327 = vmatpush1.msra.mxu0 0.0
  %8328 = vmatprep.subr.mxu0 0.0
  %8329 = vmatpush1.msra.mxu0 0.0
  %8330 = vmatprep.subr.mxu0 0.0
  %8331 = vmatpush1.msra.mxu0 0.0
  %8332 = vmatprep.subr.mxu0 0.0
  %8333 = vmatpush1.msra.mxu0 0.0
  %8334 = vmatprep.subr.mxu0 0.0
  %8335 = vmatpush1.msra.mxu0 0.0
  %8336 = vmatprep.subr.mxu0 0.0
  %8337 = vmatpush1.msra.mxu0 0.0
  %8338 = vmatprep.subr.mxu0 0.0
  %8339 = vmatpush1.msra.mxu0 0.0
  %8340 = vmatprep.subr.mxu0 0.0
  %8341 = vmatpush1.msra.mxu0 0.0
  %8342 = vmatprep.subr.mxu0 0.0
  %8343 = vmatpush1.msra.mxu0 0.0
  %8344 = vmatprep.subr.mxu0 0.0
  %8345 = vmatpush1.msra.mxu0 0.0
  %8346 = vmatprep.subr.mxu0 0.0
  %8347 = vmatpush1.msra.mxu0 0.0
  %8348 = vmatprep.subr.mxu0 0.0
  %8349 = vmatpush1.msra.mxu0 0.0
  %8350 = vmatprep.subr.mxu0 0.0
  %8351 = vmatpush1.msra.mxu0 0.0
  %8352 = vmatprep.mubr.f32.mxu0 0.0
  %8353 = vmatmul.mubr.f32.gmra.mrb[0].mxu0 %v8277
  %v8354 = vpop.f32.mrb[0].mxu0
  %v8355 = vadd.f32 0.0, %v8354
  %v8356 = vpop.f32.mrb[0].mxu0
  %8357 = vmatprep.mubr.f32.mxu0 0.0
  %8358 = vmatmul.mubr.f32.gmra.mrb[0].mxu0 %v8280
  %v8359 = vpop.f32.mrb[0].mxu0
  %v8360 = vadd.f32 0.0, %v8359
  %v8361 = vpop.f32.mrb[0].mxu0
  %8362 = vmatprep.mubr.f32.mxu0 0.0
  %8363 = vmatmul.mubr.f32.gmra.mrb[0].mxu0 %v8283
  %v8364 = vpop.f32.mrb[0].mxu0
  %v8365 = vadd.f32 0.0, %v8364
  %v8366 = vpop.f32.mrb[0].mxu0
  %8367 = vmatprep.mubr.f32.mxu0 0.0
  %8368 = vmatmul.mubr.f32.gmra.mrb[0].mxu0 %v8286
  %v8369 = vpop.f32.mrb[0].mxu0
  %v8370 = vadd.f32 0.0, %v8369
  %v8371 = vpop.f32.mrb[0].mxu0
  %8372 = vdwg.mxu0
  %v8373 = vadd.f32 %v8063, %v8355
  %v8374 = vadd.f32 %v8064, %v8360
  %v8375 = vadd.f32 %v8065, %v8365
  %v8376 = vadd.f32 %v8066, %v8370
  %8378 = vset.pattern.permute.xlu0 0
  %8379 = vperm.xlu0 %8378, %v102
  %v8380 = vpop.permute.xlu0 %8379
  %8383 = vset.pattern.permute.xlu0 0
  %8384 = vperm.xlu0 %8383, %v103
  %v8385 = vpop.permute.xlu0 %8384
  %8388 = vset.pattern.permute.xlu0 0
  %8389 = vperm.xlu0 %8388, %v104
  %v8390 = vpop.permute.xlu0 %8389
  %8393 = vset.pattern.permute.xlu0 0
  %8394 = vperm.xlu0 %8393, %v105
  %v8395 = vpop.permute.xlu0 %8394
  %v8397 = vmul.f32 %v7135, %v8380
  %v8398 = vmul.f32 %v7140, %v8385
  %v8399 = vmul.f32 %v7145, %v8390
  %v8400 = vmul.f32 %v7150, %v8395
  %s8401 = scalar_lea.vmem %s20, 2
  %v8402 = vld [vmem:[%s8401] sm:$0x1]
  %v8404 = vlaneseq
  %v8405 = vshrl.u32 %v8404, 7
  %v8406 = vsub.s32 0, %v8405
  %v8407 = vrot.slane %v8402, %v8406
  %v8409 = vadd.f32 %v8373, %v8407
  %v8410 = vadd.f32 %v8374, %v8407
  %v8411 = vadd.f32 %v8375, %v8407
  %v8412 = vadd.f32 %v8376, %v8407
  %v8413 = vmul.f32 %v8409, %v8380
  %v8414 = vmul.f32 %v8410, %v8385
  %v8415 = vmul.f32 %v8411, %v8390
  %v8416 = vmul.f32 %v8412, %v8395
  %v8417 = vadd.f32 %v8397, %v8413
  %v8418 = vadd.f32 %v8398, %v8414
  %v8419 = vadd.f32 %v8399, %v8415
  %v8420 = vadd.f32 %v8400, %v8416
  %s8421 = scalar_lea.vmem %s21, 2
  %v8422 = vld [vmem:[%s8421] sm:$0x1]
  %s8423 = scalar_lea.vmem %s22, 2
  %v8424 = vld [vmem:[%s8423] sm:$0x1]
  %v8425 = vsel %vm562, %v8417, 0.0
  %8426 = vadd.xlane.f32.xlu0 %v8425
  %v8427 = vpop.xlane.xlu0 %8426
  %v8428 = vsel %vm562, %v8418, 0.0
  %8429 = vadd.xlane.f32.xlu0 %v8428
  %v8430 = vpop.xlane.xlu0 %8429
  %v8431 = vsel %vm562, %v8419, 0.0
  %8432 = vadd.xlane.f32.xlu0 %v8431
  %v8433 = vpop.xlane.xlu0 %8432
  %v8434 = vsel %vm562, %v8420, 0.0
  %8435 = vadd.xlane.f32.xlu0 %v8434
  %v8436 = vpop.xlane.xlu0 %8435
  %v8437 = vmul.f32 %v8427, %v756
  %v8438 = vmul.f32 %v8430, %v756
  %v8439 = vmul.f32 %v8433, %v756
  %v8440 = vmul.f32 %v8436, %v756
  %v8441 = vsub.f32 %v8417, %v8437
  %v8442 = vsub.f32 %v8418, %v8438
  %v8443 = vsub.f32 %v8419, %v8439
  %v8444 = vsub.f32 %v8420, %v8440
  %v8445 = vmul.f32 %v8441, %v8441
  %v8446 = vmul.f32 %v8442, %v8442
  %v8447 = vmul.f32 %v8443, %v8443
  %v8448 = vmul.f32 %v8444, %v8444
  %v8449 = vsel %vm562, %v8445, 0.0
  %8450 = vadd.xlane.f32.xlu0 %v8449
  %v8451 = vpop.xlane.xlu0 %8450
  %v8452 = vsel %vm562, %v8446, 0.0
  %8453 = vadd.xlane.f32.xlu0 %v8452
  %v8454 = vpop.xlane.xlu0 %8453
  %v8455 = vsel %vm562, %v8447, 0.0
  %8456 = vadd.xlane.f32.xlu0 %v8455
  %v8457 = vpop.xlane.xlu0 %8456
  %v8458 = vsel %vm562, %v8448, 0.0
  %8459 = vadd.xlane.f32.xlu0 %v8458
  %v8460 = vpop.xlane.xlu0 %8459
  %v8461 = vmul.f32 %v8451, %v756
  %v8462 = vmul.f32 %v8454, %v756
  %v8463 = vmul.f32 %v8457, %v756
  %v8464 = vmul.f32 %v8460, %v756
  %v8465 = vadd.f32 %v8461, 1e-05
  %v8466 = vadd.f32 %v8462, 1e-05
  %v8467 = vadd.f32 %v8463, 1e-05
  %v8468 = vadd.f32 %v8464, 1e-05
  %v8469 = vrsqrt.pop %v8465
  %v8470 = vrsqrt.pop %v8466
  %v8471 = vrsqrt.pop %v8467
  %v8472 = vrsqrt.pop %v8468
  %v8473 = vmul.f32 %v8441, %v8469
  %v8474 = vmul.f32 %v8442, %v8470
  %v8475 = vmul.f32 %v8443, %v8471
  %v8476 = vmul.f32 %v8444, %v8472
  %v8478 = vlaneseq
  %v8479 = vshrl.u32 %v8478, 7
  %v8480 = vsub.s32 0, %v8479
  %v8481 = vrot.slane %v8422, %v8480
  %v8483 = vmul.f32 %v8473, %v8481
  %v8484 = vmul.f32 %v8474, %v8481
  %v8485 = vmul.f32 %v8475, %v8481
  %v8486 = vmul.f32 %v8476, %v8481
  %v8488 = vlaneseq
  %v8489 = vshrl.u32 %v8488, 7
  %v8490 = vsub.s32 0, %v8489
  %v8491 = vrot.slane %v8424, %v8490
  %v8493 = vadd.f32 %v8483, %v8491
  %v8494 = vadd.f32 %v8484, %v8491
  %v8495 = vadd.f32 %v8485, %v8491
  %v8496 = vadd.f32 %v8486, %v8491
  %s8497 = scalar_lea.vmem %s23, 64
  %v8498 = vld [vmem:[%s8497] sm:$0xff]
  %v8499 = vld [vmem:[%s8497 + $0x8] sm:$0xff]
  %v8500 = vld [vmem:[%s8497 + $0x10] sm:$0xff]
  %v8501 = vld [vmem:[%s8497 + $0x18] sm:$0xff]
  %s8502 = scalar_lea.vmem %s24, 2
  %v8503 = vld [vmem:[%s8502] sm:$0x1]
  %v8505 = vlaneseq
  %v8506 = vshrl.u32 %v8505, 7
  %v8507 = vsub.s32 0, %v8506
  %v8508 = vrot.slane %v8503, %v8507
  %v8511 = vsel %vm562, %v8493, 0
  %v8514 = vsel %vm562, %v8494, 0
  %v8517 = vsel %vm562, %v8495, 0
  %v8520 = vsel %vm562, %v8496, 0
  %8522 = vmatprep.subr.mxu0 0.0
  %8523 = vmatpush1.msra.mxu0 %v8498
  %8524 = vmatprep.subr.mxu0 0.0
  %8525 = vmatpush1.msra.mxu0 %v8499
  %8526 = vmatprep.subr.mxu0 0.0
  %8527 = vmatpush1.msra.mxu0 %v8500
  %8528 = vmatprep.subr.mxu0 0.0
  %8529 = vmatpush1.msra.mxu0 %v8501
  %8530 = vmatprep.subr.mxu0 0.0
  %8531 = vmatpush1.msra.mxu0 0.0
  %8532 = vmatprep.subr.mxu0 0.0
  %8533 = vmatpush1.msra.mxu0 0.0
  %8534 = vmatprep.subr.mxu0 0.0
  %8535 = vmatpush1.msra.mxu0 0.0
  %8536 = vmatprep.subr.mxu0 0.0
  %8537 = vmatpush1.msra.mxu0 0.0
  %8538 = vmatprep.subr.mxu0 0.0
  %8539 = vmatpush1.msra.mxu0 0.0
  %8540 = vmatprep.subr.mxu0 0.0
  %8541 = vmatpush1.msra.mxu0 0.0
  %8542 = vmatprep.subr.mxu0 0.0
  %8543 = vmatpush1.msra.mxu0 0.0
  %8544 = vmatprep.subr.mxu0 0.0
  %8545 = vmatpush1.msra.mxu0 0.0
  %8546 = vmatprep.subr.mxu0 0.0
  %8547 = vmatpush1.msra.mxu0 0.0
  %8548 = vmatprep.subr.mxu0 0.0
  %8549 = vmatpush1.msra.mxu0 0.0
  %8550 = vmatprep.subr.mxu0 0.0
  %8551 = vmatpush1.msra.mxu0 0.0
  %8552 = vmatprep.subr.mxu0 0.0
  %8553 = vmatpush1.msra.mxu0 0.0
  %8554 = vmatprep.subr.mxu0 0.0
  %8555 = vmatpush1.msra.mxu0 0.0
  %8556 = vmatprep.subr.mxu0 0.0
  %8557 = vmatpush1.msra.mxu0 0.0
  %8558 = vmatprep.subr.mxu0 0.0
  %8559 = vmatpush1.msra.mxu0 0.0
  %8560 = vmatprep.subr.mxu0 0.0
  %8561 = vmatpush1.msra.mxu0 0.0
  %8562 = vmatprep.subr.mxu0 0.0
  %8563 = vmatpush1.msra.mxu0 0.0
  %8564 = vmatprep.subr.mxu0 0.0
  %8565 = vmatpush1.msra.mxu0 0.0
  %8566 = vmatprep.subr.mxu0 0.0
  %8567 = vmatpush1.msra.mxu0 0.0
  %8568 = vmatprep.subr.mxu0 0.0
  %8569 = vmatpush1.msra.mxu0 0.0
  %8570 = vmatprep.subr.mxu0 0.0
  %8571 = vmatpush1.msra.mxu0 0.0
  %8572 = vmatprep.subr.mxu0 0.0
  %8573 = vmatpush1.msra.mxu0 0.0
  %8574 = vmatprep.subr.mxu0 0.0
  %8575 = vmatpush1.msra.mxu0 0.0
  %8576 = vmatprep.subr.mxu0 0.0
  %8577 = vmatpush1.msra.mxu0 0.0
  %8578 = vmatprep.subr.mxu0 0.0
  %8579 = vmatpush1.msra.mxu0 0.0
  %8580 = vmatprep.subr.mxu0 0.0
  %8581 = vmatpush1.msra.mxu0 0.0
  %8582 = vmatprep.subr.mxu0 0.0
  %8583 = vmatpush1.msra.mxu0 0.0
  %8584 = vmatprep.subr.mxu0 0.0
  %8585 = vmatpush1.msra.mxu0 0.0
  %8586 = vmatprep.mubr.f32.mxu0 0.0
  %8587 = vmatmul.mubr.f32.gmra.mrb[0].mxu0 %v8511
  %v8588 = vpop.f32.mrb[0].mxu0
  %v8589 = vadd.f32 %v8508, %v8588
  %v8590 = vpop.f32.mrb[0].mxu0
  %8591 = vmatprep.mubr.f32.mxu0 0.0
  %8592 = vmatmul.mubr.f32.gmra.mrb[0].mxu0 %v8514
  %v8593 = vpop.f32.mrb[0].mxu0
  %v8594 = vadd.f32 %v8508, %v8593
  %v8595 = vpop.f32.mrb[0].mxu0
  %8596 = vmatprep.mubr.f32.mxu0 0.0
  %8597 = vmatmul.mubr.f32.gmra.mrb[0].mxu0 %v8517
  %v8598 = vpop.f32.mrb[0].mxu0
  %v8599 = vadd.f32 %v8508, %v8598
  %v8600 = vpop.f32.mrb[0].mxu0
  %8601 = vmatprep.mubr.f32.mxu0 0.0
  %8602 = vmatmul.mubr.f32.gmra.mrb[0].mxu0 %v8520
  %v8603 = vpop.f32.mrb[0].mxu0
  %v8604 = vadd.f32 %v8508, %v8603
  %v8605 = vpop.f32.mrb[0].mxu0
  %8606 = vdwg.mxu0
  %v8607 = vmul.f32 %v8589, 0.5
  %v8608 = vmul.f32 %v8594, 0.5
  %v8609 = vmul.f32 %v8599, 0.5
  %v8610 = vmul.f32 %v8604, 0.5
  %v8611 = vmul.f32 %v8589, 0.044715
  %v8612 = vmul.f32 %v8594, 0.044715
  %v8613 = vmul.f32 %v8599, 0.044715
  %v8614 = vmul.f32 %v8604, 0.044715
  %v8615 = vmul.f32 %v8611, %v8589
  %v8616 = vmul.f32 %v8612, %v8594
  %v8617 = vmul.f32 %v8613, %v8599
  %v8618 = vmul.f32 %v8614, %v8604
  %v8619 = vmul.f32 %v8615, %v8589
  %v8620 = vmul.f32 %v8616, %v8594
  %v8621 = vmul.f32 %v8617, %v8599
  %v8622 = vmul.f32 %v8618, %v8604
  %v8623 = vadd.f32 %v8589, %v8619
  %v8624 = vadd.f32 %v8594, %v8620
  %v8625 = vadd.f32 %v8599, %v8621
  %v8626 = vadd.f32 %v8604, %v8622
  %v8627 = vmul.f32 %v8623, 0.7978846
  %v8628 = vmul.f32 %v8624, 0.7978846
  %v8629 = vmul.f32 %v8625, 0.7978846
  %v8630 = vmul.f32 %v8626, 0.7978846
  %v8631 = vtanh.pop %v8627
  %v8632 = vtanh.pop %v8628
  %v8633 = vtanh.pop %v8629
  %v8634 = vtanh.pop %v8630
  %v8635 = vadd.f32 %v8631, 1.0
  %v8636 = vadd.f32 %v8632, 1.0
  %v8637 = vadd.f32 %v8633, 1.0
  %v8638 = vadd.f32 %v8634, 1.0
  %v8639 = vmul.f32 %v8607, %v8635
  %v8640 = vmul.f32 %v8608, %v8636
  %v8641 = vmul.f32 %v8609, %v8637
  %v8642 = vmul.f32 %v8610, %v8638
  %v8643 = vmul.f32 %v8639, %v8380
  %v8644 = vmul.f32 %v8640, %v8385
  %v8645 = vmul.f32 %v8641, %v8390
  %v8646 = vmul.f32 %v8642, %v8395
  %s8647 = scalar_lea.vmem %s25, 256
  %v8648 = vld [vmem:[%s8647] sm:$0xff]
  %v8649 = vld [vmem:[%s8647 + $0x8] sm:$0xff]
  %v8650 = vld [vmem:[%s8647 + $0x10] sm:$0xff]
  %v8651 = vld [vmem:[%s8647 + $0x18] sm:$0xff]
  %v8652 = vld [vmem:[%s8647 + $0x20] sm:$0xff]
  %v8653 = vld [vmem:[%s8647 + $0x28] sm:$0xff]
  %v8654 = vld [vmem:[%s8647 + $0x30] sm:$0xff]
  %v8655 = vld [vmem:[%s8647 + $0x38] sm:$0xff]
  %v8656 = vld [vmem:[%s8647 + $0x40] sm:$0xff]
  %v8657 = vld [vmem:[%s8647 + $0x48] sm:$0xff]
  %v8658 = vld [vmem:[%s8647 + $0x50] sm:$0xff]
  %v8659 = vld [vmem:[%s8647 + $0x58] sm:$0xff]
  %v8660 = vld [vmem:[%s8647 + $0x60] sm:$0xff]
  %v8661 = vld [vmem:[%s8647 + $0x68] sm:$0xff]
  %v8662 = vld [vmem:[%s8647 + $0x70] sm:$0xff]
  %v8663 = vld [vmem:[%s8647 + $0x78] sm:$0xff]
  %s8664 = scalar_lea.vmem %s26, 2
  %v8665 = vld [vmem:[%s8664] sm:$0x1]
  %v8667 = vlaneseq
  %v8668 = vshrl.u32 %v8667, 7
  %v8669 = vsub.s32 0, %v8668
  %v8670 = vrot.slane %v8665, %v8669
  %8672 = vmatprep.subr.mxu0 0.0
  %8673 = vmatpush1.msra.mxu0 %v8648
  %8674 = vmatprep.subr.mxu0 0.0
  %8675 = vmatpush1.msra.mxu0 %v8649
  %8676 = vmatprep.subr.mxu0 0.0
  %8677 = vmatpush1.msra.mxu0 %v8650
  %8678 = vmatprep.subr.mxu0 0.0
  %8679 = vmatpush1.msra.mxu0 %v8651
  %8680 = vmatprep.subr.mxu0 0.0
  %8681 = vmatpush1.msra.mxu0 %v8652
  %8682 = vmatprep.subr.mxu0 0.0
  %8683 = vmatpush1.msra.mxu0 %v8653
  %8684 = vmatprep.subr.mxu0 0.0
  %8685 = vmatpush1.msra.mxu0 %v8654
  %8686 = vmatprep.subr.mxu0 0.0
  %8687 = vmatpush1.msra.mxu0 %v8655
  %8688 = vmatprep.subr.mxu0 0.0
  %8689 = vmatpush1.msra.mxu0 %v8656
  %8690 = vmatprep.subr.mxu0 0.0
  %8691 = vmatpush1.msra.mxu0 %v8657
  %8692 = vmatprep.subr.mxu0 0.0
  %8693 = vmatpush1.msra.mxu0 %v8658
  %8694 = vmatprep.subr.mxu0 0.0
  %8695 = vmatpush1.msra.mxu0 %v8659
  %8696 = vmatprep.subr.mxu0 0.0
  %8697 = vmatpush1.msra.mxu0 %v8660
  %8698 = vmatprep.subr.mxu0 0.0
  %8699 = vmatpush1.msra.mxu0 %v8661
  %8700 = vmatprep.subr.mxu0 0.0
  %8701 = vmatpush1.msra.mxu0 %v8662
  %8702 = vmatprep.subr.mxu0 0.0
  %8703 = vmatpush1.msra.mxu0 %v8663
  %8704 = vmatprep.subr.mxu0 0.0
  %8705 = vmatpush1.msra.mxu0 0.0
  %8706 = vmatprep.subr.mxu0 0.0
  %8707 = vmatpush1.msra.mxu0 0.0
  %8708 = vmatprep.subr.mxu0 0.0
  %8709 = vmatpush1.msra.mxu0 0.0
  %8710 = vmatprep.subr.mxu0 0.0
  %8711 = vmatpush1.msra.mxu0 0.0
  %8712 = vmatprep.subr.mxu0 0.0
  %8713 = vmatpush1.msra.mxu0 0.0
  %8714 = vmatprep.subr.mxu0 0.0
  %8715 = vmatpush1.msra.mxu0 0.0
  %8716 = vmatprep.subr.mxu0 0.0
  %8717 = vmatpush1.msra.mxu0 0.0
  %8718 = vmatprep.subr.mxu0 0.0
  %8719 = vmatpush1.msra.mxu0 0.0
  %8720 = vmatprep.subr.mxu0 0.0
  %8721 = vmatpush1.msra.mxu0 0.0
  %8722 = vmatprep.subr.mxu0 0.0
  %8723 = vmatpush1.msra.mxu0 0.0
  %8724 = vmatprep.subr.mxu0 0.0
  %8725 = vmatpush1.msra.mxu0 0.0
  %8726 = vmatprep.subr.mxu0 0.0
  %8727 = vmatpush1.msra.mxu0 0.0
  %8728 = vmatprep.subr.mxu0 0.0
  %8729 = vmatpush1.msra.mxu0 0.0
  %8730 = vmatprep.subr.mxu0 0.0
  %8731 = vmatpush1.msra.mxu0 0.0
  %8732 = vmatprep.subr.mxu0 0.0
  %8733 = vmatpush1.msra.mxu0 0.0
  %8734 = vmatprep.subr.mxu0 0.0
  %8735 = vmatpush1.msra.mxu0 0.0
  %8736 = vmatprep.mubr.f32.mxu0 0.0
  %8737 = vmatmul.mubr.f32.gmra.mrb[0].mxu0 %v8643
  %v8738 = vpop.f32.mrb[0].mxu0
  %v8739 = vadd.f32 %v8670, %v8738
  %v8740 = vpop.f32.mrb[0].mxu0
  %8741 = vmatprep.mubr.f32.mxu0 0.0
  %8742 = vmatmul.mubr.f32.gmra.mrb[0].mxu0 %v8644
  %v8743 = vpop.f32.mrb[0].mxu0
  %v8744 = vadd.f32 %v8670, %v8743
  %v8745 = vpop.f32.mrb[0].mxu0
  %8746 = vmatprep.mubr.f32.mxu0 0.0
  %8747 = vmatmul.mubr.f32.gmra.mrb[0].mxu0 %v8645
  %v8748 = vpop.f32.mrb[0].mxu0
  %v8749 = vadd.f32 %v8670, %v8748
  %v8750 = vpop.f32.mrb[0].mxu0
  %8751 = vmatprep.mubr.f32.mxu0 0.0
  %8752 = vmatmul.mubr.f32.gmra.mrb[0].mxu0 %v8646
  %v8753 = vpop.f32.mrb[0].mxu0
  %v8754 = vadd.f32 %v8670, %v8753
  %v8755 = vpop.f32.mrb[0].mxu0
  %8756 = vdwg.mxu0
  %v8757 = vmul.f32 %v8739, %v8380
  %v8758 = vmul.f32 %v8744, %v8385
  %v8759 = vmul.f32 %v8749, %v8390
  %v8760 = vmul.f32 %v8754, %v8395
  %v8761 = vadd.f32 %v8417, %v8757
  %v8762 = vadd.f32 %v8418, %v8758
  %v8763 = vadd.f32 %v8419, %v8759
  %v8764 = vadd.f32 %v8420, %v8760
  %8765 = vst.msk [vmem:[%s27 + $0x40] sm:$0xff] %vm562, %v8761
  %8766 = vst.msk [vmem:[%s27 + $0x48] sm:$0xff] %vm562, %v8762
  %8767 = vst.msk [vmem:[%s27 + $0x50] sm:$0xff] %vm562, %v8763
  %8768 = vst.msk [vmem:[%s27 + $0x58] sm:$0xff] %vm562, %v8764
  %s8769 = scalar_lea.vmem %s14, 3
  %v8770 = vld [vmem:[%s8769] sm:$0x1]
  %s8771 = scalar_lea.vmem %s15, 3
  %v8772 = vld [vmem:[%s8771] sm:$0x1]
  %v8773 = vsel %vm562, %v8761, 0.0
  %8774 = vadd.xlane.f32.xlu0 %v8773
  %v8775 = vpop.xlane.xlu0 %8774
  %v8776 = vsel %vm562, %v8762, 0.0
  %8777 = vadd.xlane.f32.xlu0 %v8776
  %v8778 = vpop.xlane.xlu0 %8777
  %v8779 = vsel %vm562, %v8763, 0.0
  %8780 = vadd.xlane.f32.xlu0 %v8779
  %v8781 = vpop.xlane.xlu0 %8780
  %v8782 = vsel %vm562, %v8764, 0.0
  %8783 = vadd.xlane.f32.xlu0 %v8782
  %v8784 = vpop.xlane.xlu0 %8783
  %v8785 = vmul.f32 %v8775, %v756
  %v8786 = vmul.f32 %v8778, %v756
  %v8787 = vmul.f32 %v8781, %v756
  %v8788 = vmul.f32 %v8784, %v756
  %v8789 = vsub.f32 %v8761, %v8785
  %v8790 = vsub.f32 %v8762, %v8786
  %v8791 = vsub.f32 %v8763, %v8787
  %v8792 = vsub.f32 %v8764, %v8788
  %v8793 = vmul.f32 %v8789, %v8789
  %v8794 = vmul.f32 %v8790, %v8790
  %v8795 = vmul.f32 %v8791, %v8791
  %v8796 = vmul.f32 %v8792, %v8792
  %v8797 = vsel %vm562, %v8793, 0.0
  %8798 = vadd.xlane.f32.xlu0 %v8797
  %v8799 = vpop.xlane.xlu0 %8798
  %v8800 = vsel %vm562, %v8794, 0.0
  %8801 = vadd.xlane.f32.xlu0 %v8800
  %v8802 = vpop.xlane.xlu0 %8801
  %v8803 = vsel %vm562, %v8795, 0.0
  %8804 = vadd.xlane.f32.xlu0 %v8803
  %v8805 = vpop.xlane.xlu0 %8804
  %v8806 = vsel %vm562, %v8796, 0.0
  %8807 = vadd.xlane.f32.xlu0 %v8806
  %v8808 = vpop.xlane.xlu0 %8807
  %v8809 = vmul.f32 %v8799, %v756
  %v8810 = vmul.f32 %v8802, %v756
  %v8811 = vmul.f32 %v8805, %v756
  %v8812 = vmul.f32 %v8808, %v756
  %v8813 = vadd.f32 %v8809, 1e-05
  %v8814 = vadd.f32 %v8810, 1e-05
  %v8815 = vadd.f32 %v8811, 1e-05
  %v8816 = vadd.f32 %v8812, 1e-05
  %v8817 = vrsqrt.pop %v8813
  %v8818 = vrsqrt.pop %v8814
  %v8819 = vrsqrt.pop %v8815
  %v8820 = vrsqrt.pop %v8816
  %v8821 = vmul.f32 %v8789, %v8817
  %v8822 = vmul.f32 %v8790, %v8818
  %v8823 = vmul.f32 %v8791, %v8819
  %v8824 = vmul.f32 %v8792, %v8820
  %v8826 = vlaneseq
  %v8827 = vshrl.u32 %v8826, 7
  %v8828 = vsub.s32 0, %v8827
  %v8829 = vrot.slane %v8770, %v8828
  %v8831 = vmul.f32 %v8821, %v8829
  %v8832 = vmul.f32 %v8822, %v8829
  %v8833 = vmul.f32 %v8823, %v8829
  %v8834 = vmul.f32 %v8824, %v8829
  %v8836 = vlaneseq
  %v8837 = vshrl.u32 %v8836, 7
  %v8838 = vsub.s32 0, %v8837
  %v8839 = vrot.slane %v8772, %v8838
  %v8841 = vadd.f32 %v8831, %v8839
  %v8842 = vadd.f32 %v8832, %v8839
  %v8843 = vadd.f32 %v8833, %v8839
  %v8844 = vadd.f32 %v8834, %v8839
  %s8845 = scalar_lea.vmem %s16, 96
  %v8846 = vld [vmem:[%s8845] sm:$0xff]
  %v8847 = vld [vmem:[%s8845 + $0x8] sm:$0xff]
  %v8848 = vld [vmem:[%s8845 + $0x10] sm:$0xff]
  %v8849 = vld [vmem:[%s8845 + $0x18] sm:$0xff]
  %s8850 = scalar_lea.vmem %s17, 3
  %v8851 = vld [vmem:[%s8850] sm:$0x1]
  %v8853 = vlaneseq
  %v8854 = vshrl.u32 %v8853, 7
  %v8855 = vsub.s32 0, %v8854
  %v8856 = vrot.slane %v8851, %v8855
  %v8859 = vsel %vm562, %v8841, 0
  %v8862 = vsel %vm562, %v8842, 0
  %v8865 = vsel %vm562, %v8843, 0
  %v8868 = vsel %vm562, %v8844, 0
  %8870 = vmatprep.subr.mxu0 0.0
  %8871 = vmatpush1.msra.mxu0 %v8846
  %8872 = vmatprep.subr.mxu0 0.0
  %8873 = vmatpush1.msra.mxu0 %v8847
  %8874 = vmatprep.subr.mxu0 0.0
  %8875 = vmatpush1.msra.mxu0 %v8848
  %8876 = vmatprep.subr.mxu0 0.0
  %8877 = vmatpush1.msra.mxu0 %v8849
  %8878 = vmatprep.subr.mxu0 0.0
  %8879 = vmatpush1.msra.mxu0 0.0
  %8880 = vmatprep.subr.mxu0 0.0
  %8881 = vmatpush1.msra.mxu0 0.0
  %8882 = vmatprep.subr.mxu0 0.0
  %8883 = vmatpush1.msra.mxu0 0.0
  %8884 = vmatprep.subr.mxu0 0.0
  %8885 = vmatpush1.msra.mxu0 0.0
  %8886 = vmatprep.subr.mxu0 0.0
  %8887 = vmatpush1.msra.mxu0 0.0
  %8888 = vmatprep.subr.mxu0 0.0
  %8889 = vmatpush1.msra.mxu0 0.0
  %8890 = vmatprep.subr.mxu0 0.0
  %8891 = vmatpush1.msra.mxu0 0.0
  %8892 = vmatprep.subr.mxu0 0.0
  %8893 = vmatpush1.msra.mxu0 0.0
  %8894 = vmatprep.subr.mxu0 0.0
  %8895 = vmatpush1.msra.mxu0 0.0
  %8896 = vmatprep.subr.mxu0 0.0
  %8897 = vmatpush1.msra.mxu0 0.0
  %8898 = vmatprep.subr.mxu0 0.0
  %8899 = vmatpush1.msra.mxu0 0.0
  %8900 = vmatprep.subr.mxu0 0.0
  %8901 = vmatpush1.msra.mxu0 0.0
  %8902 = vmatprep.subr.mxu0 0.0
  %8903 = vmatpush1.msra.mxu0 0.0
  %8904 = vmatprep.subr.mxu0 0.0
  %8905 = vmatpush1.msra.mxu0 0.0
  %8906 = vmatprep.subr.mxu0 0.0
  %8907 = vmatpush1.msra.mxu0 0.0
  %8908 = vmatprep.subr.mxu0 0.0
  %8909 = vmatpush1.msra.mxu0 0.0
  %8910 = vmatprep.subr.mxu0 0.0
  %8911 = vmatpush1.msra.mxu0 0.0
  %8912 = vmatprep.subr.mxu0 0.0
  %8913 = vmatpush1.msra.mxu0 0.0
  %8914 = vmatprep.subr.mxu0 0.0
  %8915 = vmatpush1.msra.mxu0 0.0
  %8916 = vmatprep.subr.mxu0 0.0
  %8917 = vmatpush1.msra.mxu0 0.0
  %8918 = vmatprep.subr.mxu0 0.0
  %8919 = vmatpush1.msra.mxu0 0.0
  %8920 = vmatprep.subr.mxu0 0.0
  %8921 = vmatpush1.msra.mxu0 0.0
  %8922 = vmatprep.subr.mxu0 0.0
  %8923 = vmatpush1.msra.mxu0 0.0
  %8924 = vmatprep.subr.mxu0 0.0
  %8925 = vmatpush1.msra.mxu0 0.0
  %8926 = vmatprep.subr.mxu0 0.0
  %8927 = vmatpush1.msra.mxu0 0.0
  %8928 = vmatprep.subr.mxu0 0.0
  %8929 = vmatpush1.msra.mxu0 0.0
  %8930 = vmatprep.subr.mxu0 0.0
  %8931 = vmatpush1.msra.mxu0 0.0
  %8932 = vmatprep.subr.mxu0 0.0
  %8933 = vmatpush1.msra.mxu0 0.0
  %8934 = vmatprep.mubr.f32.mxu0 0.0
  %8935 = vmatmul.mubr.f32.gmra.mrb[0].mxu0 %v8859
  %v8936 = vpop.f32.mrb[0].mxu0
  %v8937 = vadd.f32 %v8856, %v8936
  %v8938 = vpop.f32.mrb[0].mxu0
  %8939 = vmatprep.mubr.f32.mxu0 0.0
  %8940 = vmatmul.mubr.f32.gmra.mrb[0].mxu0 %v8862
  %v8941 = vpop.f32.mrb[0].mxu0
  %v8942 = vadd.f32 %v8856, %v8941
  %v8943 = vpop.f32.mrb[0].mxu0
  %8944 = vmatprep.mubr.f32.mxu0 0.0
  %8945 = vmatmul.mubr.f32.gmra.mrb[0].mxu0 %v8865
  %v8946 = vpop.f32.mrb[0].mxu0
  %v8947 = vadd.f32 %v8856, %v8946
  %v8948 = vpop.f32.mrb[0].mxu0
  %8949 = vmatprep.mubr.f32.mxu0 0.0
  %8950 = vmatmul.mubr.f32.gmra.mrb[0].mxu0 %v8868
  %v8951 = vpop.f32.mrb[0].mxu0
  %v8952 = vadd.f32 %v8856, %v8951
  %v8953 = vpop.f32.mrb[0].mxu0
  %8954 = vdwg.mxu0
  %s8955 = scalar_lea.vmem %s18, 96
  %v8956 = vld [vmem:[%s8955] sm:$0xff]
  %v8957 = vld [vmem:[%s8955 + $0x8] sm:$0xff]
  %v8958 = vld [vmem:[%s8955 + $0x10] sm:$0xff]
  %v8959 = vld [vmem:[%s8955 + $0x18] sm:$0xff]
  %s8960 = scalar_lea.vmem %s19, 3
  %v8961 = vld [vmem:[%s8960] sm:$0x1]
  %v8963 = vlaneseq
  %v8964 = vshrl.u32 %v8963, 7
  %v8965 = vsub.s32 0, %v8964
  %v8966 = vrot.slane %v8961, %v8965
  %8968 = vmatprep.subr.mxu0 0.0
  %8969 = vmatpush1.msra.mxu0 %v8956
  %8970 = vmatprep.subr.mxu0 0.0
  %8971 = vmatpush1.msra.mxu0 %v8957
  %8972 = vmatprep.subr.mxu0 0.0
  %8973 = vmatpush1.msra.mxu0 %v8958
  %8974 = vmatprep.subr.mxu0 0.0
  %8975 = vmatpush1.msra.mxu0 %v8959
  %8976 = vmatprep.subr.mxu0 0.0
  %8977 = vmatpush1.msra.mxu0 0.0
  %8978 = vmatprep.subr.mxu0 0.0
  %8979 = vmatpush1.msra.mxu0 0.0
  %8980 = vmatprep.subr.mxu0 0.0
  %8981 = vmatpush1.msra.mxu0 0.0
  %8982 = vmatprep.subr.mxu0 0.0
  %8983 = vmatpush1.msra.mxu0 0.0
  %8984 = vmatprep.subr.mxu0 0.0
  %8985 = vmatpush1.msra.mxu0 0.0
  %8986 = vmatprep.subr.mxu0 0.0
  %8987 = vmatpush1.msra.mxu0 0.0
  %8988 = vmatprep.subr.mxu0 0.0
  %8989 = vmatpush1.msra.mxu0 0.0
  %8990 = vmatprep.subr.mxu0 0.0
  %8991 = vmatpush1.msra.mxu0 0.0
  %8992 = vmatprep.subr.mxu0 0.0
  %8993 = vmatpush1.msra.mxu0 0.0
  %8994 = vmatprep.subr.mxu0 0.0
  %8995 = vmatpush1.msra.mxu0 0.0
  %8996 = vmatprep.subr.mxu0 0.0
  %8997 = vmatpush1.msra.mxu0 0.0
  %8998 = vmatprep.subr.mxu0 0.0
  %8999 = vmatpush1.msra.mxu0 0.0
  %9000 = vmatprep.subr.mxu0 0.0
  %9001 = vmatpush1.msra.mxu0 0.0
  %9002 = vmatprep.subr.mxu0 0.0
  %9003 = vmatpush1.msra.mxu0 0.0
  %9004 = vmatprep.subr.mxu0 0.0
  %9005 = vmatpush1.msra.mxu0 0.0
  %9006 = vmatprep.subr.mxu0 0.0
  %9007 = vmatpush1.msra.mxu0 0.0
  %9008 = vmatprep.subr.mxu0 0.0
  %9009 = vmatpush1.msra.mxu0 0.0
  %9010 = vmatprep.subr.mxu0 0.0
  %9011 = vmatpush1.msra.mxu0 0.0
  %9012 = vmatprep.subr.mxu0 0.0
  %9013 = vmatpush1.msra.mxu0 0.0
  %9014 = vmatprep.subr.mxu0 0.0
  %9015 = vmatpush1.msra.mxu0 0.0
  %9016 = vmatprep.subr.mxu0 0.0
  %9017 = vmatpush1.msra.mxu0 0.0
  %9018 = vmatprep.subr.mxu0 0.0
  %9019 = vmatpush1.msra.mxu0 0.0
  %9020 = vmatprep.subr.mxu0 0.0
  %9021 = vmatpush1.msra.mxu0 0.0
  %9022 = vmatprep.subr.mxu0 0.0
  %9023 = vmatpush1.msra.mxu0 0.0
  %9024 = vmatprep.subr.mxu0 0.0
  %9025 = vmatpush1.msra.mxu0 0.0
  %9026 = vmatprep.subr.mxu0 0.0
  %9027 = vmatpush1.msra.mxu0 0.0
  %9028 = vmatprep.subr.mxu0 0.0
  %9029 = vmatpush1.msra.mxu0 0.0
  %9030 = vmatprep.subr.mxu0 0.0
  %9031 = vmatpush1.msra.mxu0 0.0
  %9032 = vmatprep.mubr.f32.mxu0 0.0
  %9033 = vmatmul.mubr.f32.gmra.mrb[0].mxu0 %v8859
  %v9034 = vpop.f32.mrb[0].mxu0
  %v9035 = vadd.f32 %v8966, %v9034
  %v9036 = vpop.f32.mrb[0].mxu0
  %9037 = vmatprep.mubr.f32.mxu0 0.0
  %9038 = vmatmul.mubr.f32.gmra.mrb[0].mxu0 %v8862
  %v9039 = vpop.f32.mrb[0].mxu0
  %v9040 = vadd.f32 %v8966, %v9039
  %v9041 = vpop.f32.mrb[0].mxu0
  %9042 = vmatprep.mubr.f32.mxu0 0.0
  %9043 = vmatmul.mubr.f32.gmra.mrb[0].mxu0 %v8865
  %v9044 = vpop.f32.mrb[0].mxu0
  %v9045 = vadd.f32 %v8966, %v9044
  %v9046 = vpop.f32.mrb[0].mxu0
  %9047 = vmatprep.mubr.f32.mxu0 0.0
  %9048 = vmatmul.mubr.f32.gmra.mrb[0].mxu0 %v8868
  %v9049 = vpop.f32.mrb[0].mxu0
  %v9050 = vadd.f32 %v8966, %v9049
  %v9051 = vpop.f32.mrb[0].mxu0
  %9052 = vdwg.mxu0
  %v9053 = vld [vmem:[%s8] sm:$0xff]
  %v9054 = vld [vmem:[%s8 + $0x8] sm:$0xff]
  %v9056 = vsel %vm562, %v9053, 0
  %v9059 = vsel %vm562, %v9054, 0
  %9061 = vmatprep.subr.mxu0 0.0
  %9062 = vmatpush1.msra.mxu0 %v8937
  %9063 = vmatprep.subr.mxu0 0.0
  %9064 = vmatpush1.msra.mxu0 %v8942
  %9065 = vmatprep.subr.mxu0 0.0
  %9066 = vmatpush1.msra.mxu0 %v8947
  %9067 = vmatprep.subr.mxu0 0.0
  %9068 = vmatpush1.msra.mxu0 %v8952
  %9069 = vmatprep.subr.mxu0 0.0
  %9070 = vmatpush1.msra.mxu0 0.0
  %9071 = vmatprep.subr.mxu0 0.0
  %9072 = vmatpush1.msra.mxu0 0.0
  %9073 = vmatprep.subr.mxu0 0.0
  %9074 = vmatpush1.msra.mxu0 0.0
  %9075 = vmatprep.subr.mxu0 0.0
  %9076 = vmatpush1.msra.mxu0 0.0
  %9077 = vmatprep.subr.mxu0 0.0
  %9078 = vmatpush1.msra.mxu0 0.0
  %9079 = vmatprep.subr.mxu0 0.0
  %9080 = vmatpush1.msra.mxu0 0.0
  %9081 = vmatprep.subr.mxu0 0.0
  %9082 = vmatpush1.msra.mxu0 0.0
  %9083 = vmatprep.subr.mxu0 0.0
  %9084 = vmatpush1.msra.mxu0 0.0
  %9085 = vmatprep.subr.mxu0 0.0
  %9086 = vmatpush1.msra.mxu0 0.0
  %9087 = vmatprep.subr.mxu0 0.0
  %9088 = vmatpush1.msra.mxu0 0.0
  %9089 = vmatprep.subr.mxu0 0.0
  %9090 = vmatpush1.msra.mxu0 0.0
  %9091 = vmatprep.subr.mxu0 0.0
  %9092 = vmatpush1.msra.mxu0 0.0
  %9093 = vmatprep.subr.mxu0 0.0
  %9094 = vmatpush1.msra.mxu0 0.0
  %9095 = vmatprep.subr.mxu0 0.0
  %9096 = vmatpush1.msra.mxu0 0.0
  %9097 = vmatprep.subr.mxu0 0.0
  %9098 = vmatpush1.msra.mxu0 0.0
  %9099 = vmatprep.subr.mxu0 0.0
  %9100 = vmatpush1.msra.mxu0 0.0
  %9101 = vmatprep.subr.mxu0 0.0
  %9102 = vmatpush1.msra.mxu0 0.0
  %9103 = vmatprep.subr.mxu0 0.0
  %9104 = vmatpush1.msra.mxu0 0.0
  %9105 = vmatprep.subr.mxu0 0.0
  %9106 = vmatpush1.msra.mxu0 0.0
  %9107 = vmatprep.subr.mxu0 0.0
  %9108 = vmatpush1.msra.mxu0 0.0
  %9109 = vmatprep.subr.mxu0 0.0
  %9110 = vmatpush1.msra.mxu0 0.0
  %9111 = vmatprep.subr.mxu0 0.0
  %9112 = vmatpush1.msra.mxu0 0.0
  %9113 = vmatprep.subr.mxu0 0.0
  %9114 = vmatpush1.msra.mxu0 0.0
  %9115 = vmatprep.subr.mxu0 0.0
  %9116 = vmatpush1.msra.mxu0 0.0
  %9117 = vmatprep.subr.mxu0 0.0
  %9118 = vmatpush1.msra.mxu0 0.0
  %9119 = vmatprep.subr.mxu0 0.0
  %9120 = vmatpush1.msra.mxu0 0.0
  %9121 = vmatprep.subr.mxu0 0.0
  %9122 = vmatpush1.msra.mxu0 0.0
  %9123 = vmatprep.subr.mxu0 0.0
  %9124 = vmatpush1.msra.mxu0 0.0
  %9125 = vmatprep.mubr.f32.mxu0 0.0
  %9126 = vmatmul.mubr.f32.gmra.mrb[0].mxu0 %v9056
  %v9127 = vpop.f32.mrb[0].mxu0
  %v9128 = vadd.f32 0.0, %v9127
  %v9129 = vpop.f32.mrb[0].mxu0
  %9130 = vmatprep.mubr.f32.mxu0 0.0
  %9131 = vmatmul.mubr.f32.gmra.mrb[0].mxu0 %v9059
  %v9132 = vpop.f32.mrb[0].mxu0
  %v9133 = vadd.f32 0.0, %v9132
  %v9134 = vpop.f32.mrb[0].mxu0
  %9135 = vdwg.mxu0
  %9136 = vmatprep.subr.mxu0 0.0
  %9137 = vmatpush1.msra.mxu0 %v8761
  %9138 = vmatprep.subr.mxu0 0.0
  %9139 = vmatpush1.msra.mxu0 %v8762
  %9140 = vmatprep.subr.mxu0 0.0
  %9141 = vmatpush1.msra.mxu0 %v8763
  %9142 = vmatprep.subr.mxu0 0.0
  %9143 = vmatpush1.msra.mxu0 %v8764
  %9144 = vmatprep.subr.mxu0 0.0
  %9145 = vmatpush1.msra.mxu0 0.0
  %9146 = vmatprep.subr.mxu0 0.0
  %9147 = vmatpush1.msra.mxu0 0.0
  %9148 = vmatprep.subr.mxu0 0.0
  %9149 = vmatpush1.msra.mxu0 0.0
  %9150 = vmatprep.subr.mxu0 0.0
  %9151 = vmatpush1.msra.mxu0 0.0
  %9152 = vmatprep.subr.mxu0 0.0
  %9153 = vmatpush1.msra.mxu0 0.0
  %9154 = vmatprep.subr.mxu0 0.0
  %9155 = vmatpush1.msra.mxu0 0.0
  %9156 = vmatprep.subr.mxu0 0.0
  %9157 = vmatpush1.msra.mxu0 0.0
  %9158 = vmatprep.subr.mxu0 0.0
  %9159 = vmatpush1.msra.mxu0 0.0
  %9160 = vmatprep.subr.mxu0 0.0
  %9161 = vmatpush1.msra.mxu0 0.0
  %9162 = vmatprep.subr.mxu0 0.0
  %9163 = vmatpush1.msra.mxu0 0.0
  %9164 = vmatprep.subr.mxu0 0.0
  %9165 = vmatpush1.msra.mxu0 0.0
  %9166 = vmatprep.subr.mxu0 0.0
  %9167 = vmatpush1.msra.mxu0 0.0
  %9168 = vmatprep.subr.mxu0 0.0
  %9169 = vmatpush1.msra.mxu0 0.0
  %9170 = vmatprep.subr.mxu0 0.0
  %9171 = vmatpush1.msra.mxu0 0.0
  %9172 = vmatprep.subr.mxu0 0.0
  %9173 = vmatpush1.msra.mxu0 0.0
  %9174 = vmatprep.subr.mxu0 0.0
  %9175 = vmatpush1.msra.mxu0 0.0
  %9176 = vmatprep.subr.mxu0 0.0
  %9177 = vmatpush1.msra.mxu0 0.0
  %9178 = vmatprep.subr.mxu0 0.0
  %9179 = vmatpush1.msra.mxu0 0.0
  %9180 = vmatprep.subr.mxu0 0.0
  %9181 = vmatpush1.msra.mxu0 0.0
  %9182 = vmatprep.subr.mxu0 0.0
  %9183 = vmatpush1.msra.mxu0 0.0
  %9184 = vmatprep.subr.mxu0 0.0
  %9185 = vmatpush1.msra.mxu0 0.0
  %9186 = vmatprep.subr.mxu0 0.0
  %9187 = vmatpush1.msra.mxu0 0.0
  %9188 = vmatprep.subr.mxu0 0.0
  %9189 = vmatpush1.msra.mxu0 0.0
  %9190 = vmatprep.subr.mxu0 0.0
  %9191 = vmatpush1.msra.mxu0 0.0
  %9192 = vmatprep.subr.mxu0 0.0
  %9193 = vmatpush1.msra.mxu0 0.0
  %9194 = vmatprep.subr.mxu0 0.0
  %9195 = vmatpush1.msra.mxu0 0.0
  %9196 = vmatprep.subr.mxu0 0.0
  %9197 = vmatpush1.msra.mxu0 0.0
  %9198 = vmatprep.subr.mxu0 0.0
  %9199 = vmatpush1.msra.mxu0 0.0
  %9200 = vmatprep.mubr.f32.mxu0 0.0
  %9201 = vmatmul.mubr.f32.gmra.mrb[0].mxu0 %v9056
  %v9202 = vpop.f32.mrb[0].mxu0
  %v9203 = vadd.f32 0.0, %v9202
  %v9204 = vpop.f32.mrb[0].mxu0
  %9205 = vmatprep.mubr.f32.mxu0 0.0
  %9206 = vmatmul.mubr.f32.gmra.mrb[0].mxu0 %v9059
  %v9207 = vpop.f32.mrb[0].mxu0
  %v9208 = vadd.f32 0.0, %v9207
  %v9209 = vpop.f32.mrb[0].mxu0
  %9210 = vdwg.mxu0
  %v9211 = vld [vmem:[%s6] sm:$0xff]
  %v9212 = vld [vmem:[%s6 + $0x8] sm:$0xff]
  %9217 = vrot.lane.b32.xlu0 %v8937, 96
  %v9218 = vpop.permute.xlu0 %9217
  %9219 = vrot.lane.b32.xlu0 %v8942, 96
  %v9220 = vpop.permute.xlu0 %9219
  %9221 = vrot.lane.b32.xlu0 %v8947, 96
  %v9222 = vpop.permute.xlu0 %9221
  %9223 = vrot.lane.b32.xlu0 %v8952, 96
  %v9224 = vpop.permute.xlu0 %9223
  %v9226 = vsel %vm1717, %v9128, 0
  %v9229 = vsel %vm1717, %v9133, 0
  %v9231 = vsel %vm1717, %v9218, 0
  %v9233 = vsel %vm1717, %v9220, 0
  %v9235 = vsel %vm1717, %v9222, 0
  %v9237 = vsel %vm1717, %v9224, 0
  %9239 = vmatprep.subr.mxu0 0.0
  %9240 = vmatpush1.xpose.msra.mxu0 %v9231
  %9241 = vmatprep.subr.mxu0 0.0
  %9242 = vmatpush1.xpose.msra.mxu0 %v9233
  %9243 = vmatprep.subr.mxu0 0.0
  %9244 = vmatpush1.xpose.msra.mxu0 %v9235
  %9245 = vmatprep.subr.mxu0 0.0
  %9246 = vmatpush1.xpose.msra.mxu0 %v9237
  %9247 = vmatprep.subr.mxu0 0.0
  %9248 = vmatpush1.xpose.msra.mxu0 0.0
  %9249 = vmatprep.subr.mxu0 0.0
  %9250 = vmatpush1.xpose.msra.mxu0 0.0
  %9251 = vmatprep.subr.mxu0 0.0
  %9252 = vmatpush1.xpose.msra.mxu0 0.0
  %9253 = vmatprep.subr.mxu0 0.0
  %9254 = vmatpush1.xpose.msra.mxu0 0.0
  %9255 = vmatprep.subr.mxu0 0.0
  %9256 = vmatpush1.xpose.msra.mxu0 0.0
  %9257 = vmatprep.subr.mxu0 0.0
  %9258 = vmatpush1.xpose.msra.mxu0 0.0
  %9259 = vmatprep.subr.mxu0 0.0
  %9260 = vmatpush1.xpose.msra.mxu0 0.0
  %9261 = vmatprep.subr.mxu0 0.0
  %9262 = vmatpush1.xpose.msra.mxu0 0.0
  %9263 = vmatprep.subr.mxu0 0.0
  %9264 = vmatpush1.xpose.msra.mxu0 0.0
  %9265 = vmatprep.subr.mxu0 0.0
  %9266 = vmatpush1.xpose.msra.mxu0 0.0
  %9267 = vmatprep.subr.mxu0 0.0
  %9268 = vmatpush1.xpose.msra.mxu0 0.0
  %9269 = vmatprep.subr.mxu0 0.0
  %9270 = vmatpush1.xpose.msra.mxu0 0.0
  %9271 = vmatprep.subr.mxu0 0.0
  %9272 = vmatpush1.xpose.msra.mxu0 0.0
  %9273 = vmatprep.subr.mxu0 0.0
  %9274 = vmatpush1.xpose.msra.mxu0 0.0
  %9275 = vmatprep.subr.mxu0 0.0
  %9276 = vmatpush1.xpose.msra.mxu0 0.0
  %9277 = vmatprep.subr.mxu0 0.0
  %9278 = vmatpush1.xpose.msra.mxu0 0.0
  %9279 = vmatprep.subr.mxu0 0.0
  %9280 = vmatpush1.xpose.msra.mxu0 0.0
  %9281 = vmatprep.subr.mxu0 0.0
  %9282 = vmatpush1.xpose.msra.mxu0 0.0
  %9283 = vmatprep.subr.mxu0 0.0
  %9284 = vmatpush1.xpose.msra.mxu0 0.0
  %9285 = vmatprep.subr.mxu0 0.0
  %9286 = vmatpush1.xpose.msra.mxu0 0.0
  %9287 = vmatprep.subr.mxu0 0.0
  %9288 = vmatpush1.xpose.msra.mxu0 0.0
  %9289 = vmatprep.subr.mxu0 0.0
  %9290 = vmatpush1.xpose.msra.mxu0 0.0
  %9291 = vmatprep.subr.mxu0 0.0
  %9292 = vmatpush1.xpose.msra.mxu0 0.0
  %9293 = vmatprep.subr.mxu0 0.0
  %9294 = vmatpush1.xpose.msra.mxu0 0.0
  %9295 = vmatprep.subr.mxu0 0.0
  %9296 = vmatpush1.xpose.msra.mxu0 0.0
  %9297 = vmatprep.subr.mxu0 0.0
  %9298 = vmatpush1.xpose.msra.mxu0 0.0
  %9299 = vmatprep.subr.mxu0 0.0
  %9300 = vmatpush1.xpose.msra.mxu0 0.0
  %9301 = vmatprep.subr.mxu0 0.0
  %9302 = vmatpush1.xpose.msra.mxu0 0.0
  %9303 = vmatprep.mubr.f32.mxu0 0.0
  %9304 = vmatmul.mubr.f32.gmra.mrb[0].mxu0 %v9226
  %v9305 = vpop.f32.mrb[0].mxu0
  %v9306 = vadd.f32 0.0, %v9305
  %v9307 = vpop.f32.mrb[0].mxu0
  %9308 = vmatprep.mubr.f32.mxu0 0.0
  %9309 = vmatmul.mubr.f32.gmra.mrb[0].mxu0 %v9229
  %v9310 = vpop.f32.mrb[0].mxu0
  %v9311 = vadd.f32 0.0, %v9310
  %v9312 = vpop.f32.mrb[0].mxu0
  %9313 = vdwg.mxu0
  %v9314 = vmul.f32 %v9306, 0.35355338
  %v9315 = vmul.f32 %v9311, 0.35355338
  %v9316 = vadd.f32 %v9314, %v9211
  %v9317 = vadd.f32 %v9315, %v9212
  %v9318 = vsel %vm562, %v9316, -inf
  %9319 = vmax.xlane.f32.xlu0 %v9318
  %v9320 = vpop.xlane.xlu0 %9319
  %v9321 = vsel %vm562, %v9317, -inf
  %9322 = vmax.xlane.f32.xlu0 %v9321
  %v9323 = vpop.xlane.xlu0 %9322
  %v9324 = vsub.f32 %v9316, %v9320
  %v9325 = vsub.f32 %v9317, %v9323
  %v9326 = vmul.f32 %v9324, 1.442695
  %v9327 = vpow.pop %v9326
  %v9328 = vmul.f32 %v9325, 1.442695
  %v9329 = vpow.pop %v9328
  %v9330 = vsel %vm562, %v9327, 0.0
  %9331 = vadd.xlane.f32.xlu0 %v9330
  %v9332 = vpop.xlane.xlu0 %9331
  %v9333 = vsel %vm562, %v9329, 0.0
  %9334 = vadd.xlane.f32.xlu0 %v9333
  %v9335 = vpop.xlane.xlu0 %9334
  %v9336 = vrcp.pop %v9332
  %v9337 = vrcp.pop %v9335
  %v9338 = vmul.f32 %v9327, %v9336
  %v9339 = vmul.f32 %v9329, %v9337
  %9340 = vrot.lane.b32.xlu0 %v9128, 120
  %v9341 = vpop.permute.xlu0 %9340
  %9342 = vrot.lane.b32.xlu0 %v9133, 120
  %v9343 = vpop.permute.xlu0 %9342
  %9344 = vrot.lane.b32.xlu0 %v8937, 88
  %v9345 = vpop.permute.xlu0 %9344
  %9346 = vrot.lane.b32.xlu0 %v8942, 88
  %v9347 = vpop.permute.xlu0 %9346
  %9348 = vrot.lane.b32.xlu0 %v8947, 88
  %v9349 = vpop.permute.xlu0 %9348
  %9350 = vrot.lane.b32.xlu0 %v8952, 88
  %v9351 = vpop.permute.xlu0 %9350
  %v9352 = vsel %vm1717, %v9341, 0
  %v9354 = vsel %vm1717, %v9343, 0
  %v9356 = vsel %vm1717, %v9345, 0
  %v9358 = vsel %vm1717, %v9347, 0
  %v9360 = vsel %vm1717, %v9349, 0
  %v9362 = vsel %vm1717, %v9351, 0
  %9364 = vmatprep.subr.mxu0 0.0
  %9365 = vmatpush1.xpose.msra.mxu0 %v9356
  %9366 = vmatprep.subr.mxu0 0.0
  %9367 = vmatpush1.xpose.msra.mxu0 %v9358
  %9368 = vmatprep.subr.mxu0 0.0
  %9369 = vmatpush1.xpose.msra.mxu0 %v9360
  %9370 = vmatprep.subr.mxu0 0.0
  %9371 = vmatpush1.xpose.msra.mxu0 %v9362
  %9372 = vmatprep.subr.mxu0 0.0
  %9373 = vmatpush1.xpose.msra.mxu0 0.0
  %9374 = vmatprep.subr.mxu0 0.0
  %9375 = vmatpush1.xpose.msra.mxu0 0.0
  %9376 = vmatprep.subr.mxu0 0.0
  %9377 = vmatpush1.xpose.msra.mxu0 0.0
  %9378 = vmatprep.subr.mxu0 0.0
  %9379 = vmatpush1.xpose.msra.mxu0 0.0
  %9380 = vmatprep.subr.mxu0 0.0
  %9381 = vmatpush1.xpose.msra.mxu0 0.0
  %9382 = vmatprep.subr.mxu0 0.0
  %9383 = vmatpush1.xpose.msra.mxu0 0.0
  %9384 = vmatprep.subr.mxu0 0.0
  %9385 = vmatpush1.xpose.msra.mxu0 0.0
  %9386 = vmatprep.subr.mxu0 0.0
  %9387 = vmatpush1.xpose.msra.mxu0 0.0
  %9388 = vmatprep.subr.mxu0 0.0
  %9389 = vmatpush1.xpose.msra.mxu0 0.0
  %9390 = vmatprep.subr.mxu0 0.0
  %9391 = vmatpush1.xpose.msra.mxu0 0.0
  %9392 = vmatprep.subr.mxu0 0.0
  %9393 = vmatpush1.xpose.msra.mxu0 0.0
  %9394 = vmatprep.subr.mxu0 0.0
  %9395 = vmatpush1.xpose.msra.mxu0 0.0
  %9396 = vmatprep.subr.mxu0 0.0
  %9397 = vmatpush1.xpose.msra.mxu0 0.0
  %9398 = vmatprep.subr.mxu0 0.0
  %9399 = vmatpush1.xpose.msra.mxu0 0.0
  %9400 = vmatprep.subr.mxu0 0.0
  %9401 = vmatpush1.xpose.msra.mxu0 0.0
  %9402 = vmatprep.subr.mxu0 0.0
  %9403 = vmatpush1.xpose.msra.mxu0 0.0
  %9404 = vmatprep.subr.mxu0 0.0
  %9405 = vmatpush1.xpose.msra.mxu0 0.0
  %9406 = vmatprep.subr.mxu0 0.0
  %9407 = vmatpush1.xpose.msra.mxu0 0.0
  %9408 = vmatprep.subr.mxu0 0.0
  %9409 = vmatpush1.xpose.msra.mxu0 0.0
  %9410 = vmatprep.subr.mxu0 0.0
  %9411 = vmatpush1.xpose.msra.mxu0 0.0
  %9412 = vmatprep.subr.mxu0 0.0
  %9413 = vmatpush1.xpose.msra.mxu0 0.0
  %9414 = vmatprep.subr.mxu0 0.0
  %9415 = vmatpush1.xpose.msra.mxu0 0.0
  %9416 = vmatprep.subr.mxu0 0.0
  %9417 = vmatpush1.xpose.msra.mxu0 0.0
  %9418 = vmatprep.subr.mxu0 0.0
  %9419 = vmatpush1.xpose.msra.mxu0 0.0
  %9420 = vmatprep.subr.mxu0 0.0
  %9421 = vmatpush1.xpose.msra.mxu0 0.0
  %9422 = vmatprep.subr.mxu0 0.0
  %9423 = vmatpush1.xpose.msra.mxu0 0.0
  %9424 = vmatprep.subr.mxu0 0.0
  %9425 = vmatpush1.xpose.msra.mxu0 0.0
  %9426 = vmatprep.subr.mxu0 0.0
  %9427 = vmatpush1.xpose.msra.mxu0 0.0
  %9428 = vmatprep.mubr.f32.mxu0 0.0
  %9429 = vmatmul.mubr.f32.gmra.mrb[0].mxu0 %v9352
  %v9430 = vpop.f32.mrb[0].mxu0
  %v9431 = vadd.f32 0.0, %v9430
  %v9432 = vpop.f32.mrb[0].mxu0
  %9433 = vmatprep.mubr.f32.mxu0 0.0
  %9434 = vmatmul.mubr.f32.gmra.mrb[0].mxu0 %v9354
  %v9435 = vpop.f32.mrb[0].mxu0
  %v9436 = vadd.f32 0.0, %v9435
  %v9437 = vpop.f32.mrb[0].mxu0
  %9438 = vdwg.mxu0
  %v9439 = vmul.f32 %v9431, 0.35355338
  %v9440 = vmul.f32 %v9436, 0.35355338
  %v9441 = vadd.f32 %v9439, %v9211
  %v9442 = vadd.f32 %v9440, %v9212
  %v9443 = vsel %vm562, %v9441, -inf
  %9444 = vmax.xlane.f32.xlu0 %v9443
  %v9445 = vpop.xlane.xlu0 %9444
  %v9446 = vsel %vm562, %v9442, -inf
  %9447 = vmax.xlane.f32.xlu0 %v9446
  %v9448 = vpop.xlane.xlu0 %9447
  %v9449 = vsub.f32 %v9441, %v9445
  %v9450 = vsub.f32 %v9442, %v9448
  %v9451 = vmul.f32 %v9449, 1.442695
  %v9452 = vpow.pop %v9451
  %v9453 = vmul.f32 %v9450, 1.442695
  %v9454 = vpow.pop %v9453
  %v9455 = vsel %vm562, %v9452, 0.0
  %9456 = vadd.xlane.f32.xlu0 %v9455
  %v9457 = vpop.xlane.xlu0 %9456
  %v9458 = vsel %vm562, %v9454, 0.0
  %9459 = vadd.xlane.f32.xlu0 %v9458
  %v9460 = vpop.xlane.xlu0 %9459
  %v9461 = vrcp.pop %v9457
  %v9462 = vrcp.pop %v9460
  %v9463 = vmul.f32 %v9452, %v9461
  %v9464 = vmul.f32 %v9454, %v9462
  %9469 = vrot.lane.b32.xlu0 %v9035, 96
  %v9470 = vpop.permute.xlu0 %9469
  %9471 = vrot.lane.b32.xlu0 %v9040, 96
  %v9472 = vpop.permute.xlu0 %9471
  %9473 = vrot.lane.b32.xlu0 %v9045, 96
  %v9474 = vpop.permute.xlu0 %9473
  %9475 = vrot.lane.b32.xlu0 %v9050, 96
  %v9476 = vpop.permute.xlu0 %9475
  %v9482 = vsel %vm562, %v9463, 0
  %v9485 = vsel %vm562, %v9464, 0
  %9487 = vmatprep.subr.mxu0 0.0
  %9488 = vmatpush1.msra.mxu0 %v9470
  %9489 = vmatprep.subr.mxu0 0.0
  %9490 = vmatpush1.msra.mxu0 %v9472
  %9491 = vmatprep.subr.mxu0 0.0
  %9492 = vmatpush1.msra.mxu0 %v9474
  %9493 = vmatprep.subr.mxu0 0.0
  %9494 = vmatpush1.msra.mxu0 %v9476
  %9495 = vmatprep.subr.mxu0 0.0
  %9496 = vmatpush1.msra.mxu0 0.0
  %9497 = vmatprep.subr.mxu0 0.0
  %9498 = vmatpush1.msra.mxu0 0.0
  %9499 = vmatprep.subr.mxu0 0.0
  %9500 = vmatpush1.msra.mxu0 0.0
  %9501 = vmatprep.subr.mxu0 0.0
  %9502 = vmatpush1.msra.mxu0 0.0
  %9503 = vmatprep.subr.mxu0 0.0
  %9504 = vmatpush1.msra.mxu0 0.0
  %9505 = vmatprep.subr.mxu0 0.0
  %9506 = vmatpush1.msra.mxu0 0.0
  %9507 = vmatprep.subr.mxu0 0.0
  %9508 = vmatpush1.msra.mxu0 0.0
  %9509 = vmatprep.subr.mxu0 0.0
  %9510 = vmatpush1.msra.mxu0 0.0
  %9511 = vmatprep.subr.mxu0 0.0
  %9512 = vmatpush1.msra.mxu0 0.0
  %9513 = vmatprep.subr.mxu0 0.0
  %9514 = vmatpush1.msra.mxu0 0.0
  %9515 = vmatprep.subr.mxu0 0.0
  %9516 = vmatpush1.msra.mxu0 0.0
  %9517 = vmatprep.subr.mxu0 0.0
  %9518 = vmatpush1.msra.mxu0 0.0
  %9519 = vmatprep.subr.mxu0 0.0
  %9520 = vmatpush1.msra.mxu0 0.0
  %9521 = vmatprep.subr.mxu0 0.0
  %9522 = vmatpush1.msra.mxu0 0.0
  %9523 = vmatprep.subr.mxu0 0.0
  %9524 = vmatpush1.msra.mxu0 0.0
  %9525 = vmatprep.subr.mxu0 0.0
  %9526 = vmatpush1.msra.mxu0 0.0
  %9527 = vmatprep.subr.mxu0 0.0
  %9528 = vmatpush1.msra.mxu0 0.0
  %9529 = vmatprep.subr.mxu0 0.0
  %9530 = vmatpush1.msra.mxu0 0.0
  %9531 = vmatprep.subr.mxu0 0.0
  %9532 = vmatpush1.msra.mxu0 0.0
  %9533 = vmatprep.subr.mxu0 0.0
  %9534 = vmatpush1.msra.mxu0 0.0
  %9535 = vmatprep.subr.mxu0 0.0
  %9536 = vmatpush1.msra.mxu0 0.0
  %9537 = vmatprep.subr.mxu0 0.0
  %9538 = vmatpush1.msra.mxu0 0.0
  %9539 = vmatprep.subr.mxu0 0.0
  %9540 = vmatpush1.msra.mxu0 0.0
  %9541 = vmatprep.subr.mxu0 0.0
  %9542 = vmatpush1.msra.mxu0 0.0
  %9543 = vmatprep.subr.mxu0 0.0
  %9544 = vmatpush1.msra.mxu0 0.0
  %9545 = vmatprep.subr.mxu0 0.0
  %9546 = vmatpush1.msra.mxu0 0.0
  %9547 = vmatprep.subr.mxu0 0.0
  %9548 = vmatpush1.msra.mxu0 0.0
  %9549 = vmatprep.subr.mxu0 0.0
  %9550 = vmatpush1.msra.mxu0 0.0
  %9551 = vmatprep.mubr.f32.mxu0 0.0
  %9552 = vmatmul.mubr.f32.gmra.mrb[0].mxu0 %v9482
  %v9553 = vpop.f32.mrb[0].mxu0
  %v9554 = vadd.f32 0.0, %v9553
  %v9555 = vpop.f32.mrb[0].mxu0
  %9556 = vmatprep.mubr.f32.mxu0 0.0
  %9557 = vmatmul.mubr.f32.gmra.mrb[0].mxu0 %v9485
  %v9558 = vpop.f32.mrb[0].mxu0
  %v9559 = vadd.f32 0.0, %v9558
  %v9560 = vpop.f32.mrb[0].mxu0
  %9561 = vdwg.mxu0
  %v9563 = vsel %vm562, %v9338, 0
  %v9566 = vsel %vm562, %v9339, 0
  %9568 = vmatprep.subr.mxu0 0.0
  %9569 = vmatpush1.msra.mxu0 %v9035
  %9570 = vmatprep.subr.mxu0 0.0
  %9571 = vmatpush1.msra.mxu0 %v9040
  %9572 = vmatprep.subr.mxu0 0.0
  %9573 = vmatpush1.msra.mxu0 %v9045
  %9574 = vmatprep.subr.mxu0 0.0
  %9575 = vmatpush1.msra.mxu0 %v9050
  %9576 = vmatprep.subr.mxu0 0.0
  %9577 = vmatpush1.msra.mxu0 0.0
  %9578 = vmatprep.subr.mxu0 0.0
  %9579 = vmatpush1.msra.mxu0 0.0
  %9580 = vmatprep.subr.mxu0 0.0
  %9581 = vmatpush1.msra.mxu0 0.0
  %9582 = vmatprep.subr.mxu0 0.0
  %9583 = vmatpush1.msra.mxu0 0.0
  %9584 = vmatprep.subr.mxu0 0.0
  %9585 = vmatpush1.msra.mxu0 0.0
  %9586 = vmatprep.subr.mxu0 0.0
  %9587 = vmatpush1.msra.mxu0 0.0
  %9588 = vmatprep.subr.mxu0 0.0
  %9589 = vmatpush1.msra.mxu0 0.0
  %9590 = vmatprep.subr.mxu0 0.0
  %9591 = vmatpush1.msra.mxu0 0.0
  %9592 = vmatprep.subr.mxu0 0.0
  %9593 = vmatpush1.msra.mxu0 0.0
  %9594 = vmatprep.subr.mxu0 0.0
  %9595 = vmatpush1.msra.mxu0 0.0
  %9596 = vmatprep.subr.mxu0 0.0
  %9597 = vmatpush1.msra.mxu0 0.0
  %9598 = vmatprep.subr.mxu0 0.0
  %9599 = vmatpush1.msra.mxu0 0.0
  %9600 = vmatprep.subr.mxu0 0.0
  %9601 = vmatpush1.msra.mxu0 0.0
  %9602 = vmatprep.subr.mxu0 0.0
  %9603 = vmatpush1.msra.mxu0 0.0
  %9604 = vmatprep.subr.mxu0 0.0
  %9605 = vmatpush1.msra.mxu0 0.0
  %9606 = vmatprep.subr.mxu0 0.0
  %9607 = vmatpush1.msra.mxu0 0.0
  %9608 = vmatprep.subr.mxu0 0.0
  %9609 = vmatpush1.msra.mxu0 0.0
  %9610 = vmatprep.subr.mxu0 0.0
  %9611 = vmatpush1.msra.mxu0 0.0
  %9612 = vmatprep.subr.mxu0 0.0
  %9613 = vmatpush1.msra.mxu0 0.0
  %9614 = vmatprep.subr.mxu0 0.0
  %9615 = vmatpush1.msra.mxu0 0.0
  %9616 = vmatprep.subr.mxu0 0.0
  %9617 = vmatpush1.msra.mxu0 0.0
  %9618 = vmatprep.subr.mxu0 0.0
  %9619 = vmatpush1.msra.mxu0 0.0
  %9620 = vmatprep.subr.mxu0 0.0
  %9621 = vmatpush1.msra.mxu0 0.0
  %9622 = vmatprep.subr.mxu0 0.0
  %9623 = vmatpush1.msra.mxu0 0.0
  %9624 = vmatprep.subr.mxu0 0.0
  %9625 = vmatpush1.msra.mxu0 0.0
  %9626 = vmatprep.subr.mxu0 0.0
  %9627 = vmatpush1.msra.mxu0 0.0
  %9628 = vmatprep.subr.mxu0 0.0
  %9629 = vmatpush1.msra.mxu0 0.0
  %9630 = vmatprep.subr.mxu0 0.0
  %9631 = vmatpush1.msra.mxu0 0.0
  %9632 = vmatprep.mubr.f32.mxu0 0.0
  %9633 = vmatmul.mubr.f32.gmra.mrb[0].mxu0 %v9563
  %v9634 = vpop.f32.mrb[0].mxu0
  %v9635 = vadd.f32 %v9554, %v9634
  %v9636 = vpop.f32.mrb[0].mxu0
  %9637 = vmatprep.mubr.f32.mxu0 0.0
  %9638 = vmatmul.mubr.f32.gmra.mrb[0].mxu0 %v9566
  %v9639 = vpop.f32.mrb[0].mxu0
  %v9640 = vadd.f32 %v9559, %v9639
  %v9641 = vpop.f32.mrb[0].mxu0
  %9642 = vdwg.mxu0
  %9643 = vrot.lane.b32.xlu0 %v9128, 112
  %v9644 = vpop.permute.xlu0 %9643
  %9645 = vrot.lane.b32.xlu0 %v9133, 112
  %v9646 = vpop.permute.xlu0 %9645
  %9647 = vrot.lane.b32.xlu0 %v8937, 80
  %v9648 = vpop.permute.xlu0 %9647
  %9649 = vrot.lane.b32.xlu0 %v8942, 80
  %v9650 = vpop.permute.xlu0 %9649
  %9651 = vrot.lane.b32.xlu0 %v8947, 80
  %v9652 = vpop.permute.xlu0 %9651
  %9653 = vrot.lane.b32.xlu0 %v8952, 80
  %v9654 = vpop.permute.xlu0 %9653
  %v9655 = vsel %vm1717, %v9644, 0
  %v9657 = vsel %vm1717, %v9646, 0
  %v9659 = vsel %vm1717, %v9648, 0
  %v9661 = vsel %vm1717, %v9650, 0
  %v9663 = vsel %vm1717, %v9652, 0
  %v9665 = vsel %vm1717, %v9654, 0
  %9667 = vmatprep.subr.mxu0 0.0
  %9668 = vmatpush1.xpose.msra.mxu0 %v9659
  %9669 = vmatprep.subr.mxu0 0.0
  %9670 = vmatpush1.xpose.msra.mxu0 %v9661
  %9671 = vmatprep.subr.mxu0 0.0
  %9672 = vmatpush1.xpose.msra.mxu0 %v9663
  %9673 = vmatprep.subr.mxu0 0.0
  %9674 = vmatpush1.xpose.msra.mxu0 %v9665
  %9675 = vmatprep.subr.mxu0 0.0
  %9676 = vmatpush1.xpose.msra.mxu0 0.0
  %9677 = vmatprep.subr.mxu0 0.0
  %9678 = vmatpush1.xpose.msra.mxu0 0.0
  %9679 = vmatprep.subr.mxu0 0.0
  %9680 = vmatpush1.xpose.msra.mxu0 0.0
  %9681 = vmatprep.subr.mxu0 0.0
  %9682 = vmatpush1.xpose.msra.mxu0 0.0
  %9683 = vmatprep.subr.mxu0 0.0
  %9684 = vmatpush1.xpose.msra.mxu0 0.0
  %9685 = vmatprep.subr.mxu0 0.0
  %9686 = vmatpush1.xpose.msra.mxu0 0.0
  %9687 = vmatprep.subr.mxu0 0.0
  %9688 = vmatpush1.xpose.msra.mxu0 0.0
  %9689 = vmatprep.subr.mxu0 0.0
  %9690 = vmatpush1.xpose.msra.mxu0 0.0
  %9691 = vmatprep.subr.mxu0 0.0
  %9692 = vmatpush1.xpose.msra.mxu0 0.0
  %9693 = vmatprep.subr.mxu0 0.0
  %9694 = vmatpush1.xpose.msra.mxu0 0.0
  %9695 = vmatprep.subr.mxu0 0.0
  %9696 = vmatpush1.xpose.msra.mxu0 0.0
  %9697 = vmatprep.subr.mxu0 0.0
  %9698 = vmatpush1.xpose.msra.mxu0 0.0
  %9699 = vmatprep.subr.mxu0 0.0
  %9700 = vmatpush1.xpose.msra.mxu0 0.0
  %9701 = vmatprep.subr.mxu0 0.0
  %9702 = vmatpush1.xpose.msra.mxu0 0.0
  %9703 = vmatprep.subr.mxu0 0.0
  %9704 = vmatpush1.xpose.msra.mxu0 0.0
  %9705 = vmatprep.subr.mxu0 0.0
  %9706 = vmatpush1.xpose.msra.mxu0 0.0
  %9707 = vmatprep.subr.mxu0 0.0
  %9708 = vmatpush1.xpose.msra.mxu0 0.0
  %9709 = vmatprep.subr.mxu0 0.0
  %9710 = vmatpush1.xpose.msra.mxu0 0.0
  %9711 = vmatprep.subr.mxu0 0.0
  %9712 = vmatpush1.xpose.msra.mxu0 0.0
  %9713 = vmatprep.subr.mxu0 0.0
  %9714 = vmatpush1.xpose.msra.mxu0 0.0
  %9715 = vmatprep.subr.mxu0 0.0
  %9716 = vmatpush1.xpose.msra.mxu0 0.0
  %9717 = vmatprep.subr.mxu0 0.0
  %9718 = vmatpush1.xpose.msra.mxu0 0.0
  %9719 = vmatprep.subr.mxu0 0.0
  %9720 = vmatpush1.xpose.msra.mxu0 0.0
  %9721 = vmatprep.subr.mxu0 0.0
  %9722 = vmatpush1.xpose.msra.mxu0 0.0
  %9723 = vmatprep.subr.mxu0 0.0
  %9724 = vmatpush1.xpose.msra.mxu0 0.0
  %9725 = vmatprep.subr.mxu0 0.0
  %9726 = vmatpush1.xpose.msra.mxu0 0.0
  %9727 = vmatprep.subr.mxu0 0.0
  %9728 = vmatpush1.xpose.msra.mxu0 0.0
  %9729 = vmatprep.subr.mxu0 0.0
  %9730 = vmatpush1.xpose.msra.mxu0 0.0
  %9731 = vmatprep.mubr.f32.mxu0 0.0
  %9732 = vmatmul.mubr.f32.gmra.mrb[0].mxu0 %v9655
  %v9733 = vpop.f32.mrb[0].mxu0
  %v9734 = vadd.f32 0.0, %v9733
  %v9735 = vpop.f32.mrb[0].mxu0
  %9736 = vmatprep.mubr.f32.mxu0 0.0
  %9737 = vmatmul.mubr.f32.gmra.mrb[0].mxu0 %v9657
  %v9738 = vpop.f32.mrb[0].mxu0
  %v9739 = vadd.f32 0.0, %v9738
  %v9740 = vpop.f32.mrb[0].mxu0
  %9741 = vdwg.mxu0
  %v9742 = vmul.f32 %v9734, 0.35355338
  %v9743 = vmul.f32 %v9739, 0.35355338
  %v9744 = vadd.f32 %v9742, %v9211
  %v9745 = vadd.f32 %v9743, %v9212
  %v9746 = vsel %vm562, %v9744, -inf
  %9747 = vmax.xlane.f32.xlu0 %v9746
  %v9748 = vpop.xlane.xlu0 %9747
  %v9749 = vsel %vm562, %v9745, -inf
  %9750 = vmax.xlane.f32.xlu0 %v9749
  %v9751 = vpop.xlane.xlu0 %9750
  %v9752 = vsub.f32 %v9744, %v9748
  %v9753 = vsub.f32 %v9745, %v9751
  %v9754 = vmul.f32 %v9752, 1.442695
  %v9755 = vpow.pop %v9754
  %v9756 = vmul.f32 %v9753, 1.442695
  %v9757 = vpow.pop %v9756
  %v9758 = vsel %vm562, %v9755, 0.0
  %9759 = vadd.xlane.f32.xlu0 %v9758
  %v9760 = vpop.xlane.xlu0 %9759
  %v9761 = vsel %vm562, %v9757, 0.0
  %9762 = vadd.xlane.f32.xlu0 %v9761
  %v9763 = vpop.xlane.xlu0 %9762
  %v9764 = vrcp.pop %v9760
  %v9765 = vrcp.pop %v9763
  %v9766 = vmul.f32 %v9755, %v9764
  %v9767 = vmul.f32 %v9757, %v9765
  %9768 = vrot.lane.b32.xlu0 %v9035, 64
  %v9769 = vpop.permute.xlu0 %9768
  %9770 = vrot.lane.b32.xlu0 %v9040, 64
  %v9771 = vpop.permute.xlu0 %9770
  %9772 = vrot.lane.b32.xlu0 %v9045, 64
  %v9773 = vpop.permute.xlu0 %9772
  %9774 = vrot.lane.b32.xlu0 %v9050, 64
  %v9775 = vpop.permute.xlu0 %9774
  %v9781 = vsel %vm562, %v9766, 0
  %v9784 = vsel %vm562, %v9767, 0
  %9786 = vmatprep.subr.mxu0 0.0
  %9787 = vmatpush1.msra.mxu0 %v9769
  %9788 = vmatprep.subr.mxu0 0.0
  %9789 = vmatpush1.msra.mxu0 %v9771
  %9790 = vmatprep.subr.mxu0 0.0
  %9791 = vmatpush1.msra.mxu0 %v9773
  %9792 = vmatprep.subr.mxu0 0.0
  %9793 = vmatpush1.msra.mxu0 %v9775
  %9794 = vmatprep.subr.mxu0 0.0
  %9795 = vmatpush1.msra.mxu0 0.0
  %9796 = vmatprep.subr.mxu0 0.0
  %9797 = vmatpush1.msra.mxu0 0.0
  %9798 = vmatprep.subr.mxu0 0.0
  %9799 = vmatpush1.msra.mxu0 0.0
  %9800 = vmatprep.subr.mxu0 0.0
  %9801 = vmatpush1.msra.mxu0 0.0
  %9802 = vmatprep.subr.mxu0 0.0
  %9803 = vmatpush1.msra.mxu0 0.0
  %9804 = vmatprep.subr.mxu0 0.0
  %9805 = vmatpush1.msra.mxu0 0.0
  %9806 = vmatprep.subr.mxu0 0.0
  %9807 = vmatpush1.msra.mxu0 0.0
  %9808 = vmatprep.subr.mxu0 0.0
  %9809 = vmatpush1.msra.mxu0 0.0
  %9810 = vmatprep.subr.mxu0 0.0
  %9811 = vmatpush1.msra.mxu0 0.0
  %9812 = vmatprep.subr.mxu0 0.0
  %9813 = vmatpush1.msra.mxu0 0.0
  %9814 = vmatprep.subr.mxu0 0.0
  %9815 = vmatpush1.msra.mxu0 0.0
  %9816 = vmatprep.subr.mxu0 0.0
  %9817 = vmatpush1.msra.mxu0 0.0
  %9818 = vmatprep.subr.mxu0 0.0
  %9819 = vmatpush1.msra.mxu0 0.0
  %9820 = vmatprep.subr.mxu0 0.0
  %9821 = vmatpush1.msra.mxu0 0.0
  %9822 = vmatprep.subr.mxu0 0.0
  %9823 = vmatpush1.msra.mxu0 0.0
  %9824 = vmatprep.subr.mxu0 0.0
  %9825 = vmatpush1.msra.mxu0 0.0
  %9826 = vmatprep.subr.mxu0 0.0
  %9827 = vmatpush1.msra.mxu0 0.0
  %9828 = vmatprep.subr.mxu0 0.0
  %9829 = vmatpush1.msra.mxu0 0.0
  %9830 = vmatprep.subr.mxu0 0.0
  %9831 = vmatpush1.msra.mxu0 0.0
  %9832 = vmatprep.subr.mxu0 0.0
  %9833 = vmatpush1.msra.mxu0 0.0
  %9834 = vmatprep.subr.mxu0 0.0
  %9835 = vmatpush1.msra.mxu0 0.0
  %9836 = vmatprep.subr.mxu0 0.0
  %9837 = vmatpush1.msra.mxu0 0.0
  %9838 = vmatprep.subr.mxu0 0.0
  %9839 = vmatpush1.msra.mxu0 0.0
  %9840 = vmatprep.subr.mxu0 0.0
  %9841 = vmatpush1.msra.mxu0 0.0
  %9842 = vmatprep.subr.mxu0 0.0
  %9843 = vmatpush1.msra.mxu0 0.0
  %9844 = vmatprep.subr.mxu0 0.0
  %9845 = vmatpush1.msra.mxu0 0.0
  %9846 = vmatprep.subr.mxu0 0.0
  %9847 = vmatpush1.msra.mxu0 0.0
  %9848 = vmatprep.subr.mxu0 0.0
  %9849 = vmatpush1.msra.mxu0 0.0
  %9850 = vmatprep.mubr.f32.mxu0 0.0
  %9851 = vmatmul.mubr.f32.gmra.mrb[0].mxu0 %v9781
  %v9852 = vpop.f32.mrb[0].mxu0
  %v9853 = vadd.f32 0.0, %v9852
  %v9854 = vpop.f32.mrb[0].mxu0
  %9855 = vmatprep.mubr.f32.mxu0 0.0
  %9856 = vmatmul.mubr.f32.gmra.mrb[0].mxu0 %v9784
  %v9857 = vpop.f32.mrb[0].mxu0
  %v9858 = vadd.f32 0.0, %v9857
  %v9859 = vpop.f32.mrb[0].mxu0
  %9860 = vdwg.mxu0
  %v9861 = vadd.f32 %v9635, %v9853
  %v9862 = vadd.f32 %v9640, %v9858
  %9863 = vrot.lane.b32.xlu0 %v9128, 104
  %v9864 = vpop.permute.xlu0 %9863
  %9865 = vrot.lane.b32.xlu0 %v9133, 104
  %v9866 = vpop.permute.xlu0 %9865
  %9867 = vrot.lane.b32.xlu0 %v8937, 72
  %v9868 = vpop.permute.xlu0 %9867
  %9869 = vrot.lane.b32.xlu0 %v8942, 72
  %v9870 = vpop.permute.xlu0 %9869
  %9871 = vrot.lane.b32.xlu0 %v8947, 72
  %v9872 = vpop.permute.xlu0 %9871
  %9873 = vrot.lane.b32.xlu0 %v8952, 72
  %v9874 = vpop.permute.xlu0 %9873
  %v9875 = vsel %vm1717, %v9864, 0
  %v9877 = vsel %vm1717, %v9866, 0
  %v9879 = vsel %vm1717, %v9868, 0
  %v9881 = vsel %vm1717, %v9870, 0
  %v9883 = vsel %vm1717, %v9872, 0
  %v9885 = vsel %vm1717, %v9874, 0
  %9887 = vmatprep.subr.mxu0 0.0
  %9888 = vmatpush1.xpose.msra.mxu0 %v9879
  %9889 = vmatprep.subr.mxu0 0.0
  %9890 = vmatpush1.xpose.msra.mxu0 %v9881
  %9891 = vmatprep.subr.mxu0 0.0
  %9892 = vmatpush1.xpose.msra.mxu0 %v9883
  %9893 = vmatprep.subr.mxu0 0.0
  %9894 = vmatpush1.xpose.msra.mxu0 %v9885
  %9895 = vmatprep.subr.mxu0 0.0
  %9896 = vmatpush1.xpose.msra.mxu0 0.0
  %9897 = vmatprep.subr.mxu0 0.0
  %9898 = vmatpush1.xpose.msra.mxu0 0.0
  %9899 = vmatprep.subr.mxu0 0.0
  %9900 = vmatpush1.xpose.msra.mxu0 0.0
  %9901 = vmatprep.subr.mxu0 0.0
  %9902 = vmatpush1.xpose.msra.mxu0 0.0
  %9903 = vmatprep.subr.mxu0 0.0
  %9904 = vmatpush1.xpose.msra.mxu0 0.0
  %9905 = vmatprep.subr.mxu0 0.0
  %9906 = vmatpush1.xpose.msra.mxu0 0.0
  %9907 = vmatprep.subr.mxu0 0.0
  %9908 = vmatpush1.xpose.msra.mxu0 0.0
  %9909 = vmatprep.subr.mxu0 0.0
  %9910 = vmatpush1.xpose.msra.mxu0 0.0
  %9911 = vmatprep.subr.mxu0 0.0
  %9912 = vmatpush1.xpose.msra.mxu0 0.0
  %9913 = vmatprep.subr.mxu0 0.0
  %9914 = vmatpush1.xpose.msra.mxu0 0.0
  %9915 = vmatprep.subr.mxu0 0.0
  %9916 = vmatpush1.xpose.msra.mxu0 0.0
  %9917 = vmatprep.subr.mxu0 0.0
  %9918 = vmatpush1.xpose.msra.mxu0 0.0
  %9919 = vmatprep.subr.mxu0 0.0
  %9920 = vmatpush1.xpose.msra.mxu0 0.0
  %9921 = vmatprep.subr.mxu0 0.0
  %9922 = vmatpush1.xpose.msra.mxu0 0.0
  %9923 = vmatprep.subr.mxu0 0.0
  %9924 = vmatpush1.xpose.msra.mxu0 0.0
  %9925 = vmatprep.subr.mxu0 0.0
  %9926 = vmatpush1.xpose.msra.mxu0 0.0
  %9927 = vmatprep.subr.mxu0 0.0
  %9928 = vmatpush1.xpose.msra.mxu0 0.0
  %9929 = vmatprep.subr.mxu0 0.0
  %9930 = vmatpush1.xpose.msra.mxu0 0.0
  %9931 = vmatprep.subr.mxu0 0.0
  %9932 = vmatpush1.xpose.msra.mxu0 0.0
  %9933 = vmatprep.subr.mxu0 0.0
  %9934 = vmatpush1.xpose.msra.mxu0 0.0
  %9935 = vmatprep.subr.mxu0 0.0
  %9936 = vmatpush1.xpose.msra.mxu0 0.0
  %9937 = vmatprep.subr.mxu0 0.0
  %9938 = vmatpush1.xpose.msra.mxu0 0.0
  %9939 = vmatprep.subr.mxu0 0.0
  %9940 = vmatpush1.xpose.msra.mxu0 0.0
  %9941 = vmatprep.subr.mxu0 0.0
  %9942 = vmatpush1.xpose.msra.mxu0 0.0
  %9943 = vmatprep.subr.mxu0 0.0
  %9944 = vmatpush1.xpose.msra.mxu0 0.0
  %9945 = vmatprep.subr.mxu0 0.0
  %9946 = vmatpush1.xpose.msra.mxu0 0.0
  %9947 = vmatprep.subr.mxu0 0.0
  %9948 = vmatpush1.xpose.msra.mxu0 0.0
  %9949 = vmatprep.subr.mxu0 0.0
  %9950 = vmatpush1.xpose.msra.mxu0 0.0
  %9951 = vmatprep.mubr.f32.mxu0 0.0
  %9952 = vmatmul.mubr.f32.gmra.mrb[0].mxu0 %v9875
  %v9953 = vpop.f32.mrb[0].mxu0
  %v9954 = vadd.f32 0.0, %v9953
  %v9955 = vpop.f32.mrb[0].mxu0
  %9956 = vmatprep.mubr.f32.mxu0 0.0
  %9957 = vmatmul.mubr.f32.gmra.mrb[0].mxu0 %v9877
  %v9958 = vpop.f32.mrb[0].mxu0
  %v9959 = vadd.f32 0.0, %v9958
  %v9960 = vpop.f32.mrb[0].mxu0
  %9961 = vdwg.mxu0
  %v9962 = vmul.f32 %v9954, 0.35355338
  %v9963 = vmul.f32 %v9959, 0.35355338
  %v9964 = vadd.f32 %v9962, %v9211
  %v9965 = vadd.f32 %v9963, %v9212
  %v9966 = vsel %vm562, %v9964, -inf
  %9967 = vmax.xlane.f32.xlu0 %v9966
  %v9968 = vpop.xlane.xlu0 %9967
  %v9969 = vsel %vm562, %v9965, -inf
  %9970 = vmax.xlane.f32.xlu0 %v9969
  %v9971 = vpop.xlane.xlu0 %9970
  %v9972 = vsub.f32 %v9964, %v9968
  %v9973 = vsub.f32 %v9965, %v9971
  %v9974 = vmul.f32 %v9972, 1.442695
  %v9975 = vpow.pop %v9974
  %v9976 = vmul.f32 %v9973, 1.442695
  %v9977 = vpow.pop %v9976
  %v9978 = vsel %vm562, %v9975, 0.0
  %9979 = vadd.xlane.f32.xlu0 %v9978
  %v9980 = vpop.xlane.xlu0 %9979
  %v9981 = vsel %vm562, %v9977, 0.0
  %9982 = vadd.xlane.f32.xlu0 %v9981
  %v9983 = vpop.xlane.xlu0 %9982
  %v9984 = vrcp.pop %v9980
  %v9985 = vrcp.pop %v9983
  %v9986 = vmul.f32 %v9975, %v9984
  %v9987 = vmul.f32 %v9977, %v9985
  %9988 = vrot.lane.b32.xlu0 %v9035, 32
  %v9989 = vpop.permute.xlu0 %9988
  %9990 = vrot.lane.b32.xlu0 %v9040, 32
  %v9991 = vpop.permute.xlu0 %9990
  %9992 = vrot.lane.b32.xlu0 %v9045, 32
  %v9993 = vpop.permute.xlu0 %9992
  %9994 = vrot.lane.b32.xlu0 %v9050, 32
  %v9995 = vpop.permute.xlu0 %9994
  %v10001 = vsel %vm562, %v9986, 0
  %v10004 = vsel %vm562, %v9987, 0
  %10006 = vmatprep.subr.mxu0 0.0
  %10007 = vmatpush1.msra.mxu0 %v9989
  %10008 = vmatprep.subr.mxu0 0.0
  %10009 = vmatpush1.msra.mxu0 %v9991
  %10010 = vmatprep.subr.mxu0 0.0
  %10011 = vmatpush1.msra.mxu0 %v9993
  %10012 = vmatprep.subr.mxu0 0.0
  %10013 = vmatpush1.msra.mxu0 %v9995
  %10014 = vmatprep.subr.mxu0 0.0
  %10015 = vmatpush1.msra.mxu0 0.0
  %10016 = vmatprep.subr.mxu0 0.0
  %10017 = vmatpush1.msra.mxu0 0.0
  %10018 = vmatprep.subr.mxu0 0.0
  %10019 = vmatpush1.msra.mxu0 0.0
  %10020 = vmatprep.subr.mxu0 0.0
  %10021 = vmatpush1.msra.mxu0 0.0
  %10022 = vmatprep.subr.mxu0 0.0
  %10023 = vmatpush1.msra.mxu0 0.0
  %10024 = vmatprep.subr.mxu0 0.0
  %10025 = vmatpush1.msra.mxu0 0.0
  %10026 = vmatprep.subr.mxu0 0.0
  %10027 = vmatpush1.msra.mxu0 0.0
  %10028 = vmatprep.subr.mxu0 0.0
  %10029 = vmatpush1.msra.mxu0 0.0
  %10030 = vmatprep.subr.mxu0 0.0
  %10031 = vmatpush1.msra.mxu0 0.0
  %10032 = vmatprep.subr.mxu0 0.0
  %10033 = vmatpush1.msra.mxu0 0.0
  %10034 = vmatprep.subr.mxu0 0.0
  %10035 = vmatpush1.msra.mxu0 0.0
  %10036 = vmatprep.subr.mxu0 0.0
  %10037 = vmatpush1.msra.mxu0 0.0
  %10038 = vmatprep.subr.mxu0 0.0
  %10039 = vmatpush1.msra.mxu0 0.0
  %10040 = vmatprep.subr.mxu0 0.0
  %10041 = vmatpush1.msra.mxu0 0.0
  %10042 = vmatprep.subr.mxu0 0.0
  %10043 = vmatpush1.msra.mxu0 0.0
  %10044 = vmatprep.subr.mxu0 0.0
  %10045 = vmatpush1.msra.mxu0 0.0
  %10046 = vmatprep.subr.mxu0 0.0
  %10047 = vmatpush1.msra.mxu0 0.0
  %10048 = vmatprep.subr.mxu0 0.0
  %10049 = vmatpush1.msra.mxu0 0.0
  %10050 = vmatprep.subr.mxu0 0.0
  %10051 = vmatpush1.msra.mxu0 0.0
  %10052 = vmatprep.subr.mxu0 0.0
  %10053 = vmatpush1.msra.mxu0 0.0
  %10054 = vmatprep.subr.mxu0 0.0
  %10055 = vmatpush1.msra.mxu0 0.0
  %10056 = vmatprep.subr.mxu0 0.0
  %10057 = vmatpush1.msra.mxu0 0.0
  %10058 = vmatprep.subr.mxu0 0.0
  %10059 = vmatpush1.msra.mxu0 0.0
  %10060 = vmatprep.subr.mxu0 0.0
  %10061 = vmatpush1.msra.mxu0 0.0
  %10062 = vmatprep.subr.mxu0 0.0
  %10063 = vmatpush1.msra.mxu0 0.0
  %10064 = vmatprep.subr.mxu0 0.0
  %10065 = vmatpush1.msra.mxu0 0.0
  %10066 = vmatprep.subr.mxu0 0.0
  %10067 = vmatpush1.msra.mxu0 0.0
  %10068 = vmatprep.subr.mxu0 0.0
  %10069 = vmatpush1.msra.mxu0 0.0
  %10070 = vmatprep.mubr.f32.mxu0 0.0
  %10071 = vmatmul.mubr.f32.gmra.mrb[0].mxu0 %v10001
  %v10072 = vpop.f32.mrb[0].mxu0
  %v10073 = vadd.f32 0.0, %v10072
  %v10074 = vpop.f32.mrb[0].mxu0
  %10075 = vmatprep.mubr.f32.mxu0 0.0
  %10076 = vmatmul.mubr.f32.gmra.mrb[0].mxu0 %v10004
  %v10077 = vpop.f32.mrb[0].mxu0
  %v10078 = vadd.f32 0.0, %v10077
  %v10079 = vpop.f32.mrb[0].mxu0
  %10080 = vdwg.mxu0
  %v10081 = vadd.f32 %v9861, %v10073
  %v10082 = vadd.f32 %v9862, %v10078
  %10084 = vset.pattern.permute.xlu0 0
  %10085 = vperm.xlu0 %10084, %v106
  %v10086 = vpop.permute.xlu0 %10085
  %10089 = vset.pattern.permute.xlu0 0
  %10090 = vperm.xlu0 %10089, %v107
  %v10091 = vpop.permute.xlu0 %10090
  %v10093 = vmul.f32 %v9203, %v10086
  %v10094 = vmul.f32 %v9208, %v10091
  %s10095 = scalar_lea.vmem %s20, 3
  %v10096 = vld [vmem:[%s10095] sm:$0x1]
  %v10098 = vlaneseq
  %v10099 = vshrl.u32 %v10098, 7
  %v10100 = vsub.s32 0, %v10099
  %v10101 = vrot.slane %v10096, %v10100
  %v10103 = vadd.f32 %v10081, %v10101
  %v10104 = vadd.f32 %v10082, %v10101
  %v10105 = vmul.f32 %v10103, %v10086
  %v10106 = vmul.f32 %v10104, %v10091
  %v10107 = vadd.f32 %v10093, %v10105
  %v10108 = vadd.f32 %v10094, %v10106
  %s10109 = scalar_lea.vmem %s21, 3
  %v10110 = vld [vmem:[%s10109] sm:$0x1]
  %s10111 = scalar_lea.vmem %s22, 3
  %v10112 = vld [vmem:[%s10111] sm:$0x1]
  %v10113 = vsel %vm562, %v10107, 0.0
  %10114 = vadd.xlane.f32.xlu0 %v10113
  %v10115 = vpop.xlane.xlu0 %10114
  %v10116 = vsel %vm562, %v10108, 0.0
  %10117 = vadd.xlane.f32.xlu0 %v10116
  %v10118 = vpop.xlane.xlu0 %10117
  %v10119 = vmul.f32 %v10115, %v756
  %v10120 = vmul.f32 %v10118, %v756
  %v10121 = vsub.f32 %v10107, %v10119
  %v10122 = vsub.f32 %v10108, %v10120
  %v10123 = vmul.f32 %v10121, %v10121
  %v10124 = vmul.f32 %v10122, %v10122
  %v10125 = vsel %vm562, %v10123, 0.0
  %10126 = vadd.xlane.f32.xlu0 %v10125
  %v10127 = vpop.xlane.xlu0 %10126
  %v10128 = vsel %vm562, %v10124, 0.0
  %10129 = vadd.xlane.f32.xlu0 %v10128
  %v10130 = vpop.xlane.xlu0 %10129
  %v10131 = vmul.f32 %v10127, %v756
  %v10132 = vmul.f32 %v10130, %v756
  %v10133 = vadd.f32 %v10131, 1e-05
  %v10134 = vadd.f32 %v10132, 1e-05
  %v10135 = vrsqrt.pop %v10133
  %v10136 = vrsqrt.pop %v10134
  %v10137 = vmul.f32 %v10121, %v10135
  %v10138 = vmul.f32 %v10122, %v10136
  %v10140 = vlaneseq
  %v10141 = vshrl.u32 %v10140, 7
  %v10142 = vsub.s32 0, %v10141
  %v10143 = vrot.slane %v10110, %v10142
  %v10145 = vmul.f32 %v10137, %v10143
  %v10146 = vmul.f32 %v10138, %v10143
  %v10148 = vlaneseq
  %v10149 = vshrl.u32 %v10148, 7
  %v10150 = vsub.s32 0, %v10149
  %v10151 = vrot.slane %v10112, %v10150
  %v10153 = vadd.f32 %v10145, %v10151
  %v10154 = vadd.f32 %v10146, %v10151
  %s10155 = scalar_lea.vmem %s23, 96
  %v10156 = vld [vmem:[%s10155] sm:$0xff]
  %v10157 = vld [vmem:[%s10155 + $0x8] sm:$0xff]
  %v10158 = vld [vmem:[%s10155 + $0x10] sm:$0xff]
  %v10159 = vld [vmem:[%s10155 + $0x18] sm:$0xff]
  %s10160 = scalar_lea.vmem %s24, 3
  %v10161 = vld [vmem:[%s10160] sm:$0x1]
  %v10163 = vlaneseq
  %v10164 = vshrl.u32 %v10163, 7
  %v10165 = vsub.s32 0, %v10164
  %v10166 = vrot.slane %v10161, %v10165
  %v10169 = vsel %vm562, %v10153, 0
  %v10172 = vsel %vm562, %v10154, 0
  %10174 = vmatprep.subr.mxu0 0.0
  %10175 = vmatpush1.msra.mxu0 %v10156
  %10176 = vmatprep.subr.mxu0 0.0
  %10177 = vmatpush1.msra.mxu0 %v10157
  %10178 = vmatprep.subr.mxu0 0.0
  %10179 = vmatpush1.msra.mxu0 %v10158
  %10180 = vmatprep.subr.mxu0 0.0
  %10181 = vmatpush1.msra.mxu0 %v10159
  %10182 = vmatprep.subr.mxu0 0.0
  %10183 = vmatpush1.msra.mxu0 0.0
  %10184 = vmatprep.subr.mxu0 0.0
  %10185 = vmatpush1.msra.mxu0 0.0
  %10186 = vmatprep.subr.mxu0 0.0
  %10187 = vmatpush1.msra.mxu0 0.0
  %10188 = vmatprep.subr.mxu0 0.0
  %10189 = vmatpush1.msra.mxu0 0.0
  %10190 = vmatprep.subr.mxu0 0.0
  %10191 = vmatpush1.msra.mxu0 0.0
  %10192 = vmatprep.subr.mxu0 0.0
  %10193 = vmatpush1.msra.mxu0 0.0
  %10194 = vmatprep.subr.mxu0 0.0
  %10195 = vmatpush1.msra.mxu0 0.0
  %10196 = vmatprep.subr.mxu0 0.0
  %10197 = vmatpush1.msra.mxu0 0.0
  %10198 = vmatprep.subr.mxu0 0.0
  %10199 = vmatpush1.msra.mxu0 0.0
  %10200 = vmatprep.subr.mxu0 0.0
  %10201 = vmatpush1.msra.mxu0 0.0
  %10202 = vmatprep.subr.mxu0 0.0
  %10203 = vmatpush1.msra.mxu0 0.0
  %10204 = vmatprep.subr.mxu0 0.0
  %10205 = vmatpush1.msra.mxu0 0.0
  %10206 = vmatprep.subr.mxu0 0.0
  %10207 = vmatpush1.msra.mxu0 0.0
  %10208 = vmatprep.subr.mxu0 0.0
  %10209 = vmatpush1.msra.mxu0 0.0
  %10210 = vmatprep.subr.mxu0 0.0
  %10211 = vmatpush1.msra.mxu0 0.0
  %10212 = vmatprep.subr.mxu0 0.0
  %10213 = vmatpush1.msra.mxu0 0.0
  %10214 = vmatprep.subr.mxu0 0.0
  %10215 = vmatpush1.msra.mxu0 0.0
  %10216 = vmatprep.subr.mxu0 0.0
  %10217 = vmatpush1.msra.mxu0 0.0
  %10218 = vmatprep.subr.mxu0 0.0
  %10219 = vmatpush1.msra.mxu0 0.0
  %10220 = vmatprep.subr.mxu0 0.0
  %10221 = vmatpush1.msra.mxu0 0.0
  %10222 = vmatprep.subr.mxu0 0.0
  %10223 = vmatpush1.msra.mxu0 0.0
  %10224 = vmatprep.subr.mxu0 0.0
  %10225 = vmatpush1.msra.mxu0 0.0
  %10226 = vmatprep.subr.mxu0 0.0
  %10227 = vmatpush1.msra.mxu0 0.0
  %10228 = vmatprep.subr.mxu0 0.0
  %10229 = vmatpush1.msra.mxu0 0.0
  %10230 = vmatprep.subr.mxu0 0.0
  %10231 = vmatpush1.msra.mxu0 0.0
  %10232 = vmatprep.subr.mxu0 0.0
  %10233 = vmatpush1.msra.mxu0 0.0
  %10234 = vmatprep.subr.mxu0 0.0
  %10235 = vmatpush1.msra.mxu0 0.0
  %10236 = vmatprep.subr.mxu0 0.0
  %10237 = vmatpush1.msra.mxu0 0.0
  %10238 = vmatprep.mubr.f32.mxu0 0.0
  %10239 = vmatmul.mubr.f32.gmra.mrb[0].mxu0 %v10169
  %v10240 = vpop.f32.mrb[0].mxu0
  %v10241 = vadd.f32 %v10166, %v10240
  %v10242 = vpop.f32.mrb[0].mxu0
  %10243 = vmatprep.mubr.f32.mxu0 0.0
  %10244 = vmatmul.mubr.f32.gmra.mrb[0].mxu0 %v10172
  %v10245 = vpop.f32.mrb[0].mxu0
  %v10246 = vadd.f32 %v10166, %v10245
  %v10247 = vpop.f32.mrb[0].mxu0
  %10248 = vdwg.mxu0
  %v10249 = vmul.f32 %v10241, 0.5
  %v10250 = vmul.f32 %v10246, 0.5
  %v10251 = vmul.f32 %v10241, 0.044715
  %v10252 = vmul.f32 %v10246, 0.044715
  %v10253 = vmul.f32 %v10251, %v10241
  %v10254 = vmul.f32 %v10252, %v10246
  %v10255 = vmul.f32 %v10253, %v10241
  %v10256 = vmul.f32 %v10254, %v10246
  %v10257 = vadd.f32 %v10241, %v10255
  %v10258 = vadd.f32 %v10246, %v10256
  %v10259 = vmul.f32 %v10257, 0.7978846
  %v10260 = vmul.f32 %v10258, 0.7978846
  %v10261 = vtanh.pop %v10259
  %v10262 = vtanh.pop %v10260
  %v10263 = vadd.f32 %v10261, 1.0
  %v10264 = vadd.f32 %v10262, 1.0
  %v10265 = vmul.f32 %v10249, %v10263
  %v10266 = vmul.f32 %v10250, %v10264
  %v10267 = vmul.f32 %v10265, %v10086
  %v10268 = vmul.f32 %v10266, %v10091
  %s10269 = scalar_lea.vmem %s25, 384
  %v10270 = vld [vmem:[%s10269] sm:$0xff]
  %v10271 = vld [vmem:[%s10269 + $0x8] sm:$0xff]
  %v10272 = vld [vmem:[%s10269 + $0x10] sm:$0xff]
  %v10273 = vld [vmem:[%s10269 + $0x18] sm:$0xff]
  %v10274 = vld [vmem:[%s10269 + $0x20] sm:$0xff]
  %v10275 = vld [vmem:[%s10269 + $0x28] sm:$0xff]
  %v10276 = vld [vmem:[%s10269 + $0x30] sm:$0xff]
  %v10277 = vld [vmem:[%s10269 + $0x38] sm:$0xff]
  %v10278 = vld [vmem:[%s10269 + $0x40] sm:$0xff]
  %v10279 = vld [vmem:[%s10269 + $0x48] sm:$0xff]
  %v10280 = vld [vmem:[%s10269 + $0x50] sm:$0xff]
  %v10281 = vld [vmem:[%s10269 + $0x58] sm:$0xff]
  %v10282 = vld [vmem:[%s10269 + $0x60] sm:$0xff]
  %v10283 = vld [vmem:[%s10269 + $0x68] sm:$0xff]
  %v10284 = vld [vmem:[%s10269 + $0x70] sm:$0xff]
  %v10285 = vld [vmem:[%s10269 + $0x78] sm:$0xff]
  %s10286 = scalar_lea.vmem %s26, 3
  %v10287 = vld [vmem:[%s10286] sm:$0x1]
  %v10289 = vlaneseq
  %v10290 = vshrl.u32 %v10289, 7
  %v10291 = vsub.s32 0, %v10290
  %v10292 = vrot.slane %v10287, %v10291
  %10294 = vmatprep.subr.mxu0 0.0
  %10295 = vmatpush1.msra.mxu0 %v10270
  %10296 = vmatprep.subr.mxu0 0.0
  %10297 = vmatpush1.msra.mxu0 %v10271
  %10298 = vmatprep.subr.mxu0 0.0
  %10299 = vmatpush1.msra.mxu0 %v10272
  %10300 = vmatprep.subr.mxu0 0.0
  %10301 = vmatpush1.msra.mxu0 %v10273
  %10302 = vmatprep.subr.mxu0 0.0
  %10303 = vmatpush1.msra.mxu0 %v10274
  %10304 = vmatprep.subr.mxu0 0.0
  %10305 = vmatpush1.msra.mxu0 %v10275
  %10306 = vmatprep.subr.mxu0 0.0
  %10307 = vmatpush1.msra.mxu0 %v10276
  %10308 = vmatprep.subr.mxu0 0.0
  %10309 = vmatpush1.msra.mxu0 %v10277
  %10310 = vmatprep.subr.mxu0 0.0
  %10311 = vmatpush1.msra.mxu0 %v10278
  %10312 = vmatprep.subr.mxu0 0.0
  %10313 = vmatpush1.msra.mxu0 %v10279
  %10314 = vmatprep.subr.mxu0 0.0
  %10315 = vmatpush1.msra.mxu0 %v10280
  %10316 = vmatprep.subr.mxu0 0.0
  %10317 = vmatpush1.msra.mxu0 %v10281
  %10318 = vmatprep.subr.mxu0 0.0
  %10319 = vmatpush1.msra.mxu0 %v10282
  %10320 = vmatprep.subr.mxu0 0.0
  %10321 = vmatpush1.msra.mxu0 %v10283
  %10322 = vmatprep.subr.mxu0 0.0
  %10323 = vmatpush1.msra.mxu0 %v10284
  %10324 = vmatprep.subr.mxu0 0.0
  %10325 = vmatpush1.msra.mxu0 %v10285
  %10326 = vmatprep.subr.mxu0 0.0
  %10327 = vmatpush1.msra.mxu0 0.0
  %10328 = vmatprep.subr.mxu0 0.0
  %10329 = vmatpush1.msra.mxu0 0.0
  %10330 = vmatprep.subr.mxu0 0.0
  %10331 = vmatpush1.msra.mxu0 0.0
  %10332 = vmatprep.subr.mxu0 0.0
  %10333 = vmatpush1.msra.mxu0 0.0
  %10334 = vmatprep.subr.mxu0 0.0
  %10335 = vmatpush1.msra.mxu0 0.0
  %10336 = vmatprep.subr.mxu0 0.0
  %10337 = vmatpush1.msra.mxu0 0.0
  %10338 = vmatprep.subr.mxu0 0.0
  %10339 = vmatpush1.msra.mxu0 0.0
  %10340 = vmatprep.subr.mxu0 0.0
  %10341 = vmatpush1.msra.mxu0 0.0
  %10342 = vmatprep.subr.mxu0 0.0
  %10343 = vmatpush1.msra.mxu0 0.0
  %10344 = vmatprep.subr.mxu0 0.0
  %10345 = vmatpush1.msra.mxu0 0.0
  %10346 = vmatprep.subr.mxu0 0.0
  %10347 = vmatpush1.msra.mxu0 0.0
  %10348 = vmatprep.subr.mxu0 0.0
  %10349 = vmatpush1.msra.mxu0 0.0
  %10350 = vmatprep.subr.mxu0 0.0
  %10351 = vmatpush1.msra.mxu0 0.0
  %10352 = vmatprep.subr.mxu0 0.0
  %10353 = vmatpush1.msra.mxu0 0.0
  %10354 = vmatprep.subr.mxu0 0.0
  %10355 = vmatpush1.msra.mxu0 0.0
  %10356 = vmatprep.subr.mxu0 0.0
  %10357 = vmatpush1.msra.mxu0 0.0
  %10358 = vmatprep.mubr.f32.mxu0 0.0
  %10359 = vmatmul.mubr.f32.gmra.mrb[0].mxu0 %v10267
  %v10360 = vpop.f32.mrb[0].mxu0
  %v10361 = vadd.f32 %v10292, %v10360
  %v10362 = vpop.f32.mrb[0].mxu0
  %10363 = vmatprep.mubr.f32.mxu0 0.0
  %10364 = vmatmul.mubr.f32.gmra.mrb[0].mxu0 %v10268
  %v10365 = vpop.f32.mrb[0].mxu0
  %v10366 = vadd.f32 %v10292, %v10365
  %v10367 = vpop.f32.mrb[0].mxu0
  %10368 = vdwg.mxu0
  %v10369 = vmul.f32 %v10361, %v10086
  %v10370 = vmul.f32 %v10366, %v10091
  %v10371 = vadd.f32 %v10107, %v10369
  %v10372 = vadd.f32 %v10108, %v10370
  %10373 = vst.msk [vmem:[%s27 + $0x60] sm:$0xff] %vm562, %v10371
  %10374 = vst.msk [vmem:[%s27 + $0x68] sm:$0xff] %vm562, %v10372
  // Predicated region
  $region110: #{video_transformer_forward.1} parent=0 // pred_check
    _
  $region111: #{video_transformer_forward.1} parent=0 // pred_check_branch
    %10376 = sbr.rel (0) target = $region113
  $region112: #{video_transformer_forward.1} parent=0 // pred_region
    _
  $region113: #{video_transformer_forward.1} parent=0 // pred_fallthru
    _
  // Predicated region
  $region114: #{video_transformer_forward.1} parent=0 // pred_check
    _
  $region115: #{video_transformer_forward.1} parent=0 // pred_check_branch
    %10378 = sbr.rel (0) target = $region117
  $region116: #{video_transformer_forward.1} parent=0 // pred_region
    _
  $region117: #{video_transformer_forward.1} parent=0 // pred_fallthru
    _

</llo_original>
